<compile_context>
chip_gen: v7x
topology: tpu7x:2x2x1
jax: 0.10.0
libtpu: 0.0.40
codegen_flags: <defaults>
</compile_context>

<pallas_src>
import jax
import jax.numpy as jnp
from jax.experimental import pallas as pl
from jax.experimental.pallas import tpu as pltpu

SEQ_IN = 1024   # siglip-base-patch16-512 -> (512/16)^2 = 1024 tokens
SEQ_OUT = 77    # proj: Linear(1024, 77)
HIDDEN = 768    # LayerNorm(768)
LN_EPS = 1e-5   # torch.nn.LayerNorm default


def _adapter_kernel(x_ref, w_ref, g_ref, beta_ref, o_ref):
    """Bt batch elements per grid step.

    x_ref    : (Bt, SEQ_IN, HIDDEN)   bf16 cond-embedding tile
    w_ref    : (SEQ_OUT, SEQ_IN)      bf16 proj weight (resident across grid)
    g_ref    : (1, HIDDEN)            f32 LayerNorm gamma
    beta_ref : (1, HIDDEN)            f32 LayerNorm beta
    o_ref    : (Bt, SEQ_OUT, HIDDEN)  output tile (original activation dtype)

    Note: the nn.Linear bias is intentionally omitted — it is constant along
    the hidden (normalized) axis, so LayerNorm cancels it exactly.
    """
    w = w_ref[...]              # bf16, fed straight to the MXU
    gamma = g_ref[...]          # (1, H) f32
    beta = beta_ref[...]        # (1, H) f32

    for i in range(x_ref.shape[0]):          # tiny static unroll (Bt <= 2)
        # (S_out, S_in) @ (S_in, H) -> (S_out, H), bf16 inputs, f32 accumulation.
        y = jnp.dot(w, x_ref[i], preferred_element_type=jnp.float32)

        # LayerNorm over the hidden (lane) dimension — all stats in f32.
        mean = jnp.mean(y, axis=-1, keepdims=True)
        centered = y - mean
        var = jnp.mean(centered * centered, axis=-1, keepdims=True)
        yn = centered * jax.lax.rsqrt(var + LN_EPS)
        o_ref[i] = (yn * gamma + beta).astype(o_ref.dtype)


def tryoffdiff_adapter(emb, proj_w, proj_b, ln_gamma, ln_beta):
    """emb: (B, SEQ_IN, HIDDEN) -> (B, SEQ_OUT, HIDDEN).

    `proj_b` is accepted for API parity with nn.Linear but is mathematically a
    no-op after LayerNorm (constant along the normalized axis), so it is not
    passed to the kernel.
    """
    del proj_b  # exactly cancelled by the LayerNorm mean-subtraction
    B, S, H = emb.shape
    assert S == SEQ_IN and H == HIDDEN

    # HBM-bound kernel: stream activations + weight in bf16 (halves read bytes).
    emb_bf16 = emb.astype(jnp.bfloat16)
    w_bf16 = proj_w.astype(jnp.bfloat16)
    gamma_row = ln_gamma.reshape(1, HIDDEN).astype(jnp.float32)
    beta_row = ln_beta.reshape(1, HIDDEN).astype(jnp.float32)

    # Amortize per-grid-step overhead over 2 batches when the batch divides evenly.
    bt = 2 if (B % 2 == 0 and B >= 2) else 1
    grid = (B // bt,)

    cost = pl.CostEstimate(
        flops=2 * B * SEQ_OUT * SEQ_IN * HIDDEN,
        transcendentals=B * SEQ_OUT,  # one rsqrt per output row
        bytes_accessed=(
            emb_bf16.size * 2            # bf16 activations in
            + w_bf16.size * 2            # bf16 weight in
            + (gamma_row.size + beta_row.size) * 4
            + B * SEQ_OUT * HIDDEN * emb.dtype.itemsize  # output
        ),
    )

    return pl.pallas_call(
        _adapter_kernel,
        out_shape=jax.ShapeDtypeStruct((B, SEQ_OUT, HIDDEN), emb.dtype),
        grid_spec=pltpu.PrefetchScalarGridSpec(
            num_scalar_prefetch=0,
            grid=grid,
            in_specs=[
                pl.BlockSpec((bt, SEQ_IN, HIDDEN), lambda b: (b, 0, 0)),
                pl.BlockSpec((SEQ_OUT, SEQ_IN), lambda b: (0, 0)),
                pl.BlockSpec((1, HIDDEN), lambda b: (0, 0)),
                pl.BlockSpec((1, HIDDEN), lambda b: (0, 0)),
            ],
            out_specs=pl.BlockSpec((bt, SEQ_OUT, HIDDEN), lambda b: (b, 0, 0)),
        ),
        compiler_params=pltpu.CompilerParams(
            dimension_semantics=("parallel",),
        ),
        cost_estimate=cost,
    )(emb_bf16, w_bf16, gamma_row, beta_row)


def _reference(emb, proj_w, proj_b, ln_gamma, ln_beta):
    """f32 reference, including the bias (proves the LN cancellation is exact).

    Inputs are pre-rounded to bf16 (matching what the kernel streams) so the
    comparison isolates kernel math from quantization of the stream.
    """
    emb32 = emb.astype(jnp.bfloat16).astype(jnp.float32)
    w32 = proj_w.astype(jnp.bfloat16).astype(jnp.float32)
    y = jnp.einsum("ts,bsh->bth", w32, emb32,
                   preferred_element_type=jnp.float32) + proj_b[None, :, None]
    mean = jnp.mean(y, axis=-1, keepdims=True)
    var = jnp.mean((y - mean) ** 2, axis=-1, keepdims=True)
    yn = (y - mean) / jnp.sqrt(var + LN_EPS)
    return yn * ln_gamma[None, None, :] + ln_beta[None, None, :]


def _xavier_uniform(key, shape):
    fan_out, fan_in = shape
    limit = jnp.sqrt(6.0 / (fan_in + fan_out))
    return jax.random.uniform(key, shape, jnp.float32, -limit, limit)


if __name__ == "__main__":
    key = jax.random.PRNGKey(0)
    k_emb, k_w, k_b = jax.random.split(key, 3)

    B = 2
    # Synthetic "last_hidden_state" from the frozen SigLIP encoder.
    emb = jax.random.normal(k_emb, (B, SEQ_IN, HIDDEN), jnp.float32)

    # Deterministic parameter init matching the module's __init__ shapes.
    proj_w = _xavier_uniform(k_w, (SEQ_OUT, SEQ_IN))            # nn.init.xavier_uniform_
    bound = 1.0 / jnp.sqrt(jnp.float32(SEQ_IN))
    proj_b = jax.random.uniform(k_b, (SEQ_OUT,), jnp.float32, -bound, bound)
    ln_gamma = jnp.ones((HIDDEN,), jnp.float32)
    ln_beta = jnp.zeros((HIDDEN,), jnp.float32)

    out = tryoffdiff_adapter(emb, proj_w, proj_b, ln_gamma, ln_beta)
    out = jax.block_until_ready(out)

    ref = _reference(emb, proj_w, proj_b, ln_gamma, ln_beta)
    assert out.shape == (B, SEQ_OUT, HIDDEN)
    assert jnp.allclose(out, ref, atol=2e-3, rtol=2e-3), float(
        jnp.max(jnp.abs(out - ref)))

    print("KERNEL_OK")
</pallas_src>

<mosaic_0001>
module attributes {stable_mosaic.version = 11 : i64} {
  func.func @_adapter_kernel(%arg0: i32, %arg1: memref<2x1024x768xbf16, #tpu.memory_space<vmem>>, %arg2: memref<77x1024xbf16, #tpu.memory_space<vmem>>, %arg3: memref<1x768xf32, #tpu.memory_space<vmem>>, %arg4: memref<1x768xf32, #tpu.memory_space<vmem>>, %arg5: memref<2x77x768xf32, #tpu.memory_space<vmem>>) attributes {dimension_semantics = [#tpu.dimension_semantics<parallel>], iteration_bounds = array<i64: 1>, scalar_prefetch = 0 : i64, scratch_operands = 0 : i64, tpu.core_type = #tpu.core_type<tc>, window_params = [{transform_indices = @transform_0, window_bounds = array<i64: 2, 1024, 768>}, {pipeline_mode = #tpu.pipeline_mode<synchronous>, transform_indices = @transform_1, window_bounds = array<i64: 77, 1024>}, {pipeline_mode = #tpu.pipeline_mode<synchronous>, transform_indices = @transform_2, window_bounds = array<i64: 1, 768>}, {pipeline_mode = #tpu.pipeline_mode<synchronous>, transform_indices = @transform_3, window_bounds = array<i64: 1, 768>}, {transform_indices = @transform_4, window_bounds = array<i64: 2, 77, 768>}]} {
    %c0 = arith.constant 0 : index
    %c0_0 = arith.constant 0 : index
    %0 = vector.load %arg2[%c0, %c0_0] : memref<77x1024xbf16, #tpu.memory_space<vmem>>, vector<77x1024xbf16>
    %c0_1 = arith.constant 0 : index
    %c0_2 = arith.constant 0 : index
    %1 = vector.load %arg3[%c0_1, %c0_2] : memref<1x768xf32, #tpu.memory_space<vmem>>, vector<1x768xf32>
    %c0_3 = arith.constant 0 : index
    %c0_4 = arith.constant 0 : index
    %2 = vector.load %arg4[%c0_3, %c0_4] : memref<1x768xf32, #tpu.memory_space<vmem>>, vector<1x768xf32>
    %c0_5 = arith.constant 0 : index
    %c0_6 = arith.constant 0 : index
    %c0_7 = arith.constant 0 : index
    %3 = vector.load %arg1[%c0_5, %c0_6, %c0_7] : memref<2x1024x768xbf16, #tpu.memory_space<vmem>>, vector<1x1024x768xbf16>
    %4 = vector.shape_cast %3 : vector<1x1024x768xbf16> to vector<1024x768xbf16>
    %cst = arith.constant dense<0.000000e+00> : vector<77x768xf32>
    %5 = tpu.matmul %0, %4, %cst {dimension_numbers = #tpu.dot_dimension_numbers<[1], [0], [0], [1], [0, 0, 1, 1], [], []>} : vector<77x1024xbf16>, vector<1024x768xbf16>, vector<77x768xf32> -> vector<77x768xf32>
    %cst_8 = arith.constant dense<0.000000e+00> : vector<77xf32>
    %6 = vector.multi_reduction <add>, %5, %cst_8 [1] : vector<77x768xf32> to vector<77xf32>
    %7 = vector.shape_cast %6 : vector<77xf32> to vector<77x1xf32>
    %cst_9 = arith.constant 7.680000e+02 : f32
    %8 = vector.broadcast %cst_9 : f32 to vector<77x1xf32>
    %9 = arith.divf %7, %8 : vector<77x1xf32>
    %10 = vector.broadcast %9 : vector<77x1xf32> to vector<77x768xf32>
    %11 = arith.subf %5, %10 : vector<77x768xf32>
    %12 = arith.mulf %11, %11 : vector<77x768xf32>
    %cst_10 = arith.constant dense<0.000000e+00> : vector<77xf32>
    %13 = vector.multi_reduction <add>, %12, %cst_10 [1] : vector<77x768xf32> to vector<77xf32>
    %14 = vector.shape_cast %13 : vector<77xf32> to vector<77x1xf32>
    %cst_11 = arith.constant 7.680000e+02 : f32
    %15 = vector.broadcast %cst_11 : f32 to vector<77x1xf32>
    %16 = arith.divf %14, %15 : vector<77x1xf32>
    %cst_12 = arith.constant 9.99999974E-6 : f32
    %17 = vector.broadcast %cst_12 : f32 to vector<77x1xf32>
    %18 = arith.addf %16, %17 : vector<77x1xf32>
    %19 = math.rsqrt %18 : vector<77x1xf32>
    %20 = vector.broadcast %19 : vector<77x1xf32> to vector<77x768xf32>
    %21 = arith.mulf %11, %20 : vector<77x768xf32>
    %22 = vector.broadcast %1 : vector<1x768xf32> to vector<77x768xf32>
    %23 = arith.mulf %21, %22 : vector<77x768xf32>
    %24 = vector.broadcast %2 : vector<1x768xf32> to vector<77x768xf32>
    %25 = arith.addf %23, %24 : vector<77x768xf32>
    %c0_13 = arith.constant 0 : index
    %c0_14 = arith.constant 0 : index
    %c0_15 = arith.constant 0 : index
    %26 = vector.load %arg5[%c0_13, %c0_14, %c0_15] : memref<2x77x768xf32, #tpu.memory_space<vmem>>, vector<1x77x768xf32>
    %27 = vector.shape_cast %26 : vector<1x77x768xf32> to vector<77x768xf32>
    %28 = vector.shape_cast %25 : vector<77x768xf32> to vector<1x77x768xf32>
    tpu.vector_store %arg5[%c0_13, %c0_14, %c0_15], %28 {strides = array<i32>} : memref<2x77x768xf32, #tpu.memory_space<vmem>>, vector<1x77x768xf32>,
    %c1 = arith.constant 1 : index
    %c0_16 = arith.constant 0 : index
    %c0_17 = arith.constant 0 : index
    %29 = vector.load %arg1[%c1, %c0_16, %c0_17] : memref<2x1024x768xbf16, #tpu.memory_space<vmem>>, vector<1x1024x768xbf16>
    %30 = vector.shape_cast %29 : vector<1x1024x768xbf16> to vector<1024x768xbf16>
    %cst_18 = arith.constant dense<0.000000e+00> : vector<77x768xf32>
    %31 = tpu.matmul %0, %30, %cst_18 {dimension_numbers = #tpu.dot_dimension_numbers<[1], [0], [0], [1], [0, 0, 1, 1], [], []>} : vector<77x1024xbf16>, vector<1024x768xbf16>, vector<77x768xf32> -> vector<77x768xf32>
    %cst_19 = arith.constant dense<0.000000e+00> : vector<77xf32>
    %32 = vector.multi_reduction <add>, %31, %cst_19 [1] : vector<77x768xf32> to vector<77xf32>
    %33 = vector.shape_cast %32 : vector<77xf32> to vector<77x1xf32>
    %cst_20 = arith.constant 7.680000e+02 : f32
    %34 = vector.broadcast %cst_20 : f32 to vector<77x1xf32>
    %35 = arith.divf %33, %34 : vector<77x1xf32>
    %36 = vector.broadcast %35 : vector<77x1xf32> to vector<77x768xf32>
    %37 = arith.subf %31, %36 : vector<77x768xf32>
    %38 = arith.mulf %37, %37 : vector<77x768xf32>
    %cst_21 = arith.constant dense<0.000000e+00> : vector<77xf32>
    %39 = vector.multi_reduction <add>, %38, %cst_21 [1] : vector<77x768xf32> to vector<77xf32>
    %40 = vector.shape_cast %39 : vector<77xf32> to vector<77x1xf32>
    %cst_22 = arith.constant 7.680000e+02 : f32
    %41 = vector.broadcast %cst_22 : f32 to vector<77x1xf32>
    %42 = arith.divf %40, %41 : vector<77x1xf32>
    %cst_23 = arith.constant 9.99999974E-6 : f32
    %43 = vector.broadcast %cst_23 : f32 to vector<77x1xf32>
    %44 = arith.addf %42, %43 : vector<77x1xf32>
    %45 = math.rsqrt %44 : vector<77x1xf32>
    %46 = vector.broadcast %45 : vector<77x1xf32> to vector<77x768xf32>
    %47 = arith.mulf %37, %46 : vector<77x768xf32>
    %48 = vector.broadcast %1 : vector<1x768xf32> to vector<77x768xf32>
    %49 = arith.mulf %47, %48 : vector<77x768xf32>
    %50 = vector.broadcast %2 : vector<1x768xf32> to vector<77x768xf32>
    %51 = arith.addf %49, %50 : vector<77x768xf32>
    %c1_24 = arith.constant 1 : index
    %c0_25 = arith.constant 0 : index
    %c0_26 = arith.constant 0 : index
    %52 = vector.load %arg5[%c1_24, %c0_25, %c0_26] : memref<2x77x768xf32, #tpu.memory_space<vmem>>, vector<1x77x768xf32>
    %53 = vector.shape_cast %52 : vector<1x77x768xf32> to vector<77x768xf32>
    %54 = vector.shape_cast %51 : vector<77x768xf32> to vector<1x77x768xf32>
    tpu.vector_store %arg5[%c1_24, %c0_25, %c0_26], %54 {strides = array<i32>} : memref<2x77x768xf32, #tpu.memory_space<vmem>>, vector<1x77x768xf32>,
    return
  }
  func.func @transform_0(%arg0: i32) -> (i32, i32, i32) {
    %c0_i32 = arith.constant 0 : i32
    %c0_i32_0 = arith.constant 0 : i32
    %c0_i32_1 = arith.constant 0 : i32
    return %arg0, %c0_i32, %c0_i32_0 : i32, i32, i32
  }
  func.func @transform_1(%arg0: i32) -> (i32, i32) {
    %c0_i32 = arith.constant 0 : i32
    %c0_i32_0 = arith.constant 0 : i32
    %c0_i32_1 = arith.constant 0 : i32
    return %c0_i32, %c0_i32_0 : i32, i32
  }
  func.func @transform_2(%arg0: i32) -> (i32, i32) {
    %c0_i32 = arith.constant 0 : i32
    %c0_i32_0 = arith.constant 0 : i32
    %c0_i32_1 = arith.constant 0 : i32
    return %c0_i32, %c0_i32_0 : i32, i32
  }
  func.func @transform_3(%arg0: i32) -> (i32, i32) {
    %c0_i32 = arith.constant 0 : i32
    %c0_i32_0 = arith.constant 0 : i32
    %c0_i32_1 = arith.constant 0 : i32
    return %c0_i32, %c0_i32_0 : i32, i32
  }
  func.func @transform_4(%arg0: i32) -> (i32, i32, i32) {
    %c0_i32 = arith.constant 0 : i32
    %c0_i32_0 = arith.constant 0 : i32
    %c0_i32_1 = arith.constant 0 : i32
    return %arg0, %c0_i32, %c0_i32_0 : i32, i32, i32
  }
}

</mosaic_0001>

<llo_original>
// kernel: tpu_custom_call.1
$region0: #{tpu_custom_call.1}
  #allocation0 [shape = 'u32[]', space=smem, size = 0x4, offset = 0x4, fixed_abs, tag = 'smem constant byte address 0x4 - core index']
  #allocation1 [shape = 'u32[144,128]{1,0:T(1,128)}', space=vmem, size = 0x12000, scoped, tag = 'internal scratch']
  %s0 = inlined_call_operand.hbm [shape: bf16[2,1024,768], index: 0, kind: input, shape index: {}]
  %s1 = inlined_call_operand.hbm [shape: bf16[77,1024], index: 1, kind: input, shape index: {}]
  %s2 = inlined_call_operand.hbm [shape: f32[1,768], index: 2, kind: input, shape index: {}]
  %s3 = inlined_call_operand.hbm [shape: f32[1,768], index: 3, kind: input, shape index: {}]
  %s4 = inlined_call_operand.vmem [shape: f32[2,77,768], index: 4, kind: output, shape index: {}]
  %s5 = sld [smem:[#allocation0]]
  $region42: #{tpu_custom_call.1} parent=0
    _
  %s7 = ssub.s32 1, %s5
  %s8 = scalar_select 0, %s7, %s5
  $region1: #{tpu_custom_call.1} parent=0
    #allocation2 [shape = 'u8[3145728]{0}', space=vmem, size = 0x300000, scoped, tag = 'input window, operand 0, single buffered']
    #allocation3 [shape = 's32[1]{0}', space=sflag, size = 0x4, scoped, tag = 'scoped memory for tpu_custom_call.1']
    #allocation4 [shape = 'u8[163840]{0}', space=vmem, size = 0x28000, scoped, tag = 'input window, operand 1, single buffered']
    #allocation5 [shape = 's32[1]{0}', space=sflag, size = 0x4, scoped, tag = 'scoped memory for tpu_custom_call.1']
    #allocation6 [shape = 'u8[3072]{0}', space=vmem, size = 0xc00, scoped, tag = 'input window, operand 2, single buffered']
    #allocation7 [shape = 'u8[3072]{0}', space=vmem, size = 0xc00, scoped, tag = 'input window, operand 3, single buffered']
    #allocation8 [shape = 's32[1]{0}', space=sflag, size = 0x4, scoped, tag = 'scoped memory for tpu_custom_call.1']
    %9 = vsyncpa [#allocation3], 0
    %10 = vsyncpa [#allocation5], 0
    %11 = vsyncpa [#allocation8], 0
    // Predicated region
    $region2: #{tpu_custom_call.1} parent=1 // pred_check
      _
    $region3: #{tpu_custom_call.1} parent=1 // pred_check_branch
      %13 = sbr.rel (0) target = $region5
    $region4: #{tpu_custom_call.1} parent=1 // pred_region
      %s15 = ssub.s32 98304, 98304
      %16 = vsyncadd [#allocation3], %s15
      %s17 = sshll.u32 [#allocation2], 4
      %s18 = int_to_ptr.vmem [resolvable:$true] %s17
      %23 = dma.hbm_to_vmem [thread:$0]  %s0, 98304, %s18, [#allocation3], 384, 384, 24
    $region5: #{tpu_custom_call.1} parent=1 // pred_fallthru
      _
    // Predicated region
    $region6: #{tpu_custom_call.1} parent=1 // pred_check
      _
    $region7: #{tpu_custom_call.1} parent=1 // pred_check_branch
      %25 = sbr.rel (0) target = $region9
    $region8: #{tpu_custom_call.1} parent=1 // pred_region
      %s27 = ssub.s32 5120, 5120
      %28 = vsyncadd [#allocation5], %s27
      %s29 = sshll.u32 [#allocation4], 4
      %s30 = int_to_ptr.vmem [resolvable:$true] %s29
      %35 = dma.hbm_to_vmem [thread:$0]  %s1, 5120, %s30, [#allocation5], 512, 512, 32
    $region9: #{tpu_custom_call.1} parent=1 // pred_fallthru
      _
    // Predicated region
    $region10: #{tpu_custom_call.1} parent=1 // pred_check
      _
    $region11: #{tpu_custom_call.1} parent=1 // pred_check_branch
      %37 = sbr.rel (0) target = $region13
    $region12: #{tpu_custom_call.1} parent=1 // pred_region
      %s39 = ssub.s32 96, 96
      %40 = vsyncadd [#allocation5], %s39
      %s42 = sshll.u32 [#allocation6], 4
      %s43 = int_to_ptr.vmem [resolvable:$true] %s42
      %45 = dma.hbm_to_vmem [thread:$0]  %s2, 96, %s43, [#allocation5]
    $region13: #{tpu_custom_call.1} parent=1 // pred_fallthru
      _
    // Predicated region
    $region14: #{tpu_custom_call.1} parent=1 // pred_check
      _
    $region15: #{tpu_custom_call.1} parent=1 // pred_check_branch
      %47 = sbr.rel (0) target = $region17
    $region16: #{tpu_custom_call.1} parent=1 // pred_region
      %s49 = ssub.s32 96, 96
      %50 = vsyncadd [#allocation8], %s49
      %s52 = sshll.u32 [#allocation7], 4
      %s53 = int_to_ptr.vmem [resolvable:$true] %s52
      %55 = dma.hbm_to_vmem [thread:$0]  %s3, 96, %s53, [#allocation8]
    $region17: #{tpu_custom_call.1} parent=1 // pred_fallthru
      _
    // Predicated region
    $region18: #{tpu_custom_call.1} parent=1 // pred_check
      _
    $region19: #{tpu_custom_call.1} parent=1 // pred_check_branch
      %57 = sbr.rel (0) target = $region21
    $region20: #{tpu_custom_call.1} parent=1 // pred_region
      %58 = dma.done [#allocation3], 98304
    $region21: #{tpu_custom_call.1} parent=1 // pred_fallthru
      _
    // Predicated region
    $region22: #{tpu_custom_call.1} parent=1 // pred_check
      _
    $region23: #{tpu_custom_call.1} parent=1 // pred_check_branch
      %60 = sbr.rel (0) target = $region25
    $region24: #{tpu_custom_call.1} parent=1 // pred_region
      %61 = dma.done [#allocation5], 5120
    $region25: #{tpu_custom_call.1} parent=1 // pred_fallthru
      _
    // Predicated region
    $region26: #{tpu_custom_call.1} parent=1 // pred_check
      _
    $region27: #{tpu_custom_call.1} parent=1 // pred_check_branch
      %63 = sbr.rel (0) target = $region29
    $region28: #{tpu_custom_call.1} parent=1 // pred_region
      %64 = dma.done [#allocation5], 96
    $region29: #{tpu_custom_call.1} parent=1 // pred_fallthru
      _
    // Predicated region
    $region30: #{tpu_custom_call.1} parent=1 // pred_check
      _
    $region31: #{tpu_custom_call.1} parent=1 // pred_check_branch
      %66 = sbr.rel (0) target = $region33
    $region32: #{tpu_custom_call.1} parent=1 // pred_region
      %67 = dma.done [#allocation8], 96
    $region33: #{tpu_custom_call.1} parent=1 // pred_fallthru
      _
    %v68 = vld [vmem:[#allocation4] sm:$0xff]
    %v69 = vld [vmem:[#allocation4 + $0x8] sm:$0xff]
    %v70 = vld [vmem:[#allocation4 + $0x10] sm:$0xff]
    %v71 = vld [vmem:[#allocation4 + $0x18] sm:$0xff]
    %v72 = vld [vmem:[#allocation4 + $0x20] sm:$0xff]
    %v73 = vld [vmem:[#allocation4 + $0x28] sm:$0xff]
    %v74 = vld [vmem:[#allocation4 + $0x30] sm:$0xff]
    %v75 = vld [vmem:[#allocation4 + $0x38] sm:$0xff]
    %v76 = vld [vmem:[#allocation4 + $0x40] sm:$0xff]
    %v77 = vld [vmem:[#allocation4 + $0x48] sm:$0xff]
    %v78 = vld [vmem:[#allocation4 + $0x50] sm:$0xff]
    %v79 = vld [vmem:[#allocation4 + $0x58] sm:$0xff]
    %v80 = vld [vmem:[#allocation4 + $0x60] sm:$0xff]
    %v81 = vld [vmem:[#allocation4 + $0x68] sm:$0xff]
    %v82 = vld [vmem:[#allocation4 + $0x70] sm:$0xff]
    %v83 = vld [vmem:[#allocation4 + $0x78] sm:$0xff]
    %v84 = vld [vmem:[#allocation4 + $0x80] sm:$0xff]
    %v85 = vld [vmem:[#allocation4 + $0x88] sm:$0xff]
    %v86 = vld [vmem:[#allocation4 + $0x90] sm:$0xff]
    %v87 = vld [vmem:[#allocation4 + $0x98] sm:$0xff]
    %v88 = vld [vmem:[#allocation4 + $0xa0] sm:$0xff]
    %v89 = vld [vmem:[#allocation4 + $0xa8] sm:$0xff]
    %v90 = vld [vmem:[#allocation4 + $0xb0] sm:$0xff]
    %v91 = vld [vmem:[#allocation4 + $0xb8] sm:$0xff]
    %v92 = vld [vmem:[#allocation4 + $0xc0] sm:$0xff]
    %v93 = vld [vmem:[#allocation4 + $0xc8] sm:$0xff]
    %v94 = vld [vmem:[#allocation4 + $0xd0] sm:$0xff]
    %v95 = vld [vmem:[#allocation4 + $0xd8] sm:$0xff]
    %v96 = vld [vmem:[#allocation4 + $0xe0] sm:$0xff]
    %v97 = vld [vmem:[#allocation4 + $0xe8] sm:$0xff]
    %v98 = vld [vmem:[#allocation4 + $0xf0] sm:$0xff]
    %v99 = vld [vmem:[#allocation4 + $0xf8] sm:$0xff]
    %v100 = vld [vmem:[#allocation4 + $0x100] sm:$0xff]
    %v101 = vld [vmem:[#allocation4 + $0x108] sm:$0xff]
    %v102 = vld [vmem:[#allocation4 + $0x110] sm:$0xff]
    %v103 = vld [vmem:[#allocation4 + $0x118] sm:$0xff]
    %v104 = vld [vmem:[#allocation4 + $0x120] sm:$0x77]
    %v105 = vld [vmem:[#allocation4 + $0x128] sm:$0x77]
    %v106 = vld [vmem:[#allocation4 + $0x130] sm:$0x77]
    %v107 = vld [vmem:[#allocation4 + $0x138] sm:$0x77]
    %v108 = vld [vmem:[#allocation6] sm:$0x3f]
    %v109 = vld [vmem:[#allocation7] sm:$0x3f]
    %v110 = vld [vmem:[#allocation2] sm:$0xff]
    %v111 = vld [vmem:[#allocation2 + $0x8] sm:$0xff]
    %v112 = vld [vmem:[#allocation2 + $0x10] sm:$0xff]
    %v113 = vld [vmem:[#allocation2 + $0x18] sm:$0xff]
    %v114 = vld [vmem:[#allocation2 + $0x20] sm:$0xff]
    %v115 = vld [vmem:[#allocation2 + $0x28] sm:$0xff]
    %v116 = vld [vmem:[#allocation2 + $0x30] sm:$0xff]
    %v117 = vld [vmem:[#allocation2 + $0x38] sm:$0xff]
    %v118 = vld [vmem:[#allocation2 + $0x40] sm:$0xff]
    %v119 = vld [vmem:[#allocation2 + $0x48] sm:$0xff]
    %v120 = vld [vmem:[#allocation2 + $0x50] sm:$0xff]
    %v121 = vld [vmem:[#allocation2 + $0x58] sm:$0xff]
    %v122 = vld [vmem:[#allocation2 + $0x60] sm:$0xff]
    %v123 = vld [vmem:[#allocation2 + $0x68] sm:$0xff]
    %v124 = vld [vmem:[#allocation2 + $0x70] sm:$0xff]
    %v125 = vld [vmem:[#allocation2 + $0x78] sm:$0xff]
    %v126 = vld [vmem:[#allocation2 + $0x80] sm:$0xff]
    %v127 = vld [vmem:[#allocation2 + $0x88] sm:$0xff]
    %v128 = vld [vmem:[#allocation2 + $0x90] sm:$0xff]
    %v129 = vld [vmem:[#allocation2 + $0x98] sm:$0xff]
    %v130 = vld [vmem:[#allocation2 + $0xa0] sm:$0xff]
    %v131 = vld [vmem:[#allocation2 + $0xa8] sm:$0xff]
    %v132 = vld [vmem:[#allocation2 + $0xb0] sm:$0xff]
    %v133 = vld [vmem:[#allocation2 + $0xb8] sm:$0xff]
    %v134 = vld [vmem:[#allocation2 + $0xc0] sm:$0xff]
    %v135 = vld [vmem:[#allocation2 + $0xc8] sm:$0xff]
    %v136 = vld [vmem:[#allocation2 + $0xd0] sm:$0xff]
    %v137 = vld [vmem:[#allocation2 + $0xd8] sm:$0xff]
    %v138 = vld [vmem:[#allocation2 + $0xe0] sm:$0xff]
    %v139 = vld [vmem:[#allocation2 + $0xe8] sm:$0xff]
    %v140 = vld [vmem:[#allocation2 + $0xf0] sm:$0xff]
    %v141 = vld [vmem:[#allocation2 + $0xf8] sm:$0xff]
    %v142 = vld [vmem:[#allocation2 + $0x100] sm:$0xff]
    %v143 = vld [vmem:[#allocation2 + $0x108] sm:$0xff]
    %v144 = vld [vmem:[#allocation2 + $0x110] sm:$0xff]
    %v145 = vld [vmem:[#allocation2 + $0x118] sm:$0xff]
    %v146 = vld [vmem:[#allocation2 + $0x120] sm:$0xff]
    %v147 = vld [vmem:[#allocation2 + $0x128] sm:$0xff]
    %v148 = vld [vmem:[#allocation2 + $0x130] sm:$0xff]
    %v149 = vld [vmem:[#allocation2 + $0x138] sm:$0xff]
    %v150 = vld [vmem:[#allocation2 + $0x140] sm:$0xff]
    %v151 = vld [vmem:[#allocation2 + $0x148] sm:$0xff]
    %v152 = vld [vmem:[#allocation2 + $0x150] sm:$0xff]
    %v153 = vld [vmem:[#allocation2 + $0x158] sm:$0xff]
    %v154 = vld [vmem:[#allocation2 + $0x160] sm:$0xff]
    %v155 = vld [vmem:[#allocation2 + $0x168] sm:$0xff]
    %v156 = vld [vmem:[#allocation2 + $0x170] sm:$0xff]
    %v157 = vld [vmem:[#allocation2 + $0x178] sm:$0xff]
    %v158 = vld [vmem:[#allocation2 + $0x180] sm:$0xff]
    %v159 = vld [vmem:[#allocation2 + $0x188] sm:$0xff]
    %v160 = vld [vmem:[#allocation2 + $0x190] sm:$0xff]
    %v161 = vld [vmem:[#allocation2 + $0x198] sm:$0xff]
    %v162 = vld [vmem:[#allocation2 + $0x1a0] sm:$0xff]
    %v163 = vld [vmem:[#allocation2 + $0x1a8] sm:$0xff]
    %v164 = vld [vmem:[#allocation2 + $0x1b0] sm:$0xff]
    %v165 = vld [vmem:[#allocation2 + $0x1b8] sm:$0xff]
    %v166 = vld [vmem:[#allocation2 + $0x1c0] sm:$0xff]
    %v167 = vld [vmem:[#allocation2 + $0x1c8] sm:$0xff]
    %v168 = vld [vmem:[#allocation2 + $0x1d0] sm:$0xff]
    %v169 = vld [vmem:[#allocation2 + $0x1d8] sm:$0xff]
    %v170 = vld [vmem:[#allocation2 + $0x1e0] sm:$0xff]
    %v171 = vld [vmem:[#allocation2 + $0x1e8] sm:$0xff]
    %v172 = vld [vmem:[#allocation2 + $0x1f0] sm:$0xff]
    %v173 = vld [vmem:[#allocation2 + $0x1f8] sm:$0xff]
    %v174 = vld [vmem:[#allocation2 + $0x200] sm:$0xff]
    %v175 = vld [vmem:[#allocation2 + $0x208] sm:$0xff]
    %v176 = vld [vmem:[#allocation2 + $0x210] sm:$0xff]
    %v177 = vld [vmem:[#allocation2 + $0x218] sm:$0xff]
    %v178 = vld [vmem:[#allocation2 + $0x220] sm:$0xff]
    %v179 = vld [vmem:[#allocation2 + $0x228] sm:$0xff]
    %v180 = vld [vmem:[#allocation2 + $0x230] sm:$0xff]
    %v181 = vld [vmem:[#allocation2 + $0x238] sm:$0xff]
    %v182 = vld [vmem:[#allocation2 + $0x240] sm:$0xff]
    %v183 = vld [vmem:[#allocation2 + $0x248] sm:$0xff]
    %v184 = vld [vmem:[#allocation2 + $0x250] sm:$0xff]
    %v185 = vld [vmem:[#allocation2 + $0x258] sm:$0xff]
    %v186 = vld [vmem:[#allocation2 + $0x260] sm:$0xff]
    %v187 = vld [vmem:[#allocation2 + $0x268] sm:$0xff]
    %v188 = vld [vmem:[#allocation2 + $0x270] sm:$0xff]
    %v189 = vld [vmem:[#allocation2 + $0x278] sm:$0xff]
    %v190 = vld [vmem:[#allocation2 + $0x280] sm:$0xff]
    %v191 = vld [vmem:[#allocation2 + $0x288] sm:$0xff]
    %v192 = vld [vmem:[#allocation2 + $0x290] sm:$0xff]
    %v193 = vld [vmem:[#allocation2 + $0x298] sm:$0xff]
    %v194 = vld [vmem:[#allocation2 + $0x2a0] sm:$0xff]
    %v195 = vld [vmem:[#allocation2 + $0x2a8] sm:$0xff]
    %v196 = vld [vmem:[#allocation2 + $0x2b0] sm:$0xff]
    %v197 = vld [vmem:[#allocation2 + $0x2b8] sm:$0xff]
    %v198 = vld [vmem:[#allocation2 + $0x2c0] sm:$0xff]
    %v199 = vld [vmem:[#allocation2 + $0x2c8] sm:$0xff]
    %v200 = vld [vmem:[#allocation2 + $0x2d0] sm:$0xff]
    %v201 = vld [vmem:[#allocation2 + $0x2d8] sm:$0xff]
    %v202 = vld [vmem:[#allocation2 + $0x2e0] sm:$0xff]
    %v203 = vld [vmem:[#allocation2 + $0x2e8] sm:$0xff]
    %v204 = vld [vmem:[#allocation2 + $0x2f0] sm:$0xff]
    %v205 = vld [vmem:[#allocation2 + $0x2f8] sm:$0xff]
    %v206 = vld [vmem:[#allocation2 + $0x300] sm:$0xff]
    %v207 = vld [vmem:[#allocation2 + $0x308] sm:$0xff]
    %v208 = vld [vmem:[#allocation2 + $0x310] sm:$0xff]
    %v209 = vld [vmem:[#allocation2 + $0x318] sm:$0xff]
    %v210 = vld [vmem:[#allocation2 + $0x320] sm:$0xff]
    %v211 = vld [vmem:[#allocation2 + $0x328] sm:$0xff]
    %v212 = vld [vmem:[#allocation2 + $0x330] sm:$0xff]
    %v213 = vld [vmem:[#allocation2 + $0x338] sm:$0xff]
    %v214 = vld [vmem:[#allocation2 + $0x340] sm:$0xff]
    %v215 = vld [vmem:[#allocation2 + $0x348] sm:$0xff]
    %v216 = vld [vmem:[#allocation2 + $0x350] sm:$0xff]
    %v217 = vld [vmem:[#allocation2 + $0x358] sm:$0xff]
    %v218 = vld [vmem:[#allocation2 + $0x360] sm:$0xff]
    %v219 = vld [vmem:[#allocation2 + $0x368] sm:$0xff]
    %v220 = vld [vmem:[#allocation2 + $0x370] sm:$0xff]
    %v221 = vld [vmem:[#allocation2 + $0x378] sm:$0xff]
    %v222 = vld [vmem:[#allocation2 + $0x380] sm:$0xff]
    %v223 = vld [vmem:[#allocation2 + $0x388] sm:$0xff]
    %v224 = vld [vmem:[#allocation2 + $0x390] sm:$0xff]
    %v225 = vld [vmem:[#allocation2 + $0x398] sm:$0xff]
    %v226 = vld [vmem:[#allocation2 + $0x3a0] sm:$0xff]
    %v227 = vld [vmem:[#allocation2 + $0x3a8] sm:$0xff]
    %v228 = vld [vmem:[#allocation2 + $0x3b0] sm:$0xff]
    %v229 = vld [vmem:[#allocation2 + $0x3b8] sm:$0xff]
    %v230 = vld [vmem:[#allocation2 + $0x3c0] sm:$0xff]
    %v231 = vld [vmem:[#allocation2 + $0x3c8] sm:$0xff]
    %v232 = vld [vmem:[#allocation2 + $0x3d0] sm:$0xff]
    %v233 = vld [vmem:[#allocation2 + $0x3d8] sm:$0xff]
    %v234 = vld [vmem:[#allocation2 + $0x3e0] sm:$0xff]
    %v235 = vld [vmem:[#allocation2 + $0x3e8] sm:$0xff]
    %v236 = vld [vmem:[#allocation2 + $0x3f0] sm:$0xff]
    %v237 = vld [vmem:[#allocation2 + $0x3f8] sm:$0xff]
    %v238 = vld [vmem:[#allocation2 + $0x400] sm:$0xff]
    %v239 = vld [vmem:[#allocation2 + $0x408] sm:$0xff]
    %v240 = vld [vmem:[#allocation2 + $0x410] sm:$0xff]
    %v241 = vld [vmem:[#allocation2 + $0x418] sm:$0xff]
    %v242 = vld [vmem:[#allocation2 + $0x420] sm:$0xff]
    %v243 = vld [vmem:[#allocation2 + $0x428] sm:$0xff]
    %v244 = vld [vmem:[#allocation2 + $0x430] sm:$0xff]
    %v245 = vld [vmem:[#allocation2 + $0x438] sm:$0xff]
    %v246 = vld [vmem:[#allocation2 + $0x440] sm:$0xff]
    %v247 = vld [vmem:[#allocation2 + $0x448] sm:$0xff]
    %v248 = vld [vmem:[#allocation2 + $0x450] sm:$0xff]
    %v249 = vld [vmem:[#allocation2 + $0x458] sm:$0xff]
    %v250 = vld [vmem:[#allocation2 + $0x460] sm:$0xff]
    %v251 = vld [vmem:[#allocation2 + $0x468] sm:$0xff]
    %v252 = vld [vmem:[#allocation2 + $0x470] sm:$0xff]
    %v253 = vld [vmem:[#allocation2 + $0x478] sm:$0xff]
    %v254 = vld [vmem:[#allocation2 + $0x480] sm:$0xff]
    %v255 = vld [vmem:[#allocation2 + $0x488] sm:$0xff]
    %v256 = vld [vmem:[#allocation2 + $0x490] sm:$0xff]
    %v257 = vld [vmem:[#allocation2 + $0x498] sm:$0xff]
    %v258 = vld [vmem:[#allocation2 + $0x4a0] sm:$0xff]
    %v259 = vld [vmem:[#allocation2 + $0x4a8] sm:$0xff]
    %v260 = vld [vmem:[#allocation2 + $0x4b0] sm:$0xff]
    %v261 = vld [vmem:[#allocation2 + $0x4b8] sm:$0xff]
    %v262 = vld [vmem:[#allocation2 + $0x4c0] sm:$0xff]
    %v263 = vld [vmem:[#allocation2 + $0x4c8] sm:$0xff]
    %v264 = vld [vmem:[#allocation2 + $0x4d0] sm:$0xff]
    %v265 = vld [vmem:[#allocation2 + $0x4d8] sm:$0xff]
    %v266 = vld [vmem:[#allocation2 + $0x4e0] sm:$0xff]
    %v267 = vld [vmem:[#allocation2 + $0x4e8] sm:$0xff]
    %v268 = vld [vmem:[#allocation2 + $0x4f0] sm:$0xff]
    %v269 = vld [vmem:[#allocation2 + $0x4f8] sm:$0xff]
    %v270 = vld [vmem:[#allocation2 + $0x500] sm:$0xff]
    %v271 = vld [vmem:[#allocation2 + $0x508] sm:$0xff]
    %v272 = vld [vmem:[#allocation2 + $0x510] sm:$0xff]
    %v273 = vld [vmem:[#allocation2 + $0x518] sm:$0xff]
    %v274 = vld [vmem:[#allocation2 + $0x520] sm:$0xff]
    %v275 = vld [vmem:[#allocation2 + $0x528] sm:$0xff]
    %v276 = vld [vmem:[#allocation2 + $0x530] sm:$0xff]
    %v277 = vld [vmem:[#allocation2 + $0x538] sm:$0xff]
    %v278 = vld [vmem:[#allocation2 + $0x540] sm:$0xff]
    %v279 = vld [vmem:[#allocation2 + $0x548] sm:$0xff]
    %v280 = vld [vmem:[#allocation2 + $0x550] sm:$0xff]
    %v281 = vld [vmem:[#allocation2 + $0x558] sm:$0xff]
    %v282 = vld [vmem:[#allocation2 + $0x560] sm:$0xff]
    %v283 = vld [vmem:[#allocation2 + $0x568] sm:$0xff]
    %v284 = vld [vmem:[#allocation2 + $0x570] sm:$0xff]
    %v285 = vld [vmem:[#allocation2 + $0x578] sm:$0xff]
    %v286 = vld [vmem:[#allocation2 + $0x580] sm:$0xff]
    %v287 = vld [vmem:[#allocation2 + $0x588] sm:$0xff]
    %v288 = vld [vmem:[#allocation2 + $0x590] sm:$0xff]
    %v289 = vld [vmem:[#allocation2 + $0x598] sm:$0xff]
    %v290 = vld [vmem:[#allocation2 + $0x5a0] sm:$0xff]
    %v291 = vld [vmem:[#allocation2 + $0x5a8] sm:$0xff]
    %v292 = vld [vmem:[#allocation2 + $0x5b0] sm:$0xff]
    %v293 = vld [vmem:[#allocation2 + $0x5b8] sm:$0xff]
    %v294 = vld [vmem:[#allocation2 + $0x5c0] sm:$0xff]
    %v295 = vld [vmem:[#allocation2 + $0x5c8] sm:$0xff]
    %v296 = vld [vmem:[#allocation2 + $0x5d0] sm:$0xff]
    %v297 = vld [vmem:[#allocation2 + $0x5d8] sm:$0xff]
    %v298 = vld [vmem:[#allocation2 + $0x5e0] sm:$0xff]
    %v299 = vld [vmem:[#allocation2 + $0x5e8] sm:$0xff]
    %v300 = vld [vmem:[#allocation2 + $0x5f0] sm:$0xff]
    %v301 = vld [vmem:[#allocation2 + $0x5f8] sm:$0xff]
    %v302 = vld [vmem:[#allocation2 + $0x600] sm:$0xff]
    %v303 = vld [vmem:[#allocation2 + $0x608] sm:$0xff]
    %v304 = vld [vmem:[#allocation2 + $0x610] sm:$0xff]
    %v305 = vld [vmem:[#allocation2 + $0x618] sm:$0xff]
    %v306 = vld [vmem:[#allocation2 + $0x620] sm:$0xff]
    %v307 = vld [vmem:[#allocation2 + $0x628] sm:$0xff]
    %v308 = vld [vmem:[#allocation2 + $0x630] sm:$0xff]
    %v309 = vld [vmem:[#allocation2 + $0x638] sm:$0xff]
    %v310 = vld [vmem:[#allocation2 + $0x640] sm:$0xff]
    %v311 = vld [vmem:[#allocation2 + $0x648] sm:$0xff]
    %v312 = vld [vmem:[#allocation2 + $0x650] sm:$0xff]
    %v313 = vld [vmem:[#allocation2 + $0x658] sm:$0xff]
    %v314 = vld [vmem:[#allocation2 + $0x660] sm:$0xff]
    %v315 = vld [vmem:[#allocation2 + $0x668] sm:$0xff]
    %v316 = vld [vmem:[#allocation2 + $0x670] sm:$0xff]
    %v317 = vld [vmem:[#allocation2 + $0x678] sm:$0xff]
    %v318 = vld [vmem:[#allocation2 + $0x680] sm:$0xff]
    %v319 = vld [vmem:[#allocation2 + $0x688] sm:$0xff]
    %v320 = vld [vmem:[#allocation2 + $0x690] sm:$0xff]
    %v321 = vld [vmem:[#allocation2 + $0x698] sm:$0xff]
    %v322 = vld [vmem:[#allocation2 + $0x6a0] sm:$0xff]
    %v323 = vld [vmem:[#allocation2 + $0x6a8] sm:$0xff]
    %v324 = vld [vmem:[#allocation2 + $0x6b0] sm:$0xff]
    %v325 = vld [vmem:[#allocation2 + $0x6b8] sm:$0xff]
    %v326 = vld [vmem:[#allocation2 + $0x6c0] sm:$0xff]
    %v327 = vld [vmem:[#allocation2 + $0x6c8] sm:$0xff]
    %v328 = vld [vmem:[#allocation2 + $0x6d0] sm:$0xff]
    %v329 = vld [vmem:[#allocation2 + $0x6d8] sm:$0xff]
    %v330 = vld [vmem:[#allocation2 + $0x6e0] sm:$0xff]
    %v331 = vld [vmem:[#allocation2 + $0x6e8] sm:$0xff]
    %v332 = vld [vmem:[#allocation2 + $0x6f0] sm:$0xff]
    %v333 = vld [vmem:[#allocation2 + $0x6f8] sm:$0xff]
    %v334 = vld [vmem:[#allocation2 + $0x700] sm:$0xff]
    %v335 = vld [vmem:[#allocation2 + $0x708] sm:$0xff]
    %v336 = vld [vmem:[#allocation2 + $0x710] sm:$0xff]
    %v337 = vld [vmem:[#allocation2 + $0x718] sm:$0xff]
    %v338 = vld [vmem:[#allocation2 + $0x720] sm:$0xff]
    %v339 = vld [vmem:[#allocation2 + $0x728] sm:$0xff]
    %v340 = vld [vmem:[#allocation2 + $0x730] sm:$0xff]
    %v341 = vld [vmem:[#allocation2 + $0x738] sm:$0xff]
    %v342 = vld [vmem:[#allocation2 + $0x740] sm:$0xff]
    %v343 = vld [vmem:[#allocation2 + $0x748] sm:$0xff]
    %v344 = vld [vmem:[#allocation2 + $0x750] sm:$0xff]
    %v345 = vld [vmem:[#allocation2 + $0x758] sm:$0xff]
    %v346 = vld [vmem:[#allocation2 + $0x760] sm:$0xff]
    %v347 = vld [vmem:[#allocation2 + $0x768] sm:$0xff]
    %v348 = vld [vmem:[#allocation2 + $0x770] sm:$0xff]
    %v349 = vld [vmem:[#allocation2 + $0x778] sm:$0xff]
    %v350 = vld [vmem:[#allocation2 + $0x780] sm:$0xff]
    %v351 = vld [vmem:[#allocation2 + $0x788] sm:$0xff]
    %v352 = vld [vmem:[#allocation2 + $0x790] sm:$0xff]
    %v353 = vld [vmem:[#allocation2 + $0x798] sm:$0xff]
    %v354 = vld [vmem:[#allocation2 + $0x7a0] sm:$0xff]
    %v355 = vld [vmem:[#allocation2 + $0x7a8] sm:$0xff]
    %v356 = vld [vmem:[#allocation2 + $0x7b0] sm:$0xff]
    %v357 = vld [vmem:[#allocation2 + $0x7b8] sm:$0xff]
    %v358 = vld [vmem:[#allocation2 + $0x7c0] sm:$0xff]
    %v359 = vld [vmem:[#allocation2 + $0x7c8] sm:$0xff]
    %v360 = vld [vmem:[#allocation2 + $0x7d0] sm:$0xff]
    %v361 = vld [vmem:[#allocation2 + $0x7d8] sm:$0xff]
    %v362 = vld [vmem:[#allocation2 + $0x7e0] sm:$0xff]
    %v363 = vld [vmem:[#allocation2 + $0x7e8] sm:$0xff]
    %v364 = vld [vmem:[#allocation2 + $0x7f0] sm:$0xff]
    %v365 = vld [vmem:[#allocation2 + $0x7f8] sm:$0xff]
    %v366 = vld [vmem:[#allocation2 + $0x800] sm:$0xff]
    %v367 = vld [vmem:[#allocation2 + $0x808] sm:$0xff]
    %v368 = vld [vmem:[#allocation2 + $0x810] sm:$0xff]
    %v369 = vld [vmem:[#allocation2 + $0x818] sm:$0xff]
    %v370 = vld [vmem:[#allocation2 + $0x820] sm:$0xff]
    %v371 = vld [vmem:[#allocation2 + $0x828] sm:$0xff]
    %v372 = vld [vmem:[#allocation2 + $0x830] sm:$0xff]
    %v373 = vld [vmem:[#allocation2 + $0x838] sm:$0xff]
    %v374 = vld [vmem:[#allocation2 + $0x840] sm:$0xff]
    %v375 = vld [vmem:[#allocation2 + $0x848] sm:$0xff]
    %v376 = vld [vmem:[#allocation2 + $0x850] sm:$0xff]
    %v377 = vld [vmem:[#allocation2 + $0x858] sm:$0xff]
    %v378 = vld [vmem:[#allocation2 + $0x860] sm:$0xff]
    %v379 = vld [vmem:[#allocation2 + $0x868] sm:$0xff]
    %v380 = vld [vmem:[#allocation2 + $0x870] sm:$0xff]
    %v381 = vld [vmem:[#allocation2 + $0x878] sm:$0xff]
    %v382 = vld [vmem:[#allocation2 + $0x880] sm:$0xff]
    %v383 = vld [vmem:[#allocation2 + $0x888] sm:$0xff]
    %v384 = vld [vmem:[#allocation2 + $0x890] sm:$0xff]
    %v385 = vld [vmem:[#allocation2 + $0x898] sm:$0xff]
    %v386 = vld [vmem:[#allocation2 + $0x8a0] sm:$0xff]
    %v387 = vld [vmem:[#allocation2 + $0x8a8] sm:$0xff]
    %v388 = vld [vmem:[#allocation2 + $0x8b0] sm:$0xff]
    %v389 = vld [vmem:[#allocation2 + $0x8b8] sm:$0xff]
    %v390 = vld [vmem:[#allocation2 + $0x8c0] sm:$0xff]
    %v391 = vld [vmem:[#allocation2 + $0x8c8] sm:$0xff]
    %v392 = vld [vmem:[#allocation2 + $0x8d0] sm:$0xff]
    %v393 = vld [vmem:[#allocation2 + $0x8d8] sm:$0xff]
    %v394 = vld [vmem:[#allocation2 + $0x8e0] sm:$0xff]
    %v395 = vld [vmem:[#allocation2 + $0x8e8] sm:$0xff]
    %v396 = vld [vmem:[#allocation2 + $0x8f0] sm:$0xff]
    %v397 = vld [vmem:[#allocation2 + $0x8f8] sm:$0xff]
    %v398 = vld [vmem:[#allocation2 + $0x900] sm:$0xff]
    %v399 = vld [vmem:[#allocation2 + $0x908] sm:$0xff]
    %v400 = vld [vmem:[#allocation2 + $0x910] sm:$0xff]
    %v401 = vld [vmem:[#allocation2 + $0x918] sm:$0xff]
    %v402 = vld [vmem:[#allocation2 + $0x920] sm:$0xff]
    %v403 = vld [vmem:[#allocation2 + $0x928] sm:$0xff]
    %v404 = vld [vmem:[#allocation2 + $0x930] sm:$0xff]
    %v405 = vld [vmem:[#allocation2 + $0x938] sm:$0xff]
    %v406 = vld [vmem:[#allocation2 + $0x940] sm:$0xff]
    %v407 = vld [vmem:[#allocation2 + $0x948] sm:$0xff]
    %v408 = vld [vmem:[#allocation2 + $0x950] sm:$0xff]
    %v409 = vld [vmem:[#allocation2 + $0x958] sm:$0xff]
    %v410 = vld [vmem:[#allocation2 + $0x960] sm:$0xff]
    %v411 = vld [vmem:[#allocation2 + $0x968] sm:$0xff]
    %v412 = vld [vmem:[#allocation2 + $0x970] sm:$0xff]
    %v413 = vld [vmem:[#allocation2 + $0x978] sm:$0xff]
    %v414 = vld [vmem:[#allocation2 + $0x980] sm:$0xff]
    %v415 = vld [vmem:[#allocation2 + $0x988] sm:$0xff]
    %v416 = vld [vmem:[#allocation2 + $0x990] sm:$0xff]
    %v417 = vld [vmem:[#allocation2 + $0x998] sm:$0xff]
    %v418 = vld [vmem:[#allocation2 + $0x9a0] sm:$0xff]
    %v419 = vld [vmem:[#allocation2 + $0x9a8] sm:$0xff]
    %v420 = vld [vmem:[#allocation2 + $0x9b0] sm:$0xff]
    %v421 = vld [vmem:[#allocation2 + $0x9b8] sm:$0xff]
    %v422 = vld [vmem:[#allocation2 + $0x9c0] sm:$0xff]
    %v423 = vld [vmem:[#allocation2 + $0x9c8] sm:$0xff]
    %v424 = vld [vmem:[#allocation2 + $0x9d0] sm:$0xff]
    %v425 = vld [vmem:[#allocation2 + $0x9d8] sm:$0xff]
    %v426 = vld [vmem:[#allocation2 + $0x9e0] sm:$0xff]
    %v427 = vld [vmem:[#allocation2 + $0x9e8] sm:$0xff]
    %v428 = vld [vmem:[#allocation2 + $0x9f0] sm:$0xff]
    %v429 = vld [vmem:[#allocation2 + $0x9f8] sm:$0xff]
    %v430 = vld [vmem:[#allocation2 + $0xa00] sm:$0xff]
    %v431 = vld [vmem:[#allocation2 + $0xa08] sm:$0xff]
    %v432 = vld [vmem:[#allocation2 + $0xa10] sm:$0xff]
    %v433 = vld [vmem:[#allocation2 + $0xa18] sm:$0xff]
    %v434 = vld [vmem:[#allocation2 + $0xa20] sm:$0xff]
    %v435 = vld [vmem:[#allocation2 + $0xa28] sm:$0xff]
    %v436 = vld [vmem:[#allocation2 + $0xa30] sm:$0xff]
    %v437 = vld [vmem:[#allocation2 + $0xa38] sm:$0xff]
    %v438 = vld [vmem:[#allocation2 + $0xa40] sm:$0xff]
    %v439 = vld [vmem:[#allocation2 + $0xa48] sm:$0xff]
    %v440 = vld [vmem:[#allocation2 + $0xa50] sm:$0xff]
    %v441 = vld [vmem:[#allocation2 + $0xa58] sm:$0xff]
    %v442 = vld [vmem:[#allocation2 + $0xa60] sm:$0xff]
    %v443 = vld [vmem:[#allocation2 + $0xa68] sm:$0xff]
    %v444 = vld [vmem:[#allocation2 + $0xa70] sm:$0xff]
    %v445 = vld [vmem:[#allocation2 + $0xa78] sm:$0xff]
    %v446 = vld [vmem:[#allocation2 + $0xa80] sm:$0xff]
    %v447 = vld [vmem:[#allocation2 + $0xa88] sm:$0xff]
    %v448 = vld [vmem:[#allocation2 + $0xa90] sm:$0xff]
    %v449 = vld [vmem:[#allocation2 + $0xa98] sm:$0xff]
    %v450 = vld [vmem:[#allocation2 + $0xaa0] sm:$0xff]
    %v451 = vld [vmem:[#allocation2 + $0xaa8] sm:$0xff]
    %v452 = vld [vmem:[#allocation2 + $0xab0] sm:$0xff]
    %v453 = vld [vmem:[#allocation2 + $0xab8] sm:$0xff]
    %v454 = vld [vmem:[#allocation2 + $0xac0] sm:$0xff]
    %v455 = vld [vmem:[#allocation2 + $0xac8] sm:$0xff]
    %v456 = vld [vmem:[#allocation2 + $0xad0] sm:$0xff]
    %v457 = vld [vmem:[#allocation2 + $0xad8] sm:$0xff]
    %v458 = vld [vmem:[#allocation2 + $0xae0] sm:$0xff]
    %v459 = vld [vmem:[#allocation2 + $0xae8] sm:$0xff]
    %v460 = vld [vmem:[#allocation2 + $0xaf0] sm:$0xff]
    %v461 = vld [vmem:[#allocation2 + $0xaf8] sm:$0xff]
    %v462 = vld [vmem:[#allocation2 + $0xb00] sm:$0xff]
    %v463 = vld [vmem:[#allocation2 + $0xb08] sm:$0xff]
    %v464 = vld [vmem:[#allocation2 + $0xb10] sm:$0xff]
    %v465 = vld [vmem:[#allocation2 + $0xb18] sm:$0xff]
    %v466 = vld [vmem:[#allocation2 + $0xb20] sm:$0xff]
    %v467 = vld [vmem:[#allocation2 + $0xb28] sm:$0xff]
    %v468 = vld [vmem:[#allocation2 + $0xb30] sm:$0xff]
    %v469 = vld [vmem:[#allocation2 + $0xb38] sm:$0xff]
    %v470 = vld [vmem:[#allocation2 + $0xb40] sm:$0xff]
    %v471 = vld [vmem:[#allocation2 + $0xb48] sm:$0xff]
    %v472 = vld [vmem:[#allocation2 + $0xb50] sm:$0xff]
    %v473 = vld [vmem:[#allocation2 + $0xb58] sm:$0xff]
    %v474 = vld [vmem:[#allocation2 + $0xb60] sm:$0xff]
    %v475 = vld [vmem:[#allocation2 + $0xb68] sm:$0xff]
    %v476 = vld [vmem:[#allocation2 + $0xb70] sm:$0xff]
    %v477 = vld [vmem:[#allocation2 + $0xb78] sm:$0xff]
    %v478 = vld [vmem:[#allocation2 + $0xb80] sm:$0xff]
    %v479 = vld [vmem:[#allocation2 + $0xb88] sm:$0xff]
    %v480 = vld [vmem:[#allocation2 + $0xb90] sm:$0xff]
    %v481 = vld [vmem:[#allocation2 + $0xb98] sm:$0xff]
    %v482 = vld [vmem:[#allocation2 + $0xba0] sm:$0xff]
    %v483 = vld [vmem:[#allocation2 + $0xba8] sm:$0xff]
    %v484 = vld [vmem:[#allocation2 + $0xbb0] sm:$0xff]
    %v485 = vld [vmem:[#allocation2 + $0xbb8] sm:$0xff]
    %v486 = vld [vmem:[#allocation2 + $0xbc0] sm:$0xff]
    %v487 = vld [vmem:[#allocation2 + $0xbc8] sm:$0xff]
    %v488 = vld [vmem:[#allocation2 + $0xbd0] sm:$0xff]
    %v489 = vld [vmem:[#allocation2 + $0xbd8] sm:$0xff]
    %v490 = vld [vmem:[#allocation2 + $0xbe0] sm:$0xff]
    %v491 = vld [vmem:[#allocation2 + $0xbe8] sm:$0xff]
    %v492 = vld [vmem:[#allocation2 + $0xbf0] sm:$0xff]
    %v493 = vld [vmem:[#allocation2 + $0xbf8] sm:$0xff]
    %v534 = vunpack.c.l.b16 %v68
    %v535 = vunpack.c.h.b16 %v68
    %v536 = vunpack.c.l.b16 %v69
    %v537 = vunpack.c.h.b16 %v69
    %v538 = vunpack.c.l.b16 %v70
    %v539 = vunpack.c.h.b16 %v70
    %v540 = vunpack.c.l.b16 %v71
    %v541 = vunpack.c.h.b16 %v71
    %v542 = vunpack.c.l.b16 %v72
    %v543 = vunpack.c.h.b16 %v72
    %v544 = vunpack.c.l.b16 %v73
    %v545 = vunpack.c.h.b16 %v73
    %v546 = vunpack.c.l.b16 %v74
    %v547 = vunpack.c.h.b16 %v74
    %v548 = vunpack.c.l.b16 %v75
    %v549 = vunpack.c.h.b16 %v75
    %v550 = vunpack.c.l.b16 %v76
    %v551 = vunpack.c.h.b16 %v76
    %v552 = vunpack.c.l.b16 %v77
    %v553 = vunpack.c.h.b16 %v77
    %v554 = vunpack.c.l.b16 %v78
    %v555 = vunpack.c.h.b16 %v78
    %v556 = vunpack.c.l.b16 %v79
    %v557 = vunpack.c.h.b16 %v79
    %v558 = vunpack.c.l.b16 %v80
    %v559 = vunpack.c.h.b16 %v80
    %v560 = vunpack.c.l.b16 %v81
    %v561 = vunpack.c.h.b16 %v81
    %v562 = vunpack.c.l.b16 %v82
    %v563 = vunpack.c.h.b16 %v82
    %v564 = vunpack.c.l.b16 %v83
    %v565 = vunpack.c.h.b16 %v83
    %v566 = vunpack.c.l.b16 %v84
    %v567 = vunpack.c.h.b16 %v84
    %v568 = vunpack.c.l.b16 %v85
    %v569 = vunpack.c.h.b16 %v85
    %v570 = vunpack.c.l.b16 %v86
    %v571 = vunpack.c.h.b16 %v86
    %v572 = vunpack.c.l.b16 %v87
    %v573 = vunpack.c.h.b16 %v87
    %v574 = vunpack.c.l.b16 %v88
    %v575 = vunpack.c.h.b16 %v88
    %v576 = vunpack.c.l.b16 %v89
    %v577 = vunpack.c.h.b16 %v89
    %v578 = vunpack.c.l.b16 %v90
    %v579 = vunpack.c.h.b16 %v90
    %v580 = vunpack.c.l.b16 %v91
    %v581 = vunpack.c.h.b16 %v91
    %v582 = vunpack.c.l.b16 %v92
    %v583 = vunpack.c.h.b16 %v92
    %v584 = vunpack.c.l.b16 %v93
    %v585 = vunpack.c.h.b16 %v93
    %v586 = vunpack.c.l.b16 %v94
    %v587 = vunpack.c.h.b16 %v94
    %v588 = vunpack.c.l.b16 %v95
    %v589 = vunpack.c.h.b16 %v95
    %v590 = vunpack.c.l.b16 %v96
    %v591 = vunpack.c.h.b16 %v96
    %v592 = vunpack.c.l.b16 %v97
    %v593 = vunpack.c.h.b16 %v97
    %v594 = vunpack.c.l.b16 %v98
    %v595 = vunpack.c.h.b16 %v98
    %v596 = vunpack.c.l.b16 %v99
    %v597 = vunpack.c.h.b16 %v99
    %v598 = vunpack.c.l.b16 %v100
    %v599 = vunpack.c.h.b16 %v100
    %v600 = vunpack.c.l.b16 %v101
    %v601 = vunpack.c.h.b16 %v101
    %v602 = vunpack.c.l.b16 %v102
    %v603 = vunpack.c.h.b16 %v102
    %v604 = vunpack.c.l.b16 %v103
    %v605 = vunpack.c.h.b16 %v103
    %v606 = vunpack.c.l.b16 %v104
    %v607 = vunpack.c.h.b16 %v104
    %v608 = vunpack.c.l.b16 %v105
    %v609 = vunpack.c.h.b16 %v105
    %v610 = vunpack.c.l.b16 %v106
    %v611 = vunpack.c.h.b16 %v106
    %v612 = vunpack.c.l.b16 %v107
    %v613 = vunpack.c.h.b16 %v107
    %v614 = vpack.c.b16 %v542, %v534
    %v615 = vpack.c.b16 %v543, %v535
    %v616 = vpack.c.b16 %v544, %v536
    %v617 = vpack.c.b16 %v545, %v537
    %v618 = vpack.c.b16 %v546, %v538
    %v619 = vpack.c.b16 %v547, %v539
    %v620 = vpack.c.b16 %v548, %v540
    %v621 = vpack.c.b16 %v549, %v541
    %v622 = vpack.c.b16 %v558, %v550
    %v623 = vpack.c.b16 %v559, %v551
    %v624 = vpack.c.b16 %v560, %v552
    %v625 = vpack.c.b16 %v561, %v553
    %v626 = vpack.c.b16 %v562, %v554
    %v627 = vpack.c.b16 %v563, %v555
    %v628 = vpack.c.b16 %v564, %v556
    %v629 = vpack.c.b16 %v565, %v557
    %v630 = vpack.c.b16 %v574, %v566
    %v631 = vpack.c.b16 %v575, %v567
    %v632 = vpack.c.b16 %v576, %v568
    %v633 = vpack.c.b16 %v577, %v569
    %v634 = vpack.c.b16 %v578, %v570
    %v635 = vpack.c.b16 %v579, %v571
    %v636 = vpack.c.b16 %v580, %v572
    %v637 = vpack.c.b16 %v581, %v573
    %v638 = vpack.c.b16 %v590, %v582
    %v639 = vpack.c.b16 %v591, %v583
    %v640 = vpack.c.b16 %v592, %v584
    %v641 = vpack.c.b16 %v593, %v585
    %v642 = vpack.c.b16 %v594, %v586
    %v643 = vpack.c.b16 %v595, %v587
    %v644 = vpack.c.b16 %v596, %v588
    %v645 = vpack.c.b16 %v597, %v589
    %v646 = vpack.c.b16 %v606, %v598
    %v647 = vpack.c.b16 %v607, %v599
    %v648 = vpack.c.b16 %v608, %v600
    %v649 = vpack.c.b16 %v609, %v601
    %v650 = vpack.c.b16 %v610, %v602
    %v651 = vpack.c.b16 %v611, %v603
    %v652 = vpack.c.b16 %v612, %v604
    %v653 = vpack.c.b16 %v613, %v605
    %v1078 = vunpack.c.l.b16 %v110
    %v1079 = vunpack.c.h.b16 %v110
    %v1080 = vunpack.c.l.b16 %v111
    %v1081 = vunpack.c.h.b16 %v111
    %v1082 = vunpack.c.l.b16 %v112
    %v1083 = vunpack.c.h.b16 %v112
    %v1084 = vunpack.c.l.b16 %v113
    %v1085 = vunpack.c.h.b16 %v113
    %v1086 = vunpack.c.l.b16 %v114
    %v1087 = vunpack.c.h.b16 %v114
    %v1088 = vunpack.c.l.b16 %v115
    %v1089 = vunpack.c.h.b16 %v115
    %v1090 = vunpack.c.l.b16 %v116
    %v1091 = vunpack.c.h.b16 %v116
    %v1092 = vunpack.c.l.b16 %v117
    %v1093 = vunpack.c.h.b16 %v117
    %v1094 = vunpack.c.l.b16 %v118
    %v1095 = vunpack.c.h.b16 %v118
    %v1096 = vunpack.c.l.b16 %v119
    %v1097 = vunpack.c.h.b16 %v119
    %v1098 = vunpack.c.l.b16 %v120
    %v1099 = vunpack.c.h.b16 %v120
    %v1100 = vunpack.c.l.b16 %v121
    %v1101 = vunpack.c.h.b16 %v121
    %v1102 = vunpack.c.l.b16 %v122
    %v1103 = vunpack.c.h.b16 %v122
    %v1104 = vunpack.c.l.b16 %v123
    %v1105 = vunpack.c.h.b16 %v123
    %v1106 = vunpack.c.l.b16 %v124
    %v1107 = vunpack.c.h.b16 %v124
    %v1108 = vunpack.c.l.b16 %v125
    %v1109 = vunpack.c.h.b16 %v125
    %v1110 = vunpack.c.l.b16 %v126
    %v1111 = vunpack.c.h.b16 %v126
    %v1112 = vunpack.c.l.b16 %v127
    %v1113 = vunpack.c.h.b16 %v127
    %v1114 = vunpack.c.l.b16 %v128
    %v1115 = vunpack.c.h.b16 %v128
    %v1116 = vunpack.c.l.b16 %v129
    %v1117 = vunpack.c.h.b16 %v129
    %v1118 = vunpack.c.l.b16 %v130
    %v1119 = vunpack.c.h.b16 %v130
    %v1120 = vunpack.c.l.b16 %v131
    %v1121 = vunpack.c.h.b16 %v131
    %v1122 = vunpack.c.l.b16 %v132
    %v1123 = vunpack.c.h.b16 %v132
    %v1124 = vunpack.c.l.b16 %v133
    %v1125 = vunpack.c.h.b16 %v133
    %v1126 = vunpack.c.l.b16 %v134
    %v1127 = vunpack.c.h.b16 %v134
    %v1128 = vunpack.c.l.b16 %v135
    %v1129 = vunpack.c.h.b16 %v135
    %v1130 = vunpack.c.l.b16 %v136
    %v1131 = vunpack.c.h.b16 %v136
    %v1132 = vunpack.c.l.b16 %v137
    %v1133 = vunpack.c.h.b16 %v137
    %v1134 = vunpack.c.l.b16 %v138
    %v1135 = vunpack.c.h.b16 %v138
    %v1136 = vunpack.c.l.b16 %v139
    %v1137 = vunpack.c.h.b16 %v139
    %v1138 = vunpack.c.l.b16 %v140
    %v1139 = vunpack.c.h.b16 %v140
    %v1140 = vunpack.c.l.b16 %v141
    %v1141 = vunpack.c.h.b16 %v141
    %v1142 = vunpack.c.l.b16 %v142
    %v1143 = vunpack.c.h.b16 %v142
    %v1144 = vunpack.c.l.b16 %v143
    %v1145 = vunpack.c.h.b16 %v143
    %v1146 = vunpack.c.l.b16 %v144
    %v1147 = vunpack.c.h.b16 %v144
    %v1148 = vunpack.c.l.b16 %v145
    %v1149 = vunpack.c.h.b16 %v145
    %v1150 = vunpack.c.l.b16 %v146
    %v1151 = vunpack.c.h.b16 %v146
    %v1152 = vunpack.c.l.b16 %v147
    %v1153 = vunpack.c.h.b16 %v147
    %v1154 = vunpack.c.l.b16 %v148
    %v1155 = vunpack.c.h.b16 %v148
    %v1156 = vunpack.c.l.b16 %v149
    %v1157 = vunpack.c.h.b16 %v149
    %v1158 = vunpack.c.l.b16 %v150
    %v1159 = vunpack.c.h.b16 %v150
    %v1160 = vunpack.c.l.b16 %v151
    %v1161 = vunpack.c.h.b16 %v151
    %v1162 = vunpack.c.l.b16 %v152
    %v1163 = vunpack.c.h.b16 %v152
    %v1164 = vunpack.c.l.b16 %v153
    %v1165 = vunpack.c.h.b16 %v153
    %v1166 = vunpack.c.l.b16 %v154
    %v1167 = vunpack.c.h.b16 %v154
    %v1168 = vunpack.c.l.b16 %v155
    %v1169 = vunpack.c.h.b16 %v155
    %v1170 = vunpack.c.l.b16 %v156
    %v1171 = vunpack.c.h.b16 %v156
    %v1172 = vunpack.c.l.b16 %v157
    %v1173 = vunpack.c.h.b16 %v157
    %v1174 = vunpack.c.l.b16 %v158
    %v1175 = vunpack.c.h.b16 %v158
    %v1176 = vunpack.c.l.b16 %v159
    %v1177 = vunpack.c.h.b16 %v159
    %v1178 = vunpack.c.l.b16 %v160
    %v1179 = vunpack.c.h.b16 %v160
    %v1180 = vunpack.c.l.b16 %v161
    %v1181 = vunpack.c.h.b16 %v161
    %v1182 = vunpack.c.l.b16 %v162
    %v1183 = vunpack.c.h.b16 %v162
    %v1184 = vunpack.c.l.b16 %v163
    %v1185 = vunpack.c.h.b16 %v163
    %v1186 = vunpack.c.l.b16 %v164
    %v1187 = vunpack.c.h.b16 %v164
    %v1188 = vunpack.c.l.b16 %v165
    %v1189 = vunpack.c.h.b16 %v165
    %v1190 = vunpack.c.l.b16 %v166
    %v1191 = vunpack.c.h.b16 %v166
    %v1192 = vunpack.c.l.b16 %v167
    %v1193 = vunpack.c.h.b16 %v167
    %v1194 = vunpack.c.l.b16 %v168
    %v1195 = vunpack.c.h.b16 %v168
    %v1196 = vunpack.c.l.b16 %v169
    %v1197 = vunpack.c.h.b16 %v169
    %v1198 = vunpack.c.l.b16 %v170
    %v1199 = vunpack.c.h.b16 %v170
    %v1200 = vunpack.c.l.b16 %v171
    %v1201 = vunpack.c.h.b16 %v171
    %v1202 = vunpack.c.l.b16 %v172
    %v1203 = vunpack.c.h.b16 %v172
    %v1204 = vunpack.c.l.b16 %v173
    %v1205 = vunpack.c.h.b16 %v173
    %v1206 = vunpack.c.l.b16 %v174
    %v1207 = vunpack.c.h.b16 %v174
    %v1208 = vunpack.c.l.b16 %v175
    %v1209 = vunpack.c.h.b16 %v175
    %v1210 = vunpack.c.l.b16 %v176
    %v1211 = vunpack.c.h.b16 %v176
    %v1212 = vunpack.c.l.b16 %v177
    %v1213 = vunpack.c.h.b16 %v177
    %v1214 = vunpack.c.l.b16 %v178
    %v1215 = vunpack.c.h.b16 %v178
    %v1216 = vunpack.c.l.b16 %v179
    %v1217 = vunpack.c.h.b16 %v179
    %v1218 = vunpack.c.l.b16 %v180
    %v1219 = vunpack.c.h.b16 %v180
    %v1220 = vunpack.c.l.b16 %v181
    %v1221 = vunpack.c.h.b16 %v181
    %v1222 = vunpack.c.l.b16 %v182
    %v1223 = vunpack.c.h.b16 %v182
    %v1224 = vunpack.c.l.b16 %v183
    %v1225 = vunpack.c.h.b16 %v183
    %v1226 = vunpack.c.l.b16 %v184
    %v1227 = vunpack.c.h.b16 %v184
    %v1228 = vunpack.c.l.b16 %v185
    %v1229 = vunpack.c.h.b16 %v185
    %v1230 = vunpack.c.l.b16 %v186
    %v1231 = vunpack.c.h.b16 %v186
    %v1232 = vunpack.c.l.b16 %v187
    %v1233 = vunpack.c.h.b16 %v187
    %v1234 = vunpack.c.l.b16 %v188
    %v1235 = vunpack.c.h.b16 %v188
    %v1236 = vunpack.c.l.b16 %v189
    %v1237 = vunpack.c.h.b16 %v189
    %v1238 = vunpack.c.l.b16 %v190
    %v1239 = vunpack.c.h.b16 %v190
    %v1240 = vunpack.c.l.b16 %v191
    %v1241 = vunpack.c.h.b16 %v191
    %v1242 = vunpack.c.l.b16 %v192
    %v1243 = vunpack.c.h.b16 %v192
    %v1244 = vunpack.c.l.b16 %v193
    %v1245 = vunpack.c.h.b16 %v193
    %v1246 = vunpack.c.l.b16 %v194
    %v1247 = vunpack.c.h.b16 %v194
    %v1248 = vunpack.c.l.b16 %v195
    %v1249 = vunpack.c.h.b16 %v195
    %v1250 = vunpack.c.l.b16 %v196
    %v1251 = vunpack.c.h.b16 %v196
    %v1252 = vunpack.c.l.b16 %v197
    %v1253 = vunpack.c.h.b16 %v197
    %v1254 = vunpack.c.l.b16 %v198
    %v1255 = vunpack.c.h.b16 %v198
    %v1256 = vunpack.c.l.b16 %v199
    %v1257 = vunpack.c.h.b16 %v199
    %v1258 = vunpack.c.l.b16 %v200
    %v1259 = vunpack.c.h.b16 %v200
    %v1260 = vunpack.c.l.b16 %v201
    %v1261 = vunpack.c.h.b16 %v201
    %v1262 = vunpack.c.l.b16 %v202
    %v1263 = vunpack.c.h.b16 %v202
    %v1264 = vunpack.c.l.b16 %v203
    %v1265 = vunpack.c.h.b16 %v203
    %v1266 = vunpack.c.l.b16 %v204
    %v1267 = vunpack.c.h.b16 %v204
    %v1268 = vunpack.c.l.b16 %v205
    %v1269 = vunpack.c.h.b16 %v205
    %v1270 = vunpack.c.l.b16 %v206
    %v1271 = vunpack.c.h.b16 %v206
    %v1272 = vunpack.c.l.b16 %v207
    %v1273 = vunpack.c.h.b16 %v207
    %v1274 = vunpack.c.l.b16 %v208
    %v1275 = vunpack.c.h.b16 %v208
    %v1276 = vunpack.c.l.b16 %v209
    %v1277 = vunpack.c.h.b16 %v209
    %v1278 = vunpack.c.l.b16 %v210
    %v1279 = vunpack.c.h.b16 %v210
    %v1280 = vunpack.c.l.b16 %v211
    %v1281 = vunpack.c.h.b16 %v211
    %v1282 = vunpack.c.l.b16 %v212
    %v1283 = vunpack.c.h.b16 %v212
    %v1284 = vunpack.c.l.b16 %v213
    %v1285 = vunpack.c.h.b16 %v213
    %v1286 = vunpack.c.l.b16 %v214
    %v1287 = vunpack.c.h.b16 %v214
    %v1288 = vunpack.c.l.b16 %v215
    %v1289 = vunpack.c.h.b16 %v215
    %v1290 = vunpack.c.l.b16 %v216
    %v1291 = vunpack.c.h.b16 %v216
    %v1292 = vunpack.c.l.b16 %v217
    %v1293 = vunpack.c.h.b16 %v217
    %v1294 = vunpack.c.l.b16 %v218
    %v1295 = vunpack.c.h.b16 %v218
    %v1296 = vunpack.c.l.b16 %v219
    %v1297 = vunpack.c.h.b16 %v219
    %v1298 = vunpack.c.l.b16 %v220
    %v1299 = vunpack.c.h.b16 %v220
    %v1300 = vunpack.c.l.b16 %v221
    %v1301 = vunpack.c.h.b16 %v221
    %v1302 = vunpack.c.l.b16 %v222
    %v1303 = vunpack.c.h.b16 %v222
    %v1304 = vunpack.c.l.b16 %v223
    %v1305 = vunpack.c.h.b16 %v223
    %v1306 = vunpack.c.l.b16 %v224
    %v1307 = vunpack.c.h.b16 %v224
    %v1308 = vunpack.c.l.b16 %v225
    %v1309 = vunpack.c.h.b16 %v225
    %v1310 = vunpack.c.l.b16 %v226
    %v1311 = vunpack.c.h.b16 %v226
    %v1312 = vunpack.c.l.b16 %v227
    %v1313 = vunpack.c.h.b16 %v227
    %v1314 = vunpack.c.l.b16 %v228
    %v1315 = vunpack.c.h.b16 %v228
    %v1316 = vunpack.c.l.b16 %v229
    %v1317 = vunpack.c.h.b16 %v229
    %v1318 = vunpack.c.l.b16 %v230
    %v1319 = vunpack.c.h.b16 %v230
    %v1320 = vunpack.c.l.b16 %v231
    %v1321 = vunpack.c.h.b16 %v231
    %v1322 = vunpack.c.l.b16 %v232
    %v1323 = vunpack.c.h.b16 %v232
    %v1324 = vunpack.c.l.b16 %v233
    %v1325 = vunpack.c.h.b16 %v233
    %v1326 = vunpack.c.l.b16 %v234
    %v1327 = vunpack.c.h.b16 %v234
    %v1328 = vunpack.c.l.b16 %v235
    %v1329 = vunpack.c.h.b16 %v235
    %v1330 = vunpack.c.l.b16 %v236
    %v1331 = vunpack.c.h.b16 %v236
    %v1332 = vunpack.c.l.b16 %v237
    %v1333 = vunpack.c.h.b16 %v237
    %v1334 = vunpack.c.l.b16 %v238
    %v1335 = vunpack.c.h.b16 %v238
    %v1336 = vunpack.c.l.b16 %v239
    %v1337 = vunpack.c.h.b16 %v239
    %v1338 = vunpack.c.l.b16 %v240
    %v1339 = vunpack.c.h.b16 %v240
    %v1340 = vunpack.c.l.b16 %v241
    %v1341 = vunpack.c.h.b16 %v241
    %v1342 = vunpack.c.l.b16 %v242
    %v1343 = vunpack.c.h.b16 %v242
    %v1344 = vunpack.c.l.b16 %v243
    %v1345 = vunpack.c.h.b16 %v243
    %v1346 = vunpack.c.l.b16 %v244
    %v1347 = vunpack.c.h.b16 %v244
    %v1348 = vunpack.c.l.b16 %v245
    %v1349 = vunpack.c.h.b16 %v245
    %v1350 = vunpack.c.l.b16 %v246
    %v1351 = vunpack.c.h.b16 %v246
    %v1352 = vunpack.c.l.b16 %v247
    %v1353 = vunpack.c.h.b16 %v247
    %v1354 = vunpack.c.l.b16 %v248
    %v1355 = vunpack.c.h.b16 %v248
    %v1356 = vunpack.c.l.b16 %v249
    %v1357 = vunpack.c.h.b16 %v249
    %v1358 = vunpack.c.l.b16 %v250
    %v1359 = vunpack.c.h.b16 %v250
    %v1360 = vunpack.c.l.b16 %v251
    %v1361 = vunpack.c.h.b16 %v251
    %v1362 = vunpack.c.l.b16 %v252
    %v1363 = vunpack.c.h.b16 %v252
    %v1364 = vunpack.c.l.b16 %v253
    %v1365 = vunpack.c.h.b16 %v253
    %v1366 = vunpack.c.l.b16 %v254
    %v1367 = vunpack.c.h.b16 %v254
    %v1368 = vunpack.c.l.b16 %v255
    %v1369 = vunpack.c.h.b16 %v255
    %v1370 = vunpack.c.l.b16 %v256
    %v1371 = vunpack.c.h.b16 %v256
    %v1372 = vunpack.c.l.b16 %v257
    %v1373 = vunpack.c.h.b16 %v257
    %v1374 = vunpack.c.l.b16 %v258
    %v1375 = vunpack.c.h.b16 %v258
    %v1376 = vunpack.c.l.b16 %v259
    %v1377 = vunpack.c.h.b16 %v259
    %v1378 = vunpack.c.l.b16 %v260
    %v1379 = vunpack.c.h.b16 %v260
    %v1380 = vunpack.c.l.b16 %v261
    %v1381 = vunpack.c.h.b16 %v261
    %v1382 = vunpack.c.l.b16 %v262
    %v1383 = vunpack.c.h.b16 %v262
    %v1384 = vunpack.c.l.b16 %v263
    %v1385 = vunpack.c.h.b16 %v263
    %v1386 = vunpack.c.l.b16 %v264
    %v1387 = vunpack.c.h.b16 %v264
    %v1388 = vunpack.c.l.b16 %v265
    %v1389 = vunpack.c.h.b16 %v265
    %v1390 = vunpack.c.l.b16 %v266
    %v1391 = vunpack.c.h.b16 %v266
    %v1392 = vunpack.c.l.b16 %v267
    %v1393 = vunpack.c.h.b16 %v267
    %v1394 = vunpack.c.l.b16 %v268
    %v1395 = vunpack.c.h.b16 %v268
    %v1396 = vunpack.c.l.b16 %v269
    %v1397 = vunpack.c.h.b16 %v269
    %v1398 = vunpack.c.l.b16 %v270
    %v1399 = vunpack.c.h.b16 %v270
    %v1400 = vunpack.c.l.b16 %v271
    %v1401 = vunpack.c.h.b16 %v271
    %v1402 = vunpack.c.l.b16 %v272
    %v1403 = vunpack.c.h.b16 %v272
    %v1404 = vunpack.c.l.b16 %v273
    %v1405 = vunpack.c.h.b16 %v273
    %v1406 = vunpack.c.l.b16 %v274
    %v1407 = vunpack.c.h.b16 %v274
    %v1408 = vunpack.c.l.b16 %v275
    %v1409 = vunpack.c.h.b16 %v275
    %v1410 = vunpack.c.l.b16 %v276
    %v1411 = vunpack.c.h.b16 %v276
    %v1412 = vunpack.c.l.b16 %v277
    %v1413 = vunpack.c.h.b16 %v277
    %v1414 = vunpack.c.l.b16 %v278
    %v1415 = vunpack.c.h.b16 %v278
    %v1416 = vunpack.c.l.b16 %v279
    %v1417 = vunpack.c.h.b16 %v279
    %v1418 = vunpack.c.l.b16 %v280
    %v1419 = vunpack.c.h.b16 %v280
    %v1420 = vunpack.c.l.b16 %v281
    %v1421 = vunpack.c.h.b16 %v281
    %v1422 = vunpack.c.l.b16 %v282
    %v1423 = vunpack.c.h.b16 %v282
    %v1424 = vunpack.c.l.b16 %v283
    %v1425 = vunpack.c.h.b16 %v283
    %v1426 = vunpack.c.l.b16 %v284
    %v1427 = vunpack.c.h.b16 %v284
    %v1428 = vunpack.c.l.b16 %v285
    %v1429 = vunpack.c.h.b16 %v285
    %v1430 = vunpack.c.l.b16 %v286
    %v1431 = vunpack.c.h.b16 %v286
    %v1432 = vunpack.c.l.b16 %v287
    %v1433 = vunpack.c.h.b16 %v287
    %v1434 = vunpack.c.l.b16 %v288
    %v1435 = vunpack.c.h.b16 %v288
    %v1436 = vunpack.c.l.b16 %v289
    %v1437 = vunpack.c.h.b16 %v289
    %v1438 = vunpack.c.l.b16 %v290
    %v1439 = vunpack.c.h.b16 %v290
    %v1440 = vunpack.c.l.b16 %v291
    %v1441 = vunpack.c.h.b16 %v291
    %v1442 = vunpack.c.l.b16 %v292
    %v1443 = vunpack.c.h.b16 %v292
    %v1444 = vunpack.c.l.b16 %v293
    %v1445 = vunpack.c.h.b16 %v293
    %v1446 = vunpack.c.l.b16 %v294
    %v1447 = vunpack.c.h.b16 %v294
    %v1448 = vunpack.c.l.b16 %v295
    %v1449 = vunpack.c.h.b16 %v295
    %v1450 = vunpack.c.l.b16 %v296
    %v1451 = vunpack.c.h.b16 %v296
    %v1452 = vunpack.c.l.b16 %v297
    %v1453 = vunpack.c.h.b16 %v297
    %v1454 = vunpack.c.l.b16 %v298
    %v1455 = vunpack.c.h.b16 %v298
    %v1456 = vunpack.c.l.b16 %v299
    %v1457 = vunpack.c.h.b16 %v299
    %v1458 = vunpack.c.l.b16 %v300
    %v1459 = vunpack.c.h.b16 %v300
    %v1460 = vunpack.c.l.b16 %v301
    %v1461 = vunpack.c.h.b16 %v301
    %v1462 = vunpack.c.l.b16 %v302
    %v1463 = vunpack.c.h.b16 %v302
    %v1464 = vunpack.c.l.b16 %v303
    %v1465 = vunpack.c.h.b16 %v303
    %v1466 = vunpack.c.l.b16 %v304
    %v1467 = vunpack.c.h.b16 %v304
    %v1468 = vunpack.c.l.b16 %v305
    %v1469 = vunpack.c.h.b16 %v305
    %v1470 = vunpack.c.l.b16 %v306
    %v1471 = vunpack.c.h.b16 %v306
    %v1472 = vunpack.c.l.b16 %v307
    %v1473 = vunpack.c.h.b16 %v307
    %v1474 = vunpack.c.l.b16 %v308
    %v1475 = vunpack.c.h.b16 %v308
    %v1476 = vunpack.c.l.b16 %v309
    %v1477 = vunpack.c.h.b16 %v309
    %v1478 = vunpack.c.l.b16 %v310
    %v1479 = vunpack.c.h.b16 %v310
    %v1480 = vunpack.c.l.b16 %v311
    %v1481 = vunpack.c.h.b16 %v311
    %v1482 = vunpack.c.l.b16 %v312
    %v1483 = vunpack.c.h.b16 %v312
    %v1484 = vunpack.c.l.b16 %v313
    %v1485 = vunpack.c.h.b16 %v313
    %v1486 = vunpack.c.l.b16 %v314
    %v1487 = vunpack.c.h.b16 %v314
    %v1488 = vunpack.c.l.b16 %v315
    %v1489 = vunpack.c.h.b16 %v315
    %v1490 = vunpack.c.l.b16 %v316
    %v1491 = vunpack.c.h.b16 %v316
    %v1492 = vunpack.c.l.b16 %v317
    %v1493 = vunpack.c.h.b16 %v317
    %v1494 = vunpack.c.l.b16 %v318
    %v1495 = vunpack.c.h.b16 %v318
    %v1496 = vunpack.c.l.b16 %v319
    %v1497 = vunpack.c.h.b16 %v319
    %v1498 = vunpack.c.l.b16 %v320
    %v1499 = vunpack.c.h.b16 %v320
    %v1500 = vunpack.c.l.b16 %v321
    %v1501 = vunpack.c.h.b16 %v321
    %v1502 = vunpack.c.l.b16 %v322
    %v1503 = vunpack.c.h.b16 %v322
    %v1504 = vunpack.c.l.b16 %v323
    %v1505 = vunpack.c.h.b16 %v323
    %v1506 = vunpack.c.l.b16 %v324
    %v1507 = vunpack.c.h.b16 %v324
    %v1508 = vunpack.c.l.b16 %v325
    %v1509 = vunpack.c.h.b16 %v325
    %v1510 = vunpack.c.l.b16 %v326
    %v1511 = vunpack.c.h.b16 %v326
    %v1512 = vunpack.c.l.b16 %v327
    %v1513 = vunpack.c.h.b16 %v327
    %v1514 = vunpack.c.l.b16 %v328
    %v1515 = vunpack.c.h.b16 %v328
    %v1516 = vunpack.c.l.b16 %v329
    %v1517 = vunpack.c.h.b16 %v329
    %v1518 = vunpack.c.l.b16 %v330
    %v1519 = vunpack.c.h.b16 %v330
    %v1520 = vunpack.c.l.b16 %v331
    %v1521 = vunpack.c.h.b16 %v331
    %v1522 = vunpack.c.l.b16 %v332
    %v1523 = vunpack.c.h.b16 %v332
    %v1524 = vunpack.c.l.b16 %v333
    %v1525 = vunpack.c.h.b16 %v333
    %v1526 = vunpack.c.l.b16 %v334
    %v1527 = vunpack.c.h.b16 %v334
    %v1528 = vunpack.c.l.b16 %v335
    %v1529 = vunpack.c.h.b16 %v335
    %v1530 = vunpack.c.l.b16 %v336
    %v1531 = vunpack.c.h.b16 %v336
    %v1532 = vunpack.c.l.b16 %v337
    %v1533 = vunpack.c.h.b16 %v337
    %v1534 = vunpack.c.l.b16 %v338
    %v1535 = vunpack.c.h.b16 %v338
    %v1536 = vunpack.c.l.b16 %v339
    %v1537 = vunpack.c.h.b16 %v339
    %v1538 = vunpack.c.l.b16 %v340
    %v1539 = vunpack.c.h.b16 %v340
    %v1540 = vunpack.c.l.b16 %v341
    %v1541 = vunpack.c.h.b16 %v341
    %v1542 = vunpack.c.l.b16 %v342
    %v1543 = vunpack.c.h.b16 %v342
    %v1544 = vunpack.c.l.b16 %v343
    %v1545 = vunpack.c.h.b16 %v343
    %v1546 = vunpack.c.l.b16 %v344
    %v1547 = vunpack.c.h.b16 %v344
    %v1548 = vunpack.c.l.b16 %v345
    %v1549 = vunpack.c.h.b16 %v345
    %v1550 = vunpack.c.l.b16 %v346
    %v1551 = vunpack.c.h.b16 %v346
    %v1552 = vunpack.c.l.b16 %v347
    %v1553 = vunpack.c.h.b16 %v347
    %v1554 = vunpack.c.l.b16 %v348
    %v1555 = vunpack.c.h.b16 %v348
    %v1556 = vunpack.c.l.b16 %v349
    %v1557 = vunpack.c.h.b16 %v349
    %v1558 = vunpack.c.l.b16 %v350
    %v1559 = vunpack.c.h.b16 %v350
    %v1560 = vunpack.c.l.b16 %v351
    %v1561 = vunpack.c.h.b16 %v351
    %v1562 = vunpack.c.l.b16 %v352
    %v1563 = vunpack.c.h.b16 %v352
    %v1564 = vunpack.c.l.b16 %v353
    %v1565 = vunpack.c.h.b16 %v353
    %v1566 = vunpack.c.l.b16 %v354
    %v1567 = vunpack.c.h.b16 %v354
    %v1568 = vunpack.c.l.b16 %v355
    %v1569 = vunpack.c.h.b16 %v355
    %v1570 = vunpack.c.l.b16 %v356
    %v1571 = vunpack.c.h.b16 %v356
    %v1572 = vunpack.c.l.b16 %v357
    %v1573 = vunpack.c.h.b16 %v357
    %v1574 = vunpack.c.l.b16 %v358
    %v1575 = vunpack.c.h.b16 %v358
    %v1576 = vunpack.c.l.b16 %v359
    %v1577 = vunpack.c.h.b16 %v359
    %v1578 = vunpack.c.l.b16 %v360
    %v1579 = vunpack.c.h.b16 %v360
    %v1580 = vunpack.c.l.b16 %v361
    %v1581 = vunpack.c.h.b16 %v361
    %v1582 = vunpack.c.l.b16 %v362
    %v1583 = vunpack.c.h.b16 %v362
    %v1584 = vunpack.c.l.b16 %v363
    %v1585 = vunpack.c.h.b16 %v363
    %v1586 = vunpack.c.l.b16 %v364
    %v1587 = vunpack.c.h.b16 %v364
    %v1588 = vunpack.c.l.b16 %v365
    %v1589 = vunpack.c.h.b16 %v365
    %v1590 = vunpack.c.l.b16 %v366
    %v1591 = vunpack.c.h.b16 %v366
    %v1592 = vunpack.c.l.b16 %v367
    %v1593 = vunpack.c.h.b16 %v367
    %v1594 = vunpack.c.l.b16 %v368
    %v1595 = vunpack.c.h.b16 %v368
    %v1596 = vunpack.c.l.b16 %v369
    %v1597 = vunpack.c.h.b16 %v369
    %v1598 = vunpack.c.l.b16 %v370
    %v1599 = vunpack.c.h.b16 %v370
    %v1600 = vunpack.c.l.b16 %v371
    %v1601 = vunpack.c.h.b16 %v371
    %v1602 = vunpack.c.l.b16 %v372
    %v1603 = vunpack.c.h.b16 %v372
    %v1604 = vunpack.c.l.b16 %v373
    %v1605 = vunpack.c.h.b16 %v373
    %v1606 = vunpack.c.l.b16 %v374
    %v1607 = vunpack.c.h.b16 %v374
    %v1608 = vunpack.c.l.b16 %v375
    %v1609 = vunpack.c.h.b16 %v375
    %v1610 = vunpack.c.l.b16 %v376
    %v1611 = vunpack.c.h.b16 %v376
    %v1612 = vunpack.c.l.b16 %v377
    %v1613 = vunpack.c.h.b16 %v377
    %v1614 = vunpack.c.l.b16 %v378
    %v1615 = vunpack.c.h.b16 %v378
    %v1616 = vunpack.c.l.b16 %v379
    %v1617 = vunpack.c.h.b16 %v379
    %v1618 = vunpack.c.l.b16 %v380
    %v1619 = vunpack.c.h.b16 %v380
    %v1620 = vunpack.c.l.b16 %v381
    %v1621 = vunpack.c.h.b16 %v381
    %v1622 = vunpack.c.l.b16 %v382
    %v1623 = vunpack.c.h.b16 %v382
    %v1624 = vunpack.c.l.b16 %v383
    %v1625 = vunpack.c.h.b16 %v383
    %v1626 = vunpack.c.l.b16 %v384
    %v1627 = vunpack.c.h.b16 %v384
    %v1628 = vunpack.c.l.b16 %v385
    %v1629 = vunpack.c.h.b16 %v385
    %v1630 = vunpack.c.l.b16 %v386
    %v1631 = vunpack.c.h.b16 %v386
    %v1632 = vunpack.c.l.b16 %v387
    %v1633 = vunpack.c.h.b16 %v387
    %v1634 = vunpack.c.l.b16 %v388
    %v1635 = vunpack.c.h.b16 %v388
    %v1636 = vunpack.c.l.b16 %v389
    %v1637 = vunpack.c.h.b16 %v389
    %v1638 = vunpack.c.l.b16 %v390
    %v1639 = vunpack.c.h.b16 %v390
    %v1640 = vunpack.c.l.b16 %v391
    %v1641 = vunpack.c.h.b16 %v391
    %v1642 = vunpack.c.l.b16 %v392
    %v1643 = vunpack.c.h.b16 %v392
    %v1644 = vunpack.c.l.b16 %v393
    %v1645 = vunpack.c.h.b16 %v393
    %v1646 = vunpack.c.l.b16 %v394
    %v1647 = vunpack.c.h.b16 %v394
    %v1648 = vunpack.c.l.b16 %v395
    %v1649 = vunpack.c.h.b16 %v395
    %v1650 = vunpack.c.l.b16 %v396
    %v1651 = vunpack.c.h.b16 %v396
    %v1652 = vunpack.c.l.b16 %v397
    %v1653 = vunpack.c.h.b16 %v397
    %v1654 = vunpack.c.l.b16 %v398
    %v1655 = vunpack.c.h.b16 %v398
    %v1656 = vunpack.c.l.b16 %v399
    %v1657 = vunpack.c.h.b16 %v399
    %v1658 = vunpack.c.l.b16 %v400
    %v1659 = vunpack.c.h.b16 %v400
    %v1660 = vunpack.c.l.b16 %v401
    %v1661 = vunpack.c.h.b16 %v401
    %v1662 = vunpack.c.l.b16 %v402
    %v1663 = vunpack.c.h.b16 %v402
    %v1664 = vunpack.c.l.b16 %v403
    %v1665 = vunpack.c.h.b16 %v403
    %v1666 = vunpack.c.l.b16 %v404
    %v1667 = vunpack.c.h.b16 %v404
    %v1668 = vunpack.c.l.b16 %v405
    %v1669 = vunpack.c.h.b16 %v405
    %v1670 = vunpack.c.l.b16 %v406
    %v1671 = vunpack.c.h.b16 %v406
    %v1672 = vunpack.c.l.b16 %v407
    %v1673 = vunpack.c.h.b16 %v407
    %v1674 = vunpack.c.l.b16 %v408
    %v1675 = vunpack.c.h.b16 %v408
    %v1676 = vunpack.c.l.b16 %v409
    %v1677 = vunpack.c.h.b16 %v409
    %v1678 = vunpack.c.l.b16 %v410
    %v1679 = vunpack.c.h.b16 %v410
    %v1680 = vunpack.c.l.b16 %v411
    %v1681 = vunpack.c.h.b16 %v411
    %v1682 = vunpack.c.l.b16 %v412
    %v1683 = vunpack.c.h.b16 %v412
    %v1684 = vunpack.c.l.b16 %v413
    %v1685 = vunpack.c.h.b16 %v413
    %v1686 = vunpack.c.l.b16 %v414
    %v1687 = vunpack.c.h.b16 %v414
    %v1688 = vunpack.c.l.b16 %v415
    %v1689 = vunpack.c.h.b16 %v415
    %v1690 = vunpack.c.l.b16 %v416
    %v1691 = vunpack.c.h.b16 %v416
    %v1692 = vunpack.c.l.b16 %v417
    %v1693 = vunpack.c.h.b16 %v417
    %v1694 = vunpack.c.l.b16 %v418
    %v1695 = vunpack.c.h.b16 %v418
    %v1696 = vunpack.c.l.b16 %v419
    %v1697 = vunpack.c.h.b16 %v419
    %v1698 = vunpack.c.l.b16 %v420
    %v1699 = vunpack.c.h.b16 %v420
    %v1700 = vunpack.c.l.b16 %v421
    %v1701 = vunpack.c.h.b16 %v421
    %v1702 = vunpack.c.l.b16 %v422
    %v1703 = vunpack.c.h.b16 %v422
    %v1704 = vunpack.c.l.b16 %v423
    %v1705 = vunpack.c.h.b16 %v423
    %v1706 = vunpack.c.l.b16 %v424
    %v1707 = vunpack.c.h.b16 %v424
    %v1708 = vunpack.c.l.b16 %v425
    %v1709 = vunpack.c.h.b16 %v425
    %v1710 = vunpack.c.l.b16 %v426
    %v1711 = vunpack.c.h.b16 %v426
    %v1712 = vunpack.c.l.b16 %v427
    %v1713 = vunpack.c.h.b16 %v427
    %v1714 = vunpack.c.l.b16 %v428
    %v1715 = vunpack.c.h.b16 %v428
    %v1716 = vunpack.c.l.b16 %v429
    %v1717 = vunpack.c.h.b16 %v429
    %v1718 = vunpack.c.l.b16 %v430
    %v1719 = vunpack.c.h.b16 %v430
    %v1720 = vunpack.c.l.b16 %v431
    %v1721 = vunpack.c.h.b16 %v431
    %v1722 = vunpack.c.l.b16 %v432
    %v1723 = vunpack.c.h.b16 %v432
    %v1724 = vunpack.c.l.b16 %v433
    %v1725 = vunpack.c.h.b16 %v433
    %v1726 = vunpack.c.l.b16 %v434
    %v1727 = vunpack.c.h.b16 %v434
    %v1728 = vunpack.c.l.b16 %v435
    %v1729 = vunpack.c.h.b16 %v435
    %v1730 = vunpack.c.l.b16 %v436
    %v1731 = vunpack.c.h.b16 %v436
    %v1732 = vunpack.c.l.b16 %v437
    %v1733 = vunpack.c.h.b16 %v437
    %v1734 = vunpack.c.l.b16 %v438
    %v1735 = vunpack.c.h.b16 %v438
    %v1736 = vunpack.c.l.b16 %v439
    %v1737 = vunpack.c.h.b16 %v439
    %v1738 = vunpack.c.l.b16 %v440
    %v1739 = vunpack.c.h.b16 %v440
    %v1740 = vunpack.c.l.b16 %v441
    %v1741 = vunpack.c.h.b16 %v441
    %v1742 = vunpack.c.l.b16 %v442
    %v1743 = vunpack.c.h.b16 %v442
    %v1744 = vunpack.c.l.b16 %v443
    %v1745 = vunpack.c.h.b16 %v443
    %v1746 = vunpack.c.l.b16 %v444
    %v1747 = vunpack.c.h.b16 %v444
    %v1748 = vunpack.c.l.b16 %v445
    %v1749 = vunpack.c.h.b16 %v445
    %v1750 = vunpack.c.l.b16 %v446
    %v1751 = vunpack.c.h.b16 %v446
    %v1752 = vunpack.c.l.b16 %v447
    %v1753 = vunpack.c.h.b16 %v447
    %v1754 = vunpack.c.l.b16 %v448
    %v1755 = vunpack.c.h.b16 %v448
    %v1756 = vunpack.c.l.b16 %v449
    %v1757 = vunpack.c.h.b16 %v449
    %v1758 = vunpack.c.l.b16 %v450
    %v1759 = vunpack.c.h.b16 %v450
    %v1760 = vunpack.c.l.b16 %v451
    %v1761 = vunpack.c.h.b16 %v451
    %v1762 = vunpack.c.l.b16 %v452
    %v1763 = vunpack.c.h.b16 %v452
    %v1764 = vunpack.c.l.b16 %v453
    %v1765 = vunpack.c.h.b16 %v453
    %v1766 = vunpack.c.l.b16 %v454
    %v1767 = vunpack.c.h.b16 %v454
    %v1768 = vunpack.c.l.b16 %v455
    %v1769 = vunpack.c.h.b16 %v455
    %v1770 = vunpack.c.l.b16 %v456
    %v1771 = vunpack.c.h.b16 %v456
    %v1772 = vunpack.c.l.b16 %v457
    %v1773 = vunpack.c.h.b16 %v457
    %v1774 = vunpack.c.l.b16 %v458
    %v1775 = vunpack.c.h.b16 %v458
    %v1776 = vunpack.c.l.b16 %v459
    %v1777 = vunpack.c.h.b16 %v459
    %v1778 = vunpack.c.l.b16 %v460
    %v1779 = vunpack.c.h.b16 %v460
    %v1780 = vunpack.c.l.b16 %v461
    %v1781 = vunpack.c.h.b16 %v461
    %v1782 = vunpack.c.l.b16 %v462
    %v1783 = vunpack.c.h.b16 %v462
    %v1784 = vunpack.c.l.b16 %v463
    %v1785 = vunpack.c.h.b16 %v463
    %v1786 = vunpack.c.l.b16 %v464
    %v1787 = vunpack.c.h.b16 %v464
    %v1788 = vunpack.c.l.b16 %v465
    %v1789 = vunpack.c.h.b16 %v465
    %v1790 = vunpack.c.l.b16 %v466
    %v1791 = vunpack.c.h.b16 %v466
    %v1792 = vunpack.c.l.b16 %v467
    %v1793 = vunpack.c.h.b16 %v467
    %v1794 = vunpack.c.l.b16 %v468
    %v1795 = vunpack.c.h.b16 %v468
    %v1796 = vunpack.c.l.b16 %v469
    %v1797 = vunpack.c.h.b16 %v469
    %v1798 = vunpack.c.l.b16 %v470
    %v1799 = vunpack.c.h.b16 %v470
    %v1800 = vunpack.c.l.b16 %v471
    %v1801 = vunpack.c.h.b16 %v471
    %v1802 = vunpack.c.l.b16 %v472
    %v1803 = vunpack.c.h.b16 %v472
    %v1804 = vunpack.c.l.b16 %v473
    %v1805 = vunpack.c.h.b16 %v473
    %v1806 = vunpack.c.l.b16 %v474
    %v1807 = vunpack.c.h.b16 %v474
    %v1808 = vunpack.c.l.b16 %v475
    %v1809 = vunpack.c.h.b16 %v475
    %v1810 = vunpack.c.l.b16 %v476
    %v1811 = vunpack.c.h.b16 %v476
    %v1812 = vunpack.c.l.b16 %v477
    %v1813 = vunpack.c.h.b16 %v477
    %v1814 = vunpack.c.l.b16 %v478
    %v1815 = vunpack.c.h.b16 %v478
    %v1816 = vunpack.c.l.b16 %v479
    %v1817 = vunpack.c.h.b16 %v479
    %v1818 = vunpack.c.l.b16 %v480
    %v1819 = vunpack.c.h.b16 %v480
    %v1820 = vunpack.c.l.b16 %v481
    %v1821 = vunpack.c.h.b16 %v481
    %v1822 = vunpack.c.l.b16 %v482
    %v1823 = vunpack.c.h.b16 %v482
    %v1824 = vunpack.c.l.b16 %v483
    %v1825 = vunpack.c.h.b16 %v483
    %v1826 = vunpack.c.l.b16 %v484
    %v1827 = vunpack.c.h.b16 %v484
    %v1828 = vunpack.c.l.b16 %v485
    %v1829 = vunpack.c.h.b16 %v485
    %v1830 = vunpack.c.l.b16 %v486
    %v1831 = vunpack.c.h.b16 %v486
    %v1832 = vunpack.c.l.b16 %v487
    %v1833 = vunpack.c.h.b16 %v487
    %v1834 = vunpack.c.l.b16 %v488
    %v1835 = vunpack.c.h.b16 %v488
    %v1836 = vunpack.c.l.b16 %v489
    %v1837 = vunpack.c.h.b16 %v489
    %v1838 = vunpack.c.l.b16 %v490
    %v1839 = vunpack.c.h.b16 %v490
    %v1840 = vunpack.c.l.b16 %v491
    %v1841 = vunpack.c.h.b16 %v491
    %v1842 = vunpack.c.l.b16 %v492
    %v1843 = vunpack.c.h.b16 %v492
    %v1844 = vunpack.c.l.b16 %v493
    %v1845 = vunpack.c.h.b16 %v493
    %v1846 = vpack.c.b16 %v1084, %v1078
    %v1847 = vpack.c.b16 %v1085, %v1079
    %v1848 = vpack.c.b16 %v1086, %v1080
    %v1849 = vpack.c.b16 %v1087, %v1081
    %v1850 = vpack.c.b16 %v1088, %v1082
    %v1851 = vpack.c.b16 %v1089, %v1083
    %v1852 = vpack.c.b16 %v1096, %v1090
    %v1853 = vpack.c.b16 %v1097, %v1091
    %v1854 = vpack.c.b16 %v1098, %v1092
    %v1855 = vpack.c.b16 %v1099, %v1093
    %v1856 = vpack.c.b16 %v1100, %v1094
    %v1857 = vpack.c.b16 %v1101, %v1095
    %v1858 = vpack.c.b16 %v1108, %v1102
    %v1859 = vpack.c.b16 %v1109, %v1103
    %v1860 = vpack.c.b16 %v1110, %v1104
    %v1861 = vpack.c.b16 %v1111, %v1105
    %v1862 = vpack.c.b16 %v1112, %v1106
    %v1863 = vpack.c.b16 %v1113, %v1107
    %v1864 = vpack.c.b16 %v1120, %v1114
    %v1865 = vpack.c.b16 %v1121, %v1115
    %v1866 = vpack.c.b16 %v1122, %v1116
    %v1867 = vpack.c.b16 %v1123, %v1117
    %v1868 = vpack.c.b16 %v1124, %v1118
    %v1869 = vpack.c.b16 %v1125, %v1119
    %v1870 = vpack.c.b16 %v1132, %v1126
    %v1871 = vpack.c.b16 %v1133, %v1127
    %v1872 = vpack.c.b16 %v1134, %v1128
    %v1873 = vpack.c.b16 %v1135, %v1129
    %v1874 = vpack.c.b16 %v1136, %v1130
    %v1875 = vpack.c.b16 %v1137, %v1131
    %v1876 = vpack.c.b16 %v1144, %v1138
    %v1877 = vpack.c.b16 %v1145, %v1139
    %v1878 = vpack.c.b16 %v1146, %v1140
    %v1879 = vpack.c.b16 %v1147, %v1141
    %v1880 = vpack.c.b16 %v1148, %v1142
    %v1881 = vpack.c.b16 %v1149, %v1143
    %v1882 = vpack.c.b16 %v1156, %v1150
    %v1883 = vpack.c.b16 %v1157, %v1151
    %v1884 = vpack.c.b16 %v1158, %v1152
    %v1885 = vpack.c.b16 %v1159, %v1153
    %v1886 = vpack.c.b16 %v1160, %v1154
    %v1887 = vpack.c.b16 %v1161, %v1155
    %v1888 = vpack.c.b16 %v1168, %v1162
    %v1889 = vpack.c.b16 %v1169, %v1163
    %v1890 = vpack.c.b16 %v1170, %v1164
    %v1891 = vpack.c.b16 %v1171, %v1165
    %v1892 = vpack.c.b16 %v1172, %v1166
    %v1893 = vpack.c.b16 %v1173, %v1167
    %v1894 = vpack.c.b16 %v1180, %v1174
    %v1895 = vpack.c.b16 %v1181, %v1175
    %v1896 = vpack.c.b16 %v1182, %v1176
    %v1897 = vpack.c.b16 %v1183, %v1177
    %v1898 = vpack.c.b16 %v1184, %v1178
    %v1899 = vpack.c.b16 %v1185, %v1179
    %v1900 = vpack.c.b16 %v1192, %v1186
    %v1901 = vpack.c.b16 %v1193, %v1187
    %v1902 = vpack.c.b16 %v1194, %v1188
    %v1903 = vpack.c.b16 %v1195, %v1189
    %v1904 = vpack.c.b16 %v1196, %v1190
    %v1905 = vpack.c.b16 %v1197, %v1191
    %v1906 = vpack.c.b16 %v1204, %v1198
    %v1907 = vpack.c.b16 %v1205, %v1199
    %v1908 = vpack.c.b16 %v1206, %v1200
    %v1909 = vpack.c.b16 %v1207, %v1201
    %v1910 = vpack.c.b16 %v1208, %v1202
    %v1911 = vpack.c.b16 %v1209, %v1203
    %v1912 = vpack.c.b16 %v1216, %v1210
    %v1913 = vpack.c.b16 %v1217, %v1211
    %v1914 = vpack.c.b16 %v1218, %v1212
    %v1915 = vpack.c.b16 %v1219, %v1213
    %v1916 = vpack.c.b16 %v1220, %v1214
    %v1917 = vpack.c.b16 %v1221, %v1215
    %v1918 = vpack.c.b16 %v1228, %v1222
    %v1919 = vpack.c.b16 %v1229, %v1223
    %v1920 = vpack.c.b16 %v1230, %v1224
    %v1921 = vpack.c.b16 %v1231, %v1225
    %v1922 = vpack.c.b16 %v1232, %v1226
    %v1923 = vpack.c.b16 %v1233, %v1227
    %v1924 = vpack.c.b16 %v1240, %v1234
    %v1925 = vpack.c.b16 %v1241, %v1235
    %v1926 = vpack.c.b16 %v1242, %v1236
    %v1927 = vpack.c.b16 %v1243, %v1237
    %v1928 = vpack.c.b16 %v1244, %v1238
    %v1929 = vpack.c.b16 %v1245, %v1239
    %v1930 = vpack.c.b16 %v1252, %v1246
    %v1931 = vpack.c.b16 %v1253, %v1247
    %v1932 = vpack.c.b16 %v1254, %v1248
    %v1933 = vpack.c.b16 %v1255, %v1249
    %v1934 = vpack.c.b16 %v1256, %v1250
    %v1935 = vpack.c.b16 %v1257, %v1251
    %v1936 = vpack.c.b16 %v1264, %v1258
    %v1937 = vpack.c.b16 %v1265, %v1259
    %v1938 = vpack.c.b16 %v1266, %v1260
    %v1939 = vpack.c.b16 %v1267, %v1261
    %v1940 = vpack.c.b16 %v1268, %v1262
    %v1941 = vpack.c.b16 %v1269, %v1263
    %v1942 = vpack.c.b16 %v1276, %v1270
    %v1943 = vpack.c.b16 %v1277, %v1271
    %v1944 = vpack.c.b16 %v1278, %v1272
    %v1945 = vpack.c.b16 %v1279, %v1273
    %v1946 = vpack.c.b16 %v1280, %v1274
    %v1947 = vpack.c.b16 %v1281, %v1275
    %v1948 = vpack.c.b16 %v1288, %v1282
    %v1949 = vpack.c.b16 %v1289, %v1283
    %v1950 = vpack.c.b16 %v1290, %v1284
    %v1951 = vpack.c.b16 %v1291, %v1285
    %v1952 = vpack.c.b16 %v1292, %v1286
    %v1953 = vpack.c.b16 %v1293, %v1287
    %v1954 = vpack.c.b16 %v1300, %v1294
    %v1955 = vpack.c.b16 %v1301, %v1295
    %v1956 = vpack.c.b16 %v1302, %v1296
    %v1957 = vpack.c.b16 %v1303, %v1297
    %v1958 = vpack.c.b16 %v1304, %v1298
    %v1959 = vpack.c.b16 %v1305, %v1299
    %v1960 = vpack.c.b16 %v1312, %v1306
    %v1961 = vpack.c.b16 %v1313, %v1307
    %v1962 = vpack.c.b16 %v1314, %v1308
    %v1963 = vpack.c.b16 %v1315, %v1309
    %v1964 = vpack.c.b16 %v1316, %v1310
    %v1965 = vpack.c.b16 %v1317, %v1311
    %v1966 = vpack.c.b16 %v1324, %v1318
    %v1967 = vpack.c.b16 %v1325, %v1319
    %v1968 = vpack.c.b16 %v1326, %v1320
    %v1969 = vpack.c.b16 %v1327, %v1321
    %v1970 = vpack.c.b16 %v1328, %v1322
    %v1971 = vpack.c.b16 %v1329, %v1323
    %v1972 = vpack.c.b16 %v1336, %v1330
    %v1973 = vpack.c.b16 %v1337, %v1331
    %v1974 = vpack.c.b16 %v1338, %v1332
    %v1975 = vpack.c.b16 %v1339, %v1333
    %v1976 = vpack.c.b16 %v1340, %v1334
    %v1977 = vpack.c.b16 %v1341, %v1335
    %v1978 = vpack.c.b16 %v1348, %v1342
    %v1979 = vpack.c.b16 %v1349, %v1343
    %v1980 = vpack.c.b16 %v1350, %v1344
    %v1981 = vpack.c.b16 %v1351, %v1345
    %v1982 = vpack.c.b16 %v1352, %v1346
    %v1983 = vpack.c.b16 %v1353, %v1347
    %v1984 = vpack.c.b16 %v1360, %v1354
    %v1985 = vpack.c.b16 %v1361, %v1355
    %v1986 = vpack.c.b16 %v1362, %v1356
    %v1987 = vpack.c.b16 %v1363, %v1357
    %v1988 = vpack.c.b16 %v1364, %v1358
    %v1989 = vpack.c.b16 %v1365, %v1359
    %v1990 = vpack.c.b16 %v1372, %v1366
    %v1991 = vpack.c.b16 %v1373, %v1367
    %v1992 = vpack.c.b16 %v1374, %v1368
    %v1993 = vpack.c.b16 %v1375, %v1369
    %v1994 = vpack.c.b16 %v1376, %v1370
    %v1995 = vpack.c.b16 %v1377, %v1371
    %v1996 = vpack.c.b16 %v1384, %v1378
    %v1997 = vpack.c.b16 %v1385, %v1379
    %v1998 = vpack.c.b16 %v1386, %v1380
    %v1999 = vpack.c.b16 %v1387, %v1381
    %v2000 = vpack.c.b16 %v1388, %v1382
    %v2001 = vpack.c.b16 %v1389, %v1383
    %v2002 = vpack.c.b16 %v1396, %v1390
    %v2003 = vpack.c.b16 %v1397, %v1391
    %v2004 = vpack.c.b16 %v1398, %v1392
    %v2005 = vpack.c.b16 %v1399, %v1393
    %v2006 = vpack.c.b16 %v1400, %v1394
    %v2007 = vpack.c.b16 %v1401, %v1395
    %v2008 = vpack.c.b16 %v1408, %v1402
    %v2009 = vpack.c.b16 %v1409, %v1403
    %v2010 = vpack.c.b16 %v1410, %v1404
    %v2011 = vpack.c.b16 %v1411, %v1405
    %v2012 = vpack.c.b16 %v1412, %v1406
    %v2013 = vpack.c.b16 %v1413, %v1407
    %v2014 = vpack.c.b16 %v1420, %v1414
    %v2015 = vpack.c.b16 %v1421, %v1415
    %v2016 = vpack.c.b16 %v1422, %v1416
    %v2017 = vpack.c.b16 %v1423, %v1417
    %v2018 = vpack.c.b16 %v1424, %v1418
    %v2019 = vpack.c.b16 %v1425, %v1419
    %v2020 = vpack.c.b16 %v1432, %v1426
    %v2021 = vpack.c.b16 %v1433, %v1427
    %v2022 = vpack.c.b16 %v1434, %v1428
    %v2023 = vpack.c.b16 %v1435, %v1429
    %v2024 = vpack.c.b16 %v1436, %v1430
    %v2025 = vpack.c.b16 %v1437, %v1431
    %v2026 = vpack.c.b16 %v1444, %v1438
    %v2027 = vpack.c.b16 %v1445, %v1439
    %v2028 = vpack.c.b16 %v1446, %v1440
    %v2029 = vpack.c.b16 %v1447, %v1441
    %v2030 = vpack.c.b16 %v1448, %v1442
    %v2031 = vpack.c.b16 %v1449, %v1443
    %v2032 = vpack.c.b16 %v1456, %v1450
    %v2033 = vpack.c.b16 %v1457, %v1451
    %v2034 = vpack.c.b16 %v1458, %v1452
    %v2035 = vpack.c.b16 %v1459, %v1453
    %v2036 = vpack.c.b16 %v1460, %v1454
    %v2037 = vpack.c.b16 %v1461, %v1455
    %v2038 = vpack.c.b16 %v1468, %v1462
    %v2039 = vpack.c.b16 %v1469, %v1463
    %v2040 = vpack.c.b16 %v1470, %v1464
    %v2041 = vpack.c.b16 %v1471, %v1465
    %v2042 = vpack.c.b16 %v1472, %v1466
    %v2043 = vpack.c.b16 %v1473, %v1467
    %v2044 = vpack.c.b16 %v1480, %v1474
    %v2045 = vpack.c.b16 %v1481, %v1475
    %v2046 = vpack.c.b16 %v1482, %v1476
    %v2047 = vpack.c.b16 %v1483, %v1477
    %v2048 = vpack.c.b16 %v1484, %v1478
    %v2049 = vpack.c.b16 %v1485, %v1479
    %v2050 = vpack.c.b16 %v1492, %v1486
    %v2051 = vpack.c.b16 %v1493, %v1487
    %v2052 = vpack.c.b16 %v1494, %v1488
    %v2053 = vpack.c.b16 %v1495, %v1489
    %v2054 = vpack.c.b16 %v1496, %v1490
    %v2055 = vpack.c.b16 %v1497, %v1491
    %v2056 = vpack.c.b16 %v1504, %v1498
    %v2057 = vpack.c.b16 %v1505, %v1499
    %v2058 = vpack.c.b16 %v1506, %v1500
    %v2059 = vpack.c.b16 %v1507, %v1501
    %v2060 = vpack.c.b16 %v1508, %v1502
    %v2061 = vpack.c.b16 %v1509, %v1503
    %v2062 = vpack.c.b16 %v1516, %v1510
    %v2063 = vpack.c.b16 %v1517, %v1511
    %v2064 = vpack.c.b16 %v1518, %v1512
    %v2065 = vpack.c.b16 %v1519, %v1513
    %v2066 = vpack.c.b16 %v1520, %v1514
    %v2067 = vpack.c.b16 %v1521, %v1515
    %v2068 = vpack.c.b16 %v1528, %v1522
    %v2069 = vpack.c.b16 %v1529, %v1523
    %v2070 = vpack.c.b16 %v1530, %v1524
    %v2071 = vpack.c.b16 %v1531, %v1525
    %v2072 = vpack.c.b16 %v1532, %v1526
    %v2073 = vpack.c.b16 %v1533, %v1527
    %v2074 = vpack.c.b16 %v1540, %v1534
    %v2075 = vpack.c.b16 %v1541, %v1535
    %v2076 = vpack.c.b16 %v1542, %v1536
    %v2077 = vpack.c.b16 %v1543, %v1537
    %v2078 = vpack.c.b16 %v1544, %v1538
    %v2079 = vpack.c.b16 %v1545, %v1539
    %v2080 = vpack.c.b16 %v1552, %v1546
    %v2081 = vpack.c.b16 %v1553, %v1547
    %v2082 = vpack.c.b16 %v1554, %v1548
    %v2083 = vpack.c.b16 %v1555, %v1549
    %v2084 = vpack.c.b16 %v1556, %v1550
    %v2085 = vpack.c.b16 %v1557, %v1551
    %v2086 = vpack.c.b16 %v1564, %v1558
    %v2087 = vpack.c.b16 %v1565, %v1559
    %v2088 = vpack.c.b16 %v1566, %v1560
    %v2089 = vpack.c.b16 %v1567, %v1561
    %v2090 = vpack.c.b16 %v1568, %v1562
    %v2091 = vpack.c.b16 %v1569, %v1563
    %v2092 = vpack.c.b16 %v1576, %v1570
    %v2093 = vpack.c.b16 %v1577, %v1571
    %v2094 = vpack.c.b16 %v1578, %v1572
    %v2095 = vpack.c.b16 %v1579, %v1573
    %v2096 = vpack.c.b16 %v1580, %v1574
    %v2097 = vpack.c.b16 %v1581, %v1575
    %v2098 = vpack.c.b16 %v1588, %v1582
    %v2099 = vpack.c.b16 %v1589, %v1583
    %v2100 = vpack.c.b16 %v1590, %v1584
    %v2101 = vpack.c.b16 %v1591, %v1585
    %v2102 = vpack.c.b16 %v1592, %v1586
    %v2103 = vpack.c.b16 %v1593, %v1587
    %v2104 = vpack.c.b16 %v1600, %v1594
    %v2105 = vpack.c.b16 %v1601, %v1595
    %v2106 = vpack.c.b16 %v1602, %v1596
    %v2107 = vpack.c.b16 %v1603, %v1597
    %v2108 = vpack.c.b16 %v1604, %v1598
    %v2109 = vpack.c.b16 %v1605, %v1599
    %v2110 = vpack.c.b16 %v1612, %v1606
    %v2111 = vpack.c.b16 %v1613, %v1607
    %v2112 = vpack.c.b16 %v1614, %v1608
    %v2113 = vpack.c.b16 %v1615, %v1609
    %v2114 = vpack.c.b16 %v1616, %v1610
    %v2115 = vpack.c.b16 %v1617, %v1611
    %v2116 = vpack.c.b16 %v1624, %v1618
    %v2117 = vpack.c.b16 %v1625, %v1619
    %v2118 = vpack.c.b16 %v1626, %v1620
    %v2119 = vpack.c.b16 %v1627, %v1621
    %v2120 = vpack.c.b16 %v1628, %v1622
    %v2121 = vpack.c.b16 %v1629, %v1623
    %v2122 = vpack.c.b16 %v1636, %v1630
    %v2123 = vpack.c.b16 %v1637, %v1631
    %v2124 = vpack.c.b16 %v1638, %v1632
    %v2125 = vpack.c.b16 %v1639, %v1633
    %v2126 = vpack.c.b16 %v1640, %v1634
    %v2127 = vpack.c.b16 %v1641, %v1635
    %v2128 = vpack.c.b16 %v1648, %v1642
    %v2129 = vpack.c.b16 %v1649, %v1643
    %v2130 = vpack.c.b16 %v1650, %v1644
    %v2131 = vpack.c.b16 %v1651, %v1645
    %v2132 = vpack.c.b16 %v1652, %v1646
    %v2133 = vpack.c.b16 %v1653, %v1647
    %v2134 = vpack.c.b16 %v1660, %v1654
    %v2135 = vpack.c.b16 %v1661, %v1655
    %v2136 = vpack.c.b16 %v1662, %v1656
    %v2137 = vpack.c.b16 %v1663, %v1657
    %v2138 = vpack.c.b16 %v1664, %v1658
    %v2139 = vpack.c.b16 %v1665, %v1659
    %v2140 = vpack.c.b16 %v1672, %v1666
    %v2141 = vpack.c.b16 %v1673, %v1667
    %v2142 = vpack.c.b16 %v1674, %v1668
    %v2143 = vpack.c.b16 %v1675, %v1669
    %v2144 = vpack.c.b16 %v1676, %v1670
    %v2145 = vpack.c.b16 %v1677, %v1671
    %v2146 = vpack.c.b16 %v1684, %v1678
    %v2147 = vpack.c.b16 %v1685, %v1679
    %v2148 = vpack.c.b16 %v1686, %v1680
    %v2149 = vpack.c.b16 %v1687, %v1681
    %v2150 = vpack.c.b16 %v1688, %v1682
    %v2151 = vpack.c.b16 %v1689, %v1683
    %v2152 = vpack.c.b16 %v1696, %v1690
    %v2153 = vpack.c.b16 %v1697, %v1691
    %v2154 = vpack.c.b16 %v1698, %v1692
    %v2155 = vpack.c.b16 %v1699, %v1693
    %v2156 = vpack.c.b16 %v1700, %v1694
    %v2157 = vpack.c.b16 %v1701, %v1695
    %v2158 = vpack.c.b16 %v1708, %v1702
    %v2159 = vpack.c.b16 %v1709, %v1703
    %v2160 = vpack.c.b16 %v1710, %v1704
    %v2161 = vpack.c.b16 %v1711, %v1705
    %v2162 = vpack.c.b16 %v1712, %v1706
    %v2163 = vpack.c.b16 %v1713, %v1707
    %v2164 = vpack.c.b16 %v1720, %v1714
    %v2165 = vpack.c.b16 %v1721, %v1715
    %v2166 = vpack.c.b16 %v1722, %v1716
    %v2167 = vpack.c.b16 %v1723, %v1717
    %v2168 = vpack.c.b16 %v1724, %v1718
    %v2169 = vpack.c.b16 %v1725, %v1719
    %v2170 = vpack.c.b16 %v1732, %v1726
    %v2171 = vpack.c.b16 %v1733, %v1727
    %v2172 = vpack.c.b16 %v1734, %v1728
    %v2173 = vpack.c.b16 %v1735, %v1729
    %v2174 = vpack.c.b16 %v1736, %v1730
    %v2175 = vpack.c.b16 %v1737, %v1731
    %v2176 = vpack.c.b16 %v1744, %v1738
    %v2177 = vpack.c.b16 %v1745, %v1739
    %v2178 = vpack.c.b16 %v1746, %v1740
    %v2179 = vpack.c.b16 %v1747, %v1741
    %v2180 = vpack.c.b16 %v1748, %v1742
    %v2181 = vpack.c.b16 %v1749, %v1743
    %v2182 = vpack.c.b16 %v1756, %v1750
    %v2183 = vpack.c.b16 %v1757, %v1751
    %v2184 = vpack.c.b16 %v1758, %v1752
    %v2185 = vpack.c.b16 %v1759, %v1753
    %v2186 = vpack.c.b16 %v1760, %v1754
    %v2187 = vpack.c.b16 %v1761, %v1755
    %v2188 = vpack.c.b16 %v1768, %v1762
    %v2189 = vpack.c.b16 %v1769, %v1763
    %v2190 = vpack.c.b16 %v1770, %v1764
    %v2191 = vpack.c.b16 %v1771, %v1765
    %v2192 = vpack.c.b16 %v1772, %v1766
    %v2193 = vpack.c.b16 %v1773, %v1767
    %v2194 = vpack.c.b16 %v1780, %v1774
    %v2195 = vpack.c.b16 %v1781, %v1775
    %v2196 = vpack.c.b16 %v1782, %v1776
    %v2197 = vpack.c.b16 %v1783, %v1777
    %v2198 = vpack.c.b16 %v1784, %v1778
    %v2199 = vpack.c.b16 %v1785, %v1779
    %v2200 = vpack.c.b16 %v1792, %v1786
    %v2201 = vpack.c.b16 %v1793, %v1787
    %v2202 = vpack.c.b16 %v1794, %v1788
    %v2203 = vpack.c.b16 %v1795, %v1789
    %v2204 = vpack.c.b16 %v1796, %v1790
    %v2205 = vpack.c.b16 %v1797, %v1791
    %v2206 = vpack.c.b16 %v1804, %v1798
    %v2207 = vpack.c.b16 %v1805, %v1799
    %v2208 = vpack.c.b16 %v1806, %v1800
    %v2209 = vpack.c.b16 %v1807, %v1801
    %v2210 = vpack.c.b16 %v1808, %v1802
    %v2211 = vpack.c.b16 %v1809, %v1803
    %v2212 = vpack.c.b16 %v1816, %v1810
    %v2213 = vpack.c.b16 %v1817, %v1811
    %v2214 = vpack.c.b16 %v1818, %v1812
    %v2215 = vpack.c.b16 %v1819, %v1813
    %v2216 = vpack.c.b16 %v1820, %v1814
    %v2217 = vpack.c.b16 %v1821, %v1815
    %v2218 = vpack.c.b16 %v1828, %v1822
    %v2219 = vpack.c.b16 %v1829, %v1823
    %v2220 = vpack.c.b16 %v1830, %v1824
    %v2221 = vpack.c.b16 %v1831, %v1825
    %v2222 = vpack.c.b16 %v1832, %v1826
    %v2223 = vpack.c.b16 %v1833, %v1827
    %v2224 = vpack.c.b16 %v1840, %v1834
    %v2225 = vpack.c.b16 %v1841, %v1835
    %v2226 = vpack.c.b16 %v1842, %v1836
    %v2227 = vpack.c.b16 %v1843, %v1837
    %v2228 = vpack.c.b16 %v1844, %v1838
    %v2229 = vpack.c.b16 %v1845, %v1839
    %2614 = vmatprep.subr.bf16.mxu0 %v1847
    %2615 = vmatpush1.bf16.msra.mxu0 %v1846
    %2616 = vmatprep.subr.bf16.mxu0 %v1853
    %2617 = vmatpush1.bf16.msra.mxu0 %v1852
    %2618 = vmatprep.subr.bf16.mxu0 %v1859
    %2619 = vmatpush1.bf16.msra.mxu0 %v1858
    %2620 = vmatprep.subr.bf16.mxu0 %v1865
    %2621 = vmatpush1.bf16.msra.mxu0 %v1864
    %2622 = vmatprep.subr.bf16.mxu0 %v1871
    %2623 = vmatpush1.bf16.msra.mxu0 %v1870
    %2624 = vmatprep.subr.bf16.mxu0 %v1877
    %2625 = vmatpush1.bf16.msra.mxu0 %v1876
    %2626 = vmatprep.subr.bf16.mxu0 %v1883
    %2627 = vmatpush1.bf16.msra.mxu0 %v1882
    %2628 = vmatprep.subr.bf16.mxu0 %v1889
    %2629 = vmatpush1.bf16.msra.mxu0 %v1888
    %2630 = vmatprep.subr.bf16.mxu0 %v1895
    %2631 = vmatpush1.bf16.msra.mxu0 %v1894
    %2632 = vmatprep.subr.bf16.mxu0 %v1901
    %2633 = vmatpush1.bf16.msra.mxu0 %v1900
    %2634 = vmatprep.subr.bf16.mxu0 %v1907
    %2635 = vmatpush1.bf16.msra.mxu0 %v1906
    %2636 = vmatprep.subr.bf16.mxu0 %v1913
    %2637 = vmatpush1.bf16.msra.mxu0 %v1912
    %2638 = vmatprep.subr.bf16.mxu0 %v1919
    %2639 = vmatpush1.bf16.msra.mxu0 %v1918
    %2640 = vmatprep.subr.bf16.mxu0 %v1925
    %2641 = vmatpush1.bf16.msra.mxu0 %v1924
    %2642 = vmatprep.subr.bf16.mxu0 %v1931
    %2643 = vmatpush1.bf16.msra.mxu0 %v1930
    %2644 = vmatprep.subr.bf16.mxu0 %v1937
    %2645 = vmatpush1.bf16.msra.mxu0 %v1936
    %2646 = vmatprep.mubr.bf16.mxu0 %v615
    %2647 = vmatmul.mubr.bf16.gmra.mrb[0].mxu0 %v614
    %v2648 = vpop.f32.mrb[0].mxu0
    %v2649 = vadd.f32 0.0, %v2648
    %v2650 = vpop.f32.mrb[0].mxu0
    %v2651 = vadd.f32 0.0, %v2650
    %v2652 = vpop.f32.mrb[0].mxu0
    %v2653 = vadd.f32 0.0, %v2652
    %v2654 = vpop.f32.mrb[0].mxu0
    %v2655 = vadd.f32 0.0, %v2654
    %2656 = vmatprep.mubr.bf16.mxu0 %v623
    %2657 = vmatmul.mubr.bf16.gmra.mrb[0].mxu0 %v622
    %v2658 = vpop.f32.mrb[0].mxu0
    %v2659 = vadd.f32 0.0, %v2658
    %v2660 = vpop.f32.mrb[0].mxu0
    %v2661 = vadd.f32 0.0, %v2660
    %v2662 = vpop.f32.mrb[0].mxu0
    %v2663 = vadd.f32 0.0, %v2662
    %v2664 = vpop.f32.mrb[0].mxu0
    %v2665 = vadd.f32 0.0, %v2664
    %2666 = vmatprep.mubr.bf16.mxu0 %v631
    %2667 = vmatmul.mubr.bf16.gmra.mrb[0].mxu0 %v630
    %v2668 = vpop.f32.mrb[0].mxu0
    %v2669 = vadd.f32 0.0, %v2668
    %v2670 = vpop.f32.mrb[0].mxu0
    %v2671 = vadd.f32 0.0, %v2670
    %v2672 = vpop.f32.mrb[0].mxu0
    %v2673 = vadd.f32 0.0, %v2672
    %v2674 = vpop.f32.mrb[0].mxu0
    %v2675 = vadd.f32 0.0, %v2674
    %2676 = vmatprep.mubr.bf16.mxu0 %v639
    %2677 = vmatmul.mubr.bf16.gmra.mrb[0].mxu0 %v638
    %v2678 = vpop.f32.mrb[0].mxu0
    %v2679 = vadd.f32 0.0, %v2678
    %v2680 = vpop.f32.mrb[0].mxu0
    %v2681 = vadd.f32 0.0, %v2680
    %v2682 = vpop.f32.mrb[0].mxu0
    %v2683 = vadd.f32 0.0, %v2682
    %v2684 = vpop.f32.mrb[0].mxu0
    %v2685 = vadd.f32 0.0, %v2684
    %2686 = vmatprep.mubr.bf16.mxu0 %v647
    %2687 = vmatmul.mubr.bf16.gmra.mrb[0].mxu0 %v646
    %v2688 = vpop.f32.mrb[0].mxu0
    %v2689 = vadd.f32 0.0, %v2688
    %v2690 = vpop.f32.mrb[0].mxu0
    %v2691 = vadd.f32 0.0, %v2690
    %v2692 = vpop.f32.mrb[0].mxu0
    %v2693 = vadd.f32 0.0, %v2692
    %v2694 = vpop.f32.mrb[0].mxu0
    %v2695 = vadd.f32 0.0, %v2694
    %2696 = vdwg.mxu0
    %2697 = vmatprep.subr.bf16.mxu0 %v1943
    %2698 = vmatpush1.bf16.msra.mxu0 %v1942
    %2699 = vmatprep.subr.bf16.mxu0 %v1949
    %2700 = vmatpush1.bf16.msra.mxu0 %v1948
    %2701 = vmatprep.subr.bf16.mxu0 %v1955
    %2702 = vmatpush1.bf16.msra.mxu0 %v1954
    %2703 = vmatprep.subr.bf16.mxu0 %v1961
    %2704 = vmatpush1.bf16.msra.mxu0 %v1960
    %2705 = vmatprep.subr.bf16.mxu0 %v1967
    %2706 = vmatpush1.bf16.msra.mxu0 %v1966
    %2707 = vmatprep.subr.bf16.mxu0 %v1973
    %2708 = vmatpush1.bf16.msra.mxu0 %v1972
    %2709 = vmatprep.subr.bf16.mxu0 %v1979
    %2710 = vmatpush1.bf16.msra.mxu0 %v1978
    %2711 = vmatprep.subr.bf16.mxu0 %v1985
    %2712 = vmatpush1.bf16.msra.mxu0 %v1984
    %2713 = vmatprep.subr.bf16.mxu0 %v1991
    %2714 = vmatpush1.bf16.msra.mxu0 %v1990
    %2715 = vmatprep.subr.bf16.mxu0 %v1997
    %2716 = vmatpush1.bf16.msra.mxu0 %v1996
    %2717 = vmatprep.subr.bf16.mxu0 %v2003
    %2718 = vmatpush1.bf16.msra.mxu0 %v2002
    %2719 = vmatprep.subr.bf16.mxu0 %v2009
    %2720 = vmatpush1.bf16.msra.mxu0 %v2008
    %2721 = vmatprep.subr.bf16.mxu0 %v2015
    %2722 = vmatpush1.bf16.msra.mxu0 %v2014
    %2723 = vmatprep.subr.bf16.mxu0 %v2021
    %2724 = vmatpush1.bf16.msra.mxu0 %v2020
    %2725 = vmatprep.subr.bf16.mxu0 %v2027
    %2726 = vmatpush1.bf16.msra.mxu0 %v2026
    %2727 = vmatprep.subr.bf16.mxu0 %v2033
    %2728 = vmatpush1.bf16.msra.mxu0 %v2032
    %2729 = vmatprep.mubr.bf16.mxu0 %v617
    %2730 = vmatmul.mubr.bf16.gmra.mrb[0].mxu0 %v616
    %v2731 = vpop.f32.mrb[0].mxu0
    %v2732 = vadd.f32 %v2649, %v2731
    %v2733 = vpop.f32.mrb[0].mxu0
    %v2734 = vadd.f32 %v2651, %v2733
    %v2735 = vpop.f32.mrb[0].mxu0
    %v2736 = vadd.f32 %v2653, %v2735
    %v2737 = vpop.f32.mrb[0].mxu0
    %v2738 = vadd.f32 %v2655, %v2737
    %2739 = vmatprep.mubr.bf16.mxu0 %v625
    %2740 = vmatmul.mubr.bf16.gmra.mrb[0].mxu0 %v624
    %v2741 = vpop.f32.mrb[0].mxu0
    %v2742 = vadd.f32 %v2659, %v2741
    %v2743 = vpop.f32.mrb[0].mxu0
    %v2744 = vadd.f32 %v2661, %v2743
    %v2745 = vpop.f32.mrb[0].mxu0
    %v2746 = vadd.f32 %v2663, %v2745
    %v2747 = vpop.f32.mrb[0].mxu0
    %v2748 = vadd.f32 %v2665, %v2747
    %2749 = vmatprep.mubr.bf16.mxu0 %v633
    %2750 = vmatmul.mubr.bf16.gmra.mrb[0].mxu0 %v632
    %v2751 = vpop.f32.mrb[0].mxu0
    %v2752 = vadd.f32 %v2669, %v2751
    %v2753 = vpop.f32.mrb[0].mxu0
    %v2754 = vadd.f32 %v2671, %v2753
    %v2755 = vpop.f32.mrb[0].mxu0
    %v2756 = vadd.f32 %v2673, %v2755
    %v2757 = vpop.f32.mrb[0].mxu0
    %v2758 = vadd.f32 %v2675, %v2757
    %2759 = vmatprep.mubr.bf16.mxu0 %v641
    %2760 = vmatmul.mubr.bf16.gmra.mrb[0].mxu0 %v640
    %v2761 = vpop.f32.mrb[0].mxu0
    %v2762 = vadd.f32 %v2679, %v2761
    %v2763 = vpop.f32.mrb[0].mxu0
    %v2764 = vadd.f32 %v2681, %v2763
    %v2765 = vpop.f32.mrb[0].mxu0
    %v2766 = vadd.f32 %v2683, %v2765
    %v2767 = vpop.f32.mrb[0].mxu0
    %v2768 = vadd.f32 %v2685, %v2767
    %2769 = vmatprep.mubr.bf16.mxu0 %v649
    %2770 = vmatmul.mubr.bf16.gmra.mrb[0].mxu0 %v648
    %v2771 = vpop.f32.mrb[0].mxu0
    %v2772 = vadd.f32 %v2689, %v2771
    %v2773 = vpop.f32.mrb[0].mxu0
    %v2774 = vadd.f32 %v2691, %v2773
    %v2775 = vpop.f32.mrb[0].mxu0
    %v2776 = vadd.f32 %v2693, %v2775
    %v2777 = vpop.f32.mrb[0].mxu0
    %v2778 = vadd.f32 %v2695, %v2777
    %2779 = vdwg.mxu0
    %2780 = vmatprep.subr.bf16.mxu0 %v2039
    %2781 = vmatpush1.bf16.msra.mxu0 %v2038
    %2782 = vmatprep.subr.bf16.mxu0 %v2045
    %2783 = vmatpush1.bf16.msra.mxu0 %v2044
    %2784 = vmatprep.subr.bf16.mxu0 %v2051
    %2785 = vmatpush1.bf16.msra.mxu0 %v2050
    %2786 = vmatprep.subr.bf16.mxu0 %v2057
    %2787 = vmatpush1.bf16.msra.mxu0 %v2056
    %2788 = vmatprep.subr.bf16.mxu0 %v2063
    %2789 = vmatpush1.bf16.msra.mxu0 %v2062
    %2790 = vmatprep.subr.bf16.mxu0 %v2069
    %2791 = vmatpush1.bf16.msra.mxu0 %v2068
    %2792 = vmatprep.subr.bf16.mxu0 %v2075
    %2793 = vmatpush1.bf16.msra.mxu0 %v2074
    %2794 = vmatprep.subr.bf16.mxu0 %v2081
    %2795 = vmatpush1.bf16.msra.mxu0 %v2080
    %2796 = vmatprep.subr.bf16.mxu0 %v2087
    %2797 = vmatpush1.bf16.msra.mxu0 %v2086
    %2798 = vmatprep.subr.bf16.mxu0 %v2093
    %2799 = vmatpush1.bf16.msra.mxu0 %v2092
    %2800 = vmatprep.subr.bf16.mxu0 %v2099
    %2801 = vmatpush1.bf16.msra.mxu0 %v2098
    %2802 = vmatprep.subr.bf16.mxu0 %v2105
    %2803 = vmatpush1.bf16.msra.mxu0 %v2104
    %2804 = vmatprep.subr.bf16.mxu0 %v2111
    %2805 = vmatpush1.bf16.msra.mxu0 %v2110
    %2806 = vmatprep.subr.bf16.mxu0 %v2117
    %2807 = vmatpush1.bf16.msra.mxu0 %v2116
    %2808 = vmatprep.subr.bf16.mxu0 %v2123
    %2809 = vmatpush1.bf16.msra.mxu0 %v2122
    %2810 = vmatprep.subr.bf16.mxu0 %v2129
    %2811 = vmatpush1.bf16.msra.mxu0 %v2128
    %2812 = vmatprep.mubr.bf16.mxu0 %v619
    %2813 = vmatmul.mubr.bf16.gmra.mrb[0].mxu0 %v618
    %v2814 = vpop.f32.mrb[0].mxu0
    %v2815 = vadd.f32 %v2732, %v2814
    %v2816 = vpop.f32.mrb[0].mxu0
    %v2817 = vadd.f32 %v2734, %v2816
    %v2818 = vpop.f32.mrb[0].mxu0
    %v2819 = vadd.f32 %v2736, %v2818
    %v2820 = vpop.f32.mrb[0].mxu0
    %v2821 = vadd.f32 %v2738, %v2820
    %2822 = vmatprep.mubr.bf16.mxu0 %v627
    %2823 = vmatmul.mubr.bf16.gmra.mrb[0].mxu0 %v626
    %v2824 = vpop.f32.mrb[0].mxu0
    %v2825 = vadd.f32 %v2742, %v2824
    %v2826 = vpop.f32.mrb[0].mxu0
    %v2827 = vadd.f32 %v2744, %v2826
    %v2828 = vpop.f32.mrb[0].mxu0
    %v2829 = vadd.f32 %v2746, %v2828
    %v2830 = vpop.f32.mrb[0].mxu0
    %v2831 = vadd.f32 %v2748, %v2830
    %2832 = vmatprep.mubr.bf16.mxu0 %v635
    %2833 = vmatmul.mubr.bf16.gmra.mrb[0].mxu0 %v634
    %v2834 = vpop.f32.mrb[0].mxu0
    %v2835 = vadd.f32 %v2752, %v2834
    %v2836 = vpop.f32.mrb[0].mxu0
    %v2837 = vadd.f32 %v2754, %v2836
    %v2838 = vpop.f32.mrb[0].mxu0
    %v2839 = vadd.f32 %v2756, %v2838
    %v2840 = vpop.f32.mrb[0].mxu0
    %v2841 = vadd.f32 %v2758, %v2840
    %2842 = vmatprep.mubr.bf16.mxu0 %v643
    %2843 = vmatmul.mubr.bf16.gmra.mrb[0].mxu0 %v642
    %v2844 = vpop.f32.mrb[0].mxu0
    %v2845 = vadd.f32 %v2762, %v2844
    %v2846 = vpop.f32.mrb[0].mxu0
    %v2847 = vadd.f32 %v2764, %v2846
    %v2848 = vpop.f32.mrb[0].mxu0
    %v2849 = vadd.f32 %v2766, %v2848
    %v2850 = vpop.f32.mrb[0].mxu0
    %v2851 = vadd.f32 %v2768, %v2850
    %2852 = vmatprep.mubr.bf16.mxu0 %v651
    %2853 = vmatmul.mubr.bf16.gmra.mrb[0].mxu0 %v650
    %v2854 = vpop.f32.mrb[0].mxu0
    %v2855 = vadd.f32 %v2772, %v2854
    %v2856 = vpop.f32.mrb[0].mxu0
    %v2857 = vadd.f32 %v2774, %v2856
    %v2858 = vpop.f32.mrb[0].mxu0
    %v2859 = vadd.f32 %v2776, %v2858
    %v2860 = vpop.f32.mrb[0].mxu0
    %v2861 = vadd.f32 %v2778, %v2860
    %2862 = vdwg.mxu0
    %2863 = vmatprep.subr.bf16.mxu0 %v2135
    %2864 = vmatpush1.bf16.msra.mxu0 %v2134
    %2865 = vmatprep.subr.bf16.mxu0 %v2141
    %2866 = vmatpush1.bf16.msra.mxu0 %v2140
    %2867 = vmatprep.subr.bf16.mxu0 %v2147
    %2868 = vmatpush1.bf16.msra.mxu0 %v2146
    %2869 = vmatprep.subr.bf16.mxu0 %v2153
    %2870 = vmatpush1.bf16.msra.mxu0 %v2152
    %2871 = vmatprep.subr.bf16.mxu0 %v2159
    %2872 = vmatpush1.bf16.msra.mxu0 %v2158
    %2873 = vmatprep.subr.bf16.mxu0 %v2165
    %2874 = vmatpush1.bf16.msra.mxu0 %v2164
    %2875 = vmatprep.subr.bf16.mxu0 %v2171
    %2876 = vmatpush1.bf16.msra.mxu0 %v2170
    %2877 = vmatprep.subr.bf16.mxu0 %v2177
    %2878 = vmatpush1.bf16.msra.mxu0 %v2176
    %2879 = vmatprep.subr.bf16.mxu0 %v2183
    %2880 = vmatpush1.bf16.msra.mxu0 %v2182
    %2881 = vmatprep.subr.bf16.mxu0 %v2189
    %2882 = vmatpush1.bf16.msra.mxu0 %v2188
    %2883 = vmatprep.subr.bf16.mxu0 %v2195
    %2884 = vmatpush1.bf16.msra.mxu0 %v2194
    %2885 = vmatprep.subr.bf16.mxu0 %v2201
    %2886 = vmatpush1.bf16.msra.mxu0 %v2200
    %2887 = vmatprep.subr.bf16.mxu0 %v2207
    %2888 = vmatpush1.bf16.msra.mxu0 %v2206
    %2889 = vmatprep.subr.bf16.mxu0 %v2213
    %2890 = vmatpush1.bf16.msra.mxu0 %v2212
    %2891 = vmatprep.subr.bf16.mxu0 %v2219
    %2892 = vmatpush1.bf16.msra.mxu0 %v2218
    %2893 = vmatprep.subr.bf16.mxu0 %v2225
    %2894 = vmatpush1.bf16.msra.mxu0 %v2224
    %2895 = vmatprep.mubr.bf16.mxu0 %v621
    %2896 = vmatmul.mubr.bf16.gmra.mrb[0].mxu0 %v620
    %v2897 = vpop.f32.mrb[0].mxu0
    %v2898 = vadd.f32 %v2815, %v2897
    %v2899 = vpop.f32.mrb[0].mxu0
    %v2900 = vadd.f32 %v2817, %v2899
    %v2901 = vpop.f32.mrb[0].mxu0
    %v2902 = vadd.f32 %v2819, %v2901
    %v2903 = vpop.f32.mrb[0].mxu0
    %v2904 = vadd.f32 %v2821, %v2903
    %2905 = vmatprep.mubr.bf16.mxu0 %v629
    %2906 = vmatmul.mubr.bf16.gmra.mrb[0].mxu0 %v628
    %v2907 = vpop.f32.mrb[0].mxu0
    %v2908 = vadd.f32 %v2825, %v2907
    %v2909 = vpop.f32.mrb[0].mxu0
    %v2910 = vadd.f32 %v2827, %v2909
    %v2911 = vpop.f32.mrb[0].mxu0
    %v2912 = vadd.f32 %v2829, %v2911
    %v2913 = vpop.f32.mrb[0].mxu0
    %v2914 = vadd.f32 %v2831, %v2913
    %2915 = vmatprep.mubr.bf16.mxu0 %v637
    %2916 = vmatmul.mubr.bf16.gmra.mrb[0].mxu0 %v636
    %v2917 = vpop.f32.mrb[0].mxu0
    %v2918 = vadd.f32 %v2835, %v2917
    %v2919 = vpop.f32.mrb[0].mxu0
    %v2920 = vadd.f32 %v2837, %v2919
    %v2921 = vpop.f32.mrb[0].mxu0
    %v2922 = vadd.f32 %v2839, %v2921
    %v2923 = vpop.f32.mrb[0].mxu0
    %v2924 = vadd.f32 %v2841, %v2923
    %2925 = vmatprep.mubr.bf16.mxu0 %v645
    %2926 = vmatmul.mubr.bf16.gmra.mrb[0].mxu0 %v644
    %v2927 = vpop.f32.mrb[0].mxu0
    %v2928 = vadd.f32 %v2845, %v2927
    %v2929 = vpop.f32.mrb[0].mxu0
    %v2930 = vadd.f32 %v2847, %v2929
    %v2931 = vpop.f32.mrb[0].mxu0
    %v2932 = vadd.f32 %v2849, %v2931
    %v2933 = vpop.f32.mrb[0].mxu0
    %v2934 = vadd.f32 %v2851, %v2933
    %2935 = vmatprep.mubr.bf16.mxu0 %v653
    %2936 = vmatmul.mubr.bf16.gmra.mrb[0].mxu0 %v652
    %v2937 = vpop.f32.mrb[0].mxu0
    %v2938 = vadd.f32 %v2855, %v2937
    %v2939 = vpop.f32.mrb[0].mxu0
    %v2940 = vadd.f32 %v2857, %v2939
    %v2941 = vpop.f32.mrb[0].mxu0
    %v2942 = vadd.f32 %v2859, %v2941
    %v2943 = vpop.f32.mrb[0].mxu0
    %v2944 = vadd.f32 %v2861, %v2943
    %2945 = vdwg.mxu0
    %2946 = vmatprep.subr.bf16.mxu0 %v1849
    %2947 = vmatpush1.bf16.msra.mxu0 %v1848
    %2948 = vmatprep.subr.bf16.mxu0 %v1855
    %2949 = vmatpush1.bf16.msra.mxu0 %v1854
    %2950 = vmatprep.subr.bf16.mxu0 %v1861
    %2951 = vmatpush1.bf16.msra.mxu0 %v1860
    %2952 = vmatprep.subr.bf16.mxu0 %v1867
    %2953 = vmatpush1.bf16.msra.mxu0 %v1866
    %2954 = vmatprep.subr.bf16.mxu0 %v1873
    %2955 = vmatpush1.bf16.msra.mxu0 %v1872
    %2956 = vmatprep.subr.bf16.mxu0 %v1879
    %2957 = vmatpush1.bf16.msra.mxu0 %v1878
    %2958 = vmatprep.subr.bf16.mxu0 %v1885
    %2959 = vmatpush1.bf16.msra.mxu0 %v1884
    %2960 = vmatprep.subr.bf16.mxu0 %v1891
    %2961 = vmatpush1.bf16.msra.mxu0 %v1890
    %2962 = vmatprep.subr.bf16.mxu0 %v1897
    %2963 = vmatpush1.bf16.msra.mxu0 %v1896
    %2964 = vmatprep.subr.bf16.mxu0 %v1903
    %2965 = vmatpush1.bf16.msra.mxu0 %v1902
    %2966 = vmatprep.subr.bf16.mxu0 %v1909
    %2967 = vmatpush1.bf16.msra.mxu0 %v1908
    %2968 = vmatprep.subr.bf16.mxu0 %v1915
    %2969 = vmatpush1.bf16.msra.mxu0 %v1914
    %2970 = vmatprep.subr.bf16.mxu0 %v1921
    %2971 = vmatpush1.bf16.msra.mxu0 %v1920
    %2972 = vmatprep.subr.bf16.mxu0 %v1927
    %2973 = vmatpush1.bf16.msra.mxu0 %v1926
    %2974 = vmatprep.subr.bf16.mxu0 %v1933
    %2975 = vmatpush1.bf16.msra.mxu0 %v1932
    %2976 = vmatprep.subr.bf16.mxu0 %v1939
    %2977 = vmatpush1.bf16.msra.mxu0 %v1938
    %2978 = vmatprep.mubr.bf16.mxu0 %v615
    %2979 = vmatmul.mubr.bf16.gmra.mrb[0].mxu0 %v614
    %v2980 = vpop.f32.mrb[0].mxu0
    %v2981 = vadd.f32 0.0, %v2980
    %v2982 = vpop.f32.mrb[0].mxu0
    %v2983 = vadd.f32 0.0, %v2982
    %v2984 = vpop.f32.mrb[0].mxu0
    %v2985 = vadd.f32 0.0, %v2984
    %v2986 = vpop.f32.mrb[0].mxu0
    %v2987 = vadd.f32 0.0, %v2986
    %2988 = vmatprep.mubr.bf16.mxu0 %v623
    %2989 = vmatmul.mubr.bf16.gmra.mrb[0].mxu0 %v622
    %v2990 = vpop.f32.mrb[0].mxu0
    %v2991 = vadd.f32 0.0, %v2990
    %v2992 = vpop.f32.mrb[0].mxu0
    %v2993 = vadd.f32 0.0, %v2992
    %v2994 = vpop.f32.mrb[0].mxu0
    %v2995 = vadd.f32 0.0, %v2994
    %v2996 = vpop.f32.mrb[0].mxu0
    %v2997 = vadd.f32 0.0, %v2996
    %2998 = vmatprep.mubr.bf16.mxu0 %v631
    %2999 = vmatmul.mubr.bf16.gmra.mrb[0].mxu0 %v630
    %v3000 = vpop.f32.mrb[0].mxu0
    %v3001 = vadd.f32 0.0, %v3000
    %v3002 = vpop.f32.mrb[0].mxu0
    %v3003 = vadd.f32 0.0, %v3002
    %v3004 = vpop.f32.mrb[0].mxu0
    %v3005 = vadd.f32 0.0, %v3004
    %v3006 = vpop.f32.mrb[0].mxu0
    %v3007 = vadd.f32 0.0, %v3006
    %3008 = vmatprep.mubr.bf16.mxu0 %v639
    %3009 = vmatmul.mubr.bf16.gmra.mrb[0].mxu0 %v638
    %v3010 = vpop.f32.mrb[0].mxu0
    %v3011 = vadd.f32 0.0, %v3010
    %v3012 = vpop.f32.mrb[0].mxu0
    %v3013 = vadd.f32 0.0, %v3012
    %v3014 = vpop.f32.mrb[0].mxu0
    %v3015 = vadd.f32 0.0, %v3014
    %v3016 = vpop.f32.mrb[0].mxu0
    %v3017 = vadd.f32 0.0, %v3016
    %3018 = vmatprep.mubr.bf16.mxu0 %v647
    %3019 = vmatmul.mubr.bf16.gmra.mrb[0].mxu0 %v646
    %v3020 = vpop.f32.mrb[0].mxu0
    %v3021 = vadd.f32 0.0, %v3020
    %v3022 = vpop.f32.mrb[0].mxu0
    %v3023 = vadd.f32 0.0, %v3022
    %v3024 = vpop.f32.mrb[0].mxu0
    %v3025 = vadd.f32 0.0, %v3024
    %v3026 = vpop.f32.mrb[0].mxu0
    %v3027 = vadd.f32 0.0, %v3026
    %3028 = vdwg.mxu0
    %3029 = vmatprep.subr.bf16.mxu0 %v1945
    %3030 = vmatpush1.bf16.msra.mxu0 %v1944
    %3031 = vmatprep.subr.bf16.mxu0 %v1951
    %3032 = vmatpush1.bf16.msra.mxu0 %v1950
    %3033 = vmatprep.subr.bf16.mxu0 %v1957
    %3034 = vmatpush1.bf16.msra.mxu0 %v1956
    %3035 = vmatprep.subr.bf16.mxu0 %v1963
    %3036 = vmatpush1.bf16.msra.mxu0 %v1962
    %3037 = vmatprep.subr.bf16.mxu0 %v1969
    %3038 = vmatpush1.bf16.msra.mxu0 %v1968
    %3039 = vmatprep.subr.bf16.mxu0 %v1975
    %3040 = vmatpush1.bf16.msra.mxu0 %v1974
    %3041 = vmatprep.subr.bf16.mxu0 %v1981
    %3042 = vmatpush1.bf16.msra.mxu0 %v1980
    %3043 = vmatprep.subr.bf16.mxu0 %v1987
    %3044 = vmatpush1.bf16.msra.mxu0 %v1986
    %3045 = vmatprep.subr.bf16.mxu0 %v1993
    %3046 = vmatpush1.bf16.msra.mxu0 %v1992
    %3047 = vmatprep.subr.bf16.mxu0 %v1999
    %3048 = vmatpush1.bf16.msra.mxu0 %v1998
    %3049 = vmatprep.subr.bf16.mxu0 %v2005
    %3050 = vmatpush1.bf16.msra.mxu0 %v2004
    %3051 = vmatprep.subr.bf16.mxu0 %v2011
    %3052 = vmatpush1.bf16.msra.mxu0 %v2010
    %3053 = vmatprep.subr.bf16.mxu0 %v2017
    %3054 = vmatpush1.bf16.msra.mxu0 %v2016
    %3055 = vmatprep.subr.bf16.mxu0 %v2023
    %3056 = vmatpush1.bf16.msra.mxu0 %v2022
    %3057 = vmatprep.subr.bf16.mxu0 %v2029
    %3058 = vmatpush1.bf16.msra.mxu0 %v2028
    %3059 = vmatprep.subr.bf16.mxu0 %v2035
    %3060 = vmatpush1.bf16.msra.mxu0 %v2034
    %3061 = vmatprep.mubr.bf16.mxu0 %v617
    %3062 = vmatmul.mubr.bf16.gmra.mrb[0].mxu0 %v616
    %v3063 = vpop.f32.mrb[0].mxu0
    %v3064 = vadd.f32 %v2981, %v3063
    %v3065 = vpop.f32.mrb[0].mxu0
    %v3066 = vadd.f32 %v2983, %v3065
    %v3067 = vpop.f32.mrb[0].mxu0
    %v3068 = vadd.f32 %v2985, %v3067
    %v3069 = vpop.f32.mrb[0].mxu0
    %v3070 = vadd.f32 %v2987, %v3069
    %3071 = vmatprep.mubr.bf16.mxu0 %v625
    %3072 = vmatmul.mubr.bf16.gmra.mrb[0].mxu0 %v624
    %v3073 = vpop.f32.mrb[0].mxu0
    %v3074 = vadd.f32 %v2991, %v3073
    %v3075 = vpop.f32.mrb[0].mxu0
    %v3076 = vadd.f32 %v2993, %v3075
    %v3077 = vpop.f32.mrb[0].mxu0
    %v3078 = vadd.f32 %v2995, %v3077
    %v3079 = vpop.f32.mrb[0].mxu0
    %v3080 = vadd.f32 %v2997, %v3079
    %3081 = vmatprep.mubr.bf16.mxu0 %v633
    %3082 = vmatmul.mubr.bf16.gmra.mrb[0].mxu0 %v632
    %v3083 = vpop.f32.mrb[0].mxu0
    %v3084 = vadd.f32 %v3001, %v3083
    %v3085 = vpop.f32.mrb[0].mxu0
    %v3086 = vadd.f32 %v3003, %v3085
    %v3087 = vpop.f32.mrb[0].mxu0
    %v3088 = vadd.f32 %v3005, %v3087
    %v3089 = vpop.f32.mrb[0].mxu0
    %v3090 = vadd.f32 %v3007, %v3089
    %3091 = vmatprep.mubr.bf16.mxu0 %v641
    %3092 = vmatmul.mubr.bf16.gmra.mrb[0].mxu0 %v640
    %v3093 = vpop.f32.mrb[0].mxu0
    %v3094 = vadd.f32 %v3011, %v3093
    %v3095 = vpop.f32.mrb[0].mxu0
    %v3096 = vadd.f32 %v3013, %v3095
    %v3097 = vpop.f32.mrb[0].mxu0
    %v3098 = vadd.f32 %v3015, %v3097
    %v3099 = vpop.f32.mrb[0].mxu0
    %v3100 = vadd.f32 %v3017, %v3099
    %3101 = vmatprep.mubr.bf16.mxu0 %v649
    %3102 = vmatmul.mubr.bf16.gmra.mrb[0].mxu0 %v648
    %v3103 = vpop.f32.mrb[0].mxu0
    %v3104 = vadd.f32 %v3021, %v3103
    %v3105 = vpop.f32.mrb[0].mxu0
    %v3106 = vadd.f32 %v3023, %v3105
    %v3107 = vpop.f32.mrb[0].mxu0
    %v3108 = vadd.f32 %v3025, %v3107
    %v3109 = vpop.f32.mrb[0].mxu0
    %v3110 = vadd.f32 %v3027, %v3109
    %3111 = vdwg.mxu0
    %3112 = vmatprep.subr.bf16.mxu0 %v2041
    %3113 = vmatpush1.bf16.msra.mxu0 %v2040
    %3114 = vmatprep.subr.bf16.mxu0 %v2047
    %3115 = vmatpush1.bf16.msra.mxu0 %v2046
    %3116 = vmatprep.subr.bf16.mxu0 %v2053
    %3117 = vmatpush1.bf16.msra.mxu0 %v2052
    %3118 = vmatprep.subr.bf16.mxu0 %v2059
    %3119 = vmatpush1.bf16.msra.mxu0 %v2058
    %3120 = vmatprep.subr.bf16.mxu0 %v2065
    %3121 = vmatpush1.bf16.msra.mxu0 %v2064
    %3122 = vmatprep.subr.bf16.mxu0 %v2071
    %3123 = vmatpush1.bf16.msra.mxu0 %v2070
    %3124 = vmatprep.subr.bf16.mxu0 %v2077
    %3125 = vmatpush1.bf16.msra.mxu0 %v2076
    %3126 = vmatprep.subr.bf16.mxu0 %v2083
    %3127 = vmatpush1.bf16.msra.mxu0 %v2082
    %3128 = vmatprep.subr.bf16.mxu0 %v2089
    %3129 = vmatpush1.bf16.msra.mxu0 %v2088
    %3130 = vmatprep.subr.bf16.mxu0 %v2095
    %3131 = vmatpush1.bf16.msra.mxu0 %v2094
    %3132 = vmatprep.subr.bf16.mxu0 %v2101
    %3133 = vmatpush1.bf16.msra.mxu0 %v2100
    %3134 = vmatprep.subr.bf16.mxu0 %v2107
    %3135 = vmatpush1.bf16.msra.mxu0 %v2106
    %3136 = vmatprep.subr.bf16.mxu0 %v2113
    %3137 = vmatpush1.bf16.msra.mxu0 %v2112
    %3138 = vmatprep.subr.bf16.mxu0 %v2119
    %3139 = vmatpush1.bf16.msra.mxu0 %v2118
    %3140 = vmatprep.subr.bf16.mxu0 %v2125
    %3141 = vmatpush1.bf16.msra.mxu0 %v2124
    %3142 = vmatprep.subr.bf16.mxu0 %v2131
    %3143 = vmatpush1.bf16.msra.mxu0 %v2130
    %3144 = vmatprep.mubr.bf16.mxu0 %v619
    %3145 = vmatmul.mubr.bf16.gmra.mrb[0].mxu0 %v618
    %v3146 = vpop.f32.mrb[0].mxu0
    %v3147 = vadd.f32 %v3064, %v3146
    %v3148 = vpop.f32.mrb[0].mxu0
    %v3149 = vadd.f32 %v3066, %v3148
    %v3150 = vpop.f32.mrb[0].mxu0
    %v3151 = vadd.f32 %v3068, %v3150
    %v3152 = vpop.f32.mrb[0].mxu0
    %v3153 = vadd.f32 %v3070, %v3152
    %3154 = vmatprep.mubr.bf16.mxu0 %v627
    %3155 = vmatmul.mubr.bf16.gmra.mrb[0].mxu0 %v626
    %v3156 = vpop.f32.mrb[0].mxu0
    %v3157 = vadd.f32 %v3074, %v3156
    %v3158 = vpop.f32.mrb[0].mxu0
    %v3159 = vadd.f32 %v3076, %v3158
    %v3160 = vpop.f32.mrb[0].mxu0
    %v3161 = vadd.f32 %v3078, %v3160
    %v3162 = vpop.f32.mrb[0].mxu0
    %v3163 = vadd.f32 %v3080, %v3162
    %3164 = vmatprep.mubr.bf16.mxu0 %v635
    %3165 = vmatmul.mubr.bf16.gmra.mrb[0].mxu0 %v634
    %v3166 = vpop.f32.mrb[0].mxu0
    %v3167 = vadd.f32 %v3084, %v3166
    %v3168 = vpop.f32.mrb[0].mxu0
    %v3169 = vadd.f32 %v3086, %v3168
    %v3170 = vpop.f32.mrb[0].mxu0
    %v3171 = vadd.f32 %v3088, %v3170
    %v3172 = vpop.f32.mrb[0].mxu0
    %v3173 = vadd.f32 %v3090, %v3172
    %3174 = vmatprep.mubr.bf16.mxu0 %v643
    %3175 = vmatmul.mubr.bf16.gmra.mrb[0].mxu0 %v642
    %v3176 = vpop.f32.mrb[0].mxu0
    %v3177 = vadd.f32 %v3094, %v3176
    %v3178 = vpop.f32.mrb[0].mxu0
    %v3179 = vadd.f32 %v3096, %v3178
    %v3180 = vpop.f32.mrb[0].mxu0
    %v3181 = vadd.f32 %v3098, %v3180
    %v3182 = vpop.f32.mrb[0].mxu0
    %v3183 = vadd.f32 %v3100, %v3182
    %3184 = vmatprep.mubr.bf16.mxu0 %v651
    %3185 = vmatmul.mubr.bf16.gmra.mrb[0].mxu0 %v650
    %v3186 = vpop.f32.mrb[0].mxu0
    %v3187 = vadd.f32 %v3104, %v3186
    %v3188 = vpop.f32.mrb[0].mxu0
    %v3189 = vadd.f32 %v3106, %v3188
    %v3190 = vpop.f32.mrb[0].mxu0
    %v3191 = vadd.f32 %v3108, %v3190
    %v3192 = vpop.f32.mrb[0].mxu0
    %v3193 = vadd.f32 %v3110, %v3192
    %3194 = vdwg.mxu0
    %3195 = vmatprep.subr.bf16.mxu0 %v2137
    %3196 = vmatpush1.bf16.msra.mxu0 %v2136
    %3197 = vmatprep.subr.bf16.mxu0 %v2143
    %3198 = vmatpush1.bf16.msra.mxu0 %v2142
    %3199 = vmatprep.subr.bf16.mxu0 %v2149
    %3200 = vmatpush1.bf16.msra.mxu0 %v2148
    %3201 = vmatprep.subr.bf16.mxu0 %v2155
    %3202 = vmatpush1.bf16.msra.mxu0 %v2154
    %3203 = vmatprep.subr.bf16.mxu0 %v2161
    %3204 = vmatpush1.bf16.msra.mxu0 %v2160
    %3205 = vmatprep.subr.bf16.mxu0 %v2167
    %3206 = vmatpush1.bf16.msra.mxu0 %v2166
    %3207 = vmatprep.subr.bf16.mxu0 %v2173
    %3208 = vmatpush1.bf16.msra.mxu0 %v2172
    %3209 = vmatprep.subr.bf16.mxu0 %v2179
    %3210 = vmatpush1.bf16.msra.mxu0 %v2178
    %3211 = vmatprep.subr.bf16.mxu0 %v2185
    %3212 = vmatpush1.bf16.msra.mxu0 %v2184
    %3213 = vmatprep.subr.bf16.mxu0 %v2191
    %3214 = vmatpush1.bf16.msra.mxu0 %v2190
    %3215 = vmatprep.subr.bf16.mxu0 %v2197
    %3216 = vmatpush1.bf16.msra.mxu0 %v2196
    %3217 = vmatprep.subr.bf16.mxu0 %v2203
    %3218 = vmatpush1.bf16.msra.mxu0 %v2202
    %3219 = vmatprep.subr.bf16.mxu0 %v2209
    %3220 = vmatpush1.bf16.msra.mxu0 %v2208
    %3221 = vmatprep.subr.bf16.mxu0 %v2215
    %3222 = vmatpush1.bf16.msra.mxu0 %v2214
    %3223 = vmatprep.subr.bf16.mxu0 %v2221
    %3224 = vmatpush1.bf16.msra.mxu0 %v2220
    %3225 = vmatprep.subr.bf16.mxu0 %v2227
    %3226 = vmatpush1.bf16.msra.mxu0 %v2226
    %3227 = vmatprep.mubr.bf16.mxu0 %v621
    %3228 = vmatmul.mubr.bf16.gmra.mrb[0].mxu0 %v620
    %v3229 = vpop.f32.mrb[0].mxu0
    %v3230 = vadd.f32 %v3147, %v3229
    %v3231 = vpop.f32.mrb[0].mxu0
    %v3232 = vadd.f32 %v3149, %v3231
    %v3233 = vpop.f32.mrb[0].mxu0
    %v3234 = vadd.f32 %v3151, %v3233
    %v3235 = vpop.f32.mrb[0].mxu0
    %v3236 = vadd.f32 %v3153, %v3235
    %3237 = vmatprep.mubr.bf16.mxu0 %v629
    %3238 = vmatmul.mubr.bf16.gmra.mrb[0].mxu0 %v628
    %v3239 = vpop.f32.mrb[0].mxu0
    %v3240 = vadd.f32 %v3157, %v3239
    %v3241 = vpop.f32.mrb[0].mxu0
    %v3242 = vadd.f32 %v3159, %v3241
    %v3243 = vpop.f32.mrb[0].mxu0
    %v3244 = vadd.f32 %v3161, %v3243
    %v3245 = vpop.f32.mrb[0].mxu0
    %v3246 = vadd.f32 %v3163, %v3245
    %3247 = vmatprep.mubr.bf16.mxu0 %v637
    %3248 = vmatmul.mubr.bf16.gmra.mrb[0].mxu0 %v636
    %v3249 = vpop.f32.mrb[0].mxu0
    %v3250 = vadd.f32 %v3167, %v3249
    %v3251 = vpop.f32.mrb[0].mxu0
    %v3252 = vadd.f32 %v3169, %v3251
    %v3253 = vpop.f32.mrb[0].mxu0
    %v3254 = vadd.f32 %v3171, %v3253
    %v3255 = vpop.f32.mrb[0].mxu0
    %v3256 = vadd.f32 %v3173, %v3255
    %3257 = vmatprep.mubr.bf16.mxu0 %v645
    %3258 = vmatmul.mubr.bf16.gmra.mrb[0].mxu0 %v644
    %v3259 = vpop.f32.mrb[0].mxu0
    %v3260 = vadd.f32 %v3177, %v3259
    %v3261 = vpop.f32.mrb[0].mxu0
    %v3262 = vadd.f32 %v3179, %v3261
    %v3263 = vpop.f32.mrb[0].mxu0
    %v3264 = vadd.f32 %v3181, %v3263
    %v3265 = vpop.f32.mrb[0].mxu0
    %v3266 = vadd.f32 %v3183, %v3265
    %3267 = vmatprep.mubr.bf16.mxu0 %v653
    %3268 = vmatmul.mubr.bf16.gmra.mrb[0].mxu0 %v652
    %v3269 = vpop.f32.mrb[0].mxu0
    %v3270 = vadd.f32 %v3187, %v3269
    %v3271 = vpop.f32.mrb[0].mxu0
    %v3272 = vadd.f32 %v3189, %v3271
    %v3273 = vpop.f32.mrb[0].mxu0
    %v3274 = vadd.f32 %v3191, %v3273
    %v3275 = vpop.f32.mrb[0].mxu0
    %v3276 = vadd.f32 %v3193, %v3275
    %3277 = vdwg.mxu0
    %3278 = vmatprep.subr.bf16.mxu0 %v1851
    %3279 = vmatpush1.bf16.msra.mxu0 %v1850
    %3280 = vmatprep.subr.bf16.mxu0 %v1857
    %3281 = vmatpush1.bf16.msra.mxu0 %v1856
    %3282 = vmatprep.subr.bf16.mxu0 %v1863
    %3283 = vmatpush1.bf16.msra.mxu0 %v1862
    %3284 = vmatprep.subr.bf16.mxu0 %v1869
    %3285 = vmatpush1.bf16.msra.mxu0 %v1868
    %3286 = vmatprep.subr.bf16.mxu0 %v1875
    %3287 = vmatpush1.bf16.msra.mxu0 %v1874
    %3288 = vmatprep.subr.bf16.mxu0 %v1881
    %3289 = vmatpush1.bf16.msra.mxu0 %v1880
    %3290 = vmatprep.subr.bf16.mxu0 %v1887
    %3291 = vmatpush1.bf16.msra.mxu0 %v1886
    %3292 = vmatprep.subr.bf16.mxu0 %v1893
    %3293 = vmatpush1.bf16.msra.mxu0 %v1892
    %3294 = vmatprep.subr.bf16.mxu0 %v1899
    %3295 = vmatpush1.bf16.msra.mxu0 %v1898
    %3296 = vmatprep.subr.bf16.mxu0 %v1905
    %3297 = vmatpush1.bf16.msra.mxu0 %v1904
    %3298 = vmatprep.subr.bf16.mxu0 %v1911
    %3299 = vmatpush1.bf16.msra.mxu0 %v1910
    %3300 = vmatprep.subr.bf16.mxu0 %v1917
    %3301 = vmatpush1.bf16.msra.mxu0 %v1916
    %3302 = vmatprep.subr.bf16.mxu0 %v1923
    %3303 = vmatpush1.bf16.msra.mxu0 %v1922
    %3304 = vmatprep.subr.bf16.mxu0 %v1929
    %3305 = vmatpush1.bf16.msra.mxu0 %v1928
    %3306 = vmatprep.subr.bf16.mxu0 %v1935
    %3307 = vmatpush1.bf16.msra.mxu0 %v1934
    %3308 = vmatprep.subr.bf16.mxu0 %v1941
    %3309 = vmatpush1.bf16.msra.mxu0 %v1940
    %3310 = vmatprep.mubr.bf16.mxu0 %v615
    %3311 = vmatmul.mubr.bf16.gmra.mrb[0].mxu0 %v614
    %v3312 = vpop.f32.mrb[0].mxu0
    %v3313 = vadd.f32 0.0, %v3312
    %v3314 = vpop.f32.mrb[0].mxu0
    %v3315 = vadd.f32 0.0, %v3314
    %v3316 = vpop.f32.mrb[0].mxu0
    %v3317 = vadd.f32 0.0, %v3316
    %v3318 = vpop.f32.mrb[0].mxu0
    %v3319 = vadd.f32 0.0, %v3318
    %3320 = vmatprep.mubr.bf16.mxu0 %v623
    %3321 = vmatmul.mubr.bf16.gmra.mrb[0].mxu0 %v622
    %v3322 = vpop.f32.mrb[0].mxu0
    %v3323 = vadd.f32 0.0, %v3322
    %v3324 = vpop.f32.mrb[0].mxu0
    %v3325 = vadd.f32 0.0, %v3324
    %v3326 = vpop.f32.mrb[0].mxu0
    %v3327 = vadd.f32 0.0, %v3326
    %v3328 = vpop.f32.mrb[0].mxu0
    %v3329 = vadd.f32 0.0, %v3328
    %3330 = vmatprep.mubr.bf16.mxu0 %v631
    %3331 = vmatmul.mubr.bf16.gmra.mrb[0].mxu0 %v630
    %v3332 = vpop.f32.mrb[0].mxu0
    %v3333 = vadd.f32 0.0, %v3332
    %v3334 = vpop.f32.mrb[0].mxu0
    %v3335 = vadd.f32 0.0, %v3334
    %v3336 = vpop.f32.mrb[0].mxu0
    %v3337 = vadd.f32 0.0, %v3336
    %v3338 = vpop.f32.mrb[0].mxu0
    %v3339 = vadd.f32 0.0, %v3338
    %3340 = vmatprep.mubr.bf16.mxu0 %v639
    %3341 = vmatmul.mubr.bf16.gmra.mrb[0].mxu0 %v638
    %v3342 = vpop.f32.mrb[0].mxu0
    %v3343 = vadd.f32 0.0, %v3342
    %v3344 = vpop.f32.mrb[0].mxu0
    %v3345 = vadd.f32 0.0, %v3344
    %v3346 = vpop.f32.mrb[0].mxu0
    %v3347 = vadd.f32 0.0, %v3346
    %v3348 = vpop.f32.mrb[0].mxu0
    %v3349 = vadd.f32 0.0, %v3348
    %3350 = vmatprep.mubr.bf16.mxu0 %v647
    %3351 = vmatmul.mubr.bf16.gmra.mrb[0].mxu0 %v646
    %v3352 = vpop.f32.mrb[0].mxu0
    %v3353 = vadd.f32 0.0, %v3352
    %v3354 = vpop.f32.mrb[0].mxu0
    %v3355 = vadd.f32 0.0, %v3354
    %v3356 = vpop.f32.mrb[0].mxu0
    %v3357 = vadd.f32 0.0, %v3356
    %v3358 = vpop.f32.mrb[0].mxu0
    %v3359 = vadd.f32 0.0, %v3358
    %3360 = vdwg.mxu0
    %3361 = vmatprep.subr.bf16.mxu0 %v1947
    %3362 = vmatpush1.bf16.msra.mxu0 %v1946
    %3363 = vmatprep.subr.bf16.mxu0 %v1953
    %3364 = vmatpush1.bf16.msra.mxu0 %v1952
    %3365 = vmatprep.subr.bf16.mxu0 %v1959
    %3366 = vmatpush1.bf16.msra.mxu0 %v1958
    %3367 = vmatprep.subr.bf16.mxu0 %v1965
    %3368 = vmatpush1.bf16.msra.mxu0 %v1964
    %3369 = vmatprep.subr.bf16.mxu0 %v1971
    %3370 = vmatpush1.bf16.msra.mxu0 %v1970
    %3371 = vmatprep.subr.bf16.mxu0 %v1977
    %3372 = vmatpush1.bf16.msra.mxu0 %v1976
    %3373 = vmatprep.subr.bf16.mxu0 %v1983
    %3374 = vmatpush1.bf16.msra.mxu0 %v1982
    %3375 = vmatprep.subr.bf16.mxu0 %v1989
    %3376 = vmatpush1.bf16.msra.mxu0 %v1988
    %3377 = vmatprep.subr.bf16.mxu0 %v1995
    %3378 = vmatpush1.bf16.msra.mxu0 %v1994
    %3379 = vmatprep.subr.bf16.mxu0 %v2001
    %3380 = vmatpush1.bf16.msra.mxu0 %v2000
    %3381 = vmatprep.subr.bf16.mxu0 %v2007
    %3382 = vmatpush1.bf16.msra.mxu0 %v2006
    %3383 = vmatprep.subr.bf16.mxu0 %v2013
    %3384 = vmatpush1.bf16.msra.mxu0 %v2012
    %3385 = vmatprep.subr.bf16.mxu0 %v2019
    %3386 = vmatpush1.bf16.msra.mxu0 %v2018
    %3387 = vmatprep.subr.bf16.mxu0 %v2025
    %3388 = vmatpush1.bf16.msra.mxu0 %v2024
    %3389 = vmatprep.subr.bf16.mxu0 %v2031
    %3390 = vmatpush1.bf16.msra.mxu0 %v2030
    %3391 = vmatprep.subr.bf16.mxu0 %v2037
    %3392 = vmatpush1.bf16.msra.mxu0 %v2036
    %3393 = vmatprep.mubr.bf16.mxu0 %v617
    %3394 = vmatmul.mubr.bf16.gmra.mrb[0].mxu0 %v616
    %v3395 = vpop.f32.mrb[0].mxu0
    %v3396 = vadd.f32 %v3313, %v3395
    %v3397 = vpop.f32.mrb[0].mxu0
    %v3398 = vadd.f32 %v3315, %v3397
    %v3399 = vpop.f32.mrb[0].mxu0
    %v3400 = vadd.f32 %v3317, %v3399
    %v3401 = vpop.f32.mrb[0].mxu0
    %v3402 = vadd.f32 %v3319, %v3401
    %3403 = vmatprep.mubr.bf16.mxu0 %v625
    %3404 = vmatmul.mubr.bf16.gmra.mrb[0].mxu0 %v624
    %v3405 = vpop.f32.mrb[0].mxu0
    %v3406 = vadd.f32 %v3323, %v3405
    %v3407 = vpop.f32.mrb[0].mxu0
    %v3408 = vadd.f32 %v3325, %v3407
    %v3409 = vpop.f32.mrb[0].mxu0
    %v3410 = vadd.f32 %v3327, %v3409
    %v3411 = vpop.f32.mrb[0].mxu0
    %v3412 = vadd.f32 %v3329, %v3411
    %3413 = vmatprep.mubr.bf16.mxu0 %v633
    %3414 = vmatmul.mubr.bf16.gmra.mrb[0].mxu0 %v632
    %v3415 = vpop.f32.mrb[0].mxu0
    %v3416 = vadd.f32 %v3333, %v3415
    %v3417 = vpop.f32.mrb[0].mxu0
    %v3418 = vadd.f32 %v3335, %v3417
    %v3419 = vpop.f32.mrb[0].mxu0
    %v3420 = vadd.f32 %v3337, %v3419
    %v3421 = vpop.f32.mrb[0].mxu0
    %v3422 = vadd.f32 %v3339, %v3421
    %3423 = vmatprep.mubr.bf16.mxu0 %v641
    %3424 = vmatmul.mubr.bf16.gmra.mrb[0].mxu0 %v640
    %v3425 = vpop.f32.mrb[0].mxu0
    %v3426 = vadd.f32 %v3343, %v3425
    %v3427 = vpop.f32.mrb[0].mxu0
    %v3428 = vadd.f32 %v3345, %v3427
    %v3429 = vpop.f32.mrb[0].mxu0
    %v3430 = vadd.f32 %v3347, %v3429
    %v3431 = vpop.f32.mrb[0].mxu0
    %v3432 = vadd.f32 %v3349, %v3431
    %3433 = vmatprep.mubr.bf16.mxu0 %v649
    %3434 = vmatmul.mubr.bf16.gmra.mrb[0].mxu0 %v648
    %v3435 = vpop.f32.mrb[0].mxu0
    %v3436 = vadd.f32 %v3353, %v3435
    %v3437 = vpop.f32.mrb[0].mxu0
    %v3438 = vadd.f32 %v3355, %v3437
    %v3439 = vpop.f32.mrb[0].mxu0
    %v3440 = vadd.f32 %v3357, %v3439
    %v3441 = vpop.f32.mrb[0].mxu0
    %v3442 = vadd.f32 %v3359, %v3441
    %3443 = vdwg.mxu0
    %3444 = vmatprep.subr.bf16.mxu0 %v2043
    %3445 = vmatpush1.bf16.msra.mxu0 %v2042
    %3446 = vmatprep.subr.bf16.mxu0 %v2049
    %3447 = vmatpush1.bf16.msra.mxu0 %v2048
    %3448 = vmatprep.subr.bf16.mxu0 %v2055
    %3449 = vmatpush1.bf16.msra.mxu0 %v2054
    %3450 = vmatprep.subr.bf16.mxu0 %v2061
    %3451 = vmatpush1.bf16.msra.mxu0 %v2060
    %3452 = vmatprep.subr.bf16.mxu0 %v2067
    %3453 = vmatpush1.bf16.msra.mxu0 %v2066
    %3454 = vmatprep.subr.bf16.mxu0 %v2073
    %3455 = vmatpush1.bf16.msra.mxu0 %v2072
    %3456 = vmatprep.subr.bf16.mxu0 %v2079
    %3457 = vmatpush1.bf16.msra.mxu0 %v2078
    %3458 = vmatprep.subr.bf16.mxu0 %v2085
    %3459 = vmatpush1.bf16.msra.mxu0 %v2084
    %3460 = vmatprep.subr.bf16.mxu0 %v2091
    %3461 = vmatpush1.bf16.msra.mxu0 %v2090
    %3462 = vmatprep.subr.bf16.mxu0 %v2097
    %3463 = vmatpush1.bf16.msra.mxu0 %v2096
    %3464 = vmatprep.subr.bf16.mxu0 %v2103
    %3465 = vmatpush1.bf16.msra.mxu0 %v2102
    %3466 = vmatprep.subr.bf16.mxu0 %v2109
    %3467 = vmatpush1.bf16.msra.mxu0 %v2108
    %3468 = vmatprep.subr.bf16.mxu0 %v2115
    %3469 = vmatpush1.bf16.msra.mxu0 %v2114
    %3470 = vmatprep.subr.bf16.mxu0 %v2121
    %3471 = vmatpush1.bf16.msra.mxu0 %v2120
    %3472 = vmatprep.subr.bf16.mxu0 %v2127
    %3473 = vmatpush1.bf16.msra.mxu0 %v2126
    %3474 = vmatprep.subr.bf16.mxu0 %v2133
    %3475 = vmatpush1.bf16.msra.mxu0 %v2132
    %3476 = vmatprep.mubr.bf16.mxu0 %v619
    %3477 = vmatmul.mubr.bf16.gmra.mrb[0].mxu0 %v618
    %v3478 = vpop.f32.mrb[0].mxu0
    %v3479 = vadd.f32 %v3396, %v3478
    %v3480 = vpop.f32.mrb[0].mxu0
    %v3481 = vadd.f32 %v3398, %v3480
    %v3482 = vpop.f32.mrb[0].mxu0
    %v3483 = vadd.f32 %v3400, %v3482
    %v3484 = vpop.f32.mrb[0].mxu0
    %v3485 = vadd.f32 %v3402, %v3484
    %3486 = vmatprep.mubr.bf16.mxu0 %v627
    %3487 = vmatmul.mubr.bf16.gmra.mrb[0].mxu0 %v626
    %v3488 = vpop.f32.mrb[0].mxu0
    %v3489 = vadd.f32 %v3406, %v3488
    %v3490 = vpop.f32.mrb[0].mxu0
    %v3491 = vadd.f32 %v3408, %v3490
    %v3492 = vpop.f32.mrb[0].mxu0
    %v3493 = vadd.f32 %v3410, %v3492
    %v3494 = vpop.f32.mrb[0].mxu0
    %v3495 = vadd.f32 %v3412, %v3494
    %3496 = vmatprep.mubr.bf16.mxu0 %v635
    %3497 = vmatmul.mubr.bf16.gmra.mrb[0].mxu0 %v634
    %v3498 = vpop.f32.mrb[0].mxu0
    %v3499 = vadd.f32 %v3416, %v3498
    %v3500 = vpop.f32.mrb[0].mxu0
    %v3501 = vadd.f32 %v3418, %v3500
    %v3502 = vpop.f32.mrb[0].mxu0
    %v3503 = vadd.f32 %v3420, %v3502
    %v3504 = vpop.f32.mrb[0].mxu0
    %v3505 = vadd.f32 %v3422, %v3504
    %3506 = vmatprep.mubr.bf16.mxu0 %v643
    %3507 = vmatmul.mubr.bf16.gmra.mrb[0].mxu0 %v642
    %v3508 = vpop.f32.mrb[0].mxu0
    %v3509 = vadd.f32 %v3426, %v3508
    %v3510 = vpop.f32.mrb[0].mxu0
    %v3511 = vadd.f32 %v3428, %v3510
    %v3512 = vpop.f32.mrb[0].mxu0
    %v3513 = vadd.f32 %v3430, %v3512
    %v3514 = vpop.f32.mrb[0].mxu0
    %v3515 = vadd.f32 %v3432, %v3514
    %3516 = vmatprep.mubr.bf16.mxu0 %v651
    %3517 = vmatmul.mubr.bf16.gmra.mrb[0].mxu0 %v650
    %v3518 = vpop.f32.mrb[0].mxu0
    %v3519 = vadd.f32 %v3436, %v3518
    %v3520 = vpop.f32.mrb[0].mxu0
    %v3521 = vadd.f32 %v3438, %v3520
    %v3522 = vpop.f32.mrb[0].mxu0
    %v3523 = vadd.f32 %v3440, %v3522
    %v3524 = vpop.f32.mrb[0].mxu0
    %v3525 = vadd.f32 %v3442, %v3524
    %3526 = vdwg.mxu0
    %3527 = vmatprep.subr.bf16.mxu0 %v2139
    %3528 = vmatpush1.bf16.msra.mxu0 %v2138
    %3529 = vmatprep.subr.bf16.mxu0 %v2145
    %3530 = vmatpush1.bf16.msra.mxu0 %v2144
    %3531 = vmatprep.subr.bf16.mxu0 %v2151
    %3532 = vmatpush1.bf16.msra.mxu0 %v2150
    %3533 = vmatprep.subr.bf16.mxu0 %v2157
    %3534 = vmatpush1.bf16.msra.mxu0 %v2156
    %3535 = vmatprep.subr.bf16.mxu0 %v2163
    %3536 = vmatpush1.bf16.msra.mxu0 %v2162
    %3537 = vmatprep.subr.bf16.mxu0 %v2169
    %3538 = vmatpush1.bf16.msra.mxu0 %v2168
    %3539 = vmatprep.subr.bf16.mxu0 %v2175
    %3540 = vmatpush1.bf16.msra.mxu0 %v2174
    %3541 = vmatprep.subr.bf16.mxu0 %v2181
    %3542 = vmatpush1.bf16.msra.mxu0 %v2180
    %3543 = vmatprep.subr.bf16.mxu0 %v2187
    %3544 = vmatpush1.bf16.msra.mxu0 %v2186
    %3545 = vmatprep.subr.bf16.mxu0 %v2193
    %3546 = vmatpush1.bf16.msra.mxu0 %v2192
    %3547 = vmatprep.subr.bf16.mxu0 %v2199
    %3548 = vmatpush1.bf16.msra.mxu0 %v2198
    %3549 = vmatprep.subr.bf16.mxu0 %v2205
    %3550 = vmatpush1.bf16.msra.mxu0 %v2204
    %3551 = vmatprep.subr.bf16.mxu0 %v2211
    %3552 = vmatpush1.bf16.msra.mxu0 %v2210
    %3553 = vmatprep.subr.bf16.mxu0 %v2217
    %3554 = vmatpush1.bf16.msra.mxu0 %v2216
    %3555 = vmatprep.subr.bf16.mxu0 %v2223
    %3556 = vmatpush1.bf16.msra.mxu0 %v2222
    %3557 = vmatprep.subr.bf16.mxu0 %v2229
    %3558 = vmatpush1.bf16.msra.mxu0 %v2228
    %3559 = vmatprep.mubr.bf16.mxu0 %v621
    %3560 = vmatmul.mubr.bf16.gmra.mrb[0].mxu0 %v620
    %v3561 = vpop.f32.mrb[0].mxu0
    %v3562 = vadd.f32 %v3479, %v3561
    %v3563 = vpop.f32.mrb[0].mxu0
    %v3564 = vadd.f32 %v3481, %v3563
    %v3565 = vpop.f32.mrb[0].mxu0
    %v3566 = vadd.f32 %v3483, %v3565
    %v3567 = vpop.f32.mrb[0].mxu0
    %v3568 = vadd.f32 %v3485, %v3567
    %3569 = vmatprep.mubr.bf16.mxu0 %v629
    %3570 = vmatmul.mubr.bf16.gmra.mrb[0].mxu0 %v628
    %v3571 = vpop.f32.mrb[0].mxu0
    %v3572 = vadd.f32 %v3489, %v3571
    %v3573 = vpop.f32.mrb[0].mxu0
    %v3574 = vadd.f32 %v3491, %v3573
    %v3575 = vpop.f32.mrb[0].mxu0
    %v3576 = vadd.f32 %v3493, %v3575
    %v3577 = vpop.f32.mrb[0].mxu0
    %v3578 = vadd.f32 %v3495, %v3577
    %3579 = vmatprep.mubr.bf16.mxu0 %v637
    %3580 = vmatmul.mubr.bf16.gmra.mrb[0].mxu0 %v636
    %v3581 = vpop.f32.mrb[0].mxu0
    %v3582 = vadd.f32 %v3499, %v3581
    %v3583 = vpop.f32.mrb[0].mxu0
    %v3584 = vadd.f32 %v3501, %v3583
    %v3585 = vpop.f32.mrb[0].mxu0
    %v3586 = vadd.f32 %v3503, %v3585
    %v3587 = vpop.f32.mrb[0].mxu0
    %v3588 = vadd.f32 %v3505, %v3587
    %3589 = vmatprep.mubr.bf16.mxu0 %v645
    %3590 = vmatmul.mubr.bf16.gmra.mrb[0].mxu0 %v644
    %v3591 = vpop.f32.mrb[0].mxu0
    %v3592 = vadd.f32 %v3509, %v3591
    %v3593 = vpop.f32.mrb[0].mxu0
    %v3594 = vadd.f32 %v3511, %v3593
    %v3595 = vpop.f32.mrb[0].mxu0
    %v3596 = vadd.f32 %v3513, %v3595
    %v3597 = vpop.f32.mrb[0].mxu0
    %v3598 = vadd.f32 %v3515, %v3597
    %3599 = vmatprep.mubr.bf16.mxu0 %v653
    %3600 = vmatmul.mubr.bf16.gmra.mrb[0].mxu0 %v652
    %v3601 = vpop.f32.mrb[0].mxu0
    %v3602 = vadd.f32 %v3519, %v3601
    %v3603 = vpop.f32.mrb[0].mxu0
    %v3604 = vadd.f32 %v3521, %v3603
    %v3605 = vpop.f32.mrb[0].mxu0
    %v3606 = vadd.f32 %v3523, %v3605
    %v3607 = vpop.f32.mrb[0].mxu0
    %v3608 = vadd.f32 %v3525, %v3607
    %3609 = vdwg.mxu0
    %v3610 = vadd.f32 %v2898, %v2900
    %v3611 = vadd.f32 %v3610, %v3230
    %v3612 = vadd.f32 %v3611, %v3232
    %v3613 = vadd.f32 %v3612, %v3562
    %v3614 = vadd.f32 %v3613, %v3564
    %3615 = vadd.xlane.f32.xlu0 %v3614
    %v3616 = vpop.xlane.xlu0 %3615
    %v3617 = vadd.f32 %v2902, %v2904
    %v3618 = vadd.f32 %v3617, %v3234
    %v3619 = vadd.f32 %v3618, %v3236
    %v3620 = vadd.f32 %v3619, %v3566
    %v3621 = vadd.f32 %v3620, %v3568
    %3622 = vadd.xlane.f32.xlu0 %v3621
    %v3623 = vpop.xlane.xlu0 %3622
    %v3624 = vadd.f32 %v2908, %v2910
    %v3625 = vadd.f32 %v3624, %v3240
    %v3626 = vadd.f32 %v3625, %v3242
    %v3627 = vadd.f32 %v3626, %v3572
    %v3628 = vadd.f32 %v3627, %v3574
    %3629 = vadd.xlane.f32.xlu0 %v3628
    %v3630 = vpop.xlane.xlu0 %3629
    %v3631 = vadd.f32 %v2912, %v2914
    %v3632 = vadd.f32 %v3631, %v3244
    %v3633 = vadd.f32 %v3632, %v3246
    %v3634 = vadd.f32 %v3633, %v3576
    %v3635 = vadd.f32 %v3634, %v3578
    %3636 = vadd.xlane.f32.xlu0 %v3635
    %v3637 = vpop.xlane.xlu0 %3636
    %v3638 = vadd.f32 %v2918, %v2920
    %v3639 = vadd.f32 %v3638, %v3250
    %v3640 = vadd.f32 %v3639, %v3252
    %v3641 = vadd.f32 %v3640, %v3582
    %v3642 = vadd.f32 %v3641, %v3584
    %3643 = vadd.xlane.f32.xlu0 %v3642
    %v3644 = vpop.xlane.xlu0 %3643
    %v3645 = vadd.f32 %v2922, %v2924
    %v3646 = vadd.f32 %v3645, %v3254
    %v3647 = vadd.f32 %v3646, %v3256
    %v3648 = vadd.f32 %v3647, %v3586
    %v3649 = vadd.f32 %v3648, %v3588
    %3650 = vadd.xlane.f32.xlu0 %v3649
    %v3651 = vpop.xlane.xlu0 %3650
    %v3652 = vadd.f32 %v2928, %v2930
    %v3653 = vadd.f32 %v3652, %v3260
    %v3654 = vadd.f32 %v3653, %v3262
    %v3655 = vadd.f32 %v3654, %v3592
    %v3656 = vadd.f32 %v3655, %v3594
    %3657 = vadd.xlane.f32.xlu0 %v3656
    %v3658 = vpop.xlane.xlu0 %3657
    %v3659 = vadd.f32 %v2932, %v2934
    %v3660 = vadd.f32 %v3659, %v3264
    %v3661 = vadd.f32 %v3660, %v3266
    %v3662 = vadd.f32 %v3661, %v3596
    %v3663 = vadd.f32 %v3662, %v3598
    %3664 = vadd.xlane.f32.xlu0 %v3663
    %v3665 = vpop.xlane.xlu0 %3664
    %v3666 = vadd.f32 %v2938, %v2940
    %v3667 = vadd.f32 %v3666, %v3270
    %v3668 = vadd.f32 %v3667, %v3272
    %v3669 = vadd.f32 %v3668, %v3602
    %v3670 = vadd.f32 %v3669, %v3604
    %3671 = vadd.xlane.f32.xlu0 %v3670
    %v3672 = vpop.xlane.xlu0 %3671
    %vm3673 = vcmask 1044480
    %v3674 = vsel %vm3673, %v2942, 0.0
    %v3675 = vsel %vm3673, %v2944, 0.0
    %v3676 = vadd.f32 %v3674, %v3675
    %v3677 = vsel %vm3673, %v3274, 0.0
    %v3678 = vadd.f32 %v3676, %v3677
    %v3679 = vsel %vm3673, %v3276, 0.0
    %v3680 = vadd.f32 %v3678, %v3679
    %v3681 = vsel %vm3673, %v3606, 0.0
    %v3682 = vadd.f32 %v3680, %v3681
    %v3683 = vsel %vm3673, %v3608, 0.0
    %v3684 = vadd.f32 %v3682, %v3683
    %3685 = vadd.xlane.f32.xlu0 %v3684
    %v3686 = vpop.xlane.xlu0 %3685
    %v3687 = vrcp.pop 768.0
    %v3688 = vmul.f32 %v3616, %v3687
    %v3689 = vmul.f32 %v3623, %v3687
    %v3690 = vmul.f32 %v3630, %v3687
    %v3691 = vmul.f32 %v3637, %v3687
    %v3692 = vmul.f32 %v3644, %v3687
    %v3693 = vmul.f32 %v3651, %v3687
    %v3694 = vmul.f32 %v3658, %v3687
    %v3695 = vmul.f32 %v3665, %v3687
    %v3696 = vmul.f32 %v3672, %v3687
    %v3697 = vmul.f32 %v3686, %v3687
    %v3698 = vsub.f32 %v2898, %v3688
    %v3699 = vsub.f32 %v2900, %v3688
    %v3700 = vsub.f32 %v3230, %v3688
    %v3701 = vsub.f32 %v3232, %v3688
    %v3702 = vsub.f32 %v3562, %v3688
    %v3703 = vsub.f32 %v3564, %v3688
    %v3704 = vsub.f32 %v2902, %v3689
    %v3705 = vsub.f32 %v2904, %v3689
    %v3706 = vsub.f32 %v3234, %v3689
    %v3707 = vsub.f32 %v3236, %v3689
    %v3708 = vsub.f32 %v3566, %v3689
    %v3709 = vsub.f32 %v3568, %v3689
    %v3710 = vsub.f32 %v2908, %v3690
    %v3711 = vsub.f32 %v2910, %v3690
    %v3712 = vsub.f32 %v3240, %v3690
    %v3713 = vsub.f32 %v3242, %v3690
    %v3714 = vsub.f32 %v3572, %v3690
    %v3715 = vsub.f32 %v3574, %v3690
    %v3716 = vsub.f32 %v2912, %v3691
    %v3717 = vsub.f32 %v2914, %v3691
    %v3718 = vsub.f32 %v3244, %v3691
    %v3719 = vsub.f32 %v3246, %v3691
    %v3720 = vsub.f32 %v3576, %v3691
    %v3721 = vsub.f32 %v3578, %v3691
    %v3722 = vsub.f32 %v2918, %v3692
    %v3723 = vsub.f32 %v2920, %v3692
    %v3724 = vsub.f32 %v3250, %v3692
    %v3725 = vsub.f32 %v3252, %v3692
    %v3726 = vsub.f32 %v3582, %v3692
    %v3727 = vsub.f32 %v3584, %v3692
    %v3728 = vsub.f32 %v2922, %v3693
    %v3729 = vsub.f32 %v2924, %v3693
    %v3730 = vsub.f32 %v3254, %v3693
    %v3731 = vsub.f32 %v3256, %v3693
    %v3732 = vsub.f32 %v3586, %v3693
    %v3733 = vsub.f32 %v3588, %v3693
    %v3734 = vsub.f32 %v2928, %v3694
    %v3735 = vsub.f32 %v2930, %v3694
    %v3736 = vsub.f32 %v3260, %v3694
    %v3737 = vsub.f32 %v3262, %v3694
    %v3738 = vsub.f32 %v3592, %v3694
    %v3739 = vsub.f32 %v3594, %v3694
    %v3740 = vsub.f32 %v2932, %v3695
    %v3741 = vsub.f32 %v2934, %v3695
    %v3742 = vsub.f32 %v3264, %v3695
    %v3743 = vsub.f32 %v3266, %v3695
    %v3744 = vsub.f32 %v3596, %v3695
    %v3745 = vsub.f32 %v3598, %v3695
    %v3746 = vsub.f32 %v2938, %v3696
    %v3747 = vsub.f32 %v2940, %v3696
    %v3748 = vsub.f32 %v3270, %v3696
    %v3749 = vsub.f32 %v3272, %v3696
    %v3750 = vsub.f32 %v3602, %v3696
    %v3751 = vsub.f32 %v3604, %v3696
    %v3752 = vsub.f32 %v2942, %v3697
    %v3753 = vsub.f32 %v2944, %v3697
    %v3754 = vsub.f32 %v3274, %v3697
    %v3755 = vsub.f32 %v3276, %v3697
    %v3756 = vsub.f32 %v3606, %v3697
    %v3757 = vsub.f32 %v3608, %v3697
    %v3758 = vmul.f32 %v3698, %v3698
    %v3759 = vmul.f32 %v3699, %v3699
    %v3760 = vmul.f32 %v3700, %v3700
    %v3761 = vmul.f32 %v3701, %v3701
    %v3762 = vmul.f32 %v3702, %v3702
    %v3763 = vmul.f32 %v3703, %v3703
    %v3764 = vmul.f32 %v3704, %v3704
    %v3765 = vmul.f32 %v3705, %v3705
    %v3766 = vmul.f32 %v3706, %v3706
    %v3767 = vmul.f32 %v3707, %v3707
    %v3768 = vmul.f32 %v3708, %v3708
    %v3769 = vmul.f32 %v3709, %v3709
    %v3770 = vmul.f32 %v3710, %v3710
    %v3771 = vmul.f32 %v3711, %v3711
    %v3772 = vmul.f32 %v3712, %v3712
    %v3773 = vmul.f32 %v3713, %v3713
    %v3774 = vmul.f32 %v3714, %v3714
    %v3775 = vmul.f32 %v3715, %v3715
    %v3776 = vmul.f32 %v3716, %v3716
    %v3777 = vmul.f32 %v3717, %v3717
    %v3778 = vmul.f32 %v3718, %v3718
    %v3779 = vmul.f32 %v3719, %v3719
    %v3780 = vmul.f32 %v3720, %v3720
    %v3781 = vmul.f32 %v3721, %v3721
    %v3782 = vmul.f32 %v3722, %v3722
    %v3783 = vmul.f32 %v3723, %v3723
    %v3784 = vmul.f32 %v3724, %v3724
    %v3785 = vmul.f32 %v3725, %v3725
    %v3786 = vmul.f32 %v3726, %v3726
    %v3787 = vmul.f32 %v3727, %v3727
    %v3788 = vmul.f32 %v3728, %v3728
    %v3789 = vmul.f32 %v3729, %v3729
    %v3790 = vmul.f32 %v3730, %v3730
    %v3791 = vmul.f32 %v3731, %v3731
    %v3792 = vmul.f32 %v3732, %v3732
    %v3793 = vmul.f32 %v3733, %v3733
    %v3794 = vmul.f32 %v3734, %v3734
    %v3795 = vmul.f32 %v3735, %v3735
    %v3796 = vmul.f32 %v3736, %v3736
    %v3797 = vmul.f32 %v3737, %v3737
    %v3798 = vmul.f32 %v3738, %v3738
    %v3799 = vmul.f32 %v3739, %v3739
    %v3800 = vmul.f32 %v3740, %v3740
    %v3801 = vmul.f32 %v3741, %v3741
    %v3802 = vmul.f32 %v3742, %v3742
    %v3803 = vmul.f32 %v3743, %v3743
    %v3804 = vmul.f32 %v3744, %v3744
    %v3805 = vmul.f32 %v3745, %v3745
    %v3806 = vmul.f32 %v3746, %v3746
    %v3807 = vmul.f32 %v3747, %v3747
    %v3808 = vmul.f32 %v3748, %v3748
    %v3809 = vmul.f32 %v3749, %v3749
    %v3810 = vmul.f32 %v3750, %v3750
    %v3811 = vmul.f32 %v3751, %v3751
    %v3812 = vmul.f32 %v3752, %v3752
    %v3813 = vmul.f32 %v3753, %v3753
    %v3814 = vmul.f32 %v3754, %v3754
    %v3815 = vmul.f32 %v3755, %v3755
    %v3816 = vmul.f32 %v3756, %v3756
    %v3817 = vmul.f32 %v3757, %v3757
    %v3818 = vadd.f32 %v3758, %v3759
    %v3819 = vadd.f32 %v3818, %v3760
    %v3820 = vadd.f32 %v3819, %v3761
    %v3821 = vadd.f32 %v3820, %v3762
    %v3822 = vadd.f32 %v3821, %v3763
    %3823 = vadd.xlane.f32.xlu0 %v3822
    %v3824 = vpop.xlane.xlu0 %3823
    %v3825 = vadd.f32 %v3764, %v3765
    %v3826 = vadd.f32 %v3825, %v3766
    %v3827 = vadd.f32 %v3826, %v3767
    %v3828 = vadd.f32 %v3827, %v3768
    %v3829 = vadd.f32 %v3828, %v3769
    %3830 = vadd.xlane.f32.xlu0 %v3829
    %v3831 = vpop.xlane.xlu0 %3830
    %v3832 = vadd.f32 %v3770, %v3771
    %v3833 = vadd.f32 %v3832, %v3772
    %v3834 = vadd.f32 %v3833, %v3773
    %v3835 = vadd.f32 %v3834, %v3774
    %v3836 = vadd.f32 %v3835, %v3775
    %3837 = vadd.xlane.f32.xlu0 %v3836
    %v3838 = vpop.xlane.xlu0 %3837
    %v3839 = vadd.f32 %v3776, %v3777
    %v3840 = vadd.f32 %v3839, %v3778
    %v3841 = vadd.f32 %v3840, %v3779
    %v3842 = vadd.f32 %v3841, %v3780
    %v3843 = vadd.f32 %v3842, %v3781
    %3844 = vadd.xlane.f32.xlu0 %v3843
    %v3845 = vpop.xlane.xlu0 %3844
    %v3846 = vadd.f32 %v3782, %v3783
    %v3847 = vadd.f32 %v3846, %v3784
    %v3848 = vadd.f32 %v3847, %v3785
    %v3849 = vadd.f32 %v3848, %v3786
    %v3850 = vadd.f32 %v3849, %v3787
    %3851 = vadd.xlane.f32.xlu0 %v3850
    %v3852 = vpop.xlane.xlu0 %3851
    %v3853 = vadd.f32 %v3788, %v3789
    %v3854 = vadd.f32 %v3853, %v3790
    %v3855 = vadd.f32 %v3854, %v3791
    %v3856 = vadd.f32 %v3855, %v3792
    %v3857 = vadd.f32 %v3856, %v3793
    %3858 = vadd.xlane.f32.xlu0 %v3857
    %v3859 = vpop.xlane.xlu0 %3858
    %v3860 = vadd.f32 %v3794, %v3795
    %v3861 = vadd.f32 %v3860, %v3796
    %v3862 = vadd.f32 %v3861, %v3797
    %v3863 = vadd.f32 %v3862, %v3798
    %v3864 = vadd.f32 %v3863, %v3799
    %3865 = vadd.xlane.f32.xlu0 %v3864
    %v3866 = vpop.xlane.xlu0 %3865
    %v3867 = vadd.f32 %v3800, %v3801
    %v3868 = vadd.f32 %v3867, %v3802
    %v3869 = vadd.f32 %v3868, %v3803
    %v3870 = vadd.f32 %v3869, %v3804
    %v3871 = vadd.f32 %v3870, %v3805
    %3872 = vadd.xlane.f32.xlu0 %v3871
    %v3873 = vpop.xlane.xlu0 %3872
    %v3874 = vadd.f32 %v3806, %v3807
    %v3875 = vadd.f32 %v3874, %v3808
    %v3876 = vadd.f32 %v3875, %v3809
    %v3877 = vadd.f32 %v3876, %v3810
    %v3878 = vadd.f32 %v3877, %v3811
    %3879 = vadd.xlane.f32.xlu0 %v3878
    %v3880 = vpop.xlane.xlu0 %3879
    %v3881 = vsel %vm3673, %v3812, 0.0
    %v3882 = vsel %vm3673, %v3813, 0.0
    %v3883 = vadd.f32 %v3881, %v3882
    %v3884 = vsel %vm3673, %v3814, 0.0
    %v3885 = vadd.f32 %v3883, %v3884
    %v3886 = vsel %vm3673, %v3815, 0.0
    %v3887 = vadd.f32 %v3885, %v3886
    %v3888 = vsel %vm3673, %v3816, 0.0
    %v3889 = vadd.f32 %v3887, %v3888
    %v3890 = vsel %vm3673, %v3817, 0.0
    %v3891 = vadd.f32 %v3889, %v3890
    %3892 = vadd.xlane.f32.xlu0 %v3891
    %v3893 = vpop.xlane.xlu0 %3892
    %v3894 = vmul.f32 %v3824, %v3687
    %v3895 = vmul.f32 %v3831, %v3687
    %v3896 = vmul.f32 %v3838, %v3687
    %v3897 = vmul.f32 %v3845, %v3687
    %v3898 = vmul.f32 %v3852, %v3687
    %v3899 = vmul.f32 %v3859, %v3687
    %v3900 = vmul.f32 %v3866, %v3687
    %v3901 = vmul.f32 %v3873, %v3687
    %v3902 = vmul.f32 %v3880, %v3687
    %v3903 = vmul.f32 %v3893, %v3687
    %v3904 = vadd.f32 %v3894, 1e-05
    %v3905 = vadd.f32 %v3895, 1e-05
    %v3906 = vadd.f32 %v3896, 1e-05
    %v3907 = vadd.f32 %v3897, 1e-05
    %v3908 = vadd.f32 %v3898, 1e-05
    %v3909 = vadd.f32 %v3899, 1e-05
    %v3910 = vadd.f32 %v3900, 1e-05
    %v3911 = vadd.f32 %v3901, 1e-05
    %v3912 = vadd.f32 %v3902, 1e-05
    %v3913 = vadd.f32 %v3903, 1e-05
    %v3914 = vrsqrt.pop %v3904
    %v3915 = vrsqrt.pop %v3905
    %v3916 = vrsqrt.pop %v3906
    %v3917 = vrsqrt.pop %v3907
    %v3918 = vrsqrt.pop %v3908
    %v3919 = vrsqrt.pop %v3909
    %v3920 = vrsqrt.pop %v3910
    %v3921 = vrsqrt.pop %v3911
    %v3922 = vrsqrt.pop %v3912
    %v3923 = vrsqrt.pop %v3913
    %v3924 = vmul.f32 %v3698, %v3914
    %v3925 = vmul.f32 %v3699, %v3914
    %v3926 = vmul.f32 %v3700, %v3914
    %v3927 = vmul.f32 %v3701, %v3914
    %v3928 = vmul.f32 %v3702, %v3914
    %v3929 = vmul.f32 %v3703, %v3914
    %v3930 = vmul.f32 %v3704, %v3915
    %v3931 = vmul.f32 %v3705, %v3915
    %v3932 = vmul.f32 %v3706, %v3915
    %v3933 = vmul.f32 %v3707, %v3915
    %v3934 = vmul.f32 %v3708, %v3915
    %v3935 = vmul.f32 %v3709, %v3915
    %v3936 = vmul.f32 %v3710, %v3916
    %v3937 = vmul.f32 %v3711, %v3916
    %v3938 = vmul.f32 %v3712, %v3916
    %v3939 = vmul.f32 %v3713, %v3916
    %v3940 = vmul.f32 %v3714, %v3916
    %v3941 = vmul.f32 %v3715, %v3916
    %v3942 = vmul.f32 %v3716, %v3917
    %v3943 = vmul.f32 %v3717, %v3917
    %v3944 = vmul.f32 %v3718, %v3917
    %v3945 = vmul.f32 %v3719, %v3917
    %v3946 = vmul.f32 %v3720, %v3917
    %v3947 = vmul.f32 %v3721, %v3917
    %v3948 = vmul.f32 %v3722, %v3918
    %v3949 = vmul.f32 %v3723, %v3918
    %v3950 = vmul.f32 %v3724, %v3918
    %v3951 = vmul.f32 %v3725, %v3918
    %v3952 = vmul.f32 %v3726, %v3918
    %v3953 = vmul.f32 %v3727, %v3918
    %v3954 = vmul.f32 %v3728, %v3919
    %v3955 = vmul.f32 %v3729, %v3919
    %v3956 = vmul.f32 %v3730, %v3919
    %v3957 = vmul.f32 %v3731, %v3919
    %v3958 = vmul.f32 %v3732, %v3919
    %v3959 = vmul.f32 %v3733, %v3919
    %v3960 = vmul.f32 %v3734, %v3920
    %v3961 = vmul.f32 %v3735, %v3920
    %v3962 = vmul.f32 %v3736, %v3920
    %v3963 = vmul.f32 %v3737, %v3920
    %v3964 = vmul.f32 %v3738, %v3920
    %v3965 = vmul.f32 %v3739, %v3920
    %v3966 = vmul.f32 %v3740, %v3921
    %v3967 = vmul.f32 %v3741, %v3921
    %v3968 = vmul.f32 %v3742, %v3921
    %v3969 = vmul.f32 %v3743, %v3921
    %v3970 = vmul.f32 %v3744, %v3921
    %v3971 = vmul.f32 %v3745, %v3921
    %v3972 = vmul.f32 %v3746, %v3922
    %v3973 = vmul.f32 %v3747, %v3922
    %v3974 = vmul.f32 %v3748, %v3922
    %v3975 = vmul.f32 %v3749, %v3922
    %v3976 = vmul.f32 %v3750, %v3922
    %v3977 = vmul.f32 %v3751, %v3922
    %v3978 = vmul.f32 %v3752, %v3923
    %v3979 = vmul.f32 %v3753, %v3923
    %v3980 = vmul.f32 %v3754, %v3923
    %v3981 = vmul.f32 %v3755, %v3923
    %v3982 = vmul.f32 %v3756, %v3923
    %v3983 = vmul.f32 %v3757, %v3923
    %v3985 = vlaneseq
    %v3986 = vshrl.u32 %v3985, 7
    %v3987 = vsub.s32 0, %v3986
    %v3988 = vrot.slane %v108, %v3987
    %v3989 = vlaneseq
    %v3990 = vshrl.u32 %v3989, 7
    %v3991 = vsub.s32 1, %v3990
    %v3992 = vrot.slane %v108, %v3991
    %v3993 = vlaneseq
    %v3994 = vshrl.u32 %v3993, 7
    %v3995 = vsub.s32 2, %v3994
    %v3996 = vrot.slane %v108, %v3995
    %v3997 = vlaneseq
    %v3998 = vshrl.u32 %v3997, 7
    %v3999 = vsub.s32 3, %v3998
    %v4000 = vrot.slane %v108, %v3999
    %v4001 = vlaneseq
    %v4002 = vshrl.u32 %v4001, 7
    %v4003 = vsub.s32 4, %v4002
    %v4004 = vrot.slane %v108, %v4003
    %v4005 = vlaneseq
    %v4006 = vshrl.u32 %v4005, 7
    %v4007 = vsub.s32 5, %v4006
    %v4008 = vrot.slane %v108, %v4007
    %v4015 = vmul.f32 %v3924, %v3988
    %v4016 = vmul.f32 %v3925, %v3992
    %v4017 = vmul.f32 %v3926, %v3996
    %v4018 = vmul.f32 %v3927, %v4000
    %v4019 = vmul.f32 %v3928, %v4004
    %v4020 = vmul.f32 %v3929, %v4008
    %v4021 = vmul.f32 %v3930, %v3988
    %v4022 = vmul.f32 %v3931, %v3992
    %v4023 = vmul.f32 %v3932, %v3996
    %v4024 = vmul.f32 %v3933, %v4000
    %v4025 = vmul.f32 %v3934, %v4004
    %v4026 = vmul.f32 %v3935, %v4008
    %v4027 = vmul.f32 %v3936, %v3988
    %v4028 = vmul.f32 %v3937, %v3992
    %v4029 = vmul.f32 %v3938, %v3996
    %v4030 = vmul.f32 %v3939, %v4000
    %v4031 = vmul.f32 %v3940, %v4004
    %v4032 = vmul.f32 %v3941, %v4008
    %v4033 = vmul.f32 %v3942, %v3988
    %v4034 = vmul.f32 %v3943, %v3992
    %v4035 = vmul.f32 %v3944, %v3996
    %v4036 = vmul.f32 %v3945, %v4000
    %v4037 = vmul.f32 %v3946, %v4004
    %v4038 = vmul.f32 %v3947, %v4008
    %v4039 = vmul.f32 %v3948, %v3988
    %v4040 = vmul.f32 %v3949, %v3992
    %v4041 = vmul.f32 %v3950, %v3996
    %v4042 = vmul.f32 %v3951, %v4000
    %v4043 = vmul.f32 %v3952, %v4004
    %v4044 = vmul.f32 %v3953, %v4008
    %v4045 = vmul.f32 %v3954, %v3988
    %v4046 = vmul.f32 %v3955, %v3992
    %v4047 = vmul.f32 %v3956, %v3996
    %v4048 = vmul.f32 %v3957, %v4000
    %v4049 = vmul.f32 %v3958, %v4004
    %v4050 = vmul.f32 %v3959, %v4008
    %v4051 = vmul.f32 %v3960, %v3988
    %v4052 = vmul.f32 %v3961, %v3992
    %v4053 = vmul.f32 %v3962, %v3996
    %v4054 = vmul.f32 %v3963, %v4000
    %v4055 = vmul.f32 %v3964, %v4004
    %v4056 = vmul.f32 %v3965, %v4008
    %v4057 = vmul.f32 %v3966, %v3988
    %v4058 = vmul.f32 %v3967, %v3992
    %v4059 = vmul.f32 %v3968, %v3996
    %v4060 = vmul.f32 %v3969, %v4000
    %v4061 = vmul.f32 %v3970, %v4004
    %v4062 = vmul.f32 %v3971, %v4008
    %v4063 = vmul.f32 %v3972, %v3988
    %v4064 = vmul.f32 %v3973, %v3992
    %v4065 = vmul.f32 %v3974, %v3996
    %v4066 = vmul.f32 %v3975, %v4000
    %v4067 = vmul.f32 %v3976, %v4004
    %v4068 = vmul.f32 %v3977, %v4008
    %v4069 = vmul.f32 %v3978, %v3988
    %v4070 = vmul.f32 %v3979, %v3992
    %v4071 = vmul.f32 %v3980, %v3996
    %v4072 = vmul.f32 %v3981, %v4000
    %v4073 = vmul.f32 %v3982, %v4004
    %v4074 = vmul.f32 %v3983, %v4008
    %v4076 = vlaneseq
    %v4077 = vshrl.u32 %v4076, 7
    %v4078 = vsub.s32 0, %v4077
    %v4079 = vrot.slane %v109, %v4078
    %v4080 = vlaneseq
    %v4081 = vshrl.u32 %v4080, 7
    %v4082 = vsub.s32 1, %v4081
    %v4083 = vrot.slane %v109, %v4082
    %v4084 = vlaneseq
    %v4085 = vshrl.u32 %v4084, 7
    %v4086 = vsub.s32 2, %v4085
    %v4087 = vrot.slane %v109, %v4086
    %v4088 = vlaneseq
    %v4089 = vshrl.u32 %v4088, 7
    %v4090 = vsub.s32 3, %v4089
    %v4091 = vrot.slane %v109, %v4090
    %v4092 = vlaneseq
    %v4093 = vshrl.u32 %v4092, 7
    %v4094 = vsub.s32 4, %v4093
    %v4095 = vrot.slane %v109, %v4094
    %v4096 = vlaneseq
    %v4097 = vshrl.u32 %v4096, 7
    %v4098 = vsub.s32 5, %v4097
    %v4099 = vrot.slane %v109, %v4098
    %v4106 = vadd.f32 %v4015, %v4079
    %v4107 = vadd.f32 %v4016, %v4083
    %v4108 = vadd.f32 %v4017, %v4087
    %v4109 = vadd.f32 %v4018, %v4091
    %v4110 = vadd.f32 %v4019, %v4095
    %v4111 = vadd.f32 %v4020, %v4099
    %v4112 = vadd.f32 %v4021, %v4079
    %v4113 = vadd.f32 %v4022, %v4083
    %v4114 = vadd.f32 %v4023, %v4087
    %v4115 = vadd.f32 %v4024, %v4091
    %v4116 = vadd.f32 %v4025, %v4095
    %v4117 = vadd.f32 %v4026, %v4099
    %v4118 = vadd.f32 %v4027, %v4079
    %v4119 = vadd.f32 %v4028, %v4083
    %v4120 = vadd.f32 %v4029, %v4087
    %v4121 = vadd.f32 %v4030, %v4091
    %v4122 = vadd.f32 %v4031, %v4095
    %v4123 = vadd.f32 %v4032, %v4099
    %v4124 = vadd.f32 %v4033, %v4079
    %v4125 = vadd.f32 %v4034, %v4083
    %v4126 = vadd.f32 %v4035, %v4087
    %v4127 = vadd.f32 %v4036, %v4091
    %v4128 = vadd.f32 %v4037, %v4095
    %v4129 = vadd.f32 %v4038, %v4099
    %v4130 = vadd.f32 %v4039, %v4079
    %v4131 = vadd.f32 %v4040, %v4083
    %v4132 = vadd.f32 %v4041, %v4087
    %v4133 = vadd.f32 %v4042, %v4091
    %v4134 = vadd.f32 %v4043, %v4095
    %v4135 = vadd.f32 %v4044, %v4099
    %v4136 = vadd.f32 %v4045, %v4079
    %v4137 = vadd.f32 %v4046, %v4083
    %v4138 = vadd.f32 %v4047, %v4087
    %v4139 = vadd.f32 %v4048, %v4091
    %v4140 = vadd.f32 %v4049, %v4095
    %v4141 = vadd.f32 %v4050, %v4099
    %v4142 = vadd.f32 %v4051, %v4079
    %v4143 = vadd.f32 %v4052, %v4083
    %v4144 = vadd.f32 %v4053, %v4087
    %v4145 = vadd.f32 %v4054, %v4091
    %v4146 = vadd.f32 %v4055, %v4095
    %v4147 = vadd.f32 %v4056, %v4099
    %v4148 = vadd.f32 %v4057, %v4079
    %v4149 = vadd.f32 %v4058, %v4083
    %v4150 = vadd.f32 %v4059, %v4087
    %v4151 = vadd.f32 %v4060, %v4091
    %v4152 = vadd.f32 %v4061, %v4095
    %v4153 = vadd.f32 %v4062, %v4099
    %v4154 = vadd.f32 %v4063, %v4079
    %v4155 = vadd.f32 %v4064, %v4083
    %v4156 = vadd.f32 %v4065, %v4087
    %v4157 = vadd.f32 %v4066, %v4091
    %v4158 = vadd.f32 %v4067, %v4095
    %v4159 = vadd.f32 %v4068, %v4099
    %v4160 = vadd.f32 %v4069, %v4079
    %v4161 = vadd.f32 %v4070, %v4083
    %v4162 = vadd.f32 %v4071, %v4087
    %v4163 = vadd.f32 %v4072, %v4091
    %v4164 = vadd.f32 %v4073, %v4095
    %v4165 = vadd.f32 %v4074, %v4099
    %4166 = vst [vmem:[%s4] sm:$0xff] %v4106
    %4167 = vst [vmem:[%s4 + $0x8] sm:$0xff] %v4107
    %4168 = vst [vmem:[%s4 + $0x10] sm:$0xff] %v4108
    %4169 = vst [vmem:[%s4 + $0x18] sm:$0xff] %v4109
    %4170 = vst [vmem:[%s4 + $0x20] sm:$0xff] %v4110
    %4171 = vst [vmem:[%s4 + $0x28] sm:$0xff] %v4111
    %4172 = vst [vmem:[%s4 + $0x30] sm:$0xff] %v4112
    %4173 = vst [vmem:[%s4 + $0x38] sm:$0xff] %v4113
    %4174 = vst [vmem:[%s4 + $0x40] sm:$0xff] %v4114
    %4175 = vst [vmem:[%s4 + $0x48] sm:$0xff] %v4115
    %4176 = vst [vmem:[%s4 + $0x50] sm:$0xff] %v4116
    %4177 = vst [vmem:[%s4 + $0x58] sm:$0xff] %v4117
    %4178 = vst [vmem:[%s4 + $0x60] sm:$0xff] %v4118
    %4179 = vst [vmem:[%s4 + $0x68] sm:$0xff] %v4119
    %4180 = vst [vmem:[%s4 + $0x70] sm:$0xff] %v4120
    %4181 = vst [vmem:[%s4 + $0x78] sm:$0xff] %v4121
    %4182 = vst [vmem:[%s4 + $0x80] sm:$0xff] %v4122
    %4183 = vst [vmem:[%s4 + $0x88] sm:$0xff] %v4123
    %4184 = vst [vmem:[%s4 + $0x90] sm:$0xff] %v4124
    %4185 = vst [vmem:[%s4 + $0x98] sm:$0xff] %v4125
    %4186 = vst [vmem:[%s4 + $0xa0] sm:$0xff] %v4126
    %4187 = vst [vmem:[%s4 + $0xa8] sm:$0xff] %v4127
    %4188 = vst [vmem:[%s4 + $0xb0] sm:$0xff] %v4128
    %4189 = vst [vmem:[%s4 + $0xb8] sm:$0xff] %v4129
    %4190 = vst [vmem:[%s4 + $0xc0] sm:$0xff] %v4130
    %4191 = vst [vmem:[%s4 + $0xc8] sm:$0xff] %v4131
    %4192 = vst [vmem:[%s4 + $0xd0] sm:$0xff] %v4132
    %4193 = vst [vmem:[%s4 + $0xd8] sm:$0xff] %v4133
    %4194 = vst [vmem:[%s4 + $0xe0] sm:$0xff] %v4134
    %4195 = vst [vmem:[%s4 + $0xe8] sm:$0xff] %v4135
    %4196 = vst [vmem:[%s4 + $0xf0] sm:$0xff] %v4136
    %4197 = vst [vmem:[%s4 + $0xf8] sm:$0xff] %v4137
    %4198 = vst [vmem:[%s4 + $0x100] sm:$0xff] %v4138
    %4199 = vst [vmem:[%s4 + $0x108] sm:$0xff] %v4139
    %4200 = vst [vmem:[%s4 + $0x110] sm:$0xff] %v4140
    %4201 = vst [vmem:[%s4 + $0x118] sm:$0xff] %v4141
    %4202 = vst [vmem:[%s4 + $0x120] sm:$0xff] %v4142
    %4203 = vst [vmem:[%s4 + $0x128] sm:$0xff] %v4143
    %4204 = vst [vmem:[%s4 + $0x130] sm:$0xff] %v4144
    %4205 = vst [vmem:[%s4 + $0x138] sm:$0xff] %v4145
    %4206 = vst [vmem:[%s4 + $0x140] sm:$0xff] %v4146
    %4207 = vst [vmem:[%s4 + $0x148] sm:$0xff] %v4147
    %4208 = vst [vmem:[%s4 + $0x150] sm:$0xff] %v4148
    %4209 = vst [vmem:[%s4 + $0x158] sm:$0xff] %v4149
    %4210 = vst [vmem:[%s4 + $0x160] sm:$0xff] %v4150
    %4211 = vst [vmem:[%s4 + $0x168] sm:$0xff] %v4151
    %4212 = vst [vmem:[%s4 + $0x170] sm:$0xff] %v4152
    %4213 = vst [vmem:[%s4 + $0x178] sm:$0xff] %v4153
    %4214 = vst [vmem:[%s4 + $0x180] sm:$0xff] %v4154
    %4215 = vst [vmem:[%s4 + $0x188] sm:$0xff] %v4155
    %4216 = vst [vmem:[%s4 + $0x190] sm:$0xff] %v4156
    %4217 = vst [vmem:[%s4 + $0x198] sm:$0xff] %v4157
    %4218 = vst [vmem:[%s4 + $0x1a0] sm:$0xff] %v4158
    %4219 = vst [vmem:[%s4 + $0x1a8] sm:$0xff] %v4159
    %4220 = vst [vmem:[%s4 + $0x1b0] sm:$0x1f] %v4160
    %4221 = vst [vmem:[%s4 + $0x1b8] sm:$0x1f] %v4161
    %4222 = vst [vmem:[%s4 + $0x1c0] sm:$0x1f] %v4162
    %4223 = vst [vmem:[%s4 + $0x1c8] sm:$0x1f] %v4163
    %4224 = vst [vmem:[%s4 + $0x1d0] sm:$0x1f] %v4164
    %4225 = vst [vmem:[%s4 + $0x1d8] sm:$0x1f] %v4165
    %s4226 = scalar_lea.vmem [#allocation2], 3072
    %v4227 = vld [vmem:[%s4226] sm:$0xff]
    %v4228 = vld [vmem:[%s4226 + $0x8] sm:$0xff]
    %v4229 = vld [vmem:[%s4226 + $0x10] sm:$0xff]
    %v4230 = vld [vmem:[%s4226 + $0x18] sm:$0xff]
    %v4231 = vld [vmem:[%s4226 + $0x20] sm:$0xff]
    %v4232 = vld [vmem:[%s4226 + $0x28] sm:$0xff]
    %v4233 = vld [vmem:[%s4226 + $0x30] sm:$0xff]
    %v4234 = vld [vmem:[%s4226 + $0x38] sm:$0xff]
    %v4235 = vld [vmem:[%s4226 + $0x40] sm:$0xff]
    %v4236 = vld [vmem:[%s4226 + $0x48] sm:$0xff]
    %v4237 = vld [vmem:[%s4226 + $0x50] sm:$0xff]
    %v4238 = vld [vmem:[%s4226 + $0x58] sm:$0xff]
    %v4239 = vld [vmem:[%s4226 + $0x60] sm:$0xff]
    %v4240 = vld [vmem:[%s4226 + $0x68] sm:$0xff]
    %v4241 = vld [vmem:[%s4226 + $0x70] sm:$0xff]
    %v4242 = vld [vmem:[%s4226 + $0x78] sm:$0xff]
    %v4243 = vld [vmem:[%s4226 + $0x80] sm:$0xff]
    %v4244 = vld [vmem:[%s4226 + $0x88] sm:$0xff]
    %v4245 = vld [vmem:[%s4226 + $0x90] sm:$0xff]
    %v4246 = vld [vmem:[%s4226 + $0x98] sm:$0xff]
    %v4247 = vld [vmem:[%s4226 + $0xa0] sm:$0xff]
    %v4248 = vld [vmem:[%s4226 + $0xa8] sm:$0xff]
    %v4249 = vld [vmem:[%s4226 + $0xb0] sm:$0xff]
    %v4250 = vld [vmem:[%s4226 + $0xb8] sm:$0xff]
    %v4251 = vld [vmem:[%s4226 + $0xc0] sm:$0xff]
    %v4252 = vld [vmem:[%s4226 + $0xc8] sm:$0xff]
    %v4253 = vld [vmem:[%s4226 + $0xd0] sm:$0xff]
    %v4254 = vld [vmem:[%s4226 + $0xd8] sm:$0xff]
    %v4255 = vld [vmem:[%s4226 + $0xe0] sm:$0xff]
    %v4256 = vld [vmem:[%s4226 + $0xe8] sm:$0xff]
    %v4257 = vld [vmem:[%s4226 + $0xf0] sm:$0xff]
    %v4258 = vld [vmem:[%s4226 + $0xf8] sm:$0xff]
    %v4259 = vld [vmem:[%s4226 + $0x100] sm:$0xff]
    %v4260 = vld [vmem:[%s4226 + $0x108] sm:$0xff]
    %v4261 = vld [vmem:[%s4226 + $0x110] sm:$0xff]
    %v4262 = vld [vmem:[%s4226 + $0x118] sm:$0xff]
    %v4263 = vld [vmem:[%s4226 + $0x120] sm:$0xff]
    %v4264 = vld [vmem:[%s4226 + $0x128] sm:$0xff]
    %v4265 = vld [vmem:[%s4226 + $0x130] sm:$0xff]
    %v4266 = vld [vmem:[%s4226 + $0x138] sm:$0xff]
    %v4267 = vld [vmem:[%s4226 + $0x140] sm:$0xff]
    %v4268 = vld [vmem:[%s4226 + $0x148] sm:$0xff]
    %v4269 = vld [vmem:[%s4226 + $0x150] sm:$0xff]
    %v4270 = vld [vmem:[%s4226 + $0x158] sm:$0xff]
    %v4271 = vld [vmem:[%s4226 + $0x160] sm:$0xff]
    %v4272 = vld [vmem:[%s4226 + $0x168] sm:$0xff]
    %v4273 = vld [vmem:[%s4226 + $0x170] sm:$0xff]
    %v4274 = vld [vmem:[%s4226 + $0x178] sm:$0xff]
    %v4275 = vld [vmem:[%s4226 + $0x180] sm:$0xff]
    %v4276 = vld [vmem:[%s4226 + $0x188] sm:$0xff]
    %v4277 = vld [vmem:[%s4226 + $0x190] sm:$0xff]
    %v4278 = vld [vmem:[%s4226 + $0x198] sm:$0xff]
    %v4279 = vld [vmem:[%s4226 + $0x1a0] sm:$0xff]
    %v4280 = vld [vmem:[%s4226 + $0x1a8] sm:$0xff]
    %v4281 = vld [vmem:[%s4226 + $0x1b0] sm:$0xff]
    %v4282 = vld [vmem:[%s4226 + $0x1b8] sm:$0xff]
    %v4283 = vld [vmem:[%s4226 + $0x1c0] sm:$0xff]
    %v4284 = vld [vmem:[%s4226 + $0x1c8] sm:$0xff]
    %v4285 = vld [vmem:[%s4226 + $0x1d0] sm:$0xff]
    %v4286 = vld [vmem:[%s4226 + $0x1d8] sm:$0xff]
    %v4287 = vld [vmem:[%s4226 + $0x1e0] sm:$0xff]
    %v4288 = vld [vmem:[%s4226 + $0x1e8] sm:$0xff]
    %v4289 = vld [vmem:[%s4226 + $0x1f0] sm:$0xff]
    %v4290 = vld [vmem:[%s4226 + $0x1f8] sm:$0xff]
    %v4291 = vld [vmem:[%s4226 + $0x200] sm:$0xff]
    %v4292 = vld [vmem:[%s4226 + $0x208] sm:$0xff]
    %v4293 = vld [vmem:[%s4226 + $0x210] sm:$0xff]
    %v4294 = vld [vmem:[%s4226 + $0x218] sm:$0xff]
    %v4295 = vld [vmem:[%s4226 + $0x220] sm:$0xff]
    %v4296 = vld [vmem:[%s4226 + $0x228] sm:$0xff]
    %v4297 = vld [vmem:[%s4226 + $0x230] sm:$0xff]
    %v4298 = vld [vmem:[%s4226 + $0x238] sm:$0xff]
    %v4299 = vld [vmem:[%s4226 + $0x240] sm:$0xff]
    %v4300 = vld [vmem:[%s4226 + $0x248] sm:$0xff]
    %v4301 = vld [vmem:[%s4226 + $0x250] sm:$0xff]
    %v4302 = vld [vmem:[%s4226 + $0x258] sm:$0xff]
    %v4303 = vld [vmem:[%s4226 + $0x260] sm:$0xff]
    %v4304 = vld [vmem:[%s4226 + $0x268] sm:$0xff]
    %v4305 = vld [vmem:[%s4226 + $0x270] sm:$0xff]
    %v4306 = vld [vmem:[%s4226 + $0x278] sm:$0xff]
    %v4307 = vld [vmem:[%s4226 + $0x280] sm:$0xff]
    %v4308 = vld [vmem:[%s4226 + $0x288] sm:$0xff]
    %v4309 = vld [vmem:[%s4226 + $0x290] sm:$0xff]
    %v4310 = vld [vmem:[%s4226 + $0x298] sm:$0xff]
    %v4311 = vld [vmem:[%s4226 + $0x2a0] sm:$0xff]
    %v4312 = vld [vmem:[%s4226 + $0x2a8] sm:$0xff]
    %v4313 = vld [vmem:[%s4226 + $0x2b0] sm:$0xff]
    %v4314 = vld [vmem:[%s4226 + $0x2b8] sm:$0xff]
    %v4315 = vld [vmem:[%s4226 + $0x2c0] sm:$0xff]
    %v4316 = vld [vmem:[%s4226 + $0x2c8] sm:$0xff]
    %v4317 = vld [vmem:[%s4226 + $0x2d0] sm:$0xff]
    %v4318 = vld [vmem:[%s4226 + $0x2d8] sm:$0xff]
    %v4319 = vld [vmem:[%s4226 + $0x2e0] sm:$0xff]
    %v4320 = vld [vmem:[%s4226 + $0x2e8] sm:$0xff]
    %v4321 = vld [vmem:[%s4226 + $0x2f0] sm:$0xff]
    %v4322 = vld [vmem:[%s4226 + $0x2f8] sm:$0xff]
    %v4323 = vld [vmem:[%s4226 + $0x300] sm:$0xff]
    %v4324 = vld [vmem:[%s4226 + $0x308] sm:$0xff]
    %v4325 = vld [vmem:[%s4226 + $0x310] sm:$0xff]
    %v4326 = vld [vmem:[%s4226 + $0x318] sm:$0xff]
    %v4327 = vld [vmem:[%s4226 + $0x320] sm:$0xff]
    %v4328 = vld [vmem:[%s4226 + $0x328] sm:$0xff]
    %v4329 = vld [vmem:[%s4226 + $0x330] sm:$0xff]
    %v4330 = vld [vmem:[%s4226 + $0x338] sm:$0xff]
    %v4331 = vld [vmem:[%s4226 + $0x340] sm:$0xff]
    %v4332 = vld [vmem:[%s4226 + $0x348] sm:$0xff]
    %v4333 = vld [vmem:[%s4226 + $0x350] sm:$0xff]
    %v4334 = vld [vmem:[%s4226 + $0x358] sm:$0xff]
    %v4335 = vld [vmem:[%s4226 + $0x360] sm:$0xff]
    %v4336 = vld [vmem:[%s4226 + $0x368] sm:$0xff]
    %v4337 = vld [vmem:[%s4226 + $0x370] sm:$0xff]
    %v4338 = vld [vmem:[%s4226 + $0x378] sm:$0xff]
    %v4339 = vld [vmem:[%s4226 + $0x380] sm:$0xff]
    %v4340 = vld [vmem:[%s4226 + $0x388] sm:$0xff]
    %v4341 = vld [vmem:[%s4226 + $0x390] sm:$0xff]
    %v4342 = vld [vmem:[%s4226 + $0x398] sm:$0xff]
    %v4343 = vld [vmem:[%s4226 + $0x3a0] sm:$0xff]
    %v4344 = vld [vmem:[%s4226 + $0x3a8] sm:$0xff]
    %v4345 = vld [vmem:[%s4226 + $0x3b0] sm:$0xff]
    %v4346 = vld [vmem:[%s4226 + $0x3b8] sm:$0xff]
    %v4347 = vld [vmem:[%s4226 + $0x3c0] sm:$0xff]
    %v4348 = vld [vmem:[%s4226 + $0x3c8] sm:$0xff]
    %v4349 = vld [vmem:[%s4226 + $0x3d0] sm:$0xff]
    %v4350 = vld [vmem:[%s4226 + $0x3d8] sm:$0xff]
    %v4351 = vld [vmem:[%s4226 + $0x3e0] sm:$0xff]
    %v4352 = vld [vmem:[%s4226 + $0x3e8] sm:$0xff]
    %v4353 = vld [vmem:[%s4226 + $0x3f0] sm:$0xff]
    %v4354 = vld [vmem:[%s4226 + $0x3f8] sm:$0xff]
    %v4355 = vld [vmem:[%s4226 + $0x400] sm:$0xff]
    %v4356 = vld [vmem:[%s4226 + $0x408] sm:$0xff]
    %v4357 = vld [vmem:[%s4226 + $0x410] sm:$0xff]
    %v4358 = vld [vmem:[%s4226 + $0x418] sm:$0xff]
    %v4359 = vld [vmem:[%s4226 + $0x420] sm:$0xff]
    %v4360 = vld [vmem:[%s4226 + $0x428] sm:$0xff]
    %v4361 = vld [vmem:[%s4226 + $0x430] sm:$0xff]
    %v4362 = vld [vmem:[%s4226 + $0x438] sm:$0xff]
    %v4363 = vld [vmem:[%s4226 + $0x440] sm:$0xff]
    %v4364 = vld [vmem:[%s4226 + $0x448] sm:$0xff]
    %v4365 = vld [vmem:[%s4226 + $0x450] sm:$0xff]
    %v4366 = vld [vmem:[%s4226 + $0x458] sm:$0xff]
    %v4367 = vld [vmem:[%s4226 + $0x460] sm:$0xff]
    %v4368 = vld [vmem:[%s4226 + $0x468] sm:$0xff]
    %v4369 = vld [vmem:[%s4226 + $0x470] sm:$0xff]
    %v4370 = vld [vmem:[%s4226 + $0x478] sm:$0xff]
    %v4371 = vld [vmem:[%s4226 + $0x480] sm:$0xff]
    %v4372 = vld [vmem:[%s4226 + $0x488] sm:$0xff]
    %v4373 = vld [vmem:[%s4226 + $0x490] sm:$0xff]
    %v4374 = vld [vmem:[%s4226 + $0x498] sm:$0xff]
    %v4375 = vld [vmem:[%s4226 + $0x4a0] sm:$0xff]
    %v4376 = vld [vmem:[%s4226 + $0x4a8] sm:$0xff]
    %v4377 = vld [vmem:[%s4226 + $0x4b0] sm:$0xff]
    %v4378 = vld [vmem:[%s4226 + $0x4b8] sm:$0xff]
    %v4379 = vld [vmem:[%s4226 + $0x4c0] sm:$0xff]
    %v4380 = vld [vmem:[%s4226 + $0x4c8] sm:$0xff]
    %v4381 = vld [vmem:[%s4226 + $0x4d0] sm:$0xff]
    %v4382 = vld [vmem:[%s4226 + $0x4d8] sm:$0xff]
    %v4383 = vld [vmem:[%s4226 + $0x4e0] sm:$0xff]
    %v4384 = vld [vmem:[%s4226 + $0x4e8] sm:$0xff]
    %v4385 = vld [vmem:[%s4226 + $0x4f0] sm:$0xff]
    %v4386 = vld [vmem:[%s4226 + $0x4f8] sm:$0xff]
    %v4387 = vld [vmem:[%s4226 + $0x500] sm:$0xff]
    %v4388 = vld [vmem:[%s4226 + $0x508] sm:$0xff]
    %v4389 = vld [vmem:[%s4226 + $0x510] sm:$0xff]
    %v4390 = vld [vmem:[%s4226 + $0x518] sm:$0xff]
    %v4391 = vld [vmem:[%s4226 + $0x520] sm:$0xff]
    %v4392 = vld [vmem:[%s4226 + $0x528] sm:$0xff]
    %v4393 = vld [vmem:[%s4226 + $0x530] sm:$0xff]
    %v4394 = vld [vmem:[%s4226 + $0x538] sm:$0xff]
    %v4395 = vld [vmem:[%s4226 + $0x540] sm:$0xff]
    %v4396 = vld [vmem:[%s4226 + $0x548] sm:$0xff]
    %v4397 = vld [vmem:[%s4226 + $0x550] sm:$0xff]
    %v4398 = vld [vmem:[%s4226 + $0x558] sm:$0xff]
    %v4399 = vld [vmem:[%s4226 + $0x560] sm:$0xff]
    %v4400 = vld [vmem:[%s4226 + $0x568] sm:$0xff]
    %v4401 = vld [vmem:[%s4226 + $0x570] sm:$0xff]
    %v4402 = vld [vmem:[%s4226 + $0x578] sm:$0xff]
    %v4403 = vld [vmem:[%s4226 + $0x580] sm:$0xff]
    %v4404 = vld [vmem:[%s4226 + $0x588] sm:$0xff]
    %v4405 = vld [vmem:[%s4226 + $0x590] sm:$0xff]
    %v4406 = vld [vmem:[%s4226 + $0x598] sm:$0xff]
    %v4407 = vld [vmem:[%s4226 + $0x5a0] sm:$0xff]
    %v4408 = vld [vmem:[%s4226 + $0x5a8] sm:$0xff]
    %v4409 = vld [vmem:[%s4226 + $0x5b0] sm:$0xff]
    %v4410 = vld [vmem:[%s4226 + $0x5b8] sm:$0xff]
    %v4411 = vld [vmem:[%s4226 + $0x5c0] sm:$0xff]
    %v4412 = vld [vmem:[%s4226 + $0x5c8] sm:$0xff]
    %v4413 = vld [vmem:[%s4226 + $0x5d0] sm:$0xff]
    %v4414 = vld [vmem:[%s4226 + $0x5d8] sm:$0xff]
    %v4415 = vld [vmem:[%s4226 + $0x5e0] sm:$0xff]
    %v4416 = vld [vmem:[%s4226 + $0x5e8] sm:$0xff]
    %v4417 = vld [vmem:[%s4226 + $0x5f0] sm:$0xff]
    %v4418 = vld [vmem:[%s4226 + $0x5f8] sm:$0xff]
    %v4419 = vld [vmem:[%s4226 + $0x600] sm:$0xff]
    %v4420 = vld [vmem:[%s4226 + $0x608] sm:$0xff]
    %v4421 = vld [vmem:[%s4226 + $0x610] sm:$0xff]
    %v4422 = vld [vmem:[%s4226 + $0x618] sm:$0xff]
    %v4423 = vld [vmem:[%s4226 + $0x620] sm:$0xff]
    %v4424 = vld [vmem:[%s4226 + $0x628] sm:$0xff]
    %v4425 = vld [vmem:[%s4226 + $0x630] sm:$0xff]
    %v4426 = vld [vmem:[%s4226 + $0x638] sm:$0xff]
    %v4427 = vld [vmem:[%s4226 + $0x640] sm:$0xff]
    %v4428 = vld [vmem:[%s4226 + $0x648] sm:$0xff]
    %v4429 = vld [vmem:[%s4226 + $0x650] sm:$0xff]
    %v4430 = vld [vmem:[%s4226 + $0x658] sm:$0xff]
    %v4431 = vld [vmem:[%s4226 + $0x660] sm:$0xff]
    %v4432 = vld [vmem:[%s4226 + $0x668] sm:$0xff]
    %v4433 = vld [vmem:[%s4226 + $0x670] sm:$0xff]
    %v4434 = vld [vmem:[%s4226 + $0x678] sm:$0xff]
    %v4435 = vld [vmem:[%s4226 + $0x680] sm:$0xff]
    %v4436 = vld [vmem:[%s4226 + $0x688] sm:$0xff]
    %v4437 = vld [vmem:[%s4226 + $0x690] sm:$0xff]
    %v4438 = vld [vmem:[%s4226 + $0x698] sm:$0xff]
    %v4439 = vld [vmem:[%s4226 + $0x6a0] sm:$0xff]
    %v4440 = vld [vmem:[%s4226 + $0x6a8] sm:$0xff]
    %v4441 = vld [vmem:[%s4226 + $0x6b0] sm:$0xff]
    %v4442 = vld [vmem:[%s4226 + $0x6b8] sm:$0xff]
    %v4443 = vld [vmem:[%s4226 + $0x6c0] sm:$0xff]
    %v4444 = vld [vmem:[%s4226 + $0x6c8] sm:$0xff]
    %v4445 = vld [vmem:[%s4226 + $0x6d0] sm:$0xff]
    %v4446 = vld [vmem:[%s4226 + $0x6d8] sm:$0xff]
    %v4447 = vld [vmem:[%s4226 + $0x6e0] sm:$0xff]
    %v4448 = vld [vmem:[%s4226 + $0x6e8] sm:$0xff]
    %v4449 = vld [vmem:[%s4226 + $0x6f0] sm:$0xff]
    %v4450 = vld [vmem:[%s4226 + $0x6f8] sm:$0xff]
    %v4451 = vld [vmem:[%s4226 + $0x700] sm:$0xff]
    %v4452 = vld [vmem:[%s4226 + $0x708] sm:$0xff]
    %v4453 = vld [vmem:[%s4226 + $0x710] sm:$0xff]
    %v4454 = vld [vmem:[%s4226 + $0x718] sm:$0xff]
    %v4455 = vld [vmem:[%s4226 + $0x720] sm:$0xff]
    %v4456 = vld [vmem:[%s4226 + $0x728] sm:$0xff]
    %v4457 = vld [vmem:[%s4226 + $0x730] sm:$0xff]
    %v4458 = vld [vmem:[%s4226 + $0x738] sm:$0xff]
    %v4459 = vld [vmem:[%s4226 + $0x740] sm:$0xff]
    %v4460 = vld [vmem:[%s4226 + $0x748] sm:$0xff]
    %v4461 = vld [vmem:[%s4226 + $0x750] sm:$0xff]
    %v4462 = vld [vmem:[%s4226 + $0x758] sm:$0xff]
    %v4463 = vld [vmem:[%s4226 + $0x760] sm:$0xff]
    %v4464 = vld [vmem:[%s4226 + $0x768] sm:$0xff]
    %v4465 = vld [vmem:[%s4226 + $0x770] sm:$0xff]
    %v4466 = vld [vmem:[%s4226 + $0x778] sm:$0xff]
    %v4467 = vld [vmem:[%s4226 + $0x780] sm:$0xff]
    %v4468 = vld [vmem:[%s4226 + $0x788] sm:$0xff]
    %v4469 = vld [vmem:[%s4226 + $0x790] sm:$0xff]
    %v4470 = vld [vmem:[%s4226 + $0x798] sm:$0xff]
    %v4471 = vld [vmem:[%s4226 + $0x7a0] sm:$0xff]
    %v4472 = vld [vmem:[%s4226 + $0x7a8] sm:$0xff]
    %v4473 = vld [vmem:[%s4226 + $0x7b0] sm:$0xff]
    %v4474 = vld [vmem:[%s4226 + $0x7b8] sm:$0xff]
    %v4475 = vld [vmem:[%s4226 + $0x7c0] sm:$0xff]
    %v4476 = vld [vmem:[%s4226 + $0x7c8] sm:$0xff]
    %v4477 = vld [vmem:[%s4226 + $0x7d0] sm:$0xff]
    %v4478 = vld [vmem:[%s4226 + $0x7d8] sm:$0xff]
    %v4479 = vld [vmem:[%s4226 + $0x7e0] sm:$0xff]
    %v4480 = vld [vmem:[%s4226 + $0x7e8] sm:$0xff]
    %v4481 = vld [vmem:[%s4226 + $0x7f0] sm:$0xff]
    %v4482 = vld [vmem:[%s4226 + $0x7f8] sm:$0xff]
    %v4483 = vld [vmem:[%s4226 + $0x800] sm:$0xff]
    %v4484 = vld [vmem:[%s4226 + $0x808] sm:$0xff]
    %v4485 = vld [vmem:[%s4226 + $0x810] sm:$0xff]
    %v4486 = vld [vmem:[%s4226 + $0x818] sm:$0xff]
    %v4487 = vld [vmem:[%s4226 + $0x820] sm:$0xff]
    %v4488 = vld [vmem:[%s4226 + $0x828] sm:$0xff]
    %v4489 = vld [vmem:[%s4226 + $0x830] sm:$0xff]
    %v4490 = vld [vmem:[%s4226 + $0x838] sm:$0xff]
    %v4491 = vld [vmem:[%s4226 + $0x840] sm:$0xff]
    %v4492 = vld [vmem:[%s4226 + $0x848] sm:$0xff]
    %v4493 = vld [vmem:[%s4226 + $0x850] sm:$0xff]
    %v4494 = vld [vmem:[%s4226 + $0x858] sm:$0xff]
    %v4495 = vld [vmem:[%s4226 + $0x860] sm:$0xff]
    %v4496 = vld [vmem:[%s4226 + $0x868] sm:$0xff]
    %v4497 = vld [vmem:[%s4226 + $0x870] sm:$0xff]
    %v4498 = vld [vmem:[%s4226 + $0x878] sm:$0xff]
    %v4499 = vld [vmem:[%s4226 + $0x880] sm:$0xff]
    %v4500 = vld [vmem:[%s4226 + $0x888] sm:$0xff]
    %v4501 = vld [vmem:[%s4226 + $0x890] sm:$0xff]
    %v4502 = vld [vmem:[%s4226 + $0x898] sm:$0xff]
    %v4503 = vld [vmem:[%s4226 + $0x8a0] sm:$0xff]
    %v4504 = vld [vmem:[%s4226 + $0x8a8] sm:$0xff]
    %v4505 = vld [vmem:[%s4226 + $0x8b0] sm:$0xff]
    %v4506 = vld [vmem:[%s4226 + $0x8b8] sm:$0xff]
    %v4507 = vld [vmem:[%s4226 + $0x8c0] sm:$0xff]
    %v4508 = vld [vmem:[%s4226 + $0x8c8] sm:$0xff]
    %v4509 = vld [vmem:[%s4226 + $0x8d0] sm:$0xff]
    %v4510 = vld [vmem:[%s4226 + $0x8d8] sm:$0xff]
    %v4511 = vld [vmem:[%s4226 + $0x8e0] sm:$0xff]
    %v4512 = vld [vmem:[%s4226 + $0x8e8] sm:$0xff]
    %v4513 = vld [vmem:[%s4226 + $0x8f0] sm:$0xff]
    %v4514 = vld [vmem:[%s4226 + $0x8f8] sm:$0xff]
    %v4515 = vld [vmem:[%s4226 + $0x900] sm:$0xff]
    %v4516 = vld [vmem:[%s4226 + $0x908] sm:$0xff]
    %v4517 = vld [vmem:[%s4226 + $0x910] sm:$0xff]
    %v4518 = vld [vmem:[%s4226 + $0x918] sm:$0xff]
    %v4519 = vld [vmem:[%s4226 + $0x920] sm:$0xff]
    %v4520 = vld [vmem:[%s4226 + $0x928] sm:$0xff]
    %v4521 = vld [vmem:[%s4226 + $0x930] sm:$0xff]
    %v4522 = vld [vmem:[%s4226 + $0x938] sm:$0xff]
    %v4523 = vld [vmem:[%s4226 + $0x940] sm:$0xff]
    %v4524 = vld [vmem:[%s4226 + $0x948] sm:$0xff]
    %v4525 = vld [vmem:[%s4226 + $0x950] sm:$0xff]
    %v4526 = vld [vmem:[%s4226 + $0x958] sm:$0xff]
    %v4527 = vld [vmem:[%s4226 + $0x960] sm:$0xff]
    %v4528 = vld [vmem:[%s4226 + $0x968] sm:$0xff]
    %v4529 = vld [vmem:[%s4226 + $0x970] sm:$0xff]
    %v4530 = vld [vmem:[%s4226 + $0x978] sm:$0xff]
    %v4531 = vld [vmem:[%s4226 + $0x980] sm:$0xff]
    %v4532 = vld [vmem:[%s4226 + $0x988] sm:$0xff]
    %v4533 = vld [vmem:[%s4226 + $0x990] sm:$0xff]
    %v4534 = vld [vmem:[%s4226 + $0x998] sm:$0xff]
    %v4535 = vld [vmem:[%s4226 + $0x9a0] sm:$0xff]
    %v4536 = vld [vmem:[%s4226 + $0x9a8] sm:$0xff]
    %v4537 = vld [vmem:[%s4226 + $0x9b0] sm:$0xff]
    %v4538 = vld [vmem:[%s4226 + $0x9b8] sm:$0xff]
    %v4539 = vld [vmem:[%s4226 + $0x9c0] sm:$0xff]
    %v4540 = vld [vmem:[%s4226 + $0x9c8] sm:$0xff]
    %v4541 = vld [vmem:[%s4226 + $0x9d0] sm:$0xff]
    %v4542 = vld [vmem:[%s4226 + $0x9d8] sm:$0xff]
    %v4543 = vld [vmem:[%s4226 + $0x9e0] sm:$0xff]
    %v4544 = vld [vmem:[%s4226 + $0x9e8] sm:$0xff]
    %v4545 = vld [vmem:[%s4226 + $0x9f0] sm:$0xff]
    %v4546 = vld [vmem:[%s4226 + $0x9f8] sm:$0xff]
    %v4547 = vld [vmem:[%s4226 + $0xa00] sm:$0xff]
    %v4548 = vld [vmem:[%s4226 + $0xa08] sm:$0xff]
    %v4549 = vld [vmem:[%s4226 + $0xa10] sm:$0xff]
    %v4550 = vld [vmem:[%s4226 + $0xa18] sm:$0xff]
    %v4551 = vld [vmem:[%s4226 + $0xa20] sm:$0xff]
    %v4552 = vld [vmem:[%s4226 + $0xa28] sm:$0xff]
    %v4553 = vld [vmem:[%s4226 + $0xa30] sm:$0xff]
    %v4554 = vld [vmem:[%s4226 + $0xa38] sm:$0xff]
    %v4555 = vld [vmem:[%s4226 + $0xa40] sm:$0xff]
    %v4556 = vld [vmem:[%s4226 + $0xa48] sm:$0xff]
    %v4557 = vld [vmem:[%s4226 + $0xa50] sm:$0xff]
    %v4558 = vld [vmem:[%s4226 + $0xa58] sm:$0xff]
    %v4559 = vld [vmem:[%s4226 + $0xa60] sm:$0xff]
    %v4560 = vld [vmem:[%s4226 + $0xa68] sm:$0xff]
    %v4561 = vld [vmem:[%s4226 + $0xa70] sm:$0xff]
    %v4562 = vld [vmem:[%s4226 + $0xa78] sm:$0xff]
    %v4563 = vld [vmem:[%s4226 + $0xa80] sm:$0xff]
    %v4564 = vld [vmem:[%s4226 + $0xa88] sm:$0xff]
    %v4565 = vld [vmem:[%s4226 + $0xa90] sm:$0xff]
    %v4566 = vld [vmem:[%s4226 + $0xa98] sm:$0xff]
    %v4567 = vld [vmem:[%s4226 + $0xaa0] sm:$0xff]
    %v4568 = vld [vmem:[%s4226 + $0xaa8] sm:$0xff]
    %v4569 = vld [vmem:[%s4226 + $0xab0] sm:$0xff]
    %v4570 = vld [vmem:[%s4226 + $0xab8] sm:$0xff]
    %v4571 = vld [vmem:[%s4226 + $0xac0] sm:$0xff]
    %v4572 = vld [vmem:[%s4226 + $0xac8] sm:$0xff]
    %v4573 = vld [vmem:[%s4226 + $0xad0] sm:$0xff]
    %v4574 = vld [vmem:[%s4226 + $0xad8] sm:$0xff]
    %v4575 = vld [vmem:[%s4226 + $0xae0] sm:$0xff]
    %v4576 = vld [vmem:[%s4226 + $0xae8] sm:$0xff]
    %v4577 = vld [vmem:[%s4226 + $0xaf0] sm:$0xff]
    %v4578 = vld [vmem:[%s4226 + $0xaf8] sm:$0xff]
    %v4579 = vld [vmem:[%s4226 + $0xb00] sm:$0xff]
    %v4580 = vld [vmem:[%s4226 + $0xb08] sm:$0xff]
    %v4581 = vld [vmem:[%s4226 + $0xb10] sm:$0xff]
    %v4582 = vld [vmem:[%s4226 + $0xb18] sm:$0xff]
    %v4583 = vld [vmem:[%s4226 + $0xb20] sm:$0xff]
    %v4584 = vld [vmem:[%s4226 + $0xb28] sm:$0xff]
    %v4585 = vld [vmem:[%s4226 + $0xb30] sm:$0xff]
    %v4586 = vld [vmem:[%s4226 + $0xb38] sm:$0xff]
    %v4587 = vld [vmem:[%s4226 + $0xb40] sm:$0xff]
    %v4588 = vld [vmem:[%s4226 + $0xb48] sm:$0xff]
    %v4589 = vld [vmem:[%s4226 + $0xb50] sm:$0xff]
    %v4590 = vld [vmem:[%s4226 + $0xb58] sm:$0xff]
    %v4591 = vld [vmem:[%s4226 + $0xb60] sm:$0xff]
    %v4592 = vld [vmem:[%s4226 + $0xb68] sm:$0xff]
    %v4593 = vld [vmem:[%s4226 + $0xb70] sm:$0xff]
    %v4594 = vld [vmem:[%s4226 + $0xb78] sm:$0xff]
    %v4595 = vld [vmem:[%s4226 + $0xb80] sm:$0xff]
    %v4596 = vld [vmem:[%s4226 + $0xb88] sm:$0xff]
    %v4597 = vld [vmem:[%s4226 + $0xb90] sm:$0xff]
    %v4598 = vld [vmem:[%s4226 + $0xb98] sm:$0xff]
    %v4599 = vld [vmem:[%s4226 + $0xba0] sm:$0xff]
    %v4600 = vld [vmem:[%s4226 + $0xba8] sm:$0xff]
    %v4601 = vld [vmem:[%s4226 + $0xbb0] sm:$0xff]
    %v4602 = vld [vmem:[%s4226 + $0xbb8] sm:$0xff]
    %v4603 = vld [vmem:[%s4226 + $0xbc0] sm:$0xff]
    %v4604 = vld [vmem:[%s4226 + $0xbc8] sm:$0xff]
    %v4605 = vld [vmem:[%s4226 + $0xbd0] sm:$0xff]
    %v4606 = vld [vmem:[%s4226 + $0xbd8] sm:$0xff]
    %v4607 = vld [vmem:[%s4226 + $0xbe0] sm:$0xff]
    %v4608 = vld [vmem:[%s4226 + $0xbe8] sm:$0xff]
    %v4609 = vld [vmem:[%s4226 + $0xbf0] sm:$0xff]
    %v4610 = vld [vmem:[%s4226 + $0xbf8] sm:$0xff]
    %v4995 = vunpack.c.l.b16 %v4227
    %v4996 = vunpack.c.h.b16 %v4227
    %v4997 = vunpack.c.l.b16 %v4228
    %v4998 = vunpack.c.h.b16 %v4228
    %v4999 = vunpack.c.l.b16 %v4229
    %v5000 = vunpack.c.h.b16 %v4229
    %v5001 = vunpack.c.l.b16 %v4230
    %v5002 = vunpack.c.h.b16 %v4230
    %v5003 = vunpack.c.l.b16 %v4231
    %v5004 = vunpack.c.h.b16 %v4231
    %v5005 = vunpack.c.l.b16 %v4232
    %v5006 = vunpack.c.h.b16 %v4232
    %v5007 = vunpack.c.l.b16 %v4233
    %v5008 = vunpack.c.h.b16 %v4233
    %v5009 = vunpack.c.l.b16 %v4234
    %v5010 = vunpack.c.h.b16 %v4234
    %v5011 = vunpack.c.l.b16 %v4235
    %v5012 = vunpack.c.h.b16 %v4235
    %v5013 = vunpack.c.l.b16 %v4236
    %v5014 = vunpack.c.h.b16 %v4236
    %v5015 = vunpack.c.l.b16 %v4237
    %v5016 = vunpack.c.h.b16 %v4237
    %v5017 = vunpack.c.l.b16 %v4238
    %v5018 = vunpack.c.h.b16 %v4238
    %v5019 = vunpack.c.l.b16 %v4239
    %v5020 = vunpack.c.h.b16 %v4239
    %v5021 = vunpack.c.l.b16 %v4240
    %v5022 = vunpack.c.h.b16 %v4240
    %v5023 = vunpack.c.l.b16 %v4241
    %v5024 = vunpack.c.h.b16 %v4241
    %v5025 = vunpack.c.l.b16 %v4242
    %v5026 = vunpack.c.h.b16 %v4242
    %v5027 = vunpack.c.l.b16 %v4243
    %v5028 = vunpack.c.h.b16 %v4243
    %v5029 = vunpack.c.l.b16 %v4244
    %v5030 = vunpack.c.h.b16 %v4244
    %v5031 = vunpack.c.l.b16 %v4245
    %v5032 = vunpack.c.h.b16 %v4245
    %v5033 = vunpack.c.l.b16 %v4246
    %v5034 = vunpack.c.h.b16 %v4246
    %v5035 = vunpack.c.l.b16 %v4247
    %v5036 = vunpack.c.h.b16 %v4247
    %v5037 = vunpack.c.l.b16 %v4248
    %v5038 = vunpack.c.h.b16 %v4248
    %v5039 = vunpack.c.l.b16 %v4249
    %v5040 = vunpack.c.h.b16 %v4249
    %v5041 = vunpack.c.l.b16 %v4250
    %v5042 = vunpack.c.h.b16 %v4250
    %v5043 = vunpack.c.l.b16 %v4251
    %v5044 = vunpack.c.h.b16 %v4251
    %v5045 = vunpack.c.l.b16 %v4252
    %v5046 = vunpack.c.h.b16 %v4252
    %v5047 = vunpack.c.l.b16 %v4253
    %v5048 = vunpack.c.h.b16 %v4253
    %v5049 = vunpack.c.l.b16 %v4254
    %v5050 = vunpack.c.h.b16 %v4254
    %v5051 = vunpack.c.l.b16 %v4255
    %v5052 = vunpack.c.h.b16 %v4255
    %v5053 = vunpack.c.l.b16 %v4256
    %v5054 = vunpack.c.h.b16 %v4256
    %v5055 = vunpack.c.l.b16 %v4257
    %v5056 = vunpack.c.h.b16 %v4257
    %v5057 = vunpack.c.l.b16 %v4258
    %v5058 = vunpack.c.h.b16 %v4258
    %v5059 = vunpack.c.l.b16 %v4259
    %v5060 = vunpack.c.h.b16 %v4259
    %v5061 = vunpack.c.l.b16 %v4260
    %v5062 = vunpack.c.h.b16 %v4260
    %v5063 = vunpack.c.l.b16 %v4261
    %v5064 = vunpack.c.h.b16 %v4261
    %v5065 = vunpack.c.l.b16 %v4262
    %v5066 = vunpack.c.h.b16 %v4262
    %v5067 = vunpack.c.l.b16 %v4263
    %v5068 = vunpack.c.h.b16 %v4263
    %v5069 = vunpack.c.l.b16 %v4264
    %v5070 = vunpack.c.h.b16 %v4264
    %v5071 = vunpack.c.l.b16 %v4265
    %v5072 = vunpack.c.h.b16 %v4265
    %v5073 = vunpack.c.l.b16 %v4266
    %v5074 = vunpack.c.h.b16 %v4266
    %v5075 = vunpack.c.l.b16 %v4267
    %v5076 = vunpack.c.h.b16 %v4267
    %v5077 = vunpack.c.l.b16 %v4268
    %v5078 = vunpack.c.h.b16 %v4268
    %v5079 = vunpack.c.l.b16 %v4269
    %v5080 = vunpack.c.h.b16 %v4269
    %v5081 = vunpack.c.l.b16 %v4270
    %v5082 = vunpack.c.h.b16 %v4270
    %v5083 = vunpack.c.l.b16 %v4271
    %v5084 = vunpack.c.h.b16 %v4271
    %v5085 = vunpack.c.l.b16 %v4272
    %v5086 = vunpack.c.h.b16 %v4272
    %v5087 = vunpack.c.l.b16 %v4273
    %v5088 = vunpack.c.h.b16 %v4273
    %v5089 = vunpack.c.l.b16 %v4274
    %v5090 = vunpack.c.h.b16 %v4274
    %v5091 = vunpack.c.l.b16 %v4275
    %v5092 = vunpack.c.h.b16 %v4275
    %v5093 = vunpack.c.l.b16 %v4276
    %v5094 = vunpack.c.h.b16 %v4276
    %v5095 = vunpack.c.l.b16 %v4277
    %v5096 = vunpack.c.h.b16 %v4277
    %v5097 = vunpack.c.l.b16 %v4278
    %v5098 = vunpack.c.h.b16 %v4278
    %v5099 = vunpack.c.l.b16 %v4279
    %v5100 = vunpack.c.h.b16 %v4279
    %v5101 = vunpack.c.l.b16 %v4280
    %v5102 = vunpack.c.h.b16 %v4280
    %v5103 = vunpack.c.l.b16 %v4281
    %v5104 = vunpack.c.h.b16 %v4281
    %v5105 = vunpack.c.l.b16 %v4282
    %v5106 = vunpack.c.h.b16 %v4282
    %v5107 = vunpack.c.l.b16 %v4283
    %v5108 = vunpack.c.h.b16 %v4283
    %v5109 = vunpack.c.l.b16 %v4284
    %v5110 = vunpack.c.h.b16 %v4284
    %v5111 = vunpack.c.l.b16 %v4285
    %v5112 = vunpack.c.h.b16 %v4285
    %v5113 = vunpack.c.l.b16 %v4286
    %v5114 = vunpack.c.h.b16 %v4286
    %v5115 = vunpack.c.l.b16 %v4287
    %v5116 = vunpack.c.h.b16 %v4287
    %v5117 = vunpack.c.l.b16 %v4288
    %v5118 = vunpack.c.h.b16 %v4288
    %v5119 = vunpack.c.l.b16 %v4289
    %v5120 = vunpack.c.h.b16 %v4289
    %v5121 = vunpack.c.l.b16 %v4290
    %v5122 = vunpack.c.h.b16 %v4290
    %v5123 = vunpack.c.l.b16 %v4291
    %v5124 = vunpack.c.h.b16 %v4291
    %v5125 = vunpack.c.l.b16 %v4292
    %v5126 = vunpack.c.h.b16 %v4292
    %v5127 = vunpack.c.l.b16 %v4293
    %v5128 = vunpack.c.h.b16 %v4293
    %v5129 = vunpack.c.l.b16 %v4294
    %v5130 = vunpack.c.h.b16 %v4294
    %v5131 = vunpack.c.l.b16 %v4295
    %v5132 = vunpack.c.h.b16 %v4295
    %v5133 = vunpack.c.l.b16 %v4296
    %v5134 = vunpack.c.h.b16 %v4296
    %v5135 = vunpack.c.l.b16 %v4297
    %v5136 = vunpack.c.h.b16 %v4297
    %v5137 = vunpack.c.l.b16 %v4298
    %v5138 = vunpack.c.h.b16 %v4298
    %v5139 = vunpack.c.l.b16 %v4299
    %v5140 = vunpack.c.h.b16 %v4299
    %v5141 = vunpack.c.l.b16 %v4300
    %v5142 = vunpack.c.h.b16 %v4300
    %v5143 = vunpack.c.l.b16 %v4301
    %v5144 = vunpack.c.h.b16 %v4301
    %v5145 = vunpack.c.l.b16 %v4302
    %v5146 = vunpack.c.h.b16 %v4302
    %v5147 = vunpack.c.l.b16 %v4303
    %v5148 = vunpack.c.h.b16 %v4303
    %v5149 = vunpack.c.l.b16 %v4304
    %v5150 = vunpack.c.h.b16 %v4304
    %v5151 = vunpack.c.l.b16 %v4305
    %v5152 = vunpack.c.h.b16 %v4305
    %v5153 = vunpack.c.l.b16 %v4306
    %v5154 = vunpack.c.h.b16 %v4306
    %v5155 = vunpack.c.l.b16 %v4307
    %v5156 = vunpack.c.h.b16 %v4307
    %v5157 = vunpack.c.l.b16 %v4308
    %v5158 = vunpack.c.h.b16 %v4308
    %v5159 = vunpack.c.l.b16 %v4309
    %v5160 = vunpack.c.h.b16 %v4309
    %v5161 = vunpack.c.l.b16 %v4310
    %v5162 = vunpack.c.h.b16 %v4310
    %v5163 = vunpack.c.l.b16 %v4311
    %v5164 = vunpack.c.h.b16 %v4311
    %v5165 = vunpack.c.l.b16 %v4312
    %v5166 = vunpack.c.h.b16 %v4312
    %v5167 = vunpack.c.l.b16 %v4313
    %v5168 = vunpack.c.h.b16 %v4313
    %v5169 = vunpack.c.l.b16 %v4314
    %v5170 = vunpack.c.h.b16 %v4314
    %v5171 = vunpack.c.l.b16 %v4315
    %v5172 = vunpack.c.h.b16 %v4315
    %v5173 = vunpack.c.l.b16 %v4316
    %v5174 = vunpack.c.h.b16 %v4316
    %v5175 = vunpack.c.l.b16 %v4317
    %v5176 = vunpack.c.h.b16 %v4317
    %v5177 = vunpack.c.l.b16 %v4318
    %v5178 = vunpack.c.h.b16 %v4318
    %v5179 = vunpack.c.l.b16 %v4319
    %v5180 = vunpack.c.h.b16 %v4319
    %v5181 = vunpack.c.l.b16 %v4320
    %v5182 = vunpack.c.h.b16 %v4320
    %v5183 = vunpack.c.l.b16 %v4321
    %v5184 = vunpack.c.h.b16 %v4321
    %v5185 = vunpack.c.l.b16 %v4322
    %v5186 = vunpack.c.h.b16 %v4322
    %v5187 = vunpack.c.l.b16 %v4323
    %v5188 = vunpack.c.h.b16 %v4323
    %v5189 = vunpack.c.l.b16 %v4324
    %v5190 = vunpack.c.h.b16 %v4324
    %v5191 = vunpack.c.l.b16 %v4325
    %v5192 = vunpack.c.h.b16 %v4325
    %v5193 = vunpack.c.l.b16 %v4326
    %v5194 = vunpack.c.h.b16 %v4326
    %v5195 = vunpack.c.l.b16 %v4327
    %v5196 = vunpack.c.h.b16 %v4327
    %v5197 = vunpack.c.l.b16 %v4328
    %v5198 = vunpack.c.h.b16 %v4328
    %v5199 = vunpack.c.l.b16 %v4329
    %v5200 = vunpack.c.h.b16 %v4329
    %v5201 = vunpack.c.l.b16 %v4330
    %v5202 = vunpack.c.h.b16 %v4330
    %v5203 = vunpack.c.l.b16 %v4331
    %v5204 = vunpack.c.h.b16 %v4331
    %v5205 = vunpack.c.l.b16 %v4332
    %v5206 = vunpack.c.h.b16 %v4332
    %v5207 = vunpack.c.l.b16 %v4333
    %v5208 = vunpack.c.h.b16 %v4333
    %v5209 = vunpack.c.l.b16 %v4334
    %v5210 = vunpack.c.h.b16 %v4334
    %v5211 = vunpack.c.l.b16 %v4335
    %v5212 = vunpack.c.h.b16 %v4335
    %v5213 = vunpack.c.l.b16 %v4336
    %v5214 = vunpack.c.h.b16 %v4336
    %v5215 = vunpack.c.l.b16 %v4337
    %v5216 = vunpack.c.h.b16 %v4337
    %v5217 = vunpack.c.l.b16 %v4338
    %v5218 = vunpack.c.h.b16 %v4338
    %v5219 = vunpack.c.l.b16 %v4339
    %v5220 = vunpack.c.h.b16 %v4339
    %v5221 = vunpack.c.l.b16 %v4340
    %v5222 = vunpack.c.h.b16 %v4340
    %v5223 = vunpack.c.l.b16 %v4341
    %v5224 = vunpack.c.h.b16 %v4341
    %v5225 = vunpack.c.l.b16 %v4342
    %v5226 = vunpack.c.h.b16 %v4342
    %v5227 = vunpack.c.l.b16 %v4343
    %v5228 = vunpack.c.h.b16 %v4343
    %v5229 = vunpack.c.l.b16 %v4344
    %v5230 = vunpack.c.h.b16 %v4344
    %v5231 = vunpack.c.l.b16 %v4345
    %v5232 = vunpack.c.h.b16 %v4345
    %v5233 = vunpack.c.l.b16 %v4346
    %v5234 = vunpack.c.h.b16 %v4346
    %v5235 = vunpack.c.l.b16 %v4347
    %v5236 = vunpack.c.h.b16 %v4347
    %v5237 = vunpack.c.l.b16 %v4348
    %v5238 = vunpack.c.h.b16 %v4348
    %v5239 = vunpack.c.l.b16 %v4349
    %v5240 = vunpack.c.h.b16 %v4349
    %v5241 = vunpack.c.l.b16 %v4350
    %v5242 = vunpack.c.h.b16 %v4350
    %v5243 = vunpack.c.l.b16 %v4351
    %v5244 = vunpack.c.h.b16 %v4351
    %v5245 = vunpack.c.l.b16 %v4352
    %v5246 = vunpack.c.h.b16 %v4352
    %v5247 = vunpack.c.l.b16 %v4353
    %v5248 = vunpack.c.h.b16 %v4353
    %v5249 = vunpack.c.l.b16 %v4354
    %v5250 = vunpack.c.h.b16 %v4354
    %v5251 = vunpack.c.l.b16 %v4355
    %v5252 = vunpack.c.h.b16 %v4355
    %v5253 = vunpack.c.l.b16 %v4356
    %v5254 = vunpack.c.h.b16 %v4356
    %v5255 = vunpack.c.l.b16 %v4357
    %v5256 = vunpack.c.h.b16 %v4357
    %v5257 = vunpack.c.l.b16 %v4358
    %v5258 = vunpack.c.h.b16 %v4358
    %v5259 = vunpack.c.l.b16 %v4359
    %v5260 = vunpack.c.h.b16 %v4359
    %v5261 = vunpack.c.l.b16 %v4360
    %v5262 = vunpack.c.h.b16 %v4360
    %v5263 = vunpack.c.l.b16 %v4361
    %v5264 = vunpack.c.h.b16 %v4361
    %v5265 = vunpack.c.l.b16 %v4362
    %v5266 = vunpack.c.h.b16 %v4362
    %v5267 = vunpack.c.l.b16 %v4363
    %v5268 = vunpack.c.h.b16 %v4363
    %v5269 = vunpack.c.l.b16 %v4364
    %v5270 = vunpack.c.h.b16 %v4364
    %v5271 = vunpack.c.l.b16 %v4365
    %v5272 = vunpack.c.h.b16 %v4365
    %v5273 = vunpack.c.l.b16 %v4366
    %v5274 = vunpack.c.h.b16 %v4366
    %v5275 = vunpack.c.l.b16 %v4367
    %v5276 = vunpack.c.h.b16 %v4367
    %v5277 = vunpack.c.l.b16 %v4368
    %v5278 = vunpack.c.h.b16 %v4368
    %v5279 = vunpack.c.l.b16 %v4369
    %v5280 = vunpack.c.h.b16 %v4369
    %v5281 = vunpack.c.l.b16 %v4370
    %v5282 = vunpack.c.h.b16 %v4370
    %v5283 = vunpack.c.l.b16 %v4371
    %v5284 = vunpack.c.h.b16 %v4371
    %v5285 = vunpack.c.l.b16 %v4372
    %v5286 = vunpack.c.h.b16 %v4372
    %v5287 = vunpack.c.l.b16 %v4373
    %v5288 = vunpack.c.h.b16 %v4373
    %v5289 = vunpack.c.l.b16 %v4374
    %v5290 = vunpack.c.h.b16 %v4374
    %v5291 = vunpack.c.l.b16 %v4375
    %v5292 = vunpack.c.h.b16 %v4375
    %v5293 = vunpack.c.l.b16 %v4376
    %v5294 = vunpack.c.h.b16 %v4376
    %v5295 = vunpack.c.l.b16 %v4377
    %v5296 = vunpack.c.h.b16 %v4377
    %v5297 = vunpack.c.l.b16 %v4378
    %v5298 = vunpack.c.h.b16 %v4378
    %v5299 = vunpack.c.l.b16 %v4379
    %v5300 = vunpack.c.h.b16 %v4379
    %v5301 = vunpack.c.l.b16 %v4380
    %v5302 = vunpack.c.h.b16 %v4380
    %v5303 = vunpack.c.l.b16 %v4381
    %v5304 = vunpack.c.h.b16 %v4381
    %v5305 = vunpack.c.l.b16 %v4382
    %v5306 = vunpack.c.h.b16 %v4382
    %v5307 = vunpack.c.l.b16 %v4383
    %v5308 = vunpack.c.h.b16 %v4383
    %v5309 = vunpack.c.l.b16 %v4384
    %v5310 = vunpack.c.h.b16 %v4384
    %v5311 = vunpack.c.l.b16 %v4385
    %v5312 = vunpack.c.h.b16 %v4385
    %v5313 = vunpack.c.l.b16 %v4386
    %v5314 = vunpack.c.h.b16 %v4386
    %v5315 = vunpack.c.l.b16 %v4387
    %v5316 = vunpack.c.h.b16 %v4387
    %v5317 = vunpack.c.l.b16 %v4388
    %v5318 = vunpack.c.h.b16 %v4388
    %v5319 = vunpack.c.l.b16 %v4389
    %v5320 = vunpack.c.h.b16 %v4389
    %v5321 = vunpack.c.l.b16 %v4390
    %v5322 = vunpack.c.h.b16 %v4390
    %v5323 = vunpack.c.l.b16 %v4391
    %v5324 = vunpack.c.h.b16 %v4391
    %v5325 = vunpack.c.l.b16 %v4392
    %v5326 = vunpack.c.h.b16 %v4392
    %v5327 = vunpack.c.l.b16 %v4393
    %v5328 = vunpack.c.h.b16 %v4393
    %v5329 = vunpack.c.l.b16 %v4394
    %v5330 = vunpack.c.h.b16 %v4394
    %v5331 = vunpack.c.l.b16 %v4395
    %v5332 = vunpack.c.h.b16 %v4395
    %v5333 = vunpack.c.l.b16 %v4396
    %v5334 = vunpack.c.h.b16 %v4396
    %v5335 = vunpack.c.l.b16 %v4397
    %v5336 = vunpack.c.h.b16 %v4397
    %v5337 = vunpack.c.l.b16 %v4398
    %v5338 = vunpack.c.h.b16 %v4398
    %v5339 = vunpack.c.l.b16 %v4399
    %v5340 = vunpack.c.h.b16 %v4399
    %v5341 = vunpack.c.l.b16 %v4400
    %v5342 = vunpack.c.h.b16 %v4400
    %v5343 = vunpack.c.l.b16 %v4401
    %v5344 = vunpack.c.h.b16 %v4401
    %v5345 = vunpack.c.l.b16 %v4402
    %v5346 = vunpack.c.h.b16 %v4402
    %v5347 = vunpack.c.l.b16 %v4403
    %v5348 = vunpack.c.h.b16 %v4403
    %v5349 = vunpack.c.l.b16 %v4404
    %v5350 = vunpack.c.h.b16 %v4404
    %v5351 = vunpack.c.l.b16 %v4405
    %v5352 = vunpack.c.h.b16 %v4405
    %v5353 = vunpack.c.l.b16 %v4406
    %v5354 = vunpack.c.h.b16 %v4406
    %v5355 = vunpack.c.l.b16 %v4407
    %v5356 = vunpack.c.h.b16 %v4407
    %v5357 = vunpack.c.l.b16 %v4408
    %v5358 = vunpack.c.h.b16 %v4408
    %v5359 = vunpack.c.l.b16 %v4409
    %v5360 = vunpack.c.h.b16 %v4409
    %v5361 = vunpack.c.l.b16 %v4410
    %v5362 = vunpack.c.h.b16 %v4410
    %v5363 = vunpack.c.l.b16 %v4411
    %v5364 = vunpack.c.h.b16 %v4411
    %v5365 = vunpack.c.l.b16 %v4412
    %v5366 = vunpack.c.h.b16 %v4412
    %v5367 = vunpack.c.l.b16 %v4413
    %v5368 = vunpack.c.h.b16 %v4413
    %v5369 = vunpack.c.l.b16 %v4414
    %v5370 = vunpack.c.h.b16 %v4414
    %v5371 = vunpack.c.l.b16 %v4415
    %v5372 = vunpack.c.h.b16 %v4415
    %v5373 = vunpack.c.l.b16 %v4416
    %v5374 = vunpack.c.h.b16 %v4416
    %v5375 = vunpack.c.l.b16 %v4417
    %v5376 = vunpack.c.h.b16 %v4417
    %v5377 = vunpack.c.l.b16 %v4418
    %v5378 = vunpack.c.h.b16 %v4418
    %v5379 = vunpack.c.l.b16 %v4419
    %v5380 = vunpack.c.h.b16 %v4419
    %v5381 = vunpack.c.l.b16 %v4420
    %v5382 = vunpack.c.h.b16 %v4420
    %v5383 = vunpack.c.l.b16 %v4421
    %v5384 = vunpack.c.h.b16 %v4421
    %v5385 = vunpack.c.l.b16 %v4422
    %v5386 = vunpack.c.h.b16 %v4422
    %v5387 = vunpack.c.l.b16 %v4423
    %v5388 = vunpack.c.h.b16 %v4423
    %v5389 = vunpack.c.l.b16 %v4424
    %v5390 = vunpack.c.h.b16 %v4424
    %v5391 = vunpack.c.l.b16 %v4425
    %v5392 = vunpack.c.h.b16 %v4425
    %v5393 = vunpack.c.l.b16 %v4426
    %v5394 = vunpack.c.h.b16 %v4426
    %v5395 = vunpack.c.l.b16 %v4427
    %v5396 = vunpack.c.h.b16 %v4427
    %v5397 = vunpack.c.l.b16 %v4428
    %v5398 = vunpack.c.h.b16 %v4428
    %v5399 = vunpack.c.l.b16 %v4429
    %v5400 = vunpack.c.h.b16 %v4429
    %v5401 = vunpack.c.l.b16 %v4430
    %v5402 = vunpack.c.h.b16 %v4430
    %v5403 = vunpack.c.l.b16 %v4431
    %v5404 = vunpack.c.h.b16 %v4431
    %v5405 = vunpack.c.l.b16 %v4432
    %v5406 = vunpack.c.h.b16 %v4432
    %v5407 = vunpack.c.l.b16 %v4433
    %v5408 = vunpack.c.h.b16 %v4433
    %v5409 = vunpack.c.l.b16 %v4434
    %v5410 = vunpack.c.h.b16 %v4434
    %v5411 = vunpack.c.l.b16 %v4435
    %v5412 = vunpack.c.h.b16 %v4435
    %v5413 = vunpack.c.l.b16 %v4436
    %v5414 = vunpack.c.h.b16 %v4436
    %v5415 = vunpack.c.l.b16 %v4437
    %v5416 = vunpack.c.h.b16 %v4437
    %v5417 = vunpack.c.l.b16 %v4438
    %v5418 = vunpack.c.h.b16 %v4438
    %v5419 = vunpack.c.l.b16 %v4439
    %v5420 = vunpack.c.h.b16 %v4439
    %v5421 = vunpack.c.l.b16 %v4440
    %v5422 = vunpack.c.h.b16 %v4440
    %v5423 = vunpack.c.l.b16 %v4441
    %v5424 = vunpack.c.h.b16 %v4441
    %v5425 = vunpack.c.l.b16 %v4442
    %v5426 = vunpack.c.h.b16 %v4442
    %v5427 = vunpack.c.l.b16 %v4443
    %v5428 = vunpack.c.h.b16 %v4443
    %v5429 = vunpack.c.l.b16 %v4444
    %v5430 = vunpack.c.h.b16 %v4444
    %v5431 = vunpack.c.l.b16 %v4445
    %v5432 = vunpack.c.h.b16 %v4445
    %v5433 = vunpack.c.l.b16 %v4446
    %v5434 = vunpack.c.h.b16 %v4446
    %v5435 = vunpack.c.l.b16 %v4447
    %v5436 = vunpack.c.h.b16 %v4447
    %v5437 = vunpack.c.l.b16 %v4448
    %v5438 = vunpack.c.h.b16 %v4448
    %v5439 = vunpack.c.l.b16 %v4449
    %v5440 = vunpack.c.h.b16 %v4449
    %v5441 = vunpack.c.l.b16 %v4450
    %v5442 = vunpack.c.h.b16 %v4450
    %v5443 = vunpack.c.l.b16 %v4451
    %v5444 = vunpack.c.h.b16 %v4451
    %v5445 = vunpack.c.l.b16 %v4452
    %v5446 = vunpack.c.h.b16 %v4452
    %v5447 = vunpack.c.l.b16 %v4453
    %v5448 = vunpack.c.h.b16 %v4453
    %v5449 = vunpack.c.l.b16 %v4454
    %v5450 = vunpack.c.h.b16 %v4454
    %v5451 = vunpack.c.l.b16 %v4455
    %v5452 = vunpack.c.h.b16 %v4455
    %v5453 = vunpack.c.l.b16 %v4456
    %v5454 = vunpack.c.h.b16 %v4456
    %v5455 = vunpack.c.l.b16 %v4457
    %v5456 = vunpack.c.h.b16 %v4457
    %v5457 = vunpack.c.l.b16 %v4458
    %v5458 = vunpack.c.h.b16 %v4458
    %v5459 = vunpack.c.l.b16 %v4459
    %v5460 = vunpack.c.h.b16 %v4459
    %v5461 = vunpack.c.l.b16 %v4460
    %v5462 = vunpack.c.h.b16 %v4460
    %v5463 = vunpack.c.l.b16 %v4461
    %v5464 = vunpack.c.h.b16 %v4461
    %v5465 = vunpack.c.l.b16 %v4462
    %v5466 = vunpack.c.h.b16 %v4462
    %v5467 = vunpack.c.l.b16 %v4463
    %v5468 = vunpack.c.h.b16 %v4463
    %v5469 = vunpack.c.l.b16 %v4464
    %v5470 = vunpack.c.h.b16 %v4464
    %v5471 = vunpack.c.l.b16 %v4465
    %v5472 = vunpack.c.h.b16 %v4465
    %v5473 = vunpack.c.l.b16 %v4466
    %v5474 = vunpack.c.h.b16 %v4466
    %v5475 = vunpack.c.l.b16 %v4467
    %v5476 = vunpack.c.h.b16 %v4467
    %v5477 = vunpack.c.l.b16 %v4468
    %v5478 = vunpack.c.h.b16 %v4468
    %v5479 = vunpack.c.l.b16 %v4469
    %v5480 = vunpack.c.h.b16 %v4469
    %v5481 = vunpack.c.l.b16 %v4470
    %v5482 = vunpack.c.h.b16 %v4470
    %v5483 = vunpack.c.l.b16 %v4471
    %v5484 = vunpack.c.h.b16 %v4471
    %v5485 = vunpack.c.l.b16 %v4472
    %v5486 = vunpack.c.h.b16 %v4472
    %v5487 = vunpack.c.l.b16 %v4473
    %v5488 = vunpack.c.h.b16 %v4473
    %v5489 = vunpack.c.l.b16 %v4474
    %v5490 = vunpack.c.h.b16 %v4474
    %v5491 = vunpack.c.l.b16 %v4475
    %v5492 = vunpack.c.h.b16 %v4475
    %v5493 = vunpack.c.l.b16 %v4476
    %v5494 = vunpack.c.h.b16 %v4476
    %v5495 = vunpack.c.l.b16 %v4477
    %v5496 = vunpack.c.h.b16 %v4477
    %v5497 = vunpack.c.l.b16 %v4478
    %v5498 = vunpack.c.h.b16 %v4478
    %v5499 = vunpack.c.l.b16 %v4479
    %v5500 = vunpack.c.h.b16 %v4479
    %v5501 = vunpack.c.l.b16 %v4480
    %v5502 = vunpack.c.h.b16 %v4480
    %v5503 = vunpack.c.l.b16 %v4481
    %v5504 = vunpack.c.h.b16 %v4481
    %v5505 = vunpack.c.l.b16 %v4482
    %v5506 = vunpack.c.h.b16 %v4482
    %v5507 = vunpack.c.l.b16 %v4483
    %v5508 = vunpack.c.h.b16 %v4483
    %v5509 = vunpack.c.l.b16 %v4484
    %v5510 = vunpack.c.h.b16 %v4484
    %v5511 = vunpack.c.l.b16 %v4485
    %v5512 = vunpack.c.h.b16 %v4485
    %v5513 = vunpack.c.l.b16 %v4486
    %v5514 = vunpack.c.h.b16 %v4486
    %v5515 = vunpack.c.l.b16 %v4487
    %v5516 = vunpack.c.h.b16 %v4487
    %v5517 = vunpack.c.l.b16 %v4488
    %v5518 = vunpack.c.h.b16 %v4488
    %v5519 = vunpack.c.l.b16 %v4489
    %v5520 = vunpack.c.h.b16 %v4489
    %v5521 = vunpack.c.l.b16 %v4490
    %v5522 = vunpack.c.h.b16 %v4490
    %v5523 = vunpack.c.l.b16 %v4491
    %v5524 = vunpack.c.h.b16 %v4491
    %v5525 = vunpack.c.l.b16 %v4492
    %v5526 = vunpack.c.h.b16 %v4492
    %v5527 = vunpack.c.l.b16 %v4493
    %v5528 = vunpack.c.h.b16 %v4493
    %v5529 = vunpack.c.l.b16 %v4494
    %v5530 = vunpack.c.h.b16 %v4494
    %v5531 = vunpack.c.l.b16 %v4495
    %v5532 = vunpack.c.h.b16 %v4495
    %v5533 = vunpack.c.l.b16 %v4496
    %v5534 = vunpack.c.h.b16 %v4496
    %v5535 = vunpack.c.l.b16 %v4497
    %v5536 = vunpack.c.h.b16 %v4497
    %v5537 = vunpack.c.l.b16 %v4498
    %v5538 = vunpack.c.h.b16 %v4498
    %v5539 = vunpack.c.l.b16 %v4499
    %v5540 = vunpack.c.h.b16 %v4499
    %v5541 = vunpack.c.l.b16 %v4500
    %v5542 = vunpack.c.h.b16 %v4500
    %v5543 = vunpack.c.l.b16 %v4501
    %v5544 = vunpack.c.h.b16 %v4501
    %v5545 = vunpack.c.l.b16 %v4502
    %v5546 = vunpack.c.h.b16 %v4502
    %v5547 = vunpack.c.l.b16 %v4503
    %v5548 = vunpack.c.h.b16 %v4503
    %v5549 = vunpack.c.l.b16 %v4504
    %v5550 = vunpack.c.h.b16 %v4504
    %v5551 = vunpack.c.l.b16 %v4505
    %v5552 = vunpack.c.h.b16 %v4505
    %v5553 = vunpack.c.l.b16 %v4506
    %v5554 = vunpack.c.h.b16 %v4506
    %v5555 = vunpack.c.l.b16 %v4507
    %v5556 = vunpack.c.h.b16 %v4507
    %v5557 = vunpack.c.l.b16 %v4508
    %v5558 = vunpack.c.h.b16 %v4508
    %v5559 = vunpack.c.l.b16 %v4509
    %v5560 = vunpack.c.h.b16 %v4509
    %v5561 = vunpack.c.l.b16 %v4510
    %v5562 = vunpack.c.h.b16 %v4510
    %v5563 = vunpack.c.l.b16 %v4511
    %v5564 = vunpack.c.h.b16 %v4511
    %v5565 = vunpack.c.l.b16 %v4512
    %v5566 = vunpack.c.h.b16 %v4512
    %v5567 = vunpack.c.l.b16 %v4513
    %v5568 = vunpack.c.h.b16 %v4513
    %v5569 = vunpack.c.l.b16 %v4514
    %v5570 = vunpack.c.h.b16 %v4514
    %v5571 = vunpack.c.l.b16 %v4515
    %v5572 = vunpack.c.h.b16 %v4515
    %v5573 = vunpack.c.l.b16 %v4516
    %v5574 = vunpack.c.h.b16 %v4516
    %v5575 = vunpack.c.l.b16 %v4517
    %v5576 = vunpack.c.h.b16 %v4517
    %v5577 = vunpack.c.l.b16 %v4518
    %v5578 = vunpack.c.h.b16 %v4518
    %v5579 = vunpack.c.l.b16 %v4519
    %v5580 = vunpack.c.h.b16 %v4519
    %v5581 = vunpack.c.l.b16 %v4520
    %v5582 = vunpack.c.h.b16 %v4520
    %v5583 = vunpack.c.l.b16 %v4521
    %v5584 = vunpack.c.h.b16 %v4521
    %v5585 = vunpack.c.l.b16 %v4522
    %v5586 = vunpack.c.h.b16 %v4522
    %v5587 = vunpack.c.l.b16 %v4523
    %v5588 = vunpack.c.h.b16 %v4523
    %v5589 = vunpack.c.l.b16 %v4524
    %v5590 = vunpack.c.h.b16 %v4524
    %v5591 = vunpack.c.l.b16 %v4525
    %v5592 = vunpack.c.h.b16 %v4525
    %v5593 = vunpack.c.l.b16 %v4526
    %v5594 = vunpack.c.h.b16 %v4526
    %v5595 = vunpack.c.l.b16 %v4527
    %v5596 = vunpack.c.h.b16 %v4527
    %v5597 = vunpack.c.l.b16 %v4528
    %v5598 = vunpack.c.h.b16 %v4528
    %v5599 = vunpack.c.l.b16 %v4529
    %v5600 = vunpack.c.h.b16 %v4529
    %v5601 = vunpack.c.l.b16 %v4530
    %v5602 = vunpack.c.h.b16 %v4530
    %v5603 = vunpack.c.l.b16 %v4531
    %v5604 = vunpack.c.h.b16 %v4531
    %v5605 = vunpack.c.l.b16 %v4532
    %v5606 = vunpack.c.h.b16 %v4532
    %v5607 = vunpack.c.l.b16 %v4533
    %v5608 = vunpack.c.h.b16 %v4533
    %v5609 = vunpack.c.l.b16 %v4534
    %v5610 = vunpack.c.h.b16 %v4534
    %v5611 = vunpack.c.l.b16 %v4535
    %v5612 = vunpack.c.h.b16 %v4535
    %v5613 = vunpack.c.l.b16 %v4536
    %v5614 = vunpack.c.h.b16 %v4536
    %v5615 = vunpack.c.l.b16 %v4537
    %v5616 = vunpack.c.h.b16 %v4537
    %v5617 = vunpack.c.l.b16 %v4538
    %v5618 = vunpack.c.h.b16 %v4538
    %v5619 = vunpack.c.l.b16 %v4539
    %v5620 = vunpack.c.h.b16 %v4539
    %v5621 = vunpack.c.l.b16 %v4540
    %v5622 = vunpack.c.h.b16 %v4540
    %v5623 = vunpack.c.l.b16 %v4541
    %v5624 = vunpack.c.h.b16 %v4541
    %v5625 = vunpack.c.l.b16 %v4542
    %v5626 = vunpack.c.h.b16 %v4542
    %v5627 = vunpack.c.l.b16 %v4543
    %v5628 = vunpack.c.h.b16 %v4543
    %v5629 = vunpack.c.l.b16 %v4544
    %v5630 = vunpack.c.h.b16 %v4544
    %v5631 = vunpack.c.l.b16 %v4545
    %v5632 = vunpack.c.h.b16 %v4545
    %v5633 = vunpack.c.l.b16 %v4546
    %v5634 = vunpack.c.h.b16 %v4546
    %v5635 = vunpack.c.l.b16 %v4547
    %v5636 = vunpack.c.h.b16 %v4547
    %v5637 = vunpack.c.l.b16 %v4548
    %v5638 = vunpack.c.h.b16 %v4548
    %v5639 = vunpack.c.l.b16 %v4549
    %v5640 = vunpack.c.h.b16 %v4549
    %v5641 = vunpack.c.l.b16 %v4550
    %v5642 = vunpack.c.h.b16 %v4550
    %v5643 = vunpack.c.l.b16 %v4551
    %v5644 = vunpack.c.h.b16 %v4551
    %v5645 = vunpack.c.l.b16 %v4552
    %v5646 = vunpack.c.h.b16 %v4552
    %v5647 = vunpack.c.l.b16 %v4553
    %v5648 = vunpack.c.h.b16 %v4553
    %v5649 = vunpack.c.l.b16 %v4554
    %v5650 = vunpack.c.h.b16 %v4554
    %v5651 = vunpack.c.l.b16 %v4555
    %v5652 = vunpack.c.h.b16 %v4555
    %v5653 = vunpack.c.l.b16 %v4556
    %v5654 = vunpack.c.h.b16 %v4556
    %v5655 = vunpack.c.l.b16 %v4557
    %v5656 = vunpack.c.h.b16 %v4557
    %v5657 = vunpack.c.l.b16 %v4558
    %v5658 = vunpack.c.h.b16 %v4558
    %v5659 = vunpack.c.l.b16 %v4559
    %v5660 = vunpack.c.h.b16 %v4559
    %v5661 = vunpack.c.l.b16 %v4560
    %v5662 = vunpack.c.h.b16 %v4560
    %v5663 = vunpack.c.l.b16 %v4561
    %v5664 = vunpack.c.h.b16 %v4561
    %v5665 = vunpack.c.l.b16 %v4562
    %v5666 = vunpack.c.h.b16 %v4562
    %v5667 = vunpack.c.l.b16 %v4563
    %v5668 = vunpack.c.h.b16 %v4563
    %v5669 = vunpack.c.l.b16 %v4564
    %v5670 = vunpack.c.h.b16 %v4564
    %v5671 = vunpack.c.l.b16 %v4565
    %v5672 = vunpack.c.h.b16 %v4565
    %v5673 = vunpack.c.l.b16 %v4566
    %v5674 = vunpack.c.h.b16 %v4566
    %v5675 = vunpack.c.l.b16 %v4567
    %v5676 = vunpack.c.h.b16 %v4567
    %v5677 = vunpack.c.l.b16 %v4568
    %v5678 = vunpack.c.h.b16 %v4568
    %v5679 = vunpack.c.l.b16 %v4569
    %v5680 = vunpack.c.h.b16 %v4569
    %v5681 = vunpack.c.l.b16 %v4570
    %v5682 = vunpack.c.h.b16 %v4570
    %v5683 = vunpack.c.l.b16 %v4571
    %v5684 = vunpack.c.h.b16 %v4571
    %v5685 = vunpack.c.l.b16 %v4572
    %v5686 = vunpack.c.h.b16 %v4572
    %v5687 = vunpack.c.l.b16 %v4573
    %v5688 = vunpack.c.h.b16 %v4573
    %v5689 = vunpack.c.l.b16 %v4574
    %v5690 = vunpack.c.h.b16 %v4574
    %v5691 = vunpack.c.l.b16 %v4575
    %v5692 = vunpack.c.h.b16 %v4575
    %v5693 = vunpack.c.l.b16 %v4576
    %v5694 = vunpack.c.h.b16 %v4576
    %v5695 = vunpack.c.l.b16 %v4577
    %v5696 = vunpack.c.h.b16 %v4577
    %v5697 = vunpack.c.l.b16 %v4578
    %v5698 = vunpack.c.h.b16 %v4578
    %v5699 = vunpack.c.l.b16 %v4579
    %v5700 = vunpack.c.h.b16 %v4579
    %v5701 = vunpack.c.l.b16 %v4580
    %v5702 = vunpack.c.h.b16 %v4580
    %v5703 = vunpack.c.l.b16 %v4581
    %v5704 = vunpack.c.h.b16 %v4581
    %v5705 = vunpack.c.l.b16 %v4582
    %v5706 = vunpack.c.h.b16 %v4582
    %v5707 = vunpack.c.l.b16 %v4583
    %v5708 = vunpack.c.h.b16 %v4583
    %v5709 = vunpack.c.l.b16 %v4584
    %v5710 = vunpack.c.h.b16 %v4584
    %v5711 = vunpack.c.l.b16 %v4585
    %v5712 = vunpack.c.h.b16 %v4585
    %v5713 = vunpack.c.l.b16 %v4586
    %v5714 = vunpack.c.h.b16 %v4586
    %v5715 = vunpack.c.l.b16 %v4587
    %v5716 = vunpack.c.h.b16 %v4587
    %v5717 = vunpack.c.l.b16 %v4588
    %v5718 = vunpack.c.h.b16 %v4588
    %v5719 = vunpack.c.l.b16 %v4589
    %v5720 = vunpack.c.h.b16 %v4589
    %v5721 = vunpack.c.l.b16 %v4590
    %v5722 = vunpack.c.h.b16 %v4590
    %v5723 = vunpack.c.l.b16 %v4591
    %v5724 = vunpack.c.h.b16 %v4591
    %v5725 = vunpack.c.l.b16 %v4592
    %v5726 = vunpack.c.h.b16 %v4592
    %v5727 = vunpack.c.l.b16 %v4593
    %v5728 = vunpack.c.h.b16 %v4593
    %v5729 = vunpack.c.l.b16 %v4594
    %v5730 = vunpack.c.h.b16 %v4594
    %v5731 = vunpack.c.l.b16 %v4595
    %v5732 = vunpack.c.h.b16 %v4595
    %v5733 = vunpack.c.l.b16 %v4596
    %v5734 = vunpack.c.h.b16 %v4596
    %v5735 = vunpack.c.l.b16 %v4597
    %v5736 = vunpack.c.h.b16 %v4597
    %v5737 = vunpack.c.l.b16 %v4598
    %v5738 = vunpack.c.h.b16 %v4598
    %v5739 = vunpack.c.l.b16 %v4599
    %v5740 = vunpack.c.h.b16 %v4599
    %v5741 = vunpack.c.l.b16 %v4600
    %v5742 = vunpack.c.h.b16 %v4600
    %v5743 = vunpack.c.l.b16 %v4601
    %v5744 = vunpack.c.h.b16 %v4601
    %v5745 = vunpack.c.l.b16 %v4602
    %v5746 = vunpack.c.h.b16 %v4602
    %v5747 = vunpack.c.l.b16 %v4603
    %v5748 = vunpack.c.h.b16 %v4603
    %v5749 = vunpack.c.l.b16 %v4604
    %v5750 = vunpack.c.h.b16 %v4604
    %v5751 = vunpack.c.l.b16 %v4605
    %v5752 = vunpack.c.h.b16 %v4605
    %v5753 = vunpack.c.l.b16 %v4606
    %v5754 = vunpack.c.h.b16 %v4606
    %v5755 = vunpack.c.l.b16 %v4607
    %v5756 = vunpack.c.h.b16 %v4607
    %v5757 = vunpack.c.l.b16 %v4608
    %v5758 = vunpack.c.h.b16 %v4608
    %v5759 = vunpack.c.l.b16 %v4609
    %v5760 = vunpack.c.h.b16 %v4609
    %v5761 = vunpack.c.l.b16 %v4610
    %v5762 = vunpack.c.h.b16 %v4610
    %v5763 = vpack.c.b16 %v5001, %v4995
    %v5764 = vpack.c.b16 %v5002, %v4996
    %v5765 = vpack.c.b16 %v5003, %v4997
    %v5766 = vpack.c.b16 %v5004, %v4998
    %v5767 = vpack.c.b16 %v5005, %v4999
    %v5768 = vpack.c.b16 %v5006, %v5000
    %v5769 = vpack.c.b16 %v5013, %v5007
    %v5770 = vpack.c.b16 %v5014, %v5008
    %v5771 = vpack.c.b16 %v5015, %v5009
    %v5772 = vpack.c.b16 %v5016, %v5010
    %v5773 = vpack.c.b16 %v5017, %v5011
    %v5774 = vpack.c.b16 %v5018, %v5012
    %v5775 = vpack.c.b16 %v5025, %v5019
    %v5776 = vpack.c.b16 %v5026, %v5020
    %v5777 = vpack.c.b16 %v5027, %v5021
    %v5778 = vpack.c.b16 %v5028, %v5022
    %v5779 = vpack.c.b16 %v5029, %v5023
    %v5780 = vpack.c.b16 %v5030, %v5024
    %v5781 = vpack.c.b16 %v5037, %v5031
    %v5782 = vpack.c.b16 %v5038, %v5032
    %v5783 = vpack.c.b16 %v5039, %v5033
    %v5784 = vpack.c.b16 %v5040, %v5034
    %v5785 = vpack.c.b16 %v5041, %v5035
    %v5786 = vpack.c.b16 %v5042, %v5036
    %v5787 = vpack.c.b16 %v5049, %v5043
    %v5788 = vpack.c.b16 %v5050, %v5044
    %v5789 = vpack.c.b16 %v5051, %v5045
    %v5790 = vpack.c.b16 %v5052, %v5046
    %v5791 = vpack.c.b16 %v5053, %v5047
    %v5792 = vpack.c.b16 %v5054, %v5048
    %v5793 = vpack.c.b16 %v5061, %v5055
    %v5794 = vpack.c.b16 %v5062, %v5056
    %v5795 = vpack.c.b16 %v5063, %v5057
    %v5796 = vpack.c.b16 %v5064, %v5058
    %v5797 = vpack.c.b16 %v5065, %v5059
    %v5798 = vpack.c.b16 %v5066, %v5060
    %v5799 = vpack.c.b16 %v5073, %v5067
    %v5800 = vpack.c.b16 %v5074, %v5068
    %v5801 = vpack.c.b16 %v5075, %v5069
    %v5802 = vpack.c.b16 %v5076, %v5070
    %v5803 = vpack.c.b16 %v5077, %v5071
    %v5804 = vpack.c.b16 %v5078, %v5072
    %v5805 = vpack.c.b16 %v5085, %v5079
    %v5806 = vpack.c.b16 %v5086, %v5080
    %v5807 = vpack.c.b16 %v5087, %v5081
    %v5808 = vpack.c.b16 %v5088, %v5082
    %v5809 = vpack.c.b16 %v5089, %v5083
    %v5810 = vpack.c.b16 %v5090, %v5084
    %v5811 = vpack.c.b16 %v5097, %v5091
    %v5812 = vpack.c.b16 %v5098, %v5092
    %v5813 = vpack.c.b16 %v5099, %v5093
    %v5814 = vpack.c.b16 %v5100, %v5094
    %v5815 = vpack.c.b16 %v5101, %v5095
    %v5816 = vpack.c.b16 %v5102, %v5096
    %v5817 = vpack.c.b16 %v5109, %v5103
    %v5818 = vpack.c.b16 %v5110, %v5104
    %v5819 = vpack.c.b16 %v5111, %v5105
    %v5820 = vpack.c.b16 %v5112, %v5106
    %v5821 = vpack.c.b16 %v5113, %v5107
    %v5822 = vpack.c.b16 %v5114, %v5108
    %v5823 = vpack.c.b16 %v5121, %v5115
    %v5824 = vpack.c.b16 %v5122, %v5116
    %v5825 = vpack.c.b16 %v5123, %v5117
    %v5826 = vpack.c.b16 %v5124, %v5118
    %v5827 = vpack.c.b16 %v5125, %v5119
    %v5828 = vpack.c.b16 %v5126, %v5120
    %v5829 = vpack.c.b16 %v5133, %v5127
    %v5830 = vpack.c.b16 %v5134, %v5128
    %v5831 = vpack.c.b16 %v5135, %v5129
    %v5832 = vpack.c.b16 %v5136, %v5130
    %v5833 = vpack.c.b16 %v5137, %v5131
    %v5834 = vpack.c.b16 %v5138, %v5132
    %v5835 = vpack.c.b16 %v5145, %v5139
    %v5836 = vpack.c.b16 %v5146, %v5140
    %v5837 = vpack.c.b16 %v5147, %v5141
    %v5838 = vpack.c.b16 %v5148, %v5142
    %v5839 = vpack.c.b16 %v5149, %v5143
    %v5840 = vpack.c.b16 %v5150, %v5144
    %v5841 = vpack.c.b16 %v5157, %v5151
    %v5842 = vpack.c.b16 %v5158, %v5152
    %v5843 = vpack.c.b16 %v5159, %v5153
    %v5844 = vpack.c.b16 %v5160, %v5154
    %v5845 = vpack.c.b16 %v5161, %v5155
    %v5846 = vpack.c.b16 %v5162, %v5156
    %v5847 = vpack.c.b16 %v5169, %v5163
    %v5848 = vpack.c.b16 %v5170, %v5164
    %v5849 = vpack.c.b16 %v5171, %v5165
    %v5850 = vpack.c.b16 %v5172, %v5166
    %v5851 = vpack.c.b16 %v5173, %v5167
    %v5852 = vpack.c.b16 %v5174, %v5168
    %v5853 = vpack.c.b16 %v5181, %v5175
    %v5854 = vpack.c.b16 %v5182, %v5176
    %v5855 = vpack.c.b16 %v5183, %v5177
    %v5856 = vpack.c.b16 %v5184, %v5178
    %v5857 = vpack.c.b16 %v5185, %v5179
    %v5858 = vpack.c.b16 %v5186, %v5180
    %v5859 = vpack.c.b16 %v5193, %v5187
    %v5860 = vpack.c.b16 %v5194, %v5188
    %v5861 = vpack.c.b16 %v5195, %v5189
    %v5862 = vpack.c.b16 %v5196, %v5190
    %v5863 = vpack.c.b16 %v5197, %v5191
    %v5864 = vpack.c.b16 %v5198, %v5192
    %v5865 = vpack.c.b16 %v5205, %v5199
    %v5866 = vpack.c.b16 %v5206, %v5200
    %v5867 = vpack.c.b16 %v5207, %v5201
    %v5868 = vpack.c.b16 %v5208, %v5202
    %v5869 = vpack.c.b16 %v5209, %v5203
    %v5870 = vpack.c.b16 %v5210, %v5204
    %v5871 = vpack.c.b16 %v5217, %v5211
    %v5872 = vpack.c.b16 %v5218, %v5212
    %v5873 = vpack.c.b16 %v5219, %v5213
    %v5874 = vpack.c.b16 %v5220, %v5214
    %v5875 = vpack.c.b16 %v5221, %v5215
    %v5876 = vpack.c.b16 %v5222, %v5216
    %v5877 = vpack.c.b16 %v5229, %v5223
    %v5878 = vpack.c.b16 %v5230, %v5224
    %v5879 = vpack.c.b16 %v5231, %v5225
    %v5880 = vpack.c.b16 %v5232, %v5226
    %v5881 = vpack.c.b16 %v5233, %v5227
    %v5882 = vpack.c.b16 %v5234, %v5228
    %v5883 = vpack.c.b16 %v5241, %v5235
    %v5884 = vpack.c.b16 %v5242, %v5236
    %v5885 = vpack.c.b16 %v5243, %v5237
    %v5886 = vpack.c.b16 %v5244, %v5238
    %v5887 = vpack.c.b16 %v5245, %v5239
    %v5888 = vpack.c.b16 %v5246, %v5240
    %v5889 = vpack.c.b16 %v5253, %v5247
    %v5890 = vpack.c.b16 %v5254, %v5248
    %v5891 = vpack.c.b16 %v5255, %v5249
    %v5892 = vpack.c.b16 %v5256, %v5250
    %v5893 = vpack.c.b16 %v5257, %v5251
    %v5894 = vpack.c.b16 %v5258, %v5252
    %v5895 = vpack.c.b16 %v5265, %v5259
    %v5896 = vpack.c.b16 %v5266, %v5260
    %v5897 = vpack.c.b16 %v5267, %v5261
    %v5898 = vpack.c.b16 %v5268, %v5262
    %v5899 = vpack.c.b16 %v5269, %v5263
    %v5900 = vpack.c.b16 %v5270, %v5264
    %v5901 = vpack.c.b16 %v5277, %v5271
    %v5902 = vpack.c.b16 %v5278, %v5272
    %v5903 = vpack.c.b16 %v5279, %v5273
    %v5904 = vpack.c.b16 %v5280, %v5274
    %v5905 = vpack.c.b16 %v5281, %v5275
    %v5906 = vpack.c.b16 %v5282, %v5276
    %v5907 = vpack.c.b16 %v5289, %v5283
    %v5908 = vpack.c.b16 %v5290, %v5284
    %v5909 = vpack.c.b16 %v5291, %v5285
    %v5910 = vpack.c.b16 %v5292, %v5286
    %v5911 = vpack.c.b16 %v5293, %v5287
    %v5912 = vpack.c.b16 %v5294, %v5288
    %v5913 = vpack.c.b16 %v5301, %v5295
    %v5914 = vpack.c.b16 %v5302, %v5296
    %v5915 = vpack.c.b16 %v5303, %v5297
    %v5916 = vpack.c.b16 %v5304, %v5298
    %v5917 = vpack.c.b16 %v5305, %v5299
    %v5918 = vpack.c.b16 %v5306, %v5300
    %v5919 = vpack.c.b16 %v5313, %v5307
    %v5920 = vpack.c.b16 %v5314, %v5308
    %v5921 = vpack.c.b16 %v5315, %v5309
    %v5922 = vpack.c.b16 %v5316, %v5310
    %v5923 = vpack.c.b16 %v5317, %v5311
    %v5924 = vpack.c.b16 %v5318, %v5312
    %v5925 = vpack.c.b16 %v5325, %v5319
    %v5926 = vpack.c.b16 %v5326, %v5320
    %v5927 = vpack.c.b16 %v5327, %v5321
    %v5928 = vpack.c.b16 %v5328, %v5322
    %v5929 = vpack.c.b16 %v5329, %v5323
    %v5930 = vpack.c.b16 %v5330, %v5324
    %v5931 = vpack.c.b16 %v5337, %v5331
    %v5932 = vpack.c.b16 %v5338, %v5332
    %v5933 = vpack.c.b16 %v5339, %v5333
    %v5934 = vpack.c.b16 %v5340, %v5334
    %v5935 = vpack.c.b16 %v5341, %v5335
    %v5936 = vpack.c.b16 %v5342, %v5336
    %v5937 = vpack.c.b16 %v5349, %v5343
    %v5938 = vpack.c.b16 %v5350, %v5344
    %v5939 = vpack.c.b16 %v5351, %v5345
    %v5940 = vpack.c.b16 %v5352, %v5346
    %v5941 = vpack.c.b16 %v5353, %v5347
    %v5942 = vpack.c.b16 %v5354, %v5348
    %v5943 = vpack.c.b16 %v5361, %v5355
    %v5944 = vpack.c.b16 %v5362, %v5356
    %v5945 = vpack.c.b16 %v5363, %v5357
    %v5946 = vpack.c.b16 %v5364, %v5358
    %v5947 = vpack.c.b16 %v5365, %v5359
    %v5948 = vpack.c.b16 %v5366, %v5360
    %v5949 = vpack.c.b16 %v5373, %v5367
    %v5950 = vpack.c.b16 %v5374, %v5368
    %v5951 = vpack.c.b16 %v5375, %v5369
    %v5952 = vpack.c.b16 %v5376, %v5370
    %v5953 = vpack.c.b16 %v5377, %v5371
    %v5954 = vpack.c.b16 %v5378, %v5372
    %v5955 = vpack.c.b16 %v5385, %v5379
    %v5956 = vpack.c.b16 %v5386, %v5380
    %v5957 = vpack.c.b16 %v5387, %v5381
    %v5958 = vpack.c.b16 %v5388, %v5382
    %v5959 = vpack.c.b16 %v5389, %v5383
    %v5960 = vpack.c.b16 %v5390, %v5384
    %v5961 = vpack.c.b16 %v5397, %v5391
    %v5962 = vpack.c.b16 %v5398, %v5392
    %v5963 = vpack.c.b16 %v5399, %v5393
    %v5964 = vpack.c.b16 %v5400, %v5394
    %v5965 = vpack.c.b16 %v5401, %v5395
    %v5966 = vpack.c.b16 %v5402, %v5396
    %v5967 = vpack.c.b16 %v5409, %v5403
    %v5968 = vpack.c.b16 %v5410, %v5404
    %v5969 = vpack.c.b16 %v5411, %v5405
    %v5970 = vpack.c.b16 %v5412, %v5406
    %v5971 = vpack.c.b16 %v5413, %v5407
    %v5972 = vpack.c.b16 %v5414, %v5408
    %v5973 = vpack.c.b16 %v5421, %v5415
    %v5974 = vpack.c.b16 %v5422, %v5416
    %v5975 = vpack.c.b16 %v5423, %v5417
    %v5976 = vpack.c.b16 %v5424, %v5418
    %v5977 = vpack.c.b16 %v5425, %v5419
    %v5978 = vpack.c.b16 %v5426, %v5420
    %v5979 = vpack.c.b16 %v5433, %v5427
    %v5980 = vpack.c.b16 %v5434, %v5428
    %v5981 = vpack.c.b16 %v5435, %v5429
    %v5982 = vpack.c.b16 %v5436, %v5430
    %v5983 = vpack.c.b16 %v5437, %v5431
    %v5984 = vpack.c.b16 %v5438, %v5432
    %v5985 = vpack.c.b16 %v5445, %v5439
    %v5986 = vpack.c.b16 %v5446, %v5440
    %v5987 = vpack.c.b16 %v5447, %v5441
    %v5988 = vpack.c.b16 %v5448, %v5442
    %v5989 = vpack.c.b16 %v5449, %v5443
    %v5990 = vpack.c.b16 %v5450, %v5444
    %v5991 = vpack.c.b16 %v5457, %v5451
    %v5992 = vpack.c.b16 %v5458, %v5452
    %v5993 = vpack.c.b16 %v5459, %v5453
    %v5994 = vpack.c.b16 %v5460, %v5454
    %v5995 = vpack.c.b16 %v5461, %v5455
    %v5996 = vpack.c.b16 %v5462, %v5456
    %v5997 = vpack.c.b16 %v5469, %v5463
    %v5998 = vpack.c.b16 %v5470, %v5464
    %v5999 = vpack.c.b16 %v5471, %v5465
    %v6000 = vpack.c.b16 %v5472, %v5466
    %v6001 = vpack.c.b16 %v5473, %v5467
    %v6002 = vpack.c.b16 %v5474, %v5468
    %v6003 = vpack.c.b16 %v5481, %v5475
    %v6004 = vpack.c.b16 %v5482, %v5476
    %v6005 = vpack.c.b16 %v5483, %v5477
    %v6006 = vpack.c.b16 %v5484, %v5478
    %v6007 = vpack.c.b16 %v5485, %v5479
    %v6008 = vpack.c.b16 %v5486, %v5480
    %v6009 = vpack.c.b16 %v5493, %v5487
    %v6010 = vpack.c.b16 %v5494, %v5488
    %v6011 = vpack.c.b16 %v5495, %v5489
    %v6012 = vpack.c.b16 %v5496, %v5490
    %v6013 = vpack.c.b16 %v5497, %v5491
    %v6014 = vpack.c.b16 %v5498, %v5492
    %v6015 = vpack.c.b16 %v5505, %v5499
    %v6016 = vpack.c.b16 %v5506, %v5500
    %v6017 = vpack.c.b16 %v5507, %v5501
    %v6018 = vpack.c.b16 %v5508, %v5502
    %v6019 = vpack.c.b16 %v5509, %v5503
    %v6020 = vpack.c.b16 %v5510, %v5504
    %v6021 = vpack.c.b16 %v5517, %v5511
    %v6022 = vpack.c.b16 %v5518, %v5512
    %v6023 = vpack.c.b16 %v5519, %v5513
    %v6024 = vpack.c.b16 %v5520, %v5514
    %v6025 = vpack.c.b16 %v5521, %v5515
    %v6026 = vpack.c.b16 %v5522, %v5516
    %v6027 = vpack.c.b16 %v5529, %v5523
    %v6028 = vpack.c.b16 %v5530, %v5524
    %v6029 = vpack.c.b16 %v5531, %v5525
    %v6030 = vpack.c.b16 %v5532, %v5526
    %v6031 = vpack.c.b16 %v5533, %v5527
    %v6032 = vpack.c.b16 %v5534, %v5528
    %v6033 = vpack.c.b16 %v5541, %v5535
    %v6034 = vpack.c.b16 %v5542, %v5536
    %v6035 = vpack.c.b16 %v5543, %v5537
    %v6036 = vpack.c.b16 %v5544, %v5538
    %v6037 = vpack.c.b16 %v5545, %v5539
    %v6038 = vpack.c.b16 %v5546, %v5540
    %v6039 = vpack.c.b16 %v5553, %v5547
    %v6040 = vpack.c.b16 %v5554, %v5548
    %v6041 = vpack.c.b16 %v5555, %v5549
    %v6042 = vpack.c.b16 %v5556, %v5550
    %v6043 = vpack.c.b16 %v5557, %v5551
    %v6044 = vpack.c.b16 %v5558, %v5552
    %v6045 = vpack.c.b16 %v5565, %v5559
    %v6046 = vpack.c.b16 %v5566, %v5560
    %v6047 = vpack.c.b16 %v5567, %v5561
    %v6048 = vpack.c.b16 %v5568, %v5562
    %v6049 = vpack.c.b16 %v5569, %v5563
    %v6050 = vpack.c.b16 %v5570, %v5564
    %v6051 = vpack.c.b16 %v5577, %v5571
    %v6052 = vpack.c.b16 %v5578, %v5572
    %v6053 = vpack.c.b16 %v5579, %v5573
    %v6054 = vpack.c.b16 %v5580, %v5574
    %v6055 = vpack.c.b16 %v5581, %v5575
    %v6056 = vpack.c.b16 %v5582, %v5576
    %v6057 = vpack.c.b16 %v5589, %v5583
    %v6058 = vpack.c.b16 %v5590, %v5584
    %v6059 = vpack.c.b16 %v5591, %v5585
    %v6060 = vpack.c.b16 %v5592, %v5586
    %v6061 = vpack.c.b16 %v5593, %v5587
    %v6062 = vpack.c.b16 %v5594, %v5588
    %v6063 = vpack.c.b16 %v5601, %v5595
    %v6064 = vpack.c.b16 %v5602, %v5596
    %v6065 = vpack.c.b16 %v5603, %v5597
    %v6066 = vpack.c.b16 %v5604, %v5598
    %v6067 = vpack.c.b16 %v5605, %v5599
    %v6068 = vpack.c.b16 %v5606, %v5600
    %v6069 = vpack.c.b16 %v5613, %v5607
    %v6070 = vpack.c.b16 %v5614, %v5608
    %v6071 = vpack.c.b16 %v5615, %v5609
    %v6072 = vpack.c.b16 %v5616, %v5610
    %v6073 = vpack.c.b16 %v5617, %v5611
    %v6074 = vpack.c.b16 %v5618, %v5612
    %v6075 = vpack.c.b16 %v5625, %v5619
    %v6076 = vpack.c.b16 %v5626, %v5620
    %v6077 = vpack.c.b16 %v5627, %v5621
    %v6078 = vpack.c.b16 %v5628, %v5622
    %v6079 = vpack.c.b16 %v5629, %v5623
    %v6080 = vpack.c.b16 %v5630, %v5624
    %v6081 = vpack.c.b16 %v5637, %v5631
    %v6082 = vpack.c.b16 %v5638, %v5632
    %v6083 = vpack.c.b16 %v5639, %v5633
    %v6084 = vpack.c.b16 %v5640, %v5634
    %v6085 = vpack.c.b16 %v5641, %v5635
    %v6086 = vpack.c.b16 %v5642, %v5636
    %v6087 = vpack.c.b16 %v5649, %v5643
    %v6088 = vpack.c.b16 %v5650, %v5644
    %v6089 = vpack.c.b16 %v5651, %v5645
    %v6090 = vpack.c.b16 %v5652, %v5646
    %v6091 = vpack.c.b16 %v5653, %v5647
    %v6092 = vpack.c.b16 %v5654, %v5648
    %v6093 = vpack.c.b16 %v5661, %v5655
    %v6094 = vpack.c.b16 %v5662, %v5656
    %v6095 = vpack.c.b16 %v5663, %v5657
    %v6096 = vpack.c.b16 %v5664, %v5658
    %v6097 = vpack.c.b16 %v5665, %v5659
    %v6098 = vpack.c.b16 %v5666, %v5660
    %v6099 = vpack.c.b16 %v5673, %v5667
    %v6100 = vpack.c.b16 %v5674, %v5668
    %v6101 = vpack.c.b16 %v5675, %v5669
    %v6102 = vpack.c.b16 %v5676, %v5670
    %v6103 = vpack.c.b16 %v5677, %v5671
    %v6104 = vpack.c.b16 %v5678, %v5672
    %v6105 = vpack.c.b16 %v5685, %v5679
    %v6106 = vpack.c.b16 %v5686, %v5680
    %v6107 = vpack.c.b16 %v5687, %v5681
    %v6108 = vpack.c.b16 %v5688, %v5682
    %v6109 = vpack.c.b16 %v5689, %v5683
    %v6110 = vpack.c.b16 %v5690, %v5684
    %v6111 = vpack.c.b16 %v5697, %v5691
    %v6112 = vpack.c.b16 %v5698, %v5692
    %v6113 = vpack.c.b16 %v5699, %v5693
    %v6114 = vpack.c.b16 %v5700, %v5694
    %v6115 = vpack.c.b16 %v5701, %v5695
    %v6116 = vpack.c.b16 %v5702, %v5696
    %v6117 = vpack.c.b16 %v5709, %v5703
    %v6118 = vpack.c.b16 %v5710, %v5704
    %v6119 = vpack.c.b16 %v5711, %v5705
    %v6120 = vpack.c.b16 %v5712, %v5706
    %v6121 = vpack.c.b16 %v5713, %v5707
    %v6122 = vpack.c.b16 %v5714, %v5708
    %v6123 = vpack.c.b16 %v5721, %v5715
    %v6124 = vpack.c.b16 %v5722, %v5716
    %v6125 = vpack.c.b16 %v5723, %v5717
    %v6126 = vpack.c.b16 %v5724, %v5718
    %v6127 = vpack.c.b16 %v5725, %v5719
    %v6128 = vpack.c.b16 %v5726, %v5720
    %v6129 = vpack.c.b16 %v5733, %v5727
    %v6130 = vpack.c.b16 %v5734, %v5728
    %v6131 = vpack.c.b16 %v5735, %v5729
    %v6132 = vpack.c.b16 %v5736, %v5730
    %v6133 = vpack.c.b16 %v5737, %v5731
    %v6134 = vpack.c.b16 %v5738, %v5732
    %v6135 = vpack.c.b16 %v5745, %v5739
    %v6136 = vpack.c.b16 %v5746, %v5740
    %v6137 = vpack.c.b16 %v5747, %v5741
    %v6138 = vpack.c.b16 %v5748, %v5742
    %v6139 = vpack.c.b16 %v5749, %v5743
    %v6140 = vpack.c.b16 %v5750, %v5744
    %v6141 = vpack.c.b16 %v5757, %v5751
    %v6142 = vpack.c.b16 %v5758, %v5752
    %v6143 = vpack.c.b16 %v5759, %v5753
    %v6144 = vpack.c.b16 %v5760, %v5754
    %v6145 = vpack.c.b16 %v5761, %v5755
    %v6146 = vpack.c.b16 %v5762, %v5756
    %6531 = vmatprep.subr.bf16.mxu0 %v5764
    %6532 = vmatpush1.bf16.msra.mxu0 %v5763
    %6533 = vmatprep.subr.bf16.mxu0 %v5770
    %6534 = vmatpush1.bf16.msra.mxu0 %v5769
    %6535 = vmatprep.subr.bf16.mxu0 %v5776
    %6536 = vmatpush1.bf16.msra.mxu0 %v5775
    %6537 = vmatprep.subr.bf16.mxu0 %v5782
    %6538 = vmatpush1.bf16.msra.mxu0 %v5781
    %6539 = vmatprep.subr.bf16.mxu0 %v5788
    %6540 = vmatpush1.bf16.msra.mxu0 %v5787
    %6541 = vmatprep.subr.bf16.mxu0 %v5794
    %6542 = vmatpush1.bf16.msra.mxu0 %v5793
    %6543 = vmatprep.subr.bf16.mxu0 %v5800
    %6544 = vmatpush1.bf16.msra.mxu0 %v5799
    %6545 = vmatprep.subr.bf16.mxu0 %v5806
    %6546 = vmatpush1.bf16.msra.mxu0 %v5805
    %6547 = vmatprep.subr.bf16.mxu0 %v5812
    %6548 = vmatpush1.bf16.msra.mxu0 %v5811
    %6549 = vmatprep.subr.bf16.mxu0 %v5818
    %6550 = vmatpush1.bf16.msra.mxu0 %v5817
    %6551 = vmatprep.subr.bf16.mxu0 %v5824
    %6552 = vmatpush1.bf16.msra.mxu0 %v5823
    %6553 = vmatprep.subr.bf16.mxu0 %v5830
    %6554 = vmatpush1.bf16.msra.mxu0 %v5829
    %6555 = vmatprep.subr.bf16.mxu0 %v5836
    %6556 = vmatpush1.bf16.msra.mxu0 %v5835
    %6557 = vmatprep.subr.bf16.mxu0 %v5842
    %6558 = vmatpush1.bf16.msra.mxu0 %v5841
    %6559 = vmatprep.subr.bf16.mxu0 %v5848
    %6560 = vmatpush1.bf16.msra.mxu0 %v5847
    %6561 = vmatprep.subr.bf16.mxu0 %v5854
    %6562 = vmatpush1.bf16.msra.mxu0 %v5853
    %6563 = vmatprep.mubr.bf16.mxu0 %v615
    %6564 = vmatmul.mubr.bf16.gmra.mrb[0].mxu0 %v614
    %v6565 = vpop.f32.mrb[0].mxu0
    %v6566 = vadd.f32 0.0, %v6565
    %v6567 = vpop.f32.mrb[0].mxu0
    %v6568 = vadd.f32 0.0, %v6567
    %v6569 = vpop.f32.mrb[0].mxu0
    %v6570 = vadd.f32 0.0, %v6569
    %v6571 = vpop.f32.mrb[0].mxu0
    %v6572 = vadd.f32 0.0, %v6571
    %6573 = vmatprep.mubr.bf16.mxu0 %v623
    %6574 = vmatmul.mubr.bf16.gmra.mrb[0].mxu0 %v622
    %v6575 = vpop.f32.mrb[0].mxu0
    %v6576 = vadd.f32 0.0, %v6575
    %v6577 = vpop.f32.mrb[0].mxu0
    %v6578 = vadd.f32 0.0, %v6577
    %v6579 = vpop.f32.mrb[0].mxu0
    %v6580 = vadd.f32 0.0, %v6579
    %v6581 = vpop.f32.mrb[0].mxu0
    %v6582 = vadd.f32 0.0, %v6581
    %6583 = vmatprep.mubr.bf16.mxu0 %v631
    %6584 = vmatmul.mubr.bf16.gmra.mrb[0].mxu0 %v630
    %v6585 = vpop.f32.mrb[0].mxu0
    %v6586 = vadd.f32 0.0, %v6585
    %v6587 = vpop.f32.mrb[0].mxu0
    %v6588 = vadd.f32 0.0, %v6587
    %v6589 = vpop.f32.mrb[0].mxu0
    %v6590 = vadd.f32 0.0, %v6589
    %v6591 = vpop.f32.mrb[0].mxu0
    %v6592 = vadd.f32 0.0, %v6591
    %6593 = vmatprep.mubr.bf16.mxu0 %v639
    %6594 = vmatmul.mubr.bf16.gmra.mrb[0].mxu0 %v638
    %v6595 = vpop.f32.mrb[0].mxu0
    %v6596 = vadd.f32 0.0, %v6595
    %v6597 = vpop.f32.mrb[0].mxu0
    %v6598 = vadd.f32 0.0, %v6597
    %v6599 = vpop.f32.mrb[0].mxu0
    %v6600 = vadd.f32 0.0, %v6599
    %v6601 = vpop.f32.mrb[0].mxu0
    %v6602 = vadd.f32 0.0, %v6601
    %6603 = vmatprep.mubr.bf16.mxu0 %v647
    %6604 = vmatmul.mubr.bf16.gmra.mrb[0].mxu0 %v646
    %v6605 = vpop.f32.mrb[0].mxu0
    %v6606 = vadd.f32 0.0, %v6605
    %v6607 = vpop.f32.mrb[0].mxu0
    %v6608 = vadd.f32 0.0, %v6607
    %v6609 = vpop.f32.mrb[0].mxu0
    %v6610 = vadd.f32 0.0, %v6609
    %v6611 = vpop.f32.mrb[0].mxu0
    %v6612 = vadd.f32 0.0, %v6611
    %6613 = vdwg.mxu0
    %6614 = vmatprep.subr.bf16.mxu0 %v5860
    %6615 = vmatpush1.bf16.msra.mxu0 %v5859
    %6616 = vmatprep.subr.bf16.mxu0 %v5866
    %6617 = vmatpush1.bf16.msra.mxu0 %v5865
    %6618 = vmatprep.subr.bf16.mxu0 %v5872
    %6619 = vmatpush1.bf16.msra.mxu0 %v5871
    %6620 = vmatprep.subr.bf16.mxu0 %v5878
    %6621 = vmatpush1.bf16.msra.mxu0 %v5877
    %6622 = vmatprep.subr.bf16.mxu0 %v5884
    %6623 = vmatpush1.bf16.msra.mxu0 %v5883
    %6624 = vmatprep.subr.bf16.mxu0 %v5890
    %6625 = vmatpush1.bf16.msra.mxu0 %v5889
    %6626 = vmatprep.subr.bf16.mxu0 %v5896
    %6627 = vmatpush1.bf16.msra.mxu0 %v5895
    %6628 = vmatprep.subr.bf16.mxu0 %v5902
    %6629 = vmatpush1.bf16.msra.mxu0 %v5901
    %6630 = vmatprep.subr.bf16.mxu0 %v5908
    %6631 = vmatpush1.bf16.msra.mxu0 %v5907
    %6632 = vmatprep.subr.bf16.mxu0 %v5914
    %6633 = vmatpush1.bf16.msra.mxu0 %v5913
    %6634 = vmatprep.subr.bf16.mxu0 %v5920
    %6635 = vmatpush1.bf16.msra.mxu0 %v5919
    %6636 = vmatprep.subr.bf16.mxu0 %v5926
    %6637 = vmatpush1.bf16.msra.mxu0 %v5925
    %6638 = vmatprep.subr.bf16.mxu0 %v5932
    %6639 = vmatpush1.bf16.msra.mxu0 %v5931
    %6640 = vmatprep.subr.bf16.mxu0 %v5938
    %6641 = vmatpush1.bf16.msra.mxu0 %v5937
    %6642 = vmatprep.subr.bf16.mxu0 %v5944
    %6643 = vmatpush1.bf16.msra.mxu0 %v5943
    %6644 = vmatprep.subr.bf16.mxu0 %v5950
    %6645 = vmatpush1.bf16.msra.mxu0 %v5949
    %6646 = vmatprep.mubr.bf16.mxu0 %v617
    %6647 = vmatmul.mubr.bf16.gmra.mrb[0].mxu0 %v616
    %v6648 = vpop.f32.mrb[0].mxu0
    %v6649 = vadd.f32 %v6566, %v6648
    %v6650 = vpop.f32.mrb[0].mxu0
    %v6651 = vadd.f32 %v6568, %v6650
    %v6652 = vpop.f32.mrb[0].mxu0
    %v6653 = vadd.f32 %v6570, %v6652
    %v6654 = vpop.f32.mrb[0].mxu0
    %v6655 = vadd.f32 %v6572, %v6654
    %6656 = vmatprep.mubr.bf16.mxu0 %v625
    %6657 = vmatmul.mubr.bf16.gmra.mrb[0].mxu0 %v624
    %v6658 = vpop.f32.mrb[0].mxu0
    %v6659 = vadd.f32 %v6576, %v6658
    %v6660 = vpop.f32.mrb[0].mxu0
    %v6661 = vadd.f32 %v6578, %v6660
    %v6662 = vpop.f32.mrb[0].mxu0
    %v6663 = vadd.f32 %v6580, %v6662
    %v6664 = vpop.f32.mrb[0].mxu0
    %v6665 = vadd.f32 %v6582, %v6664
    %6666 = vmatprep.mubr.bf16.mxu0 %v633
    %6667 = vmatmul.mubr.bf16.gmra.mrb[0].mxu0 %v632
    %v6668 = vpop.f32.mrb[0].mxu0
    %v6669 = vadd.f32 %v6586, %v6668
    %v6670 = vpop.f32.mrb[0].mxu0
    %v6671 = vadd.f32 %v6588, %v6670
    %v6672 = vpop.f32.mrb[0].mxu0
    %v6673 = vadd.f32 %v6590, %v6672
    %v6674 = vpop.f32.mrb[0].mxu0
    %v6675 = vadd.f32 %v6592, %v6674
    %6676 = vmatprep.mubr.bf16.mxu0 %v641
    %6677 = vmatmul.mubr.bf16.gmra.mrb[0].mxu0 %v640
    %v6678 = vpop.f32.mrb[0].mxu0
    %v6679 = vadd.f32 %v6596, %v6678
    %v6680 = vpop.f32.mrb[0].mxu0
    %v6681 = vadd.f32 %v6598, %v6680
    %v6682 = vpop.f32.mrb[0].mxu0
    %v6683 = vadd.f32 %v6600, %v6682
    %v6684 = vpop.f32.mrb[0].mxu0
    %v6685 = vadd.f32 %v6602, %v6684
    %6686 = vmatprep.mubr.bf16.mxu0 %v649
    %6687 = vmatmul.mubr.bf16.gmra.mrb[0].mxu0 %v648
    %v6688 = vpop.f32.mrb[0].mxu0
    %v6689 = vadd.f32 %v6606, %v6688
    %v6690 = vpop.f32.mrb[0].mxu0
    %v6691 = vadd.f32 %v6608, %v6690
    %v6692 = vpop.f32.mrb[0].mxu0
    %v6693 = vadd.f32 %v6610, %v6692
    %v6694 = vpop.f32.mrb[0].mxu0
    %v6695 = vadd.f32 %v6612, %v6694
    %6696 = vdwg.mxu0
    %6697 = vmatprep.subr.bf16.mxu0 %v5956
    %6698 = vmatpush1.bf16.msra.mxu0 %v5955
    %6699 = vmatprep.subr.bf16.mxu0 %v5962
    %6700 = vmatpush1.bf16.msra.mxu0 %v5961
    %6701 = vmatprep.subr.bf16.mxu0 %v5968
    %6702 = vmatpush1.bf16.msra.mxu0 %v5967
    %6703 = vmatprep.subr.bf16.mxu0 %v5974
    %6704 = vmatpush1.bf16.msra.mxu0 %v5973
    %6705 = vmatprep.subr.bf16.mxu0 %v5980
    %6706 = vmatpush1.bf16.msra.mxu0 %v5979
    %6707 = vmatprep.subr.bf16.mxu0 %v5986
    %6708 = vmatpush1.bf16.msra.mxu0 %v5985
    %6709 = vmatprep.subr.bf16.mxu0 %v5992
    %6710 = vmatpush1.bf16.msra.mxu0 %v5991
    %6711 = vmatprep.subr.bf16.mxu0 %v5998
    %6712 = vmatpush1.bf16.msra.mxu0 %v5997
    %6713 = vmatprep.subr.bf16.mxu0 %v6004
    %6714 = vmatpush1.bf16.msra.mxu0 %v6003
    %6715 = vmatprep.subr.bf16.mxu0 %v6010
    %6716 = vmatpush1.bf16.msra.mxu0 %v6009
    %6717 = vmatprep.subr.bf16.mxu0 %v6016
    %6718 = vmatpush1.bf16.msra.mxu0 %v6015
    %6719 = vmatprep.subr.bf16.mxu0 %v6022
    %6720 = vmatpush1.bf16.msra.mxu0 %v6021
    %6721 = vmatprep.subr.bf16.mxu0 %v6028
    %6722 = vmatpush1.bf16.msra.mxu0 %v6027
    %6723 = vmatprep.subr.bf16.mxu0 %v6034
    %6724 = vmatpush1.bf16.msra.mxu0 %v6033
    %6725 = vmatprep.subr.bf16.mxu0 %v6040
    %6726 = vmatpush1.bf16.msra.mxu0 %v6039
    %6727 = vmatprep.subr.bf16.mxu0 %v6046
    %6728 = vmatpush1.bf16.msra.mxu0 %v6045
    %6729 = vmatprep.mubr.bf16.mxu0 %v619
    %6730 = vmatmul.mubr.bf16.gmra.mrb[0].mxu0 %v618
    %v6731 = vpop.f32.mrb[0].mxu0
    %v6732 = vadd.f32 %v6649, %v6731
    %v6733 = vpop.f32.mrb[0].mxu0
    %v6734 = vadd.f32 %v6651, %v6733
    %v6735 = vpop.f32.mrb[0].mxu0
    %v6736 = vadd.f32 %v6653, %v6735
    %v6737 = vpop.f32.mrb[0].mxu0
    %v6738 = vadd.f32 %v6655, %v6737
    %6739 = vmatprep.mubr.bf16.mxu0 %v627
    %6740 = vmatmul.mubr.bf16.gmra.mrb[0].mxu0 %v626
    %v6741 = vpop.f32.mrb[0].mxu0
    %v6742 = vadd.f32 %v6659, %v6741
    %v6743 = vpop.f32.mrb[0].mxu0
    %v6744 = vadd.f32 %v6661, %v6743
    %v6745 = vpop.f32.mrb[0].mxu0
    %v6746 = vadd.f32 %v6663, %v6745
    %v6747 = vpop.f32.mrb[0].mxu0
    %v6748 = vadd.f32 %v6665, %v6747
    %6749 = vmatprep.mubr.bf16.mxu0 %v635
    %6750 = vmatmul.mubr.bf16.gmra.mrb[0].mxu0 %v634
    %v6751 = vpop.f32.mrb[0].mxu0
    %v6752 = vadd.f32 %v6669, %v6751
    %v6753 = vpop.f32.mrb[0].mxu0
    %v6754 = vadd.f32 %v6671, %v6753
    %v6755 = vpop.f32.mrb[0].mxu0
    %v6756 = vadd.f32 %v6673, %v6755
    %v6757 = vpop.f32.mrb[0].mxu0
    %v6758 = vadd.f32 %v6675, %v6757
    %6759 = vmatprep.mubr.bf16.mxu0 %v643
    %6760 = vmatmul.mubr.bf16.gmra.mrb[0].mxu0 %v642
    %v6761 = vpop.f32.mrb[0].mxu0
    %v6762 = vadd.f32 %v6679, %v6761
    %v6763 = vpop.f32.mrb[0].mxu0
    %v6764 = vadd.f32 %v6681, %v6763
    %v6765 = vpop.f32.mrb[0].mxu0
    %v6766 = vadd.f32 %v6683, %v6765
    %v6767 = vpop.f32.mrb[0].mxu0
    %v6768 = vadd.f32 %v6685, %v6767
    %6769 = vmatprep.mubr.bf16.mxu0 %v651
    %6770 = vmatmul.mubr.bf16.gmra.mrb[0].mxu0 %v650
    %v6771 = vpop.f32.mrb[0].mxu0
    %v6772 = vadd.f32 %v6689, %v6771
    %v6773 = vpop.f32.mrb[0].mxu0
    %v6774 = vadd.f32 %v6691, %v6773
    %v6775 = vpop.f32.mrb[0].mxu0
    %v6776 = vadd.f32 %v6693, %v6775
    %v6777 = vpop.f32.mrb[0].mxu0
    %v6778 = vadd.f32 %v6695, %v6777
    %6779 = vdwg.mxu0
    %6780 = vmatprep.subr.bf16.mxu0 %v6052
    %6781 = vmatpush1.bf16.msra.mxu0 %v6051
    %6782 = vmatprep.subr.bf16.mxu0 %v6058
    %6783 = vmatpush1.bf16.msra.mxu0 %v6057
    %6784 = vmatprep.subr.bf16.mxu0 %v6064
    %6785 = vmatpush1.bf16.msra.mxu0 %v6063
    %6786 = vmatprep.subr.bf16.mxu0 %v6070
    %6787 = vmatpush1.bf16.msra.mxu0 %v6069
    %6788 = vmatprep.subr.bf16.mxu0 %v6076
    %6789 = vmatpush1.bf16.msra.mxu0 %v6075
    %6790 = vmatprep.subr.bf16.mxu0 %v6082
    %6791 = vmatpush1.bf16.msra.mxu0 %v6081
    %6792 = vmatprep.subr.bf16.mxu0 %v6088
    %6793 = vmatpush1.bf16.msra.mxu0 %v6087
    %6794 = vmatprep.subr.bf16.mxu0 %v6094
    %6795 = vmatpush1.bf16.msra.mxu0 %v6093
    %6796 = vmatprep.subr.bf16.mxu0 %v6100
    %6797 = vmatpush1.bf16.msra.mxu0 %v6099
    %6798 = vmatprep.subr.bf16.mxu0 %v6106
    %6799 = vmatpush1.bf16.msra.mxu0 %v6105
    %6800 = vmatprep.subr.bf16.mxu0 %v6112
    %6801 = vmatpush1.bf16.msra.mxu0 %v6111
    %6802 = vmatprep.subr.bf16.mxu0 %v6118
    %6803 = vmatpush1.bf16.msra.mxu0 %v6117
    %6804 = vmatprep.subr.bf16.mxu0 %v6124
    %6805 = vmatpush1.bf16.msra.mxu0 %v6123
    %6806 = vmatprep.subr.bf16.mxu0 %v6130
    %6807 = vmatpush1.bf16.msra.mxu0 %v6129
    %6808 = vmatprep.subr.bf16.mxu0 %v6136
    %6809 = vmatpush1.bf16.msra.mxu0 %v6135
    %6810 = vmatprep.subr.bf16.mxu0 %v6142
    %6811 = vmatpush1.bf16.msra.mxu0 %v6141
    %6812 = vmatprep.mubr.bf16.mxu0 %v621
    %6813 = vmatmul.mubr.bf16.gmra.mrb[0].mxu0 %v620
    %v6814 = vpop.f32.mrb[0].mxu0
    %v6815 = vadd.f32 %v6732, %v6814
    %v6816 = vpop.f32.mrb[0].mxu0
    %v6817 = vadd.f32 %v6734, %v6816
    %v6818 = vpop.f32.mrb[0].mxu0
    %v6819 = vadd.f32 %v6736, %v6818
    %v6820 = vpop.f32.mrb[0].mxu0
    %v6821 = vadd.f32 %v6738, %v6820
    %6822 = vmatprep.mubr.bf16.mxu0 %v629
    %6823 = vmatmul.mubr.bf16.gmra.mrb[0].mxu0 %v628
    %v6824 = vpop.f32.mrb[0].mxu0
    %v6825 = vadd.f32 %v6742, %v6824
    %v6826 = vpop.f32.mrb[0].mxu0
    %v6827 = vadd.f32 %v6744, %v6826
    %v6828 = vpop.f32.mrb[0].mxu0
    %v6829 = vadd.f32 %v6746, %v6828
    %v6830 = vpop.f32.mrb[0].mxu0
    %v6831 = vadd.f32 %v6748, %v6830
    %6832 = vmatprep.mubr.bf16.mxu0 %v637
    %6833 = vmatmul.mubr.bf16.gmra.mrb[0].mxu0 %v636
    %v6834 = vpop.f32.mrb[0].mxu0
    %v6835 = vadd.f32 %v6752, %v6834
    %v6836 = vpop.f32.mrb[0].mxu0
    %v6837 = vadd.f32 %v6754, %v6836
    %v6838 = vpop.f32.mrb[0].mxu0
    %v6839 = vadd.f32 %v6756, %v6838
    %v6840 = vpop.f32.mrb[0].mxu0
    %v6841 = vadd.f32 %v6758, %v6840
    %6842 = vmatprep.mubr.bf16.mxu0 %v645
    %6843 = vmatmul.mubr.bf16.gmra.mrb[0].mxu0 %v644
    %v6844 = vpop.f32.mrb[0].mxu0
    %v6845 = vadd.f32 %v6762, %v6844
    %v6846 = vpop.f32.mrb[0].mxu0
    %v6847 = vadd.f32 %v6764, %v6846
    %v6848 = vpop.f32.mrb[0].mxu0
    %v6849 = vadd.f32 %v6766, %v6848
    %v6850 = vpop.f32.mrb[0].mxu0
    %v6851 = vadd.f32 %v6768, %v6850
    %6852 = vmatprep.mubr.bf16.mxu0 %v653
    %6853 = vmatmul.mubr.bf16.gmra.mrb[0].mxu0 %v652
    %v6854 = vpop.f32.mrb[0].mxu0
    %v6855 = vadd.f32 %v6772, %v6854
    %v6856 = vpop.f32.mrb[0].mxu0
    %v6857 = vadd.f32 %v6774, %v6856
    %v6858 = vpop.f32.mrb[0].mxu0
    %v6859 = vadd.f32 %v6776, %v6858
    %v6860 = vpop.f32.mrb[0].mxu0
    %v6861 = vadd.f32 %v6778, %v6860
    %6862 = vdwg.mxu0
    %6863 = vmatprep.subr.bf16.mxu0 %v5766
    %6864 = vmatpush1.bf16.msra.mxu0 %v5765
    %6865 = vmatprep.subr.bf16.mxu0 %v5772
    %6866 = vmatpush1.bf16.msra.mxu0 %v5771
    %6867 = vmatprep.subr.bf16.mxu0 %v5778
    %6868 = vmatpush1.bf16.msra.mxu0 %v5777
    %6869 = vmatprep.subr.bf16.mxu0 %v5784
    %6870 = vmatpush1.bf16.msra.mxu0 %v5783
    %6871 = vmatprep.subr.bf16.mxu0 %v5790
    %6872 = vmatpush1.bf16.msra.mxu0 %v5789
    %6873 = vmatprep.subr.bf16.mxu0 %v5796
    %6874 = vmatpush1.bf16.msra.mxu0 %v5795
    %6875 = vmatprep.subr.bf16.mxu0 %v5802
    %6876 = vmatpush1.bf16.msra.mxu0 %v5801
    %6877 = vmatprep.subr.bf16.mxu0 %v5808
    %6878 = vmatpush1.bf16.msra.mxu0 %v5807
    %6879 = vmatprep.subr.bf16.mxu0 %v5814
    %6880 = vmatpush1.bf16.msra.mxu0 %v5813
    %6881 = vmatprep.subr.bf16.mxu0 %v5820
    %6882 = vmatpush1.bf16.msra.mxu0 %v5819
    %6883 = vmatprep.subr.bf16.mxu0 %v5826
    %6884 = vmatpush1.bf16.msra.mxu0 %v5825
    %6885 = vmatprep.subr.bf16.mxu0 %v5832
    %6886 = vmatpush1.bf16.msra.mxu0 %v5831
    %6887 = vmatprep.subr.bf16.mxu0 %v5838
    %6888 = vmatpush1.bf16.msra.mxu0 %v5837
    %6889 = vmatprep.subr.bf16.mxu0 %v5844
    %6890 = vmatpush1.bf16.msra.mxu0 %v5843
    %6891 = vmatprep.subr.bf16.mxu0 %v5850
    %6892 = vmatpush1.bf16.msra.mxu0 %v5849
    %6893 = vmatprep.subr.bf16.mxu0 %v5856
    %6894 = vmatpush1.bf16.msra.mxu0 %v5855
    %6895 = vmatprep.mubr.bf16.mxu0 %v615
    %6896 = vmatmul.mubr.bf16.gmra.mrb[0].mxu0 %v614
    %v6897 = vpop.f32.mrb[0].mxu0
    %v6898 = vadd.f32 0.0, %v6897
    %v6899 = vpop.f32.mrb[0].mxu0
    %v6900 = vadd.f32 0.0, %v6899
    %v6901 = vpop.f32.mrb[0].mxu0
    %v6902 = vadd.f32 0.0, %v6901
    %v6903 = vpop.f32.mrb[0].mxu0
    %v6904 = vadd.f32 0.0, %v6903
    %6905 = vmatprep.mubr.bf16.mxu0 %v623
    %6906 = vmatmul.mubr.bf16.gmra.mrb[0].mxu0 %v622
    %v6907 = vpop.f32.mrb[0].mxu0
    %v6908 = vadd.f32 0.0, %v6907
    %v6909 = vpop.f32.mrb[0].mxu0
    %v6910 = vadd.f32 0.0, %v6909
    %v6911 = vpop.f32.mrb[0].mxu0
    %v6912 = vadd.f32 0.0, %v6911
    %v6913 = vpop.f32.mrb[0].mxu0
    %v6914 = vadd.f32 0.0, %v6913
    %6915 = vmatprep.mubr.bf16.mxu0 %v631
    %6916 = vmatmul.mubr.bf16.gmra.mrb[0].mxu0 %v630
    %v6917 = vpop.f32.mrb[0].mxu0
    %v6918 = vadd.f32 0.0, %v6917
    %v6919 = vpop.f32.mrb[0].mxu0
    %v6920 = vadd.f32 0.0, %v6919
    %v6921 = vpop.f32.mrb[0].mxu0
    %v6922 = vadd.f32 0.0, %v6921
    %v6923 = vpop.f32.mrb[0].mxu0
    %v6924 = vadd.f32 0.0, %v6923
    %6925 = vmatprep.mubr.bf16.mxu0 %v639
    %6926 = vmatmul.mubr.bf16.gmra.mrb[0].mxu0 %v638
    %v6927 = vpop.f32.mrb[0].mxu0
    %v6928 = vadd.f32 0.0, %v6927
    %v6929 = vpop.f32.mrb[0].mxu0
    %v6930 = vadd.f32 0.0, %v6929
    %v6931 = vpop.f32.mrb[0].mxu0
    %v6932 = vadd.f32 0.0, %v6931
    %v6933 = vpop.f32.mrb[0].mxu0
    %v6934 = vadd.f32 0.0, %v6933
    %6935 = vmatprep.mubr.bf16.mxu0 %v647
    %6936 = vmatmul.mubr.bf16.gmra.mrb[0].mxu0 %v646
    %v6937 = vpop.f32.mrb[0].mxu0
    %v6938 = vadd.f32 0.0, %v6937
    %v6939 = vpop.f32.mrb[0].mxu0
    %v6940 = vadd.f32 0.0, %v6939
    %v6941 = vpop.f32.mrb[0].mxu0
    %v6942 = vadd.f32 0.0, %v6941
    %v6943 = vpop.f32.mrb[0].mxu0
    %v6944 = vadd.f32 0.0, %v6943
    %6945 = vdwg.mxu0
    %6946 = vmatprep.subr.bf16.mxu0 %v5862
    %6947 = vmatpush1.bf16.msra.mxu0 %v5861
    %6948 = vmatprep.subr.bf16.mxu0 %v5868
    %6949 = vmatpush1.bf16.msra.mxu0 %v5867
    %6950 = vmatprep.subr.bf16.mxu0 %v5874
    %6951 = vmatpush1.bf16.msra.mxu0 %v5873
    %6952 = vmatprep.subr.bf16.mxu0 %v5880
    %6953 = vmatpush1.bf16.msra.mxu0 %v5879
    %6954 = vmatprep.subr.bf16.mxu0 %v5886
    %6955 = vmatpush1.bf16.msra.mxu0 %v5885
    %6956 = vmatprep.subr.bf16.mxu0 %v5892
    %6957 = vmatpush1.bf16.msra.mxu0 %v5891
    %6958 = vmatprep.subr.bf16.mxu0 %v5898
    %6959 = vmatpush1.bf16.msra.mxu0 %v5897
    %6960 = vmatprep.subr.bf16.mxu0 %v5904
    %6961 = vmatpush1.bf16.msra.mxu0 %v5903
    %6962 = vmatprep.subr.bf16.mxu0 %v5910
    %6963 = vmatpush1.bf16.msra.mxu0 %v5909
    %6964 = vmatprep.subr.bf16.mxu0 %v5916
    %6965 = vmatpush1.bf16.msra.mxu0 %v5915
    %6966 = vmatprep.subr.bf16.mxu0 %v5922
    %6967 = vmatpush1.bf16.msra.mxu0 %v5921
    %6968 = vmatprep.subr.bf16.mxu0 %v5928
    %6969 = vmatpush1.bf16.msra.mxu0 %v5927
    %6970 = vmatprep.subr.bf16.mxu0 %v5934
    %6971 = vmatpush1.bf16.msra.mxu0 %v5933
    %6972 = vmatprep.subr.bf16.mxu0 %v5940
    %6973 = vmatpush1.bf16.msra.mxu0 %v5939
    %6974 = vmatprep.subr.bf16.mxu0 %v5946
    %6975 = vmatpush1.bf16.msra.mxu0 %v5945
    %6976 = vmatprep.subr.bf16.mxu0 %v5952
    %6977 = vmatpush1.bf16.msra.mxu0 %v5951
    %6978 = vmatprep.mubr.bf16.mxu0 %v617
    %6979 = vmatmul.mubr.bf16.gmra.mrb[0].mxu0 %v616
    %v6980 = vpop.f32.mrb[0].mxu0
    %v6981 = vadd.f32 %v6898, %v6980
    %v6982 = vpop.f32.mrb[0].mxu0
    %v6983 = vadd.f32 %v6900, %v6982
    %v6984 = vpop.f32.mrb[0].mxu0
    %v6985 = vadd.f32 %v6902, %v6984
    %v6986 = vpop.f32.mrb[0].mxu0
    %v6987 = vadd.f32 %v6904, %v6986
    %6988 = vmatprep.mubr.bf16.mxu0 %v625
    %6989 = vmatmul.mubr.bf16.gmra.mrb[0].mxu0 %v624
    %v6990 = vpop.f32.mrb[0].mxu0
    %v6991 = vadd.f32 %v6908, %v6990
    %v6992 = vpop.f32.mrb[0].mxu0
    %v6993 = vadd.f32 %v6910, %v6992
    %v6994 = vpop.f32.mrb[0].mxu0
    %v6995 = vadd.f32 %v6912, %v6994
    %v6996 = vpop.f32.mrb[0].mxu0
    %v6997 = vadd.f32 %v6914, %v6996
    %6998 = vmatprep.mubr.bf16.mxu0 %v633
    %6999 = vmatmul.mubr.bf16.gmra.mrb[0].mxu0 %v632
    %v7000 = vpop.f32.mrb[0].mxu0
    %v7001 = vadd.f32 %v6918, %v7000
    %v7002 = vpop.f32.mrb[0].mxu0
    %v7003 = vadd.f32 %v6920, %v7002
    %v7004 = vpop.f32.mrb[0].mxu0
    %v7005 = vadd.f32 %v6922, %v7004
    %v7006 = vpop.f32.mrb[0].mxu0
    %v7007 = vadd.f32 %v6924, %v7006
    %7008 = vmatprep.mubr.bf16.mxu0 %v641
    %7009 = vmatmul.mubr.bf16.gmra.mrb[0].mxu0 %v640
    %v7010 = vpop.f32.mrb[0].mxu0
    %v7011 = vadd.f32 %v6928, %v7010
    %v7012 = vpop.f32.mrb[0].mxu0
    %v7013 = vadd.f32 %v6930, %v7012
    %v7014 = vpop.f32.mrb[0].mxu0
    %v7015 = vadd.f32 %v6932, %v7014
    %v7016 = vpop.f32.mrb[0].mxu0
    %v7017 = vadd.f32 %v6934, %v7016
    %7018 = vmatprep.mubr.bf16.mxu0 %v649
    %7019 = vmatmul.mubr.bf16.gmra.mrb[0].mxu0 %v648
    %v7020 = vpop.f32.mrb[0].mxu0
    %v7021 = vadd.f32 %v6938, %v7020
    %v7022 = vpop.f32.mrb[0].mxu0
    %v7023 = vadd.f32 %v6940, %v7022
    %v7024 = vpop.f32.mrb[0].mxu0
    %v7025 = vadd.f32 %v6942, %v7024
    %v7026 = vpop.f32.mrb[0].mxu0
    %v7027 = vadd.f32 %v6944, %v7026
    %7028 = vdwg.mxu0
    %7029 = vmatprep.subr.bf16.mxu0 %v5958
    %7030 = vmatpush1.bf16.msra.mxu0 %v5957
    %7031 = vmatprep.subr.bf16.mxu0 %v5964
    %7032 = vmatpush1.bf16.msra.mxu0 %v5963
    %7033 = vmatprep.subr.bf16.mxu0 %v5970
    %7034 = vmatpush1.bf16.msra.mxu0 %v5969
    %7035 = vmatprep.subr.bf16.mxu0 %v5976
    %7036 = vmatpush1.bf16.msra.mxu0 %v5975
    %7037 = vmatprep.subr.bf16.mxu0 %v5982
    %7038 = vmatpush1.bf16.msra.mxu0 %v5981
    %7039 = vmatprep.subr.bf16.mxu0 %v5988
    %7040 = vmatpush1.bf16.msra.mxu0 %v5987
    %7041 = vmatprep.subr.bf16.mxu0 %v5994
    %7042 = vmatpush1.bf16.msra.mxu0 %v5993
    %7043 = vmatprep.subr.bf16.mxu0 %v6000
    %7044 = vmatpush1.bf16.msra.mxu0 %v5999
    %7045 = vmatprep.subr.bf16.mxu0 %v6006
    %7046 = vmatpush1.bf16.msra.mxu0 %v6005
    %7047 = vmatprep.subr.bf16.mxu0 %v6012
    %7048 = vmatpush1.bf16.msra.mxu0 %v6011
    %7049 = vmatprep.subr.bf16.mxu0 %v6018
    %7050 = vmatpush1.bf16.msra.mxu0 %v6017
    %7051 = vmatprep.subr.bf16.mxu0 %v6024
    %7052 = vmatpush1.bf16.msra.mxu0 %v6023
    %7053 = vmatprep.subr.bf16.mxu0 %v6030
    %7054 = vmatpush1.bf16.msra.mxu0 %v6029
    %7055 = vmatprep.subr.bf16.mxu0 %v6036
    %7056 = vmatpush1.bf16.msra.mxu0 %v6035
    %7057 = vmatprep.subr.bf16.mxu0 %v6042
    %7058 = vmatpush1.bf16.msra.mxu0 %v6041
    %7059 = vmatprep.subr.bf16.mxu0 %v6048
    %7060 = vmatpush1.bf16.msra.mxu0 %v6047
    %7061 = vmatprep.mubr.bf16.mxu0 %v619
    %7062 = vmatmul.mubr.bf16.gmra.mrb[0].mxu0 %v618
    %v7063 = vpop.f32.mrb[0].mxu0
    %v7064 = vadd.f32 %v6981, %v7063
    %v7065 = vpop.f32.mrb[0].mxu0
    %v7066 = vadd.f32 %v6983, %v7065
    %v7067 = vpop.f32.mrb[0].mxu0
    %v7068 = vadd.f32 %v6985, %v7067
    %v7069 = vpop.f32.mrb[0].mxu0
    %v7070 = vadd.f32 %v6987, %v7069
    %7071 = vmatprep.mubr.bf16.mxu0 %v627
    %7072 = vmatmul.mubr.bf16.gmra.mrb[0].mxu0 %v626
    %v7073 = vpop.f32.mrb[0].mxu0
    %v7074 = vadd.f32 %v6991, %v7073
    %v7075 = vpop.f32.mrb[0].mxu0
    %v7076 = vadd.f32 %v6993, %v7075
    %v7077 = vpop.f32.mrb[0].mxu0
    %v7078 = vadd.f32 %v6995, %v7077
    %v7079 = vpop.f32.mrb[0].mxu0
    %v7080 = vadd.f32 %v6997, %v7079
    %7081 = vmatprep.mubr.bf16.mxu0 %v635
    %7082 = vmatmul.mubr.bf16.gmra.mrb[0].mxu0 %v634
    %v7083 = vpop.f32.mrb[0].mxu0
    %v7084 = vadd.f32 %v7001, %v7083
    %v7085 = vpop.f32.mrb[0].mxu0
    %v7086 = vadd.f32 %v7003, %v7085
    %v7087 = vpop.f32.mrb[0].mxu0
    %v7088 = vadd.f32 %v7005, %v7087
    %v7089 = vpop.f32.mrb[0].mxu0
    %v7090 = vadd.f32 %v7007, %v7089
    %7091 = vmatprep.mubr.bf16.mxu0 %v643
    %7092 = vmatmul.mubr.bf16.gmra.mrb[0].mxu0 %v642
    %v7093 = vpop.f32.mrb[0].mxu0
    %v7094 = vadd.f32 %v7011, %v7093
    %v7095 = vpop.f32.mrb[0].mxu0
    %v7096 = vadd.f32 %v7013, %v7095
    %v7097 = vpop.f32.mrb[0].mxu0
    %v7098 = vadd.f32 %v7015, %v7097
    %v7099 = vpop.f32.mrb[0].mxu0
    %v7100 = vadd.f32 %v7017, %v7099
    %7101 = vmatprep.mubr.bf16.mxu0 %v651
    %7102 = vmatmul.mubr.bf16.gmra.mrb[0].mxu0 %v650
    %v7103 = vpop.f32.mrb[0].mxu0
    %v7104 = vadd.f32 %v7021, %v7103
    %v7105 = vpop.f32.mrb[0].mxu0
    %v7106 = vadd.f32 %v7023, %v7105
    %v7107 = vpop.f32.mrb[0].mxu0
    %v7108 = vadd.f32 %v7025, %v7107
    %v7109 = vpop.f32.mrb[0].mxu0
    %v7110 = vadd.f32 %v7027, %v7109
    %7111 = vdwg.mxu0
    %7112 = vmatprep.subr.bf16.mxu0 %v6054
    %7113 = vmatpush1.bf16.msra.mxu0 %v6053
    %7114 = vmatprep.subr.bf16.mxu0 %v6060
    %7115 = vmatpush1.bf16.msra.mxu0 %v6059
    %7116 = vmatprep.subr.bf16.mxu0 %v6066
    %7117 = vmatpush1.bf16.msra.mxu0 %v6065
    %7118 = vmatprep.subr.bf16.mxu0 %v6072
    %7119 = vmatpush1.bf16.msra.mxu0 %v6071
    %7120 = vmatprep.subr.bf16.mxu0 %v6078
    %7121 = vmatpush1.bf16.msra.mxu0 %v6077
    %7122 = vmatprep.subr.bf16.mxu0 %v6084
    %7123 = vmatpush1.bf16.msra.mxu0 %v6083
    %7124 = vmatprep.subr.bf16.mxu0 %v6090
    %7125 = vmatpush1.bf16.msra.mxu0 %v6089
    %7126 = vmatprep.subr.bf16.mxu0 %v6096
    %7127 = vmatpush1.bf16.msra.mxu0 %v6095
    %7128 = vmatprep.subr.bf16.mxu0 %v6102
    %7129 = vmatpush1.bf16.msra.mxu0 %v6101
    %7130 = vmatprep.subr.bf16.mxu0 %v6108
    %7131 = vmatpush1.bf16.msra.mxu0 %v6107
    %7132 = vmatprep.subr.bf16.mxu0 %v6114
    %7133 = vmatpush1.bf16.msra.mxu0 %v6113
    %7134 = vmatprep.subr.bf16.mxu0 %v6120
    %7135 = vmatpush1.bf16.msra.mxu0 %v6119
    %7136 = vmatprep.subr.bf16.mxu0 %v6126
    %7137 = vmatpush1.bf16.msra.mxu0 %v6125
    %7138 = vmatprep.subr.bf16.mxu0 %v6132
    %7139 = vmatpush1.bf16.msra.mxu0 %v6131
    %7140 = vmatprep.subr.bf16.mxu0 %v6138
    %7141 = vmatpush1.bf16.msra.mxu0 %v6137
    %7142 = vmatprep.subr.bf16.mxu0 %v6144
    %7143 = vmatpush1.bf16.msra.mxu0 %v6143
    %7144 = vmatprep.mubr.bf16.mxu0 %v621
    %7145 = vmatmul.mubr.bf16.gmra.mrb[0].mxu0 %v620
    %v7146 = vpop.f32.mrb[0].mxu0
    %v7147 = vadd.f32 %v7064, %v7146
    %v7148 = vpop.f32.mrb[0].mxu0
    %v7149 = vadd.f32 %v7066, %v7148
    %v7150 = vpop.f32.mrb[0].mxu0
    %v7151 = vadd.f32 %v7068, %v7150
    %v7152 = vpop.f32.mrb[0].mxu0
    %v7153 = vadd.f32 %v7070, %v7152
    %7154 = vmatprep.mubr.bf16.mxu0 %v629
    %7155 = vmatmul.mubr.bf16.gmra.mrb[0].mxu0 %v628
    %v7156 = vpop.f32.mrb[0].mxu0
    %v7157 = vadd.f32 %v7074, %v7156
    %v7158 = vpop.f32.mrb[0].mxu0
    %v7159 = vadd.f32 %v7076, %v7158
    %v7160 = vpop.f32.mrb[0].mxu0
    %v7161 = vadd.f32 %v7078, %v7160
    %v7162 = vpop.f32.mrb[0].mxu0
    %v7163 = vadd.f32 %v7080, %v7162
    %7164 = vmatprep.mubr.bf16.mxu0 %v637
    %7165 = vmatmul.mubr.bf16.gmra.mrb[0].mxu0 %v636
    %v7166 = vpop.f32.mrb[0].mxu0
    %v7167 = vadd.f32 %v7084, %v7166
    %v7168 = vpop.f32.mrb[0].mxu0
    %v7169 = vadd.f32 %v7086, %v7168
    %v7170 = vpop.f32.mrb[0].mxu0
    %v7171 = vadd.f32 %v7088, %v7170
    %v7172 = vpop.f32.mrb[0].mxu0
    %v7173 = vadd.f32 %v7090, %v7172
    %7174 = vmatprep.mubr.bf16.mxu0 %v645
    %7175 = vmatmul.mubr.bf16.gmra.mrb[0].mxu0 %v644
    %v7176 = vpop.f32.mrb[0].mxu0
    %v7177 = vadd.f32 %v7094, %v7176
    %v7178 = vpop.f32.mrb[0].mxu0
    %v7179 = vadd.f32 %v7096, %v7178
    %v7180 = vpop.f32.mrb[0].mxu0
    %v7181 = vadd.f32 %v7098, %v7180
    %v7182 = vpop.f32.mrb[0].mxu0
    %v7183 = vadd.f32 %v7100, %v7182
    %7184 = vmatprep.mubr.bf16.mxu0 %v653
    %7185 = vmatmul.mubr.bf16.gmra.mrb[0].mxu0 %v652
    %v7186 = vpop.f32.mrb[0].mxu0
    %v7187 = vadd.f32 %v7104, %v7186
    %v7188 = vpop.f32.mrb[0].mxu0
    %v7189 = vadd.f32 %v7106, %v7188
    %v7190 = vpop.f32.mrb[0].mxu0
    %v7191 = vadd.f32 %v7108, %v7190
    %v7192 = vpop.f32.mrb[0].mxu0
    %v7193 = vadd.f32 %v7110, %v7192
    %7194 = vdwg.mxu0
    %7195 = vmatprep.subr.bf16.mxu0 %v5768
    %7196 = vmatpush1.bf16.msra.mxu0 %v5767
    %7197 = vmatprep.subr.bf16.mxu0 %v5774
    %7198 = vmatpush1.bf16.msra.mxu0 %v5773
    %7199 = vmatprep.subr.bf16.mxu0 %v5780
    %7200 = vmatpush1.bf16.msra.mxu0 %v5779
    %7201 = vmatprep.subr.bf16.mxu0 %v5786
    %7202 = vmatpush1.bf16.msra.mxu0 %v5785
    %7203 = vmatprep.subr.bf16.mxu0 %v5792
    %7204 = vmatpush1.bf16.msra.mxu0 %v5791
    %7205 = vmatprep.subr.bf16.mxu0 %v5798
    %7206 = vmatpush1.bf16.msra.mxu0 %v5797
    %7207 = vmatprep.subr.bf16.mxu0 %v5804
    %7208 = vmatpush1.bf16.msra.mxu0 %v5803
    %7209 = vmatprep.subr.bf16.mxu0 %v5810
    %7210 = vmatpush1.bf16.msra.mxu0 %v5809
    %7211 = vmatprep.subr.bf16.mxu0 %v5816
    %7212 = vmatpush1.bf16.msra.mxu0 %v5815
    %7213 = vmatprep.subr.bf16.mxu0 %v5822
    %7214 = vmatpush1.bf16.msra.mxu0 %v5821
    %7215 = vmatprep.subr.bf16.mxu0 %v5828
    %7216 = vmatpush1.bf16.msra.mxu0 %v5827
    %7217 = vmatprep.subr.bf16.mxu0 %v5834
    %7218 = vmatpush1.bf16.msra.mxu0 %v5833
    %7219 = vmatprep.subr.bf16.mxu0 %v5840
    %7220 = vmatpush1.bf16.msra.mxu0 %v5839
    %7221 = vmatprep.subr.bf16.mxu0 %v5846
    %7222 = vmatpush1.bf16.msra.mxu0 %v5845
    %7223 = vmatprep.subr.bf16.mxu0 %v5852
    %7224 = vmatpush1.bf16.msra.mxu0 %v5851
    %7225 = vmatprep.subr.bf16.mxu0 %v5858
    %7226 = vmatpush1.bf16.msra.mxu0 %v5857
    %7227 = vmatprep.mubr.bf16.mxu0 %v615
    %7228 = vmatmul.mubr.bf16.gmra.mrb[0].mxu0 %v614
    %v7229 = vpop.f32.mrb[0].mxu0
    %v7230 = vadd.f32 0.0, %v7229
    %v7231 = vpop.f32.mrb[0].mxu0
    %v7232 = vadd.f32 0.0, %v7231
    %v7233 = vpop.f32.mrb[0].mxu0
    %v7234 = vadd.f32 0.0, %v7233
    %v7235 = vpop.f32.mrb[0].mxu0
    %v7236 = vadd.f32 0.0, %v7235
    %7237 = vmatprep.mubr.bf16.mxu0 %v623
    %7238 = vmatmul.mubr.bf16.gmra.mrb[0].mxu0 %v622
    %v7239 = vpop.f32.mrb[0].mxu0
    %v7240 = vadd.f32 0.0, %v7239
    %v7241 = vpop.f32.mrb[0].mxu0
    %v7242 = vadd.f32 0.0, %v7241
    %v7243 = vpop.f32.mrb[0].mxu0
    %v7244 = vadd.f32 0.0, %v7243
    %v7245 = vpop.f32.mrb[0].mxu0
    %v7246 = vadd.f32 0.0, %v7245
    %7247 = vmatprep.mubr.bf16.mxu0 %v631
    %7248 = vmatmul.mubr.bf16.gmra.mrb[0].mxu0 %v630
    %v7249 = vpop.f32.mrb[0].mxu0
    %v7250 = vadd.f32 0.0, %v7249
    %v7251 = vpop.f32.mrb[0].mxu0
    %v7252 = vadd.f32 0.0, %v7251
    %v7253 = vpop.f32.mrb[0].mxu0
    %v7254 = vadd.f32 0.0, %v7253
    %v7255 = vpop.f32.mrb[0].mxu0
    %v7256 = vadd.f32 0.0, %v7255
    %7257 = vmatprep.mubr.bf16.mxu0 %v639
    %7258 = vmatmul.mubr.bf16.gmra.mrb[0].mxu0 %v638
    %v7259 = vpop.f32.mrb[0].mxu0
    %v7260 = vadd.f32 0.0, %v7259
    %v7261 = vpop.f32.mrb[0].mxu0
    %v7262 = vadd.f32 0.0, %v7261
    %v7263 = vpop.f32.mrb[0].mxu0
    %v7264 = vadd.f32 0.0, %v7263
    %v7265 = vpop.f32.mrb[0].mxu0
    %v7266 = vadd.f32 0.0, %v7265
    %7267 = vmatprep.mubr.bf16.mxu0 %v647
    %7268 = vmatmul.mubr.bf16.gmra.mrb[0].mxu0 %v646
    %v7269 = vpop.f32.mrb[0].mxu0
    %v7270 = vadd.f32 0.0, %v7269
    %v7271 = vpop.f32.mrb[0].mxu0
    %v7272 = vadd.f32 0.0, %v7271
    %v7273 = vpop.f32.mrb[0].mxu0
    %v7274 = vadd.f32 0.0, %v7273
    %v7275 = vpop.f32.mrb[0].mxu0
    %v7276 = vadd.f32 0.0, %v7275
    %7277 = vdwg.mxu0
    %7278 = vmatprep.subr.bf16.mxu0 %v5864
    %7279 = vmatpush1.bf16.msra.mxu0 %v5863
    %7280 = vmatprep.subr.bf16.mxu0 %v5870
    %7281 = vmatpush1.bf16.msra.mxu0 %v5869
    %7282 = vmatprep.subr.bf16.mxu0 %v5876
    %7283 = vmatpush1.bf16.msra.mxu0 %v5875
    %7284 = vmatprep.subr.bf16.mxu0 %v5882
    %7285 = vmatpush1.bf16.msra.mxu0 %v5881
    %7286 = vmatprep.subr.bf16.mxu0 %v5888
    %7287 = vmatpush1.bf16.msra.mxu0 %v5887
    %7288 = vmatprep.subr.bf16.mxu0 %v5894
    %7289 = vmatpush1.bf16.msra.mxu0 %v5893
    %7290 = vmatprep.subr.bf16.mxu0 %v5900
    %7291 = vmatpush1.bf16.msra.mxu0 %v5899
    %7292 = vmatprep.subr.bf16.mxu0 %v5906
    %7293 = vmatpush1.bf16.msra.mxu0 %v5905
    %7294 = vmatprep.subr.bf16.mxu0 %v5912
    %7295 = vmatpush1.bf16.msra.mxu0 %v5911
    %7296 = vmatprep.subr.bf16.mxu0 %v5918
    %7297 = vmatpush1.bf16.msra.mxu0 %v5917
    %7298 = vmatprep.subr.bf16.mxu0 %v5924
    %7299 = vmatpush1.bf16.msra.mxu0 %v5923
    %7300 = vmatprep.subr.bf16.mxu0 %v5930
    %7301 = vmatpush1.bf16.msra.mxu0 %v5929
    %7302 = vmatprep.subr.bf16.mxu0 %v5936
    %7303 = vmatpush1.bf16.msra.mxu0 %v5935
    %7304 = vmatprep.subr.bf16.mxu0 %v5942
    %7305 = vmatpush1.bf16.msra.mxu0 %v5941
    %7306 = vmatprep.subr.bf16.mxu0 %v5948
    %7307 = vmatpush1.bf16.msra.mxu0 %v5947
    %7308 = vmatprep.subr.bf16.mxu0 %v5954
    %7309 = vmatpush1.bf16.msra.mxu0 %v5953
    %7310 = vmatprep.mubr.bf16.mxu0 %v617
    %7311 = vmatmul.mubr.bf16.gmra.mrb[0].mxu0 %v616
    %v7312 = vpop.f32.mrb[0].mxu0
    %v7313 = vadd.f32 %v7230, %v7312
    %v7314 = vpop.f32.mrb[0].mxu0
    %v7315 = vadd.f32 %v7232, %v7314
    %v7316 = vpop.f32.mrb[0].mxu0
    %v7317 = vadd.f32 %v7234, %v7316
    %v7318 = vpop.f32.mrb[0].mxu0
    %v7319 = vadd.f32 %v7236, %v7318
    %7320 = vmatprep.mubr.bf16.mxu0 %v625
    %7321 = vmatmul.mubr.bf16.gmra.mrb[0].mxu0 %v624
    %v7322 = vpop.f32.mrb[0].mxu0
    %v7323 = vadd.f32 %v7240, %v7322
    %v7324 = vpop.f32.mrb[0].mxu0
    %v7325 = vadd.f32 %v7242, %v7324
    %v7326 = vpop.f32.mrb[0].mxu0
    %v7327 = vadd.f32 %v7244, %v7326
    %v7328 = vpop.f32.mrb[0].mxu0
    %v7329 = vadd.f32 %v7246, %v7328
    %7330 = vmatprep.mubr.bf16.mxu0 %v633
    %7331 = vmatmul.mubr.bf16.gmra.mrb[0].mxu0 %v632
    %v7332 = vpop.f32.mrb[0].mxu0
    %v7333 = vadd.f32 %v7250, %v7332
    %v7334 = vpop.f32.mrb[0].mxu0
    %v7335 = vadd.f32 %v7252, %v7334
    %v7336 = vpop.f32.mrb[0].mxu0
    %v7337 = vadd.f32 %v7254, %v7336
    %v7338 = vpop.f32.mrb[0].mxu0
    %v7339 = vadd.f32 %v7256, %v7338
    %7340 = vmatprep.mubr.bf16.mxu0 %v641
    %7341 = vmatmul.mubr.bf16.gmra.mrb[0].mxu0 %v640
    %v7342 = vpop.f32.mrb[0].mxu0
    %v7343 = vadd.f32 %v7260, %v7342
    %v7344 = vpop.f32.mrb[0].mxu0
    %v7345 = vadd.f32 %v7262, %v7344
    %v7346 = vpop.f32.mrb[0].mxu0
    %v7347 = vadd.f32 %v7264, %v7346
    %v7348 = vpop.f32.mrb[0].mxu0
    %v7349 = vadd.f32 %v7266, %v7348
    %7350 = vmatprep.mubr.bf16.mxu0 %v649
    %7351 = vmatmul.mubr.bf16.gmra.mrb[0].mxu0 %v648
    %v7352 = vpop.f32.mrb[0].mxu0
    %v7353 = vadd.f32 %v7270, %v7352
    %v7354 = vpop.f32.mrb[0].mxu0
    %v7355 = vadd.f32 %v7272, %v7354
    %v7356 = vpop.f32.mrb[0].mxu0
    %v7357 = vadd.f32 %v7274, %v7356
    %v7358 = vpop.f32.mrb[0].mxu0
    %v7359 = vadd.f32 %v7276, %v7358
    %7360 = vdwg.mxu0
    %7361 = vmatprep.subr.bf16.mxu0 %v5960
    %7362 = vmatpush1.bf16.msra.mxu0 %v5959
    %7363 = vmatprep.subr.bf16.mxu0 %v5966
    %7364 = vmatpush1.bf16.msra.mxu0 %v5965
    %7365 = vmatprep.subr.bf16.mxu0 %v5972
    %7366 = vmatpush1.bf16.msra.mxu0 %v5971
    %7367 = vmatprep.subr.bf16.mxu0 %v5978
    %7368 = vmatpush1.bf16.msra.mxu0 %v5977
    %7369 = vmatprep.subr.bf16.mxu0 %v5984
    %7370 = vmatpush1.bf16.msra.mxu0 %v5983
    %7371 = vmatprep.subr.bf16.mxu0 %v5990
    %7372 = vmatpush1.bf16.msra.mxu0 %v5989
    %7373 = vmatprep.subr.bf16.mxu0 %v5996
    %7374 = vmatpush1.bf16.msra.mxu0 %v5995
    %7375 = vmatprep.subr.bf16.mxu0 %v6002
    %7376 = vmatpush1.bf16.msra.mxu0 %v6001
    %7377 = vmatprep.subr.bf16.mxu0 %v6008
    %7378 = vmatpush1.bf16.msra.mxu0 %v6007
    %7379 = vmatprep.subr.bf16.mxu0 %v6014
    %7380 = vmatpush1.bf16.msra.mxu0 %v6013
    %7381 = vmatprep.subr.bf16.mxu0 %v6020
    %7382 = vmatpush1.bf16.msra.mxu0 %v6019
    %7383 = vmatprep.subr.bf16.mxu0 %v6026
    %7384 = vmatpush1.bf16.msra.mxu0 %v6025
    %7385 = vmatprep.subr.bf16.mxu0 %v6032
    %7386 = vmatpush1.bf16.msra.mxu0 %v6031
    %7387 = vmatprep.subr.bf16.mxu0 %v6038
    %7388 = vmatpush1.bf16.msra.mxu0 %v6037
    %7389 = vmatprep.subr.bf16.mxu0 %v6044
    %7390 = vmatpush1.bf16.msra.mxu0 %v6043
    %7391 = vmatprep.subr.bf16.mxu0 %v6050
    %7392 = vmatpush1.bf16.msra.mxu0 %v6049
    %7393 = vmatprep.mubr.bf16.mxu0 %v619
    %7394 = vmatmul.mubr.bf16.gmra.mrb[0].mxu0 %v618
    %v7395 = vpop.f32.mrb[0].mxu0
    %v7396 = vadd.f32 %v7313, %v7395
    %v7397 = vpop.f32.mrb[0].mxu0
    %v7398 = vadd.f32 %v7315, %v7397
    %v7399 = vpop.f32.mrb[0].mxu0
    %v7400 = vadd.f32 %v7317, %v7399
    %v7401 = vpop.f32.mrb[0].mxu0
    %v7402 = vadd.f32 %v7319, %v7401
    %7403 = vmatprep.mubr.bf16.mxu0 %v627
    %7404 = vmatmul.mubr.bf16.gmra.mrb[0].mxu0 %v626
    %v7405 = vpop.f32.mrb[0].mxu0
    %v7406 = vadd.f32 %v7323, %v7405
    %v7407 = vpop.f32.mrb[0].mxu0
    %v7408 = vadd.f32 %v7325, %v7407
    %v7409 = vpop.f32.mrb[0].mxu0
    %v7410 = vadd.f32 %v7327, %v7409
    %v7411 = vpop.f32.mrb[0].mxu0
    %v7412 = vadd.f32 %v7329, %v7411
    %7413 = vmatprep.mubr.bf16.mxu0 %v635
    %7414 = vmatmul.mubr.bf16.gmra.mrb[0].mxu0 %v634
    %v7415 = vpop.f32.mrb[0].mxu0
    %v7416 = vadd.f32 %v7333, %v7415
    %v7417 = vpop.f32.mrb[0].mxu0
    %v7418 = vadd.f32 %v7335, %v7417
    %v7419 = vpop.f32.mrb[0].mxu0
    %v7420 = vadd.f32 %v7337, %v7419
    %v7421 = vpop.f32.mrb[0].mxu0
    %v7422 = vadd.f32 %v7339, %v7421
    %7423 = vmatprep.mubr.bf16.mxu0 %v643
    %7424 = vmatmul.mubr.bf16.gmra.mrb[0].mxu0 %v642
    %v7425 = vpop.f32.mrb[0].mxu0
    %v7426 = vadd.f32 %v7343, %v7425
    %v7427 = vpop.f32.mrb[0].mxu0
    %v7428 = vadd.f32 %v7345, %v7427
    %v7429 = vpop.f32.mrb[0].mxu0
    %v7430 = vadd.f32 %v7347, %v7429
    %v7431 = vpop.f32.mrb[0].mxu0
    %v7432 = vadd.f32 %v7349, %v7431
    %7433 = vmatprep.mubr.bf16.mxu0 %v651
    %7434 = vmatmul.mubr.bf16.gmra.mrb[0].mxu0 %v650
    %v7435 = vpop.f32.mrb[0].mxu0
    %v7436 = vadd.f32 %v7353, %v7435
    %v7437 = vpop.f32.mrb[0].mxu0
    %v7438 = vadd.f32 %v7355, %v7437
    %v7439 = vpop.f32.mrb[0].mxu0
    %v7440 = vadd.f32 %v7357, %v7439
    %v7441 = vpop.f32.mrb[0].mxu0
    %v7442 = vadd.f32 %v7359, %v7441
    %7443 = vdwg.mxu0
    %7444 = vmatprep.subr.bf16.mxu0 %v6056
    %7445 = vmatpush1.bf16.msra.mxu0 %v6055
    %7446 = vmatprep.subr.bf16.mxu0 %v6062
    %7447 = vmatpush1.bf16.msra.mxu0 %v6061
    %7448 = vmatprep.subr.bf16.mxu0 %v6068
    %7449 = vmatpush1.bf16.msra.mxu0 %v6067
    %7450 = vmatprep.subr.bf16.mxu0 %v6074
    %7451 = vmatpush1.bf16.msra.mxu0 %v6073
    %7452 = vmatprep.subr.bf16.mxu0 %v6080
    %7453 = vmatpush1.bf16.msra.mxu0 %v6079
    %7454 = vmatprep.subr.bf16.mxu0 %v6086
    %7455 = vmatpush1.bf16.msra.mxu0 %v6085
    %7456 = vmatprep.subr.bf16.mxu0 %v6092
    %7457 = vmatpush1.bf16.msra.mxu0 %v6091
    %7458 = vmatprep.subr.bf16.mxu0 %v6098
    %7459 = vmatpush1.bf16.msra.mxu0 %v6097
    %7460 = vmatprep.subr.bf16.mxu0 %v6104
    %7461 = vmatpush1.bf16.msra.mxu0 %v6103
    %7462 = vmatprep.subr.bf16.mxu0 %v6110
    %7463 = vmatpush1.bf16.msra.mxu0 %v6109
    %7464 = vmatprep.subr.bf16.mxu0 %v6116
    %7465 = vmatpush1.bf16.msra.mxu0 %v6115
    %7466 = vmatprep.subr.bf16.mxu0 %v6122
    %7467 = vmatpush1.bf16.msra.mxu0 %v6121
    %7468 = vmatprep.subr.bf16.mxu0 %v6128
    %7469 = vmatpush1.bf16.msra.mxu0 %v6127
    %7470 = vmatprep.subr.bf16.mxu0 %v6134
    %7471 = vmatpush1.bf16.msra.mxu0 %v6133
    %7472 = vmatprep.subr.bf16.mxu0 %v6140
    %7473 = vmatpush1.bf16.msra.mxu0 %v6139
    %7474 = vmatprep.subr.bf16.mxu0 %v6146
    %7475 = vmatpush1.bf16.msra.mxu0 %v6145
    %7476 = vmatprep.mubr.bf16.mxu0 %v621
    %7477 = vmatmul.mubr.bf16.gmra.mrb[0].mxu0 %v620
    %v7478 = vpop.f32.mrb[0].mxu0
    %v7479 = vadd.f32 %v7396, %v7478
    %v7480 = vpop.f32.mrb[0].mxu0
    %v7481 = vadd.f32 %v7398, %v7480
    %v7482 = vpop.f32.mrb[0].mxu0
    %v7483 = vadd.f32 %v7400, %v7482
    %v7484 = vpop.f32.mrb[0].mxu0
    %v7485 = vadd.f32 %v7402, %v7484
    %7486 = vmatprep.mubr.bf16.mxu0 %v629
    %7487 = vmatmul.mubr.bf16.gmra.mrb[0].mxu0 %v628
    %v7488 = vpop.f32.mrb[0].mxu0
    %v7489 = vadd.f32 %v7406, %v7488
    %v7490 = vpop.f32.mrb[0].mxu0
    %v7491 = vadd.f32 %v7408, %v7490
    %v7492 = vpop.f32.mrb[0].mxu0
    %v7493 = vadd.f32 %v7410, %v7492
    %v7494 = vpop.f32.mrb[0].mxu0
    %v7495 = vadd.f32 %v7412, %v7494
    %7496 = vmatprep.mubr.bf16.mxu0 %v637
    %7497 = vmatmul.mubr.bf16.gmra.mrb[0].mxu0 %v636
    %v7498 = vpop.f32.mrb[0].mxu0
    %v7499 = vadd.f32 %v7416, %v7498
    %v7500 = vpop.f32.mrb[0].mxu0
    %v7501 = vadd.f32 %v7418, %v7500
    %v7502 = vpop.f32.mrb[0].mxu0
    %v7503 = vadd.f32 %v7420, %v7502
    %v7504 = vpop.f32.mrb[0].mxu0
    %v7505 = vadd.f32 %v7422, %v7504
    %7506 = vmatprep.mubr.bf16.mxu0 %v645
    %7507 = vmatmul.mubr.bf16.gmra.mrb[0].mxu0 %v644
    %v7508 = vpop.f32.mrb[0].mxu0
    %v7509 = vadd.f32 %v7426, %v7508
    %v7510 = vpop.f32.mrb[0].mxu0
    %v7511 = vadd.f32 %v7428, %v7510
    %v7512 = vpop.f32.mrb[0].mxu0
    %v7513 = vadd.f32 %v7430, %v7512
    %v7514 = vpop.f32.mrb[0].mxu0
    %v7515 = vadd.f32 %v7432, %v7514
    %7516 = vmatprep.mubr.bf16.mxu0 %v653
    %7517 = vmatmul.mubr.bf16.gmra.mrb[0].mxu0 %v652
    %v7518 = vpop.f32.mrb[0].mxu0
    %v7519 = vadd.f32 %v7436, %v7518
    %v7520 = vpop.f32.mrb[0].mxu0
    %v7521 = vadd.f32 %v7438, %v7520
    %v7522 = vpop.f32.mrb[0].mxu0
    %v7523 = vadd.f32 %v7440, %v7522
    %v7524 = vpop.f32.mrb[0].mxu0
    %v7525 = vadd.f32 %v7442, %v7524
    %7526 = vdwg.mxu0
    %v7527 = vadd.f32 %v6815, %v6817
    %v7528 = vadd.f32 %v7527, %v7147
    %v7529 = vadd.f32 %v7528, %v7149
    %v7530 = vadd.f32 %v7529, %v7479
    %v7531 = vadd.f32 %v7530, %v7481
    %7532 = vadd.xlane.f32.xlu0 %v7531
    %v7533 = vpop.xlane.xlu0 %7532
    %v7534 = vadd.f32 %v6819, %v6821
    %v7535 = vadd.f32 %v7534, %v7151
    %v7536 = vadd.f32 %v7535, %v7153
    %v7537 = vadd.f32 %v7536, %v7483
    %v7538 = vadd.f32 %v7537, %v7485
    %7539 = vadd.xlane.f32.xlu0 %v7538
    %v7540 = vpop.xlane.xlu0 %7539
    %v7541 = vadd.f32 %v6825, %v6827
    %v7542 = vadd.f32 %v7541, %v7157
    %v7543 = vadd.f32 %v7542, %v7159
    %v7544 = vadd.f32 %v7543, %v7489
    %v7545 = vadd.f32 %v7544, %v7491
    %7546 = vadd.xlane.f32.xlu0 %v7545
    %v7547 = vpop.xlane.xlu0 %7546
    %v7548 = vadd.f32 %v6829, %v6831
    %v7549 = vadd.f32 %v7548, %v7161
    %v7550 = vadd.f32 %v7549, %v7163
    %v7551 = vadd.f32 %v7550, %v7493
    %v7552 = vadd.f32 %v7551, %v7495
    %7553 = vadd.xlane.f32.xlu0 %v7552
    %v7554 = vpop.xlane.xlu0 %7553
    %v7555 = vadd.f32 %v6835, %v6837
    %v7556 = vadd.f32 %v7555, %v7167
    %v7557 = vadd.f32 %v7556, %v7169
    %v7558 = vadd.f32 %v7557, %v7499
    %v7559 = vadd.f32 %v7558, %v7501
    %7560 = vadd.xlane.f32.xlu0 %v7559
    %v7561 = vpop.xlane.xlu0 %7560
    %v7562 = vadd.f32 %v6839, %v6841
    %v7563 = vadd.f32 %v7562, %v7171
    %v7564 = vadd.f32 %v7563, %v7173
    %v7565 = vadd.f32 %v7564, %v7503
    %v7566 = vadd.f32 %v7565, %v7505
    %7567 = vadd.xlane.f32.xlu0 %v7566
    %v7568 = vpop.xlane.xlu0 %7567
    %v7569 = vadd.f32 %v6845, %v6847
    %v7570 = vadd.f32 %v7569, %v7177
    %v7571 = vadd.f32 %v7570, %v7179
    %v7572 = vadd.f32 %v7571, %v7509
    %v7573 = vadd.f32 %v7572, %v7511
    %7574 = vadd.xlane.f32.xlu0 %v7573
    %v7575 = vpop.xlane.xlu0 %7574
    %v7576 = vadd.f32 %v6849, %v6851
    %v7577 = vadd.f32 %v7576, %v7181
    %v7578 = vadd.f32 %v7577, %v7183
    %v7579 = vadd.f32 %v7578, %v7513
    %v7580 = vadd.f32 %v7579, %v7515
    %7581 = vadd.xlane.f32.xlu0 %v7580
    %v7582 = vpop.xlane.xlu0 %7581
    %v7583 = vadd.f32 %v6855, %v6857
    %v7584 = vadd.f32 %v7583, %v7187
    %v7585 = vadd.f32 %v7584, %v7189
    %v7586 = vadd.f32 %v7585, %v7519
    %v7587 = vadd.f32 %v7586, %v7521
    %7588 = vadd.xlane.f32.xlu0 %v7587
    %v7589 = vpop.xlane.xlu0 %7588
    %v7590 = vsel %vm3673, %v6859, 0.0
    %v7591 = vsel %vm3673, %v6861, 0.0
    %v7592 = vadd.f32 %v7590, %v7591
    %v7593 = vsel %vm3673, %v7191, 0.0
    %v7594 = vadd.f32 %v7592, %v7593
    %v7595 = vsel %vm3673, %v7193, 0.0
    %v7596 = vadd.f32 %v7594, %v7595
    %v7597 = vsel %vm3673, %v7523, 0.0
    %v7598 = vadd.f32 %v7596, %v7597
    %v7599 = vsel %vm3673, %v7525, 0.0
    %v7600 = vadd.f32 %v7598, %v7599
    %7601 = vadd.xlane.f32.xlu0 %v7600
    %v7602 = vpop.xlane.xlu0 %7601
    %v7603 = vmul.f32 %v7533, %v3687
    %v7604 = vmul.f32 %v7540, %v3687
    %v7605 = vmul.f32 %v7547, %v3687
    %v7606 = vmul.f32 %v7554, %v3687
    %v7607 = vmul.f32 %v7561, %v3687
    %v7608 = vmul.f32 %v7568, %v3687
    %v7609 = vmul.f32 %v7575, %v3687
    %v7610 = vmul.f32 %v7582, %v3687
    %v7611 = vmul.f32 %v7589, %v3687
    %v7612 = vmul.f32 %v7602, %v3687
    %v7613 = vsub.f32 %v6815, %v7603
    %v7614 = vsub.f32 %v6817, %v7603
    %v7615 = vsub.f32 %v7147, %v7603
    %v7616 = vsub.f32 %v7149, %v7603
    %v7617 = vsub.f32 %v7479, %v7603
    %v7618 = vsub.f32 %v7481, %v7603
    %v7619 = vsub.f32 %v6819, %v7604
    %v7620 = vsub.f32 %v6821, %v7604
    %v7621 = vsub.f32 %v7151, %v7604
    %v7622 = vsub.f32 %v7153, %v7604
    %v7623 = vsub.f32 %v7483, %v7604
    %v7624 = vsub.f32 %v7485, %v7604
    %v7625 = vsub.f32 %v6825, %v7605
    %v7626 = vsub.f32 %v6827, %v7605
    %v7627 = vsub.f32 %v7157, %v7605
    %v7628 = vsub.f32 %v7159, %v7605
    %v7629 = vsub.f32 %v7489, %v7605
    %v7630 = vsub.f32 %v7491, %v7605
    %v7631 = vsub.f32 %v6829, %v7606
    %v7632 = vsub.f32 %v6831, %v7606
    %v7633 = vsub.f32 %v7161, %v7606
    %v7634 = vsub.f32 %v7163, %v7606
    %v7635 = vsub.f32 %v7493, %v7606
    %v7636 = vsub.f32 %v7495, %v7606
    %v7637 = vsub.f32 %v6835, %v7607
    %v7638 = vsub.f32 %v6837, %v7607
    %v7639 = vsub.f32 %v7167, %v7607
    %v7640 = vsub.f32 %v7169, %v7607
    %v7641 = vsub.f32 %v7499, %v7607
    %v7642 = vsub.f32 %v7501, %v7607
    %v7643 = vsub.f32 %v6839, %v7608
    %v7644 = vsub.f32 %v6841, %v7608
    %v7645 = vsub.f32 %v7171, %v7608
    %v7646 = vsub.f32 %v7173, %v7608
    %v7647 = vsub.f32 %v7503, %v7608
    %v7648 = vsub.f32 %v7505, %v7608
    %v7649 = vsub.f32 %v6845, %v7609
    %v7650 = vsub.f32 %v6847, %v7609
    %v7651 = vsub.f32 %v7177, %v7609
    %v7652 = vsub.f32 %v7179, %v7609
    %v7653 = vsub.f32 %v7509, %v7609
    %v7654 = vsub.f32 %v7511, %v7609
    %v7655 = vsub.f32 %v6849, %v7610
    %v7656 = vsub.f32 %v6851, %v7610
    %v7657 = vsub.f32 %v7181, %v7610
    %v7658 = vsub.f32 %v7183, %v7610
    %v7659 = vsub.f32 %v7513, %v7610
    %v7660 = vsub.f32 %v7515, %v7610
    %v7661 = vsub.f32 %v6855, %v7611
    %v7662 = vsub.f32 %v6857, %v7611
    %v7663 = vsub.f32 %v7187, %v7611
    %v7664 = vsub.f32 %v7189, %v7611
    %v7665 = vsub.f32 %v7519, %v7611
    %v7666 = vsub.f32 %v7521, %v7611
    %v7667 = vsub.f32 %v6859, %v7612
    %v7668 = vsub.f32 %v6861, %v7612
    %v7669 = vsub.f32 %v7191, %v7612
    %v7670 = vsub.f32 %v7193, %v7612
    %v7671 = vsub.f32 %v7523, %v7612
    %v7672 = vsub.f32 %v7525, %v7612
    %v7673 = vmul.f32 %v7613, %v7613
    %v7674 = vmul.f32 %v7614, %v7614
    %v7675 = vmul.f32 %v7615, %v7615
    %v7676 = vmul.f32 %v7616, %v7616
    %v7677 = vmul.f32 %v7617, %v7617
    %v7678 = vmul.f32 %v7618, %v7618
    %v7679 = vmul.f32 %v7619, %v7619
    %v7680 = vmul.f32 %v7620, %v7620
    %v7681 = vmul.f32 %v7621, %v7621
    %v7682 = vmul.f32 %v7622, %v7622
    %v7683 = vmul.f32 %v7623, %v7623
    %v7684 = vmul.f32 %v7624, %v7624
    %v7685 = vmul.f32 %v7625, %v7625
    %v7686 = vmul.f32 %v7626, %v7626
    %v7687 = vmul.f32 %v7627, %v7627
    %v7688 = vmul.f32 %v7628, %v7628
    %v7689 = vmul.f32 %v7629, %v7629
    %v7690 = vmul.f32 %v7630, %v7630
    %v7691 = vmul.f32 %v7631, %v7631
    %v7692 = vmul.f32 %v7632, %v7632
    %v7693 = vmul.f32 %v7633, %v7633
    %v7694 = vmul.f32 %v7634, %v7634
    %v7695 = vmul.f32 %v7635, %v7635
    %v7696 = vmul.f32 %v7636, %v7636
    %v7697 = vmul.f32 %v7637, %v7637
    %v7698 = vmul.f32 %v7638, %v7638
    %v7699 = vmul.f32 %v7639, %v7639
    %v7700 = vmul.f32 %v7640, %v7640
    %v7701 = vmul.f32 %v7641, %v7641
    %v7702 = vmul.f32 %v7642, %v7642
    %v7703 = vmul.f32 %v7643, %v7643
    %v7704 = vmul.f32 %v7644, %v7644
    %v7705 = vmul.f32 %v7645, %v7645
    %v7706 = vmul.f32 %v7646, %v7646
    %v7707 = vmul.f32 %v7647, %v7647
    %v7708 = vmul.f32 %v7648, %v7648
    %v7709 = vmul.f32 %v7649, %v7649
    %v7710 = vmul.f32 %v7650, %v7650
    %v7711 = vmul.f32 %v7651, %v7651
    %v7712 = vmul.f32 %v7652, %v7652
    %v7713 = vmul.f32 %v7653, %v7653
    %v7714 = vmul.f32 %v7654, %v7654
    %v7715 = vmul.f32 %v7655, %v7655
    %v7716 = vmul.f32 %v7656, %v7656
    %v7717 = vmul.f32 %v7657, %v7657
    %v7718 = vmul.f32 %v7658, %v7658
    %v7719 = vmul.f32 %v7659, %v7659
    %v7720 = vmul.f32 %v7660, %v7660
    %v7721 = vmul.f32 %v7661, %v7661
    %v7722 = vmul.f32 %v7662, %v7662
    %v7723 = vmul.f32 %v7663, %v7663
    %v7724 = vmul.f32 %v7664, %v7664
    %v7725 = vmul.f32 %v7665, %v7665
    %v7726 = vmul.f32 %v7666, %v7666
    %v7727 = vmul.f32 %v7667, %v7667
    %v7728 = vmul.f32 %v7668, %v7668
    %v7729 = vmul.f32 %v7669, %v7669
    %v7730 = vmul.f32 %v7670, %v7670
    %v7731 = vmul.f32 %v7671, %v7671
    %v7732 = vmul.f32 %v7672, %v7672
    %v7733 = vadd.f32 %v7673, %v7674
    %v7734 = vadd.f32 %v7733, %v7675
    %v7735 = vadd.f32 %v7734, %v7676
    %v7736 = vadd.f32 %v7735, %v7677
    %v7737 = vadd.f32 %v7736, %v7678
    %7738 = vadd.xlane.f32.xlu0 %v7737
    %v7739 = vpop.xlane.xlu0 %7738
    %v7740 = vadd.f32 %v7679, %v7680
    %v7741 = vadd.f32 %v7740, %v7681
    %v7742 = vadd.f32 %v7741, %v7682
    %v7743 = vadd.f32 %v7742, %v7683
    %v7744 = vadd.f32 %v7743, %v7684
    %7745 = vadd.xlane.f32.xlu0 %v7744
    %v7746 = vpop.xlane.xlu0 %7745
    %v7747 = vadd.f32 %v7685, %v7686
    %v7748 = vadd.f32 %v7747, %v7687
    %v7749 = vadd.f32 %v7748, %v7688
    %v7750 = vadd.f32 %v7749, %v7689
    %v7751 = vadd.f32 %v7750, %v7690
    %7752 = vadd.xlane.f32.xlu0 %v7751
    %v7753 = vpop.xlane.xlu0 %7752
    %v7754 = vadd.f32 %v7691, %v7692
    %v7755 = vadd.f32 %v7754, %v7693
    %v7756 = vadd.f32 %v7755, %v7694
    %v7757 = vadd.f32 %v7756, %v7695
    %v7758 = vadd.f32 %v7757, %v7696
    %7759 = vadd.xlane.f32.xlu0 %v7758
    %v7760 = vpop.xlane.xlu0 %7759
    %v7761 = vadd.f32 %v7697, %v7698
    %v7762 = vadd.f32 %v7761, %v7699
    %v7763 = vadd.f32 %v7762, %v7700
    %v7764 = vadd.f32 %v7763, %v7701
    %v7765 = vadd.f32 %v7764, %v7702
    %7766 = vadd.xlane.f32.xlu0 %v7765
    %v7767 = vpop.xlane.xlu0 %7766
    %v7768 = vadd.f32 %v7703, %v7704
    %v7769 = vadd.f32 %v7768, %v7705
    %v7770 = vadd.f32 %v7769, %v7706
    %v7771 = vadd.f32 %v7770, %v7707
    %v7772 = vadd.f32 %v7771, %v7708
    %7773 = vadd.xlane.f32.xlu0 %v7772
    %v7774 = vpop.xlane.xlu0 %7773
    %v7775 = vadd.f32 %v7709, %v7710
    %v7776 = vadd.f32 %v7775, %v7711
    %v7777 = vadd.f32 %v7776, %v7712
    %v7778 = vadd.f32 %v7777, %v7713
    %v7779 = vadd.f32 %v7778, %v7714
    %7780 = vadd.xlane.f32.xlu0 %v7779
    %v7781 = vpop.xlane.xlu0 %7780
    %v7782 = vadd.f32 %v7715, %v7716
    %v7783 = vadd.f32 %v7782, %v7717
    %v7784 = vadd.f32 %v7783, %v7718
    %v7785 = vadd.f32 %v7784, %v7719
    %v7786 = vadd.f32 %v7785, %v7720
    %7787 = vadd.xlane.f32.xlu0 %v7786
    %v7788 = vpop.xlane.xlu0 %7787
    %v7789 = vadd.f32 %v7721, %v7722
    %v7790 = vadd.f32 %v7789, %v7723
    %v7791 = vadd.f32 %v7790, %v7724
    %v7792 = vadd.f32 %v7791, %v7725
    %v7793 = vadd.f32 %v7792, %v7726
    %7794 = vadd.xlane.f32.xlu0 %v7793
    %v7795 = vpop.xlane.xlu0 %7794
    %v7796 = vsel %vm3673, %v7727, 0.0
    %v7797 = vsel %vm3673, %v7728, 0.0
    %v7798 = vadd.f32 %v7796, %v7797
    %v7799 = vsel %vm3673, %v7729, 0.0
    %v7800 = vadd.f32 %v7798, %v7799
    %v7801 = vsel %vm3673, %v7730, 0.0
    %v7802 = vadd.f32 %v7800, %v7801
    %v7803 = vsel %vm3673, %v7731, 0.0
    %v7804 = vadd.f32 %v7802, %v7803
    %v7805 = vsel %vm3673, %v7732, 0.0
    %v7806 = vadd.f32 %v7804, %v7805
    %7807 = vadd.xlane.f32.xlu0 %v7806
    %v7808 = vpop.xlane.xlu0 %7807
    %v7809 = vmul.f32 %v7739, %v3687
    %v7810 = vmul.f32 %v7746, %v3687
    %v7811 = vmul.f32 %v7753, %v3687
    %v7812 = vmul.f32 %v7760, %v3687
    %v7813 = vmul.f32 %v7767, %v3687
    %v7814 = vmul.f32 %v7774, %v3687
    %v7815 = vmul.f32 %v7781, %v3687
    %v7816 = vmul.f32 %v7788, %v3687
    %v7817 = vmul.f32 %v7795, %v3687
    %v7818 = vmul.f32 %v7808, %v3687
    %v7819 = vadd.f32 %v7809, 1e-05
    %v7820 = vadd.f32 %v7810, 1e-05
    %v7821 = vadd.f32 %v7811, 1e-05
    %v7822 = vadd.f32 %v7812, 1e-05
    %v7823 = vadd.f32 %v7813, 1e-05
    %v7824 = vadd.f32 %v7814, 1e-05
    %v7825 = vadd.f32 %v7815, 1e-05
    %v7826 = vadd.f32 %v7816, 1e-05
    %v7827 = vadd.f32 %v7817, 1e-05
    %v7828 = vadd.f32 %v7818, 1e-05
    %v7829 = vrsqrt.pop %v7819
    %v7830 = vrsqrt.pop %v7820
    %v7831 = vrsqrt.pop %v7821
    %v7832 = vrsqrt.pop %v7822
    %v7833 = vrsqrt.pop %v7823
    %v7834 = vrsqrt.pop %v7824
    %v7835 = vrsqrt.pop %v7825
    %v7836 = vrsqrt.pop %v7826
    %v7837 = vrsqrt.pop %v7827
    %v7838 = vrsqrt.pop %v7828
    %v7839 = vmul.f32 %v7613, %v7829
    %v7840 = vmul.f32 %v7614, %v7829
    %v7841 = vmul.f32 %v7615, %v7829
    %v7842 = vmul.f32 %v7616, %v7829
    %v7843 = vmul.f32 %v7617, %v7829
    %v7844 = vmul.f32 %v7618, %v7829
    %v7845 = vmul.f32 %v7619, %v7830
    %v7846 = vmul.f32 %v7620, %v7830
    %v7847 = vmul.f32 %v7621, %v7830
    %v7848 = vmul.f32 %v7622, %v7830
    %v7849 = vmul.f32 %v7623, %v7830
    %v7850 = vmul.f32 %v7624, %v7830
    %v7851 = vmul.f32 %v7625, %v7831
    %v7852 = vmul.f32 %v7626, %v7831
    %v7853 = vmul.f32 %v7627, %v7831
    %v7854 = vmul.f32 %v7628, %v7831
    %v7855 = vmul.f32 %v7629, %v7831
    %v7856 = vmul.f32 %v7630, %v7831
    %v7857 = vmul.f32 %v7631, %v7832
    %v7858 = vmul.f32 %v7632, %v7832
    %v7859 = vmul.f32 %v7633, %v7832
    %v7860 = vmul.f32 %v7634, %v7832
    %v7861 = vmul.f32 %v7635, %v7832
    %v7862 = vmul.f32 %v7636, %v7832
    %v7863 = vmul.f32 %v7637, %v7833
    %v7864 = vmul.f32 %v7638, %v7833
    %v7865 = vmul.f32 %v7639, %v7833
    %v7866 = vmul.f32 %v7640, %v7833
    %v7867 = vmul.f32 %v7641, %v7833
    %v7868 = vmul.f32 %v7642, %v7833
    %v7869 = vmul.f32 %v7643, %v7834
    %v7870 = vmul.f32 %v7644, %v7834
    %v7871 = vmul.f32 %v7645, %v7834
    %v7872 = vmul.f32 %v7646, %v7834
    %v7873 = vmul.f32 %v7647, %v7834
    %v7874 = vmul.f32 %v7648, %v7834
    %v7875 = vmul.f32 %v7649, %v7835
    %v7876 = vmul.f32 %v7650, %v7835
    %v7877 = vmul.f32 %v7651, %v7835
    %v7878 = vmul.f32 %v7652, %v7835
    %v7879 = vmul.f32 %v7653, %v7835
    %v7880 = vmul.f32 %v7654, %v7835
    %v7881 = vmul.f32 %v7655, %v7836
    %v7882 = vmul.f32 %v7656, %v7836
    %v7883 = vmul.f32 %v7657, %v7836
    %v7884 = vmul.f32 %v7658, %v7836
    %v7885 = vmul.f32 %v7659, %v7836
    %v7886 = vmul.f32 %v7660, %v7836
    %v7887 = vmul.f32 %v7661, %v7837
    %v7888 = vmul.f32 %v7662, %v7837
    %v7889 = vmul.f32 %v7663, %v7837
    %v7890 = vmul.f32 %v7664, %v7837
    %v7891 = vmul.f32 %v7665, %v7837
    %v7892 = vmul.f32 %v7666, %v7837
    %v7893 = vmul.f32 %v7667, %v7838
    %v7894 = vmul.f32 %v7668, %v7838
    %v7895 = vmul.f32 %v7669, %v7838
    %v7896 = vmul.f32 %v7670, %v7838
    %v7897 = vmul.f32 %v7671, %v7838
    %v7898 = vmul.f32 %v7672, %v7838
    %v7899 = vmul.f32 %v7839, %v3988
    %v7900 = vmul.f32 %v7840, %v3992
    %v7901 = vmul.f32 %v7841, %v3996
    %v7902 = vmul.f32 %v7842, %v4000
    %v7903 = vmul.f32 %v7843, %v4004
    %v7904 = vmul.f32 %v7844, %v4008
    %v7905 = vmul.f32 %v7845, %v3988
    %v7906 = vmul.f32 %v7846, %v3992
    %v7907 = vmul.f32 %v7847, %v3996
    %v7908 = vmul.f32 %v7848, %v4000
    %v7909 = vmul.f32 %v7849, %v4004
    %v7910 = vmul.f32 %v7850, %v4008
    %v7911 = vmul.f32 %v7851, %v3988
    %v7912 = vmul.f32 %v7852, %v3992
    %v7913 = vmul.f32 %v7853, %v3996
    %v7914 = vmul.f32 %v7854, %v4000
    %v7915 = vmul.f32 %v7855, %v4004
    %v7916 = vmul.f32 %v7856, %v4008
    %v7917 = vmul.f32 %v7857, %v3988
    %v7918 = vmul.f32 %v7858, %v3992
    %v7919 = vmul.f32 %v7859, %v3996
    %v7920 = vmul.f32 %v7860, %v4000
    %v7921 = vmul.f32 %v7861, %v4004
    %v7922 = vmul.f32 %v7862, %v4008
    %v7923 = vmul.f32 %v7863, %v3988
    %v7924 = vmul.f32 %v7864, %v3992
    %v7925 = vmul.f32 %v7865, %v3996
    %v7926 = vmul.f32 %v7866, %v4000
    %v7927 = vmul.f32 %v7867, %v4004
    %v7928 = vmul.f32 %v7868, %v4008
    %v7929 = vmul.f32 %v7869, %v3988
    %v7930 = vmul.f32 %v7870, %v3992
    %v7931 = vmul.f32 %v7871, %v3996
    %v7932 = vmul.f32 %v7872, %v4000
    %v7933 = vmul.f32 %v7873, %v4004
    %v7934 = vmul.f32 %v7874, %v4008
    %v7935 = vmul.f32 %v7875, %v3988
    %v7936 = vmul.f32 %v7876, %v3992
    %v7937 = vmul.f32 %v7877, %v3996
    %v7938 = vmul.f32 %v7878, %v4000
    %v7939 = vmul.f32 %v7879, %v4004
    %v7940 = vmul.f32 %v7880, %v4008
    %v7941 = vmul.f32 %v7881, %v3988
    %v7942 = vmul.f32 %v7882, %v3992
    %v7943 = vmul.f32 %v7883, %v3996
    %v7944 = vmul.f32 %v7884, %v4000
    %v7945 = vmul.f32 %v7885, %v4004
    %v7946 = vmul.f32 %v7886, %v4008
    %v7947 = vmul.f32 %v7887, %v3988
    %v7948 = vmul.f32 %v7888, %v3992
    %v7949 = vmul.f32 %v7889, %v3996
    %v7950 = vmul.f32 %v7890, %v4000
    %v7951 = vmul.f32 %v7891, %v4004
    %v7952 = vmul.f32 %v7892, %v4008
    %v7953 = vmul.f32 %v7893, %v3988
    %v7954 = vmul.f32 %v7894, %v3992
    %v7955 = vmul.f32 %v7895, %v3996
    %v7956 = vmul.f32 %v7896, %v4000
    %v7957 = vmul.f32 %v7897, %v4004
    %v7958 = vmul.f32 %v7898, %v4008
    %v7959 = vadd.f32 %v7899, %v4079
    %v7960 = vadd.f32 %v7900, %v4083
    %v7961 = vadd.f32 %v7901, %v4087
    %v7962 = vadd.f32 %v7902, %v4091
    %v7963 = vadd.f32 %v7903, %v4095
    %v7964 = vadd.f32 %v7904, %v4099
    %v7965 = vadd.f32 %v7905, %v4079
    %v7966 = vadd.f32 %v7906, %v4083
    %v7967 = vadd.f32 %v7907, %v4087
    %v7968 = vadd.f32 %v7908, %v4091
    %v7969 = vadd.f32 %v7909, %v4095
    %v7970 = vadd.f32 %v7910, %v4099
    %v7971 = vadd.f32 %v7911, %v4079
    %v7972 = vadd.f32 %v7912, %v4083
    %v7973 = vadd.f32 %v7913, %v4087
    %v7974 = vadd.f32 %v7914, %v4091
    %v7975 = vadd.f32 %v7915, %v4095
    %v7976 = vadd.f32 %v7916, %v4099
    %v7977 = vadd.f32 %v7917, %v4079
    %v7978 = vadd.f32 %v7918, %v4083
    %v7979 = vadd.f32 %v7919, %v4087
    %v7980 = vadd.f32 %v7920, %v4091
    %v7981 = vadd.f32 %v7921, %v4095
    %v7982 = vadd.f32 %v7922, %v4099
    %v7983 = vadd.f32 %v7923, %v4079
    %v7984 = vadd.f32 %v7924, %v4083
    %v7985 = vadd.f32 %v7925, %v4087
    %v7986 = vadd.f32 %v7926, %v4091
    %v7987 = vadd.f32 %v7927, %v4095
    %v7988 = vadd.f32 %v7928, %v4099
    %v7989 = vadd.f32 %v7929, %v4079
    %v7990 = vadd.f32 %v7930, %v4083
    %v7991 = vadd.f32 %v7931, %v4087
    %v7992 = vadd.f32 %v7932, %v4091
    %v7993 = vadd.f32 %v7933, %v4095
    %v7994 = vadd.f32 %v7934, %v4099
    %v7995 = vadd.f32 %v7935, %v4079
    %v7996 = vadd.f32 %v7936, %v4083
    %v7997 = vadd.f32 %v7937, %v4087
    %v7998 = vadd.f32 %v7938, %v4091
    %v7999 = vadd.f32 %v7939, %v4095
    %v8000 = vadd.f32 %v7940, %v4099
    %v8001 = vadd.f32 %v7941, %v4079
    %v8002 = vadd.f32 %v7942, %v4083
    %v8003 = vadd.f32 %v7943, %v4087
    %v8004 = vadd.f32 %v7944, %v4091
    %v8005 = vadd.f32 %v7945, %v4095
    %v8006 = vadd.f32 %v7946, %v4099
    %v8007 = vadd.f32 %v7947, %v4079
    %v8008 = vadd.f32 %v7948, %v4083
    %v8009 = vadd.f32 %v7949, %v4087
    %v8010 = vadd.f32 %v7950, %v4091
    %v8011 = vadd.f32 %v7951, %v4095
    %v8012 = vadd.f32 %v7952, %v4099
    %v8013 = vadd.f32 %v7953, %v4079
    %v8014 = vadd.f32 %v7954, %v4083
    %v8015 = vadd.f32 %v7955, %v4087
    %v8016 = vadd.f32 %v7956, %v4091
    %v8017 = vadd.f32 %v7957, %v4095
    %v8018 = vadd.f32 %v7958, %v4099
    %s8019 = scalar_lea.vmem %s4, 480
    %8020 = vst [vmem:[%s8019] sm:$0xff] %v7959
    %8021 = vst [vmem:[%s8019 + $0x8] sm:$0xff] %v7960
    %8022 = vst [vmem:[%s8019 + $0x10] sm:$0xff] %v7961
    %8023 = vst [vmem:[%s8019 + $0x18] sm:$0xff] %v7962
    %8024 = vst [vmem:[%s8019 + $0x20] sm:$0xff] %v7963
    %8025 = vst [vmem:[%s8019 + $0x28] sm:$0xff] %v7964
    %8026 = vst [vmem:[%s8019 + $0x30] sm:$0xff] %v7965
    %8027 = vst [vmem:[%s8019 + $0x38] sm:$0xff] %v7966
    %8028 = vst [vmem:[%s8019 + $0x40] sm:$0xff] %v7967
    %8029 = vst [vmem:[%s8019 + $0x48] sm:$0xff] %v7968
    %8030 = vst [vmem:[%s8019 + $0x50] sm:$0xff] %v7969
    %8031 = vst [vmem:[%s8019 + $0x58] sm:$0xff] %v7970
    %8032 = vst [vmem:[%s8019 + $0x60] sm:$0xff] %v7971
    %8033 = vst [vmem:[%s8019 + $0x68] sm:$0xff] %v7972
    %8034 = vst [vmem:[%s8019 + $0x70] sm:$0xff] %v7973
    %8035 = vst [vmem:[%s8019 + $0x78] sm:$0xff] %v7974
    %8036 = vst [vmem:[%s8019 + $0x80] sm:$0xff] %v7975
    %8037 = vst [vmem:[%s8019 + $0x88] sm:$0xff] %v7976
    %8038 = vst [vmem:[%s8019 + $0x90] sm:$0xff] %v7977
    %8039 = vst [vmem:[%s8019 + $0x98] sm:$0xff] %v7978
    %8040 = vst [vmem:[%s8019 + $0xa0] sm:$0xff] %v7979
    %8041 = vst [vmem:[%s8019 + $0xa8] sm:$0xff] %v7980
    %8042 = vst [vmem:[%s8019 + $0xb0] sm:$0xff] %v7981
    %8043 = vst [vmem:[%s8019 + $0xb8] sm:$0xff] %v7982
    %8044 = vst [vmem:[%s8019 + $0xc0] sm:$0xff] %v7983
    %8045 = vst [vmem:[%s8019 + $0xc8] sm:$0xff] %v7984
    %8046 = vst [vmem:[%s8019 + $0xd0] sm:$0xff] %v7985
    %8047 = vst [vmem:[%s8019 + $0xd8] sm:$0xff] %v7986
    %8048 = vst [vmem:[%s8019 + $0xe0] sm:$0xff] %v7987
    %8049 = vst [vmem:[%s8019 + $0xe8] sm:$0xff] %v7988
    %8050 = vst [vmem:[%s8019 + $0xf0] sm:$0xff] %v7989
    %8051 = vst [vmem:[%s8019 + $0xf8] sm:$0xff] %v7990
    %8052 = vst [vmem:[%s8019 + $0x100] sm:$0xff] %v7991
    %8053 = vst [vmem:[%s8019 + $0x108] sm:$0xff] %v7992
    %8054 = vst [vmem:[%s8019 + $0x110] sm:$0xff] %v7993
    %8055 = vst [vmem:[%s8019 + $0x118] sm:$0xff] %v7994
    %8056 = vst [vmem:[%s8019 + $0x120] sm:$0xff] %v7995
    %8057 = vst [vmem:[%s8019 + $0x128] sm:$0xff] %v7996
    %8058 = vst [vmem:[%s8019 + $0x130] sm:$0xff] %v7997
    %8059 = vst [vmem:[%s8019 + $0x138] sm:$0xff] %v7998
    %8060 = vst [vmem:[%s8019 + $0x140] sm:$0xff] %v7999
    %8061 = vst [vmem:[%s8019 + $0x148] sm:$0xff] %v8000
    %8062 = vst [vmem:[%s8019 + $0x150] sm:$0xff] %v8001
    %8063 = vst [vmem:[%s8019 + $0x158] sm:$0xff] %v8002
    %8064 = vst [vmem:[%s8019 + $0x160] sm:$0xff] %v8003
    %8065 = vst [vmem:[%s8019 + $0x168] sm:$0xff] %v8004
    %8066 = vst [vmem:[%s8019 + $0x170] sm:$0xff] %v8005
    %8067 = vst [vmem:[%s8019 + $0x178] sm:$0xff] %v8006
    %8068 = vst [vmem:[%s8019 + $0x180] sm:$0xff] %v8007
    %8069 = vst [vmem:[%s8019 + $0x188] sm:$0xff] %v8008
    %8070 = vst [vmem:[%s8019 + $0x190] sm:$0xff] %v8009
    %8071 = vst [vmem:[%s8019 + $0x198] sm:$0xff] %v8010
    %8072 = vst [vmem:[%s8019 + $0x1a0] sm:$0xff] %v8011
    %8073 = vst [vmem:[%s8019 + $0x1a8] sm:$0xff] %v8012
    %8074 = vst [vmem:[%s8019 + $0x1b0] sm:$0x1f] %v8013
    %8075 = vst [vmem:[%s8019 + $0x1b8] sm:$0x1f] %v8014
    %8076 = vst [vmem:[%s8019 + $0x1c0] sm:$0x1f] %v8015
    %8077 = vst [vmem:[%s8019 + $0x1c8] sm:$0x1f] %v8016
    %8078 = vst [vmem:[%s8019 + $0x1d0] sm:$0x1f] %v8017
    %8079 = vst [vmem:[%s8019 + $0x1d8] sm:$0x1f] %v8018
    // Predicated region
    $region34: #{tpu_custom_call.1} parent=1 // pred_check
      _
    $region35: #{tpu_custom_call.1} parent=1 // pred_check_branch
      %8081 = sbr.rel (0) target = $region37
    $region36: #{tpu_custom_call.1} parent=1 // pred_region
      _
    $region37: #{tpu_custom_call.1} parent=1 // pred_fallthru
      _
    // Predicated region
    $region38: #{tpu_custom_call.1} parent=1 // pred_check
      _
    $region39: #{tpu_custom_call.1} parent=1 // pred_check_branch
      %8083 = sbr.rel (0) target = $region41
    $region40: #{tpu_custom_call.1} parent=1 // pred_region
      _
    $region41: #{tpu_custom_call.1} parent=1 // pred_fallthru
      _
    %8084 = vsyncpa [#allocation3], 1
    %8085 = vsyncpa [#allocation5], 1
    %8086 = vsyncpa [#allocation8], 1

</llo_original>
